<compile_context>
chip_gen: v6e
topology: v6e:2x2x1
jax: 0.10.0
libtpu: 0.0.40
codegen_flags: <defaults>
</compile_context>

<pallas_src>
import jax
import jax.numpy as jnp
from jax.experimental import pallas as pl
from jax.experimental.pallas import tpu as pltpu

_LANE = 128
_SUBLANE = 8
_TILE_BYTES = 4 * 1024 * 1024          # per-buffer tile budget
_VMEM_LIMIT = 32 * 1024 * 1024         # explicit scoped-VMEM limit (safe on v5e/v6e/v7x)
_SMALL_BYTES = 128 * 1024              # below this, fused XLA sin beats a pallas_call


def _sin_kernel(x_ref, o_ref):
    # Elementwise sin on a VMEM tile (VPU/EUP path); f32 compute, cast on store.
    o_ref[...] = jnp.sin(x_ref[...].astype(jnp.float32)).astype(o_ref.dtype)


def _choose_row_tile(rows, cols, itemsize):
    """Row-tile: largest multiple of 8 fitting _TILE_BYTES, >=2 grid steps if possible."""
    max_tr = (_TILE_BYTES // (cols * itemsize)) // _SUBLANE * _SUBLANE
    max_tr = max(_SUBLANE, max_tr)
    if rows <= max_tr:
        if rows >= 2 * _SUBLANE:
            # Split into (at least) two steps so both v7x TensorCores are used.
            half = ((rows + 1) // 2 + _SUBLANE - 1) // _SUBLANE * _SUBLANE
            return min(half, max_tr)
        return rows                     # single full-extent block (tiny row count)
    return max_tr


def _run_sin_2d(x2d):
    rows, cols = x2d.shape
    itemsize = jnp.dtype(x2d.dtype).itemsize
    tr = _choose_row_tile(rows, cols, itemsize)
    grid = (pl.cdiv(rows, tr),)
    total = rows * cols
    cost = pl.CostEstimate(
        flops=2 * total,
        transcendentals=total,
        bytes_accessed=2 * total * itemsize,
    )
    return pl.pallas_call(
        _sin_kernel,
        out_shape=jax.ShapeDtypeStruct((rows, cols), x2d.dtype),
        grid=grid,
        in_specs=[pl.BlockSpec((tr, cols), lambda i: (i, 0))],
        out_specs=pl.BlockSpec((tr, cols), lambda i: (i, 0)),
        compiler_params=pltpu.CompilerParams(
            dimension_semantics=("parallel",),
            vmem_limit_bytes=_VMEM_LIMIT,
        ),
        cost_estimate=cost,
    )(x2d)


def dynamic_model_forward(x):
    """x: 2-D array (M, N). Returns sin(x) flattened to shape (M*N,)."""
    M, N = x.shape
    total = M * N
    itemsize = jnp.dtype(x.dtype).itemsize

    # Small-input fallback: pallas dispatch overhead would dominate the sin.
    if total * itemsize <= _SMALL_BYTES:
        return jnp.sin(x).reshape(total)

    if N % _LANE == 0:
        # Fast path: already lane-dense; run the grid directly over x.
        y2d = _run_sin_2d(x)
    else:
        lanes = next((c for c in (512, 256, 128) if total % c == 0), None)
        if lanes is not None:
            # Lane-dense metadata reshape (no pad, no slice).
            y2d = _run_sin_2d(x.reshape(total // lanes, lanes))
        else:
            # Fully ragged: block last dim equals the full N (allowed), masked
            # partial stores on the lane tail but zero extra HBM passes.
            # TODO(synk): could scalar-prefetch `total` and mask the tail into a
            # 1-D output to improve lane density for very small ragged N.
            y2d = _run_sin_2d(x)

    # .view(M*N) equivalent.
    return y2d.reshape(total)


def _check(x):
    out = jax.block_until_ready(dynamic_model_forward(x))
    ref = jnp.sin(x).reshape(x.shape[0] * x.shape[1])
    assert out.shape == (x.shape[0] * x.shape[1],), f"bad shape for {x.shape}"
    assert jnp.allclose(out, ref, atol=1e-6), f"mismatch vs reference for {x.shape}"


if __name__ == "__main__":
    key = jax.random.PRNGKey(0)
    k0, k1, k2, k3 = jax.random.split(key, 4)

    # 1) tiny shape from the original test -> small-input (fused XLA) path.
    _check(jax.random.normal(k0, (8, 32), dtype=jnp.float32))

    # 2) N % 128 == 0 -> direct pallas grid over x, 2 grid steps (megacore).
    _check(jax.random.normal(k1, (512, 384), dtype=jnp.float32))

    # 3) N ragged, total % 512 == 0 -> lane-dense reshape path.
    _check(jax.random.normal(k2, (1024, 100), dtype=jnp.float32))

    # 4) fully ragged rows and lanes -> full-N block, ragged last row-block.
    _check(jax.random.normal(k3, (257, 129), dtype=jnp.float32))

    print("KERNEL_OK")
</pallas_src>

<mosaic_0001>
module attributes {stable_mosaic.version = 11 : i64} {
  func.func @_sin_kernel(%arg0: i32, %arg1: memref<256x384xf32, #tpu.memory_space<vmem>>, %arg2: memref<256x384xf32, #tpu.memory_space<vmem>>) attributes {dimension_semantics = [#tpu.dimension_semantics<parallel>], iteration_bounds = array<i64: 2>, scalar_prefetch = 0 : i64, scratch_operands = 0 : i64, tpu.core_type = #tpu.core_type<tc>, window_params = [{transform_indices = @transform_0, window_bounds = array<i64: 256, 384>}, {transform_indices = @transform_1, window_bounds = array<i64: 256, 384>}]} {
    %c0 = arith.constant 0 : index
    %c0_0 = arith.constant 0 : index
    %0 = vector.load %arg1[%c0, %c0_0] : memref<256x384xf32, #tpu.memory_space<vmem>>, vector<256x384xf32>
    %1 = math.sin %0 : vector<256x384xf32>
    %c0_1 = arith.constant 0 : index
    %c0_2 = arith.constant 0 : index
    %2 = vector.load %arg2[%c0_1, %c0_2] : memref<256x384xf32, #tpu.memory_space<vmem>>, vector<256x384xf32>
    tpu.vector_store %arg2[%c0_1, %c0_2], %1 {strides = array<i32>} : memref<256x384xf32, #tpu.memory_space<vmem>>, vector<256x384xf32>,
    return
  }
  func.func @transform_0(%arg0: i32) -> (i32, i32) {
    %c0_i32 = arith.constant 0 : i32
    %c0_i32_0 = arith.constant 0 : i32
    return %arg0, %c0_i32 : i32, i32
  }
  func.func @transform_1(%arg0: i32) -> (i32, i32) {
    %c0_i32 = arith.constant 0 : i32
    %c0_i32_0 = arith.constant 0 : i32
    return %arg0, %c0_i32 : i32, i32
  }
}

</mosaic_0001>

<llo_original>
// kernel: tpu_custom_call.1
$region0: #{tpu_custom_call.1}
  #allocation0 [shape = 'u32[]', space=smem, size = 0x4, offset = 0x4, fixed_abs, tag = 'smem constant byte address 0x4 - core index']
  #allocation1 [shape = 'u32[144,128]{1,0:T(1,128)}', space=vmem, size = 0x12000, scoped, tag = 'internal scratch']
  %s0 = inlined_call_operand.hbm [shape: f32[512,384], index: 0, kind: input, shape index: {}]
  %s1 = inlined_call_operand.hbm [shape: f32[512,384], index: 1, kind: output, shape index: {}]
  %s2 = sld [smem:[#allocation0]]
  $region41: #{tpu_custom_call.1} parent=0
    _
  %s4 = ssub.s32 1, %s2
  %s5 = scalar_select 0, %s4, %s2
  $region1: #{tpu_custom_call.1} parent=0
    #allocation2 [shape = 'u8[786432]{0}', space=vmem, size = 0xc0000, scoped, tag = 'input window, operand 0']
    #allocation3 [shape = 's32[2]{0}', space=sflag, size = 0x8, scoped, tag = 'scoped memory for tpu_custom_call.1']
    #allocation4 [shape = 's32[2]{0}', space=sflag, size = 0x8, scoped, tag = 'scoped memory for tpu_custom_call.1']
    #allocation5 [shape = 'u8[786432]{0}', space=vmem, size = 0xc0000, scoped, tag = 'output window, operand 0']
    %6 = vsyncpa [#allocation3], 0
    %s7 = scalar_lea.sflag [#allocation3], 1
    %8 = vsyncpa %s7, 0
    %9 = vsyncpa [#allocation4], 0
    %s10 = scalar_lea.sflag [#allocation4], 1
    %11 = vsyncpa %s10, 0
    loop: start=0, step=1, limit=4
    $region2: #{tpu_custom_call.1} parent=1 // loop_pre_header
      _
    $region3: #{tpu_custom_call.1} parent=1 // loop_header
      %s13 = sphi 0, %s17
      %p14 = scmp.ge.s32.totalorder %s13, 4
      %s23 = sphi 0, %s25
      %s26 = sphi 0, %s23
      %s27 = sphi 0, %s26
      %s43 = sphi 0, %s27
      %s49 = sphi 0, %s51
      %s52 = sphi 0, %s49
      %s53 = sphi 0, %s52
      %s69 = sphi 0, %s53
    $region4: #{tpu_custom_call.1} parent=1 // loop_header_branch
      %16 = sbr.rel (%p14) target = $region8
    $region5: #{tpu_custom_call.1} parent=1 // loop_body
      %s18 = ssub.s32 %s13, 1
      %s19 = ssub.s32 %s13, 2
      %s20 = sadd.s32 %s13, 1
      %s21 = ssub.s32 %s13, %s20
      %p22 = scmp.eq.s32.totalorder %s21, 0
      %s24 = sadd.s32 %s23, 1
      %s25 = scalar_select %p22, %s23, %s24
      %p28 = pneg %p22
      %p29 = scmp.eq.s32.totalorder %s13, 1
      %p30 = por %p28, %p29
      %p31 = scmp.ne.s32.totalorder %s23, %s26
      %p32 = scmp.eq.s32.totalorder %s13, 0
      %p33 = por %p31, %p32
      %p34 = scmp.ne.s32.totalorder %s23, %s26
      %p35 = scmp.eq.s32.totalorder %s18, 1
      %p36 = por %p34, %p35
      %p37 = scmp.ne.s32.totalorder %s26, %s27
      %p38 = scmp.eq.s32.totalorder %s18, 0
      %p39 = por %p37, %p38
      %p40 = scmp.ne.s32.totalorder %s26, %s27
      %p41 = scmp.eq.s32.totalorder %s19, 1
      %p42 = por %p40, %p41
      %p44 = scmp.ne.s32.totalorder %s27, %s43
      %p45 = scmp.eq.s32.totalorder %s19, 0
      %p46 = por %p44, %p45
      %s47 = ssub.s32 %s13, %s20
      %p48 = scmp.eq.s32.totalorder %s47, 0
      %s50 = sadd.s32 %s49, 1
      %s51 = scalar_select %p48, %s49, %s50
      %p54 = pneg %p48
      %p55 = scmp.eq.s32.totalorder %s13, 1
      %p56 = por %p54, %p55
      %p57 = scmp.ne.s32.totalorder %s49, %s52
      %p58 = scmp.eq.s32.totalorder %s13, 0
      %p59 = por %p57, %p58
      %p60 = scmp.ne.s32.totalorder %s49, %s52
      %p61 = scmp.eq.s32.totalorder %s18, 1
      %p62 = por %p60, %p61
      %p63 = scmp.ne.s32.totalorder %s52, %s53
      %p64 = scmp.eq.s32.totalorder %s18, 0
      %p65 = por %p63, %p64
      %p66 = scmp.ne.s32.totalorder %s52, %s53
      %p67 = scmp.eq.s32.totalorder %s19, 1
      %p68 = por %p66, %p67
      %p70 = scmp.ne.s32.totalorder %s53, %s69
      %p71 = scmp.eq.s32.totalorder %s19, 0
      %p72 = por %p70, %p71
      %p73 = scmp.le.s32.totalorder 1, %s13
      %p74 = scmp.lt.s32.totalorder %s13, 3
      %p75 = pnand %p73, %p74
      %p76 = pneg %p75
      // Predicated region
      $region9: #{tpu_custom_call.1} parent=5 // pred_check
        _
      $region10: #{tpu_custom_call.1} parent=5 // pred_check_branch
        %78 = sbr.rel (%p75) target = $region12
      $region11: #{tpu_custom_call.1} parent=5 // pred_region
        %s79 = ssub.s32 %s13, 1
      $region12: #{tpu_custom_call.1} parent=5 // pred_fallthru
        _
      %p80 = scmp.lt.s32.totalorder %s13, 2
      // Predicated region
      $region13: #{tpu_custom_call.1} parent=5 // pred_check
        %p81 = pneg %p80
      $region14: #{tpu_custom_call.1} parent=5 // pred_check_branch
        %83 = sbr.rel (%p81) target = $region16
      $region15: #{tpu_custom_call.1} parent=5 // pred_region
        // Predicated region
        $region17: #{tpu_custom_call.1} parent=15 // pred_check
          %p84 = pneg %p33
        $region18: #{tpu_custom_call.1} parent=15 // pred_check_branch
          %86 = sbr.rel (%p84) target = $region20
        $region19: #{tpu_custom_call.1} parent=15 // pred_region
          %s87 = sand.u32 %s23, 1
          %s88 = scalar_lea.sflag [#allocation3], %s87
          %s89 = sand.u32 %s23, 1
          %s90 = smul.addr %s89, 768
          %s91 = scalar_lea.vmem [#allocation2], %s90
          %s92 = smul.u32 32, %s13
          %s94 = ssub.s32 12288, 12288
          %95 = vsyncadd %s88, %s94
          %s96 = smul.addr %s92, 3
          %s97 = smul.addr %s96, 128
          %s98 = scalar_lea.hbm %s0, %s97
          %s99 = sshll.u32 %s91, 4
          %s100 = int_to_ptr.vmem [resolvable:$true] %s99
          %105 = dma.hbm_to_vmem [thread:$0]  %s98, 12288, %s100, %s88, 384, 384, 24
        $region20: #{tpu_custom_call.1} parent=15 // pred_fallthru
          _
      $region16: #{tpu_custom_call.1} parent=5 // pred_fallthru
        _
      %p106 = scmp.le.s32.totalorder 1, %s13
      %p107 = scmp.lt.s32.totalorder %s13, 3
      %p108 = pnand %p106, %p107
      %p109 = pneg %p108
      // Predicated region
      $region21: #{tpu_custom_call.1} parent=5 // pred_check
        _
      $region22: #{tpu_custom_call.1} parent=5 // pred_check_branch
        %111 = sbr.rel (%p108) target = $region24
      $region23: #{tpu_custom_call.1} parent=5 // pred_region
        %s112 = ssub.s32 %s13, 1
        %s113 = sand.u32 %s26, 1
        %s114 = scalar_lea.sflag [#allocation3], %s113
        %s115 = sand.u32 %s26, 1
        %s116 = smul.addr %s115, 768
        %s117 = scalar_lea.vmem [#allocation2], %s116
        // Predicated region
        $region25: #{tpu_custom_call.1} parent=23 // pred_check
          %p118 = pneg %p39
        $region26: #{tpu_custom_call.1} parent=23 // pred_check_branch
          %120 = sbr.rel (%p118) target = $region28
        $region27: #{tpu_custom_call.1} parent=23 // pred_region
          %121 = dma.done %s114, 12288
        $region28: #{tpu_custom_call.1} parent=23 // pred_fallthru
          _
        %s122 = sand.u32 %s26, 1
        %s123 = scalar_lea.sflag [#allocation3], %s122
        %s124 = sand.u32 %s26, 1
        %s125 = smul.addr %s124, 768
        %s126 = scalar_lea.vmem [#allocation2], %s125
        %p127 = pneg %p39
        %p128 = pneg %p36
        %p129 = pneg %p65
        %p130 = pneg %p62
        %s131 = sand.u32 %s52, 1
        %s132 = scalar_lea.sflag [#allocation4], %s131
        %s133 = sand.u32 %s52, 1
        %s134 = smul.addr %s133, 768
        %s135 = scalar_lea.vmem [#allocation5], %s134
        %s136 = smul.u32 32, %s18
        %s137 = smul.u32 32, %s18
        %v138 = vld [vmem:[%s117] sm:$0xff]
        %v139 = vld [vmem:[%s117 + $0x8] sm:$0xff]
        %v140 = vld [vmem:[%s117 + $0x10] sm:$0xff]
        %v141 = vld [vmem:[%s117 + $0x18] sm:$0xff]
        %v142 = vld [vmem:[%s117 + $0x20] sm:$0xff]
        %v143 = vld [vmem:[%s117 + $0x28] sm:$0xff]
        %v144 = vld [vmem:[%s117 + $0x30] sm:$0xff]
        %v145 = vld [vmem:[%s117 + $0x38] sm:$0xff]
        %v146 = vld [vmem:[%s117 + $0x40] sm:$0xff]
        %v147 = vld [vmem:[%s117 + $0x48] sm:$0xff]
        %v148 = vld [vmem:[%s117 + $0x50] sm:$0xff]
        %v149 = vld [vmem:[%s117 + $0x58] sm:$0xff]
        %v150 = vld [vmem:[%s117 + $0x60] sm:$0xff]
        %v151 = vld [vmem:[%s117 + $0x68] sm:$0xff]
        %v152 = vld [vmem:[%s117 + $0x70] sm:$0xff]
        %v153 = vld [vmem:[%s117 + $0x78] sm:$0xff]
        %v154 = vld [vmem:[%s117 + $0x80] sm:$0xff]
        %v155 = vld [vmem:[%s117 + $0x88] sm:$0xff]
        %v156 = vld [vmem:[%s117 + $0x90] sm:$0xff]
        %v157 = vld [vmem:[%s117 + $0x98] sm:$0xff]
        %v158 = vld [vmem:[%s117 + $0xa0] sm:$0xff]
        %v159 = vld [vmem:[%s117 + $0xa8] sm:$0xff]
        %v160 = vld [vmem:[%s117 + $0xb0] sm:$0xff]
        %v161 = vld [vmem:[%s117 + $0xb8] sm:$0xff]
        %v162 = vld [vmem:[%s117 + $0xc0] sm:$0xff]
        %v163 = vld [vmem:[%s117 + $0xc8] sm:$0xff]
        %v164 = vld [vmem:[%s117 + $0xd0] sm:$0xff]
        %v165 = vld [vmem:[%s117 + $0xd8] sm:$0xff]
        %v166 = vld [vmem:[%s117 + $0xe0] sm:$0xff]
        %v167 = vld [vmem:[%s117 + $0xe8] sm:$0xff]
        %v168 = vld [vmem:[%s117 + $0xf0] sm:$0xff]
        %v169 = vld [vmem:[%s117 + $0xf8] sm:$0xff]
        %v170 = vld [vmem:[%s117 + $0x100] sm:$0xff]
        %v171 = vld [vmem:[%s117 + $0x108] sm:$0xff]
        %v172 = vld [vmem:[%s117 + $0x110] sm:$0xff]
        %v173 = vld [vmem:[%s117 + $0x118] sm:$0xff]
        %v174 = vld [vmem:[%s117 + $0x120] sm:$0xff]
        %v175 = vld [vmem:[%s117 + $0x128] sm:$0xff]
        %v176 = vld [vmem:[%s117 + $0x130] sm:$0xff]
        %v177 = vld [vmem:[%s117 + $0x138] sm:$0xff]
        %v178 = vld [vmem:[%s117 + $0x140] sm:$0xff]
        %v179 = vld [vmem:[%s117 + $0x148] sm:$0xff]
        %v180 = vld [vmem:[%s117 + $0x150] sm:$0xff]
        %v181 = vld [vmem:[%s117 + $0x158] sm:$0xff]
        %v182 = vld [vmem:[%s117 + $0x160] sm:$0xff]
        %v183 = vld [vmem:[%s117 + $0x168] sm:$0xff]
        %v184 = vld [vmem:[%s117 + $0x170] sm:$0xff]
        %v185 = vld [vmem:[%s117 + $0x178] sm:$0xff]
        %v186 = vld [vmem:[%s117 + $0x180] sm:$0xff]
        %v187 = vld [vmem:[%s117 + $0x188] sm:$0xff]
        %v188 = vld [vmem:[%s117 + $0x190] sm:$0xff]
        %v189 = vld [vmem:[%s117 + $0x198] sm:$0xff]
        %v190 = vld [vmem:[%s117 + $0x1a0] sm:$0xff]
        %v191 = vld [vmem:[%s117 + $0x1a8] sm:$0xff]
        %v192 = vld [vmem:[%s117 + $0x1b0] sm:$0xff]
        %v193 = vld [vmem:[%s117 + $0x1b8] sm:$0xff]
        %v194 = vld [vmem:[%s117 + $0x1c0] sm:$0xff]
        %v195 = vld [vmem:[%s117 + $0x1c8] sm:$0xff]
        %v196 = vld [vmem:[%s117 + $0x1d0] sm:$0xff]
        %v197 = vld [vmem:[%s117 + $0x1d8] sm:$0xff]
        %v198 = vld [vmem:[%s117 + $0x1e0] sm:$0xff]
        %v199 = vld [vmem:[%s117 + $0x1e8] sm:$0xff]
        %v200 = vld [vmem:[%s117 + $0x1f0] sm:$0xff]
        %v201 = vld [vmem:[%s117 + $0x1f8] sm:$0xff]
        %v202 = vld [vmem:[%s117 + $0x200] sm:$0xff]
        %v203 = vld [vmem:[%s117 + $0x208] sm:$0xff]
        %v204 = vld [vmem:[%s117 + $0x210] sm:$0xff]
        %v205 = vld [vmem:[%s117 + $0x218] sm:$0xff]
        %v206 = vld [vmem:[%s117 + $0x220] sm:$0xff]
        %v207 = vld [vmem:[%s117 + $0x228] sm:$0xff]
        %v208 = vld [vmem:[%s117 + $0x230] sm:$0xff]
        %v209 = vld [vmem:[%s117 + $0x238] sm:$0xff]
        %v210 = vld [vmem:[%s117 + $0x240] sm:$0xff]
        %v211 = vld [vmem:[%s117 + $0x248] sm:$0xff]
        %v212 = vld [vmem:[%s117 + $0x250] sm:$0xff]
        %v213 = vld [vmem:[%s117 + $0x258] sm:$0xff]
        %v214 = vld [vmem:[%s117 + $0x260] sm:$0xff]
        %v215 = vld [vmem:[%s117 + $0x268] sm:$0xff]
        %v216 = vld [vmem:[%s117 + $0x270] sm:$0xff]
        %v217 = vld [vmem:[%s117 + $0x278] sm:$0xff]
        %v218 = vld [vmem:[%s117 + $0x280] sm:$0xff]
        %v219 = vld [vmem:[%s117 + $0x288] sm:$0xff]
        %v220 = vld [vmem:[%s117 + $0x290] sm:$0xff]
        %v221 = vld [vmem:[%s117 + $0x298] sm:$0xff]
        %v222 = vld [vmem:[%s117 + $0x2a0] sm:$0xff]
        %v223 = vld [vmem:[%s117 + $0x2a8] sm:$0xff]
        %v224 = vld [vmem:[%s117 + $0x2b0] sm:$0xff]
        %v225 = vld [vmem:[%s117 + $0x2b8] sm:$0xff]
        %v226 = vld [vmem:[%s117 + $0x2c0] sm:$0xff]
        %v227 = vld [vmem:[%s117 + $0x2c8] sm:$0xff]
        %v228 = vld [vmem:[%s117 + $0x2d0] sm:$0xff]
        %v229 = vld [vmem:[%s117 + $0x2d8] sm:$0xff]
        %v230 = vld [vmem:[%s117 + $0x2e0] sm:$0xff]
        %v231 = vld [vmem:[%s117 + $0x2e8] sm:$0xff]
        %v232 = vld [vmem:[%s117 + $0x2f0] sm:$0xff]
        %v233 = vld [vmem:[%s117 + $0x2f8] sm:$0xff]
        %v234 = vand.u32 2147483647, %v138
        %vm235 = vcmp.le.f32.partialorder %v234, 0.7853982
        %vm236 = vcmp.lt.s32.totalorder %v138, 0
        %v237 = vand.u32 %v138, 2139095040
        %v238 = vshrl.u32 %v237, 23
        %v239 = vsub.s32 %v238, 127
        %v240 = vand.u32 2147483647, %v138
        %v241 = vand.u32 %v240, 8388607
        %v242 = vor.u32 %v241, 8388608
        %v243 = vsub.s32 0, %v242
        %v244 = vadd.s32 %v239, 1
        %vm245 = vcmp.gt.s32.totalorder %v244, 0
        %v246 = vsel %vm245, %v244, 0
        %v247 = vshrl.u32 %v246, 5
        %v248 = vand.u32 %v246, 31
        %v249 = vsub.s32 32, %v248
        %v250 = vshrl.u32 683565275, %v249
        %v251 = vshll.u32 683565275, %v248
        %v252 = vshrl.u32 2475754826, %v249
        %v253 = vor.u32 %v251, %v252
        %v254 = vshll.u32 2475754826, %v248
        %v255 = vshrl.u32 2131351028, %v249
        %v256 = vor.u32 %v254, %v255
        %v257 = vshll.u32 2131351028, %v248
        %v258 = vshrl.u32 2102212464, %v249
        %v259 = vor.u32 %v257, %v258
        %v260 = vshll.u32 2102212464, %v248
        %v261 = vshrl.u32 920167782, %v249
        %v262 = vor.u32 %v260, %v261
        %v263 = vshll.u32 920167782, %v248
        %v264 = vshrl.u32 1326507024, %v249
        %v265 = vor.u32 %v263, %v264
        %vm266 = vcmp.lt.s32.totalorder %v247, 1
        %vm267 = vcmp.lt.s32.totalorder %v247, 2
        %vm268 = vcmp.lt.s32.totalorder %v247, 3
        %vm269 = vcmp.lt.s32.totalorder %v247, 4
        %v270 = vsel %vm266, %v250, %v253
        %v271 = vsel %vm269, %v259, 2102212464
        %v272 = vsel %vm268, %v256, %v271
        %v273 = vsel %vm267, %v270, %v272
        %v274 = vsel %vm266, %v253, %v256
        %v275 = vsel %vm269, %v262, 920167782
        %v276 = vsel %vm268, %v259, %v275
        %v277 = vsel %vm267, %v274, %v276
        %v278 = vsel %vm266, %v256, %v259
        %v279 = vsel %vm269, %v265, 1326507024
        %v280 = vsel %vm268, %v262, %v279
        %v281 = vsel %vm267, %v278, %v280
        %v282 = vshll.u32 %v242, 8
        %v283 = vmul.u32.u64.compose %v282, %v281
        %v284 = vextract.low.u32 %v283
        %v285 = vextract.high.u32 %v283
        %v286 = vmul.u32.u64.compose %v282, %v277
        %v287 = vextract.low.u32 %v286
        %v288 = vextract.high.u32 %v286
        %v289 = vmul.u32 %v282, %v273
        %v290 = vadd.s32 %v285, %v287
        %vm291 = vc.u32 %v285, %v287
        %v292 = vadd.s32 %v288, 1
        %v293 = vsel %vm291, %v292, %v288
        %v294 = vadd.s32 %v289, %v293
        %v295 = vadd.s32 %v294, 536870912
        %v296 = vshrl.u32 %v295, 30
        %v297 = vshll.u32 %v296, 30
        %v298 = vsub.s32 %v294, %v297
        %vm299 = vcmp.lt.s32.totalorder %v298, 0
        %v300 = vsub.s32 0, %v298
        %v301 = vsel %vm299, %v300, %v298
        %v302 = vclz %v301
        %v303 = vsub.s32 %v302, 2
        %vm304 = vcmp.gt.s32.totalorder 0, %v303
        %v305 = vsel %vm304, 0, %v303
        %v306 = vsub.s32 32, %v305
        %v307 = vshll.u32 %v298, %v305
        %v308 = vshrl.u32 %v290, %v306
        %v309 = vor.u32 %v307, %v308
        %v310 = vsub.s32 4294967266, %v305
        %v311 = vadd.s32 %v310, 127
        %v312 = vshll.u32 %v311, 23
        %v313 = vor.u32 4788187, %v312
        %v314 = vand.u32 2147483647, %v313
        %v316 = vcvt.s32.f32 %v309
        %v317 = vmul.f32 %v316, %v314
        %v318 = vxor.u32 %v317, 2147483648
        %v319 = vsel %vm236, %v318, %v317
        %v320 = vsub.s32 4, %v296
        %v321 = vsel %vm236, %v320, %v296
        %v322 = vsel %vm235, %v138, %v319
        %v323 = vsel %vm235, 0, %v321
        %v324 = vcosq.f32.pop %v322
        %v325 = vsinq.f32.pop %v322
        %vm326 = vweird.f32 %v138
        %v327 = vadd.s32 %v323, 3
        %v328 = vand.u32 %v327, 3
        %vm329 = vcmp.lt.s32.totalorder %v328, 2
        %vm330 = vcmp.eq.s32.totalorder %v328, 0
        %v331 = vxor.u32 %v325, 2147483648
        %v332 = vsel %vm330, %v324, %v331
        %vm333 = vcmp.eq.s32.totalorder %v328, 2
        %v334 = vxor.u32 %v324, 2147483648
        %v335 = vsel %vm333, %v334, %v325
        %v336 = vsel %vm329, %v332, %v335
        %v337 = vsel %vm326, nan, %v336
        %v338 = vand.u32 2147483647, %v139
        %vm339 = vcmp.le.f32.partialorder %v338, 0.7853982
        %vm340 = vcmp.lt.s32.totalorder %v139, 0
        %v341 = vand.u32 %v139, 2139095040
        %v342 = vshrl.u32 %v341, 23
        %v343 = vsub.s32 %v342, 127
        %v344 = vand.u32 2147483647, %v139
        %v345 = vand.u32 %v344, 8388607
        %v346 = vor.u32 %v345, 8388608
        %v347 = vsub.s32 0, %v346
        %v348 = vadd.s32 %v343, 1
        %vm349 = vcmp.gt.s32.totalorder %v348, 0
        %v350 = vsel %vm349, %v348, 0
        %v351 = vshrl.u32 %v350, 5
        %v352 = vand.u32 %v350, 31
        %v353 = vsub.s32 32, %v352
        %v354 = vshrl.u32 683565275, %v353
        %v355 = vshll.u32 683565275, %v352
        %v356 = vshrl.u32 2475754826, %v353
        %v357 = vor.u32 %v355, %v356
        %v358 = vshll.u32 2475754826, %v352
        %v359 = vshrl.u32 2131351028, %v353
        %v360 = vor.u32 %v358, %v359
        %v361 = vshll.u32 2131351028, %v352
        %v362 = vshrl.u32 2102212464, %v353
        %v363 = vor.u32 %v361, %v362
        %v364 = vshll.u32 2102212464, %v352
        %v365 = vshrl.u32 920167782, %v353
        %v366 = vor.u32 %v364, %v365
        %v367 = vshll.u32 920167782, %v352
        %v368 = vshrl.u32 1326507024, %v353
        %v369 = vor.u32 %v367, %v368
        %vm370 = vcmp.lt.s32.totalorder %v351, 1
        %vm371 = vcmp.lt.s32.totalorder %v351, 2
        %vm372 = vcmp.lt.s32.totalorder %v351, 3
        %vm373 = vcmp.lt.s32.totalorder %v351, 4
        %v374 = vsel %vm370, %v354, %v357
        %v375 = vsel %vm373, %v363, 2102212464
        %v376 = vsel %vm372, %v360, %v375
        %v377 = vsel %vm371, %v374, %v376
        %v378 = vsel %vm370, %v357, %v360
        %v379 = vsel %vm373, %v366, 920167782
        %v380 = vsel %vm372, %v363, %v379
        %v381 = vsel %vm371, %v378, %v380
        %v382 = vsel %vm370, %v360, %v363
        %v383 = vsel %vm373, %v369, 1326507024
        %v384 = vsel %vm372, %v366, %v383
        %v385 = vsel %vm371, %v382, %v384
        %v386 = vshll.u32 %v346, 8
        %v387 = vmul.u32.u64.compose %v386, %v385
        %v388 = vextract.low.u32 %v387
        %v389 = vextract.high.u32 %v387
        %v390 = vmul.u32.u64.compose %v386, %v381
        %v391 = vextract.low.u32 %v390
        %v392 = vextract.high.u32 %v390
        %v393 = vmul.u32 %v386, %v377
        %v394 = vadd.s32 %v389, %v391
        %vm395 = vc.u32 %v389, %v391
        %v396 = vadd.s32 %v392, 1
        %v397 = vsel %vm395, %v396, %v392
        %v398 = vadd.s32 %v393, %v397
        %v399 = vadd.s32 %v398, 536870912
        %v400 = vshrl.u32 %v399, 30
        %v401 = vshll.u32 %v400, 30
        %v402 = vsub.s32 %v398, %v401
        %vm403 = vcmp.lt.s32.totalorder %v402, 0
        %v404 = vsub.s32 0, %v402
        %v405 = vsel %vm403, %v404, %v402
        %v406 = vclz %v405
        %v407 = vsub.s32 %v406, 2
        %vm408 = vcmp.gt.s32.totalorder 0, %v407
        %v409 = vsel %vm408, 0, %v407
        %v410 = vsub.s32 32, %v409
        %v411 = vshll.u32 %v402, %v409
        %v412 = vshrl.u32 %v394, %v410
        %v413 = vor.u32 %v411, %v412
        %v414 = vsub.s32 4294967266, %v409
        %v415 = vadd.s32 %v414, 127
        %v416 = vshll.u32 %v415, 23
        %v417 = vor.u32 4788187, %v416
        %v418 = vand.u32 2147483647, %v417
        %v420 = vcvt.s32.f32 %v413
        %v421 = vmul.f32 %v420, %v418
        %v422 = vxor.u32 %v421, 2147483648
        %v423 = vsel %vm340, %v422, %v421
        %v424 = vsub.s32 4, %v400
        %v425 = vsel %vm340, %v424, %v400
        %v426 = vsel %vm339, %v139, %v423
        %v427 = vsel %vm339, 0, %v425
        %v428 = vcosq.f32.pop %v426
        %v429 = vsinq.f32.pop %v426
        %vm430 = vweird.f32 %v139
        %v431 = vadd.s32 %v427, 3
        %v432 = vand.u32 %v431, 3
        %vm433 = vcmp.lt.s32.totalorder %v432, 2
        %vm434 = vcmp.eq.s32.totalorder %v432, 0
        %v435 = vxor.u32 %v429, 2147483648
        %v436 = vsel %vm434, %v428, %v435
        %vm437 = vcmp.eq.s32.totalorder %v432, 2
        %v438 = vxor.u32 %v428, 2147483648
        %v439 = vsel %vm437, %v438, %v429
        %v440 = vsel %vm433, %v436, %v439
        %v441 = vsel %vm430, nan, %v440
        %v442 = vand.u32 2147483647, %v140
        %vm443 = vcmp.le.f32.partialorder %v442, 0.7853982
        %vm444 = vcmp.lt.s32.totalorder %v140, 0
        %v445 = vand.u32 %v140, 2139095040
        %v446 = vshrl.u32 %v445, 23
        %v447 = vsub.s32 %v446, 127
        %v448 = vand.u32 2147483647, %v140
        %v449 = vand.u32 %v448, 8388607
        %v450 = vor.u32 %v449, 8388608
        %v451 = vsub.s32 0, %v450
        %v452 = vadd.s32 %v447, 1
        %vm453 = vcmp.gt.s32.totalorder %v452, 0
        %v454 = vsel %vm453, %v452, 0
        %v455 = vshrl.u32 %v454, 5
        %v456 = vand.u32 %v454, 31
        %v457 = vsub.s32 32, %v456
        %v458 = vshrl.u32 683565275, %v457
        %v459 = vshll.u32 683565275, %v456
        %v460 = vshrl.u32 2475754826, %v457
        %v461 = vor.u32 %v459, %v460
        %v462 = vshll.u32 2475754826, %v456
        %v463 = vshrl.u32 2131351028, %v457
        %v464 = vor.u32 %v462, %v463
        %v465 = vshll.u32 2131351028, %v456
        %v466 = vshrl.u32 2102212464, %v457
        %v467 = vor.u32 %v465, %v466
        %v468 = vshll.u32 2102212464, %v456
        %v469 = vshrl.u32 920167782, %v457
        %v470 = vor.u32 %v468, %v469
        %v471 = vshll.u32 920167782, %v456
        %v472 = vshrl.u32 1326507024, %v457
        %v473 = vor.u32 %v471, %v472
        %vm474 = vcmp.lt.s32.totalorder %v455, 1
        %vm475 = vcmp.lt.s32.totalorder %v455, 2
        %vm476 = vcmp.lt.s32.totalorder %v455, 3
        %vm477 = vcmp.lt.s32.totalorder %v455, 4
        %v478 = vsel %vm474, %v458, %v461
        %v479 = vsel %vm477, %v467, 2102212464
        %v480 = vsel %vm476, %v464, %v479
        %v481 = vsel %vm475, %v478, %v480
        %v482 = vsel %vm474, %v461, %v464
        %v483 = vsel %vm477, %v470, 920167782
        %v484 = vsel %vm476, %v467, %v483
        %v485 = vsel %vm475, %v482, %v484
        %v486 = vsel %vm474, %v464, %v467
        %v487 = vsel %vm477, %v473, 1326507024
        %v488 = vsel %vm476, %v470, %v487
        %v489 = vsel %vm475, %v486, %v488
        %v490 = vshll.u32 %v450, 8
        %v491 = vmul.u32.u64.compose %v490, %v489
        %v492 = vextract.low.u32 %v491
        %v493 = vextract.high.u32 %v491
        %v494 = vmul.u32.u64.compose %v490, %v485
        %v495 = vextract.low.u32 %v494
        %v496 = vextract.high.u32 %v494
        %v497 = vmul.u32 %v490, %v481
        %v498 = vadd.s32 %v493, %v495
        %vm499 = vc.u32 %v493, %v495
        %v500 = vadd.s32 %v496, 1
        %v501 = vsel %vm499, %v500, %v496
        %v502 = vadd.s32 %v497, %v501
        %v503 = vadd.s32 %v502, 536870912
        %v504 = vshrl.u32 %v503, 30
        %v505 = vshll.u32 %v504, 30
        %v506 = vsub.s32 %v502, %v505
        %vm507 = vcmp.lt.s32.totalorder %v506, 0
        %v508 = vsub.s32 0, %v506
        %v509 = vsel %vm507, %v508, %v506
        %v510 = vclz %v509
        %v511 = vsub.s32 %v510, 2
        %vm512 = vcmp.gt.s32.totalorder 0, %v511
        %v513 = vsel %vm512, 0, %v511
        %v514 = vsub.s32 32, %v513
        %v515 = vshll.u32 %v506, %v513
        %v516 = vshrl.u32 %v498, %v514
        %v517 = vor.u32 %v515, %v516
        %v518 = vsub.s32 4294967266, %v513
        %v519 = vadd.s32 %v518, 127
        %v520 = vshll.u32 %v519, 23
        %v521 = vor.u32 4788187, %v520
        %v522 = vand.u32 2147483647, %v521
        %v524 = vcvt.s32.f32 %v517
        %v525 = vmul.f32 %v524, %v522
        %v526 = vxor.u32 %v525, 2147483648
        %v527 = vsel %vm444, %v526, %v525
        %v528 = vsub.s32 4, %v504
        %v529 = vsel %vm444, %v528, %v504
        %v530 = vsel %vm443, %v140, %v527
        %v531 = vsel %vm443, 0, %v529
        %v532 = vcosq.f32.pop %v530
        %v533 = vsinq.f32.pop %v530
        %vm534 = vweird.f32 %v140
        %v535 = vadd.s32 %v531, 3
        %v536 = vand.u32 %v535, 3
        %vm537 = vcmp.lt.s32.totalorder %v536, 2
        %vm538 = vcmp.eq.s32.totalorder %v536, 0
        %v539 = vxor.u32 %v533, 2147483648
        %v540 = vsel %vm538, %v532, %v539
        %vm541 = vcmp.eq.s32.totalorder %v536, 2
        %v542 = vxor.u32 %v532, 2147483648
        %v543 = vsel %vm541, %v542, %v533
        %v544 = vsel %vm537, %v540, %v543
        %v545 = vsel %vm534, nan, %v544
        %v546 = vand.u32 2147483647, %v141
        %vm547 = vcmp.le.f32.partialorder %v546, 0.7853982
        %vm548 = vcmp.lt.s32.totalorder %v141, 0
        %v549 = vand.u32 %v141, 2139095040
        %v550 = vshrl.u32 %v549, 23
        %v551 = vsub.s32 %v550, 127
        %v552 = vand.u32 2147483647, %v141
        %v553 = vand.u32 %v552, 8388607
        %v554 = vor.u32 %v553, 8388608
        %v555 = vsub.s32 0, %v554
        %v556 = vadd.s32 %v551, 1
        %vm557 = vcmp.gt.s32.totalorder %v556, 0
        %v558 = vsel %vm557, %v556, 0
        %v559 = vshrl.u32 %v558, 5
        %v560 = vand.u32 %v558, 31
        %v561 = vsub.s32 32, %v560
        %v562 = vshrl.u32 683565275, %v561
        %v563 = vshll.u32 683565275, %v560
        %v564 = vshrl.u32 2475754826, %v561
        %v565 = vor.u32 %v563, %v564
        %v566 = vshll.u32 2475754826, %v560
        %v567 = vshrl.u32 2131351028, %v561
        %v568 = vor.u32 %v566, %v567
        %v569 = vshll.u32 2131351028, %v560
        %v570 = vshrl.u32 2102212464, %v561
        %v571 = vor.u32 %v569, %v570
        %v572 = vshll.u32 2102212464, %v560
        %v573 = vshrl.u32 920167782, %v561
        %v574 = vor.u32 %v572, %v573
        %v575 = vshll.u32 920167782, %v560
        %v576 = vshrl.u32 1326507024, %v561
        %v577 = vor.u32 %v575, %v576
        %vm578 = vcmp.lt.s32.totalorder %v559, 1
        %vm579 = vcmp.lt.s32.totalorder %v559, 2
        %vm580 = vcmp.lt.s32.totalorder %v559, 3
        %vm581 = vcmp.lt.s32.totalorder %v559, 4
        %v582 = vsel %vm578, %v562, %v565
        %v583 = vsel %vm581, %v571, 2102212464
        %v584 = vsel %vm580, %v568, %v583
        %v585 = vsel %vm579, %v582, %v584
        %v586 = vsel %vm578, %v565, %v568
        %v587 = vsel %vm581, %v574, 920167782
        %v588 = vsel %vm580, %v571, %v587
        %v589 = vsel %vm579, %v586, %v588
        %v590 = vsel %vm578, %v568, %v571
        %v591 = vsel %vm581, %v577, 1326507024
        %v592 = vsel %vm580, %v574, %v591
        %v593 = vsel %vm579, %v590, %v592
        %v594 = vshll.u32 %v554, 8
        %v595 = vmul.u32.u64.compose %v594, %v593
        %v596 = vextract.low.u32 %v595
        %v597 = vextract.high.u32 %v595
        %v598 = vmul.u32.u64.compose %v594, %v589
        %v599 = vextract.low.u32 %v598
        %v600 = vextract.high.u32 %v598
        %v601 = vmul.u32 %v594, %v585
        %v602 = vadd.s32 %v597, %v599
        %vm603 = vc.u32 %v597, %v599
        %v604 = vadd.s32 %v600, 1
        %v605 = vsel %vm603, %v604, %v600
        %v606 = vadd.s32 %v601, %v605
        %v607 = vadd.s32 %v606, 536870912
        %v608 = vshrl.u32 %v607, 30
        %v609 = vshll.u32 %v608, 30
        %v610 = vsub.s32 %v606, %v609
        %vm611 = vcmp.lt.s32.totalorder %v610, 0
        %v612 = vsub.s32 0, %v610
        %v613 = vsel %vm611, %v612, %v610
        %v614 = vclz %v613
        %v615 = vsub.s32 %v614, 2
        %vm616 = vcmp.gt.s32.totalorder 0, %v615
        %v617 = vsel %vm616, 0, %v615
        %v618 = vsub.s32 32, %v617
        %v619 = vshll.u32 %v610, %v617
        %v620 = vshrl.u32 %v602, %v618
        %v621 = vor.u32 %v619, %v620
        %v622 = vsub.s32 4294967266, %v617
        %v623 = vadd.s32 %v622, 127
        %v624 = vshll.u32 %v623, 23
        %v625 = vor.u32 4788187, %v624
        %v626 = vand.u32 2147483647, %v625
        %v628 = vcvt.s32.f32 %v621
        %v629 = vmul.f32 %v628, %v626
        %v630 = vxor.u32 %v629, 2147483648
        %v631 = vsel %vm548, %v630, %v629
        %v632 = vsub.s32 4, %v608
        %v633 = vsel %vm548, %v632, %v608
        %v634 = vsel %vm547, %v141, %v631
        %v635 = vsel %vm547, 0, %v633
        %v636 = vcosq.f32.pop %v634
        %v637 = vsinq.f32.pop %v634
        %vm638 = vweird.f32 %v141
        %v639 = vadd.s32 %v635, 3
        %v640 = vand.u32 %v639, 3
        %vm641 = vcmp.lt.s32.totalorder %v640, 2
        %vm642 = vcmp.eq.s32.totalorder %v640, 0
        %v643 = vxor.u32 %v637, 2147483648
        %v644 = vsel %vm642, %v636, %v643
        %vm645 = vcmp.eq.s32.totalorder %v640, 2
        %v646 = vxor.u32 %v636, 2147483648
        %v647 = vsel %vm645, %v646, %v637
        %v648 = vsel %vm641, %v644, %v647
        %v649 = vsel %vm638, nan, %v648
        %v650 = vand.u32 2147483647, %v142
        %vm651 = vcmp.le.f32.partialorder %v650, 0.7853982
        %vm652 = vcmp.lt.s32.totalorder %v142, 0
        %v653 = vand.u32 %v142, 2139095040
        %v654 = vshrl.u32 %v653, 23
        %v655 = vsub.s32 %v654, 127
        %v656 = vand.u32 2147483647, %v142
        %v657 = vand.u32 %v656, 8388607
        %v658 = vor.u32 %v657, 8388608
        %v659 = vsub.s32 0, %v658
        %v660 = vadd.s32 %v655, 1
        %vm661 = vcmp.gt.s32.totalorder %v660, 0
        %v662 = vsel %vm661, %v660, 0
        %v663 = vshrl.u32 %v662, 5
        %v664 = vand.u32 %v662, 31
        %v665 = vsub.s32 32, %v664
        %v666 = vshrl.u32 683565275, %v665
        %v667 = vshll.u32 683565275, %v664
        %v668 = vshrl.u32 2475754826, %v665
        %v669 = vor.u32 %v667, %v668
        %v670 = vshll.u32 2475754826, %v664
        %v671 = vshrl.u32 2131351028, %v665
        %v672 = vor.u32 %v670, %v671
        %v673 = vshll.u32 2131351028, %v664
        %v674 = vshrl.u32 2102212464, %v665
        %v675 = vor.u32 %v673, %v674
        %v676 = vshll.u32 2102212464, %v664
        %v677 = vshrl.u32 920167782, %v665
        %v678 = vor.u32 %v676, %v677
        %v679 = vshll.u32 920167782, %v664
        %v680 = vshrl.u32 1326507024, %v665
        %v681 = vor.u32 %v679, %v680
        %vm682 = vcmp.lt.s32.totalorder %v663, 1
        %vm683 = vcmp.lt.s32.totalorder %v663, 2
        %vm684 = vcmp.lt.s32.totalorder %v663, 3
        %vm685 = vcmp.lt.s32.totalorder %v663, 4
        %v686 = vsel %vm682, %v666, %v669
        %v687 = vsel %vm685, %v675, 2102212464
        %v688 = vsel %vm684, %v672, %v687
        %v689 = vsel %vm683, %v686, %v688
        %v690 = vsel %vm682, %v669, %v672
        %v691 = vsel %vm685, %v678, 920167782
        %v692 = vsel %vm684, %v675, %v691
        %v693 = vsel %vm683, %v690, %v692
        %v694 = vsel %vm682, %v672, %v675
        %v695 = vsel %vm685, %v681, 1326507024
        %v696 = vsel %vm684, %v678, %v695
        %v697 = vsel %vm683, %v694, %v696
        %v698 = vshll.u32 %v658, 8
        %v699 = vmul.u32.u64.compose %v698, %v697
        %v700 = vextract.low.u32 %v699
        %v701 = vextract.high.u32 %v699
        %v702 = vmul.u32.u64.compose %v698, %v693
        %v703 = vextract.low.u32 %v702
        %v704 = vextract.high.u32 %v702
        %v705 = vmul.u32 %v698, %v689
        %v706 = vadd.s32 %v701, %v703
        %vm707 = vc.u32 %v701, %v703
        %v708 = vadd.s32 %v704, 1
        %v709 = vsel %vm707, %v708, %v704
        %v710 = vadd.s32 %v705, %v709
        %v711 = vadd.s32 %v710, 536870912
        %v712 = vshrl.u32 %v711, 30
        %v713 = vshll.u32 %v712, 30
        %v714 = vsub.s32 %v710, %v713
        %vm715 = vcmp.lt.s32.totalorder %v714, 0
        %v716 = vsub.s32 0, %v714
        %v717 = vsel %vm715, %v716, %v714
        %v718 = vclz %v717
        %v719 = vsub.s32 %v718, 2
        %vm720 = vcmp.gt.s32.totalorder 0, %v719
        %v721 = vsel %vm720, 0, %v719
        %v722 = vsub.s32 32, %v721
        %v723 = vshll.u32 %v714, %v721
        %v724 = vshrl.u32 %v706, %v722
        %v725 = vor.u32 %v723, %v724
        %v726 = vsub.s32 4294967266, %v721
        %v727 = vadd.s32 %v726, 127
        %v728 = vshll.u32 %v727, 23
        %v729 = vor.u32 4788187, %v728
        %v730 = vand.u32 2147483647, %v729
        %v732 = vcvt.s32.f32 %v725
        %v733 = vmul.f32 %v732, %v730
        %v734 = vxor.u32 %v733, 2147483648
        %v735 = vsel %vm652, %v734, %v733
        %v736 = vsub.s32 4, %v712
        %v737 = vsel %vm652, %v736, %v712
        %v738 = vsel %vm651, %v142, %v735
        %v739 = vsel %vm651, 0, %v737
        %v740 = vcosq.f32.pop %v738
        %v741 = vsinq.f32.pop %v738
        %vm742 = vweird.f32 %v142
        %v743 = vadd.s32 %v739, 3
        %v744 = vand.u32 %v743, 3
        %vm745 = vcmp.lt.s32.totalorder %v744, 2
        %vm746 = vcmp.eq.s32.totalorder %v744, 0
        %v747 = vxor.u32 %v741, 2147483648
        %v748 = vsel %vm746, %v740, %v747
        %vm749 = vcmp.eq.s32.totalorder %v744, 2
        %v750 = vxor.u32 %v740, 2147483648
        %v751 = vsel %vm749, %v750, %v741
        %v752 = vsel %vm745, %v748, %v751
        %v753 = vsel %vm742, nan, %v752
        %v754 = vand.u32 2147483647, %v143
        %vm755 = vcmp.le.f32.partialorder %v754, 0.7853982
        %vm756 = vcmp.lt.s32.totalorder %v143, 0
        %v757 = vand.u32 %v143, 2139095040
        %v758 = vshrl.u32 %v757, 23
        %v759 = vsub.s32 %v758, 127
        %v760 = vand.u32 2147483647, %v143
        %v761 = vand.u32 %v760, 8388607
        %v762 = vor.u32 %v761, 8388608
        %v763 = vsub.s32 0, %v762
        %v764 = vadd.s32 %v759, 1
        %vm765 = vcmp.gt.s32.totalorder %v764, 0
        %v766 = vsel %vm765, %v764, 0
        %v767 = vshrl.u32 %v766, 5
        %v768 = vand.u32 %v766, 31
        %v769 = vsub.s32 32, %v768
        %v770 = vshrl.u32 683565275, %v769
        %v771 = vshll.u32 683565275, %v768
        %v772 = vshrl.u32 2475754826, %v769
        %v773 = vor.u32 %v771, %v772
        %v774 = vshll.u32 2475754826, %v768
        %v775 = vshrl.u32 2131351028, %v769
        %v776 = vor.u32 %v774, %v775
        %v777 = vshll.u32 2131351028, %v768
        %v778 = vshrl.u32 2102212464, %v769
        %v779 = vor.u32 %v777, %v778
        %v780 = vshll.u32 2102212464, %v768
        %v781 = vshrl.u32 920167782, %v769
        %v782 = vor.u32 %v780, %v781
        %v783 = vshll.u32 920167782, %v768
        %v784 = vshrl.u32 1326507024, %v769
        %v785 = vor.u32 %v783, %v784
        %vm786 = vcmp.lt.s32.totalorder %v767, 1
        %vm787 = vcmp.lt.s32.totalorder %v767, 2
        %vm788 = vcmp.lt.s32.totalorder %v767, 3
        %vm789 = vcmp.lt.s32.totalorder %v767, 4
        %v790 = vsel %vm786, %v770, %v773
        %v791 = vsel %vm789, %v779, 2102212464
        %v792 = vsel %vm788, %v776, %v791
        %v793 = vsel %vm787, %v790, %v792
        %v794 = vsel %vm786, %v773, %v776
        %v795 = vsel %vm789, %v782, 920167782
        %v796 = vsel %vm788, %v779, %v795
        %v797 = vsel %vm787, %v794, %v796
        %v798 = vsel %vm786, %v776, %v779
        %v799 = vsel %vm789, %v785, 1326507024
        %v800 = vsel %vm788, %v782, %v799
        %v801 = vsel %vm787, %v798, %v800
        %v802 = vshll.u32 %v762, 8
        %v803 = vmul.u32.u64.compose %v802, %v801
        %v804 = vextract.low.u32 %v803
        %v805 = vextract.high.u32 %v803
        %v806 = vmul.u32.u64.compose %v802, %v797
        %v807 = vextract.low.u32 %v806
        %v808 = vextract.high.u32 %v806
        %v809 = vmul.u32 %v802, %v793
        %v810 = vadd.s32 %v805, %v807
        %vm811 = vc.u32 %v805, %v807
        %v812 = vadd.s32 %v808, 1
        %v813 = vsel %vm811, %v812, %v808
        %v814 = vadd.s32 %v809, %v813
        %v815 = vadd.s32 %v814, 536870912
        %v816 = vshrl.u32 %v815, 30
        %v817 = vshll.u32 %v816, 30
        %v818 = vsub.s32 %v814, %v817
        %vm819 = vcmp.lt.s32.totalorder %v818, 0
        %v820 = vsub.s32 0, %v818
        %v821 = vsel %vm819, %v820, %v818
        %v822 = vclz %v821
        %v823 = vsub.s32 %v822, 2
        %vm824 = vcmp.gt.s32.totalorder 0, %v823
        %v825 = vsel %vm824, 0, %v823
        %v826 = vsub.s32 32, %v825
        %v827 = vshll.u32 %v818, %v825
        %v828 = vshrl.u32 %v810, %v826
        %v829 = vor.u32 %v827, %v828
        %v830 = vsub.s32 4294967266, %v825
        %v831 = vadd.s32 %v830, 127
        %v832 = vshll.u32 %v831, 23
        %v833 = vor.u32 4788187, %v832
        %v834 = vand.u32 2147483647, %v833
        %v836 = vcvt.s32.f32 %v829
        %v837 = vmul.f32 %v836, %v834
        %v838 = vxor.u32 %v837, 2147483648
        %v839 = vsel %vm756, %v838, %v837
        %v840 = vsub.s32 4, %v816
        %v841 = vsel %vm756, %v840, %v816
        %v842 = vsel %vm755, %v143, %v839
        %v843 = vsel %vm755, 0, %v841
        %v844 = vcosq.f32.pop %v842
        %v845 = vsinq.f32.pop %v842
        %vm846 = vweird.f32 %v143
        %v847 = vadd.s32 %v843, 3
        %v848 = vand.u32 %v847, 3
        %vm849 = vcmp.lt.s32.totalorder %v848, 2
        %vm850 = vcmp.eq.s32.totalorder %v848, 0
        %v851 = vxor.u32 %v845, 2147483648
        %v852 = vsel %vm850, %v844, %v851
        %vm853 = vcmp.eq.s32.totalorder %v848, 2
        %v854 = vxor.u32 %v844, 2147483648
        %v855 = vsel %vm853, %v854, %v845
        %v856 = vsel %vm849, %v852, %v855
        %v857 = vsel %vm846, nan, %v856
        %v858 = vand.u32 2147483647, %v144
        %vm859 = vcmp.le.f32.partialorder %v858, 0.7853982
        %vm860 = vcmp.lt.s32.totalorder %v144, 0
        %v861 = vand.u32 %v144, 2139095040
        %v862 = vshrl.u32 %v861, 23
        %v863 = vsub.s32 %v862, 127
        %v864 = vand.u32 2147483647, %v144
        %v865 = vand.u32 %v864, 8388607
        %v866 = vor.u32 %v865, 8388608
        %v867 = vsub.s32 0, %v866
        %v868 = vadd.s32 %v863, 1
        %vm869 = vcmp.gt.s32.totalorder %v868, 0
        %v870 = vsel %vm869, %v868, 0
        %v871 = vshrl.u32 %v870, 5
        %v872 = vand.u32 %v870, 31
        %v873 = vsub.s32 32, %v872
        %v874 = vshrl.u32 683565275, %v873
        %v875 = vshll.u32 683565275, %v872
        %v876 = vshrl.u32 2475754826, %v873
        %v877 = vor.u32 %v875, %v876
        %v878 = vshll.u32 2475754826, %v872
        %v879 = vshrl.u32 2131351028, %v873
        %v880 = vor.u32 %v878, %v879
        %v881 = vshll.u32 2131351028, %v872
        %v882 = vshrl.u32 2102212464, %v873
        %v883 = vor.u32 %v881, %v882
        %v884 = vshll.u32 2102212464, %v872
        %v885 = vshrl.u32 920167782, %v873
        %v886 = vor.u32 %v884, %v885
        %v887 = vshll.u32 920167782, %v872
        %v888 = vshrl.u32 1326507024, %v873
        %v889 = vor.u32 %v887, %v888
        %vm890 = vcmp.lt.s32.totalorder %v871, 1
        %vm891 = vcmp.lt.s32.totalorder %v871, 2
        %vm892 = vcmp.lt.s32.totalorder %v871, 3
        %vm893 = vcmp.lt.s32.totalorder %v871, 4
        %v894 = vsel %vm890, %v874, %v877
        %v895 = vsel %vm893, %v883, 2102212464
        %v896 = vsel %vm892, %v880, %v895
        %v897 = vsel %vm891, %v894, %v896
        %v898 = vsel %vm890, %v877, %v880
        %v899 = vsel %vm893, %v886, 920167782
        %v900 = vsel %vm892, %v883, %v899
        %v901 = vsel %vm891, %v898, %v900
        %v902 = vsel %vm890, %v880, %v883
        %v903 = vsel %vm893, %v889, 1326507024
        %v904 = vsel %vm892, %v886, %v903
        %v905 = vsel %vm891, %v902, %v904
        %v906 = vshll.u32 %v866, 8
        %v907 = vmul.u32.u64.compose %v906, %v905
        %v908 = vextract.low.u32 %v907
        %v909 = vextract.high.u32 %v907
        %v910 = vmul.u32.u64.compose %v906, %v901
        %v911 = vextract.low.u32 %v910
        %v912 = vextract.high.u32 %v910
        %v913 = vmul.u32 %v906, %v897
        %v914 = vadd.s32 %v909, %v911
        %vm915 = vc.u32 %v909, %v911
        %v916 = vadd.s32 %v912, 1
        %v917 = vsel %vm915, %v916, %v912
        %v918 = vadd.s32 %v913, %v917
        %v919 = vadd.s32 %v918, 536870912
        %v920 = vshrl.u32 %v919, 30
        %v921 = vshll.u32 %v920, 30
        %v922 = vsub.s32 %v918, %v921
        %vm923 = vcmp.lt.s32.totalorder %v922, 0
        %v924 = vsub.s32 0, %v922
        %v925 = vsel %vm923, %v924, %v922
        %v926 = vclz %v925
        %v927 = vsub.s32 %v926, 2
        %vm928 = vcmp.gt.s32.totalorder 0, %v927
        %v929 = vsel %vm928, 0, %v927
        %v930 = vsub.s32 32, %v929
        %v931 = vshll.u32 %v922, %v929
        %v932 = vshrl.u32 %v914, %v930
        %v933 = vor.u32 %v931, %v932
        %v934 = vsub.s32 4294967266, %v929
        %v935 = vadd.s32 %v934, 127
        %v936 = vshll.u32 %v935, 23
        %v937 = vor.u32 4788187, %v936
        %v938 = vand.u32 2147483647, %v937
        %v940 = vcvt.s32.f32 %v933
        %v941 = vmul.f32 %v940, %v938
        %v942 = vxor.u32 %v941, 2147483648
        %v943 = vsel %vm860, %v942, %v941
        %v944 = vsub.s32 4, %v920
        %v945 = vsel %vm860, %v944, %v920
        %v946 = vsel %vm859, %v144, %v943
        %v947 = vsel %vm859, 0, %v945
        %v948 = vcosq.f32.pop %v946
        %v949 = vsinq.f32.pop %v946
        %vm950 = vweird.f32 %v144
        %v951 = vadd.s32 %v947, 3
        %v952 = vand.u32 %v951, 3
        %vm953 = vcmp.lt.s32.totalorder %v952, 2
        %vm954 = vcmp.eq.s32.totalorder %v952, 0
        %v955 = vxor.u32 %v949, 2147483648
        %v956 = vsel %vm954, %v948, %v955
        %vm957 = vcmp.eq.s32.totalorder %v952, 2
        %v958 = vxor.u32 %v948, 2147483648
        %v959 = vsel %vm957, %v958, %v949
        %v960 = vsel %vm953, %v956, %v959
        %v961 = vsel %vm950, nan, %v960
        %v962 = vand.u32 2147483647, %v145
        %vm963 = vcmp.le.f32.partialorder %v962, 0.7853982
        %vm964 = vcmp.lt.s32.totalorder %v145, 0
        %v965 = vand.u32 %v145, 2139095040
        %v966 = vshrl.u32 %v965, 23
        %v967 = vsub.s32 %v966, 127
        %v968 = vand.u32 2147483647, %v145
        %v969 = vand.u32 %v968, 8388607
        %v970 = vor.u32 %v969, 8388608
        %v971 = vsub.s32 0, %v970
        %v972 = vadd.s32 %v967, 1
        %vm973 = vcmp.gt.s32.totalorder %v972, 0
        %v974 = vsel %vm973, %v972, 0
        %v975 = vshrl.u32 %v974, 5
        %v976 = vand.u32 %v974, 31
        %v977 = vsub.s32 32, %v976
        %v978 = vshrl.u32 683565275, %v977
        %v979 = vshll.u32 683565275, %v976
        %v980 = vshrl.u32 2475754826, %v977
        %v981 = vor.u32 %v979, %v980
        %v982 = vshll.u32 2475754826, %v976
        %v983 = vshrl.u32 2131351028, %v977
        %v984 = vor.u32 %v982, %v983
        %v985 = vshll.u32 2131351028, %v976
        %v986 = vshrl.u32 2102212464, %v977
        %v987 = vor.u32 %v985, %v986
        %v988 = vshll.u32 2102212464, %v976
        %v989 = vshrl.u32 920167782, %v977
        %v990 = vor.u32 %v988, %v989
        %v991 = vshll.u32 920167782, %v976
        %v992 = vshrl.u32 1326507024, %v977
        %v993 = vor.u32 %v991, %v992
        %vm994 = vcmp.lt.s32.totalorder %v975, 1
        %vm995 = vcmp.lt.s32.totalorder %v975, 2
        %vm996 = vcmp.lt.s32.totalorder %v975, 3
        %vm997 = vcmp.lt.s32.totalorder %v975, 4
        %v998 = vsel %vm994, %v978, %v981
        %v999 = vsel %vm997, %v987, 2102212464
        %v1000 = vsel %vm996, %v984, %v999
        %v1001 = vsel %vm995, %v998, %v1000
        %v1002 = vsel %vm994, %v981, %v984
        %v1003 = vsel %vm997, %v990, 920167782
        %v1004 = vsel %vm996, %v987, %v1003
        %v1005 = vsel %vm995, %v1002, %v1004
        %v1006 = vsel %vm994, %v984, %v987
        %v1007 = vsel %vm997, %v993, 1326507024
        %v1008 = vsel %vm996, %v990, %v1007
        %v1009 = vsel %vm995, %v1006, %v1008
        %v1010 = vshll.u32 %v970, 8
        %v1011 = vmul.u32.u64.compose %v1010, %v1009
        %v1012 = vextract.low.u32 %v1011
        %v1013 = vextract.high.u32 %v1011
        %v1014 = vmul.u32.u64.compose %v1010, %v1005
        %v1015 = vextract.low.u32 %v1014
        %v1016 = vextract.high.u32 %v1014
        %v1017 = vmul.u32 %v1010, %v1001
        %v1018 = vadd.s32 %v1013, %v1015
        %vm1019 = vc.u32 %v1013, %v1015
        %v1020 = vadd.s32 %v1016, 1
        %v1021 = vsel %vm1019, %v1020, %v1016
        %v1022 = vadd.s32 %v1017, %v1021
        %v1023 = vadd.s32 %v1022, 536870912
        %v1024 = vshrl.u32 %v1023, 30
        %v1025 = vshll.u32 %v1024, 30
        %v1026 = vsub.s32 %v1022, %v1025
        %vm1027 = vcmp.lt.s32.totalorder %v1026, 0
        %v1028 = vsub.s32 0, %v1026
        %v1029 = vsel %vm1027, %v1028, %v1026
        %v1030 = vclz %v1029
        %v1031 = vsub.s32 %v1030, 2
        %vm1032 = vcmp.gt.s32.totalorder 0, %v1031
        %v1033 = vsel %vm1032, 0, %v1031
        %v1034 = vsub.s32 32, %v1033
        %v1035 = vshll.u32 %v1026, %v1033
        %v1036 = vshrl.u32 %v1018, %v1034
        %v1037 = vor.u32 %v1035, %v1036
        %v1038 = vsub.s32 4294967266, %v1033
        %v1039 = vadd.s32 %v1038, 127
        %v1040 = vshll.u32 %v1039, 23
        %v1041 = vor.u32 4788187, %v1040
        %v1042 = vand.u32 2147483647, %v1041
        %v1044 = vcvt.s32.f32 %v1037
        %v1045 = vmul.f32 %v1044, %v1042
        %v1046 = vxor.u32 %v1045, 2147483648
        %v1047 = vsel %vm964, %v1046, %v1045
        %v1048 = vsub.s32 4, %v1024
        %v1049 = vsel %vm964, %v1048, %v1024
        %v1050 = vsel %vm963, %v145, %v1047
        %v1051 = vsel %vm963, 0, %v1049
        %v1052 = vcosq.f32.pop %v1050
        %v1053 = vsinq.f32.pop %v1050
        %vm1054 = vweird.f32 %v145
        %v1055 = vadd.s32 %v1051, 3
        %v1056 = vand.u32 %v1055, 3
        %vm1057 = vcmp.lt.s32.totalorder %v1056, 2
        %vm1058 = vcmp.eq.s32.totalorder %v1056, 0
        %v1059 = vxor.u32 %v1053, 2147483648
        %v1060 = vsel %vm1058, %v1052, %v1059
        %vm1061 = vcmp.eq.s32.totalorder %v1056, 2
        %v1062 = vxor.u32 %v1052, 2147483648
        %v1063 = vsel %vm1061, %v1062, %v1053
        %v1064 = vsel %vm1057, %v1060, %v1063
        %v1065 = vsel %vm1054, nan, %v1064
        %v1066 = vand.u32 2147483647, %v146
        %vm1067 = vcmp.le.f32.partialorder %v1066, 0.7853982
        %vm1068 = vcmp.lt.s32.totalorder %v146, 0
        %v1069 = vand.u32 %v146, 2139095040
        %v1070 = vshrl.u32 %v1069, 23
        %v1071 = vsub.s32 %v1070, 127
        %v1072 = vand.u32 2147483647, %v146
        %v1073 = vand.u32 %v1072, 8388607
        %v1074 = vor.u32 %v1073, 8388608
        %v1075 = vsub.s32 0, %v1074
        %v1076 = vadd.s32 %v1071, 1
        %vm1077 = vcmp.gt.s32.totalorder %v1076, 0
        %v1078 = vsel %vm1077, %v1076, 0
        %v1079 = vshrl.u32 %v1078, 5
        %v1080 = vand.u32 %v1078, 31
        %v1081 = vsub.s32 32, %v1080
        %v1082 = vshrl.u32 683565275, %v1081
        %v1083 = vshll.u32 683565275, %v1080
        %v1084 = vshrl.u32 2475754826, %v1081
        %v1085 = vor.u32 %v1083, %v1084
        %v1086 = vshll.u32 2475754826, %v1080
        %v1087 = vshrl.u32 2131351028, %v1081
        %v1088 = vor.u32 %v1086, %v1087
        %v1089 = vshll.u32 2131351028, %v1080
        %v1090 = vshrl.u32 2102212464, %v1081
        %v1091 = vor.u32 %v1089, %v1090
        %v1092 = vshll.u32 2102212464, %v1080
        %v1093 = vshrl.u32 920167782, %v1081
        %v1094 = vor.u32 %v1092, %v1093
        %v1095 = vshll.u32 920167782, %v1080
        %v1096 = vshrl.u32 1326507024, %v1081
        %v1097 = vor.u32 %v1095, %v1096
        %vm1098 = vcmp.lt.s32.totalorder %v1079, 1
        %vm1099 = vcmp.lt.s32.totalorder %v1079, 2
        %vm1100 = vcmp.lt.s32.totalorder %v1079, 3
        %vm1101 = vcmp.lt.s32.totalorder %v1079, 4
        %v1102 = vsel %vm1098, %v1082, %v1085
        %v1103 = vsel %vm1101, %v1091, 2102212464
        %v1104 = vsel %vm1100, %v1088, %v1103
        %v1105 = vsel %vm1099, %v1102, %v1104
        %v1106 = vsel %vm1098, %v1085, %v1088
        %v1107 = vsel %vm1101, %v1094, 920167782
        %v1108 = vsel %vm1100, %v1091, %v1107
        %v1109 = vsel %vm1099, %v1106, %v1108
        %v1110 = vsel %vm1098, %v1088, %v1091
        %v1111 = vsel %vm1101, %v1097, 1326507024
        %v1112 = vsel %vm1100, %v1094, %v1111
        %v1113 = vsel %vm1099, %v1110, %v1112
        %v1114 = vshll.u32 %v1074, 8
        %v1115 = vmul.u32.u64.compose %v1114, %v1113
        %v1116 = vextract.low.u32 %v1115
        %v1117 = vextract.high.u32 %v1115
        %v1118 = vmul.u32.u64.compose %v1114, %v1109
        %v1119 = vextract.low.u32 %v1118
        %v1120 = vextract.high.u32 %v1118
        %v1121 = vmul.u32 %v1114, %v1105
        %v1122 = vadd.s32 %v1117, %v1119
        %vm1123 = vc.u32 %v1117, %v1119
        %v1124 = vadd.s32 %v1120, 1
        %v1125 = vsel %vm1123, %v1124, %v1120
        %v1126 = vadd.s32 %v1121, %v1125
        %v1127 = vadd.s32 %v1126, 536870912
        %v1128 = vshrl.u32 %v1127, 30
        %v1129 = vshll.u32 %v1128, 30
        %v1130 = vsub.s32 %v1126, %v1129
        %vm1131 = vcmp.lt.s32.totalorder %v1130, 0
        %v1132 = vsub.s32 0, %v1130
        %v1133 = vsel %vm1131, %v1132, %v1130
        %v1134 = vclz %v1133
        %v1135 = vsub.s32 %v1134, 2
        %vm1136 = vcmp.gt.s32.totalorder 0, %v1135
        %v1137 = vsel %vm1136, 0, %v1135
        %v1138 = vsub.s32 32, %v1137
        %v1139 = vshll.u32 %v1130, %v1137
        %v1140 = vshrl.u32 %v1122, %v1138
        %v1141 = vor.u32 %v1139, %v1140
        %v1142 = vsub.s32 4294967266, %v1137
        %v1143 = vadd.s32 %v1142, 127
        %v1144 = vshll.u32 %v1143, 23
        %v1145 = vor.u32 4788187, %v1144
        %v1146 = vand.u32 2147483647, %v1145
        %v1148 = vcvt.s32.f32 %v1141
        %v1149 = vmul.f32 %v1148, %v1146
        %v1150 = vxor.u32 %v1149, 2147483648
        %v1151 = vsel %vm1068, %v1150, %v1149
        %v1152 = vsub.s32 4, %v1128
        %v1153 = vsel %vm1068, %v1152, %v1128
        %v1154 = vsel %vm1067, %v146, %v1151
        %v1155 = vsel %vm1067, 0, %v1153
        %v1156 = vcosq.f32.pop %v1154
        %v1157 = vsinq.f32.pop %v1154
        %vm1158 = vweird.f32 %v146
        %v1159 = vadd.s32 %v1155, 3
        %v1160 = vand.u32 %v1159, 3
        %vm1161 = vcmp.lt.s32.totalorder %v1160, 2
        %vm1162 = vcmp.eq.s32.totalorder %v1160, 0
        %v1163 = vxor.u32 %v1157, 2147483648
        %v1164 = vsel %vm1162, %v1156, %v1163
        %vm1165 = vcmp.eq.s32.totalorder %v1160, 2
        %v1166 = vxor.u32 %v1156, 2147483648
        %v1167 = vsel %vm1165, %v1166, %v1157
        %v1168 = vsel %vm1161, %v1164, %v1167
        %v1169 = vsel %vm1158, nan, %v1168
        %v1170 = vand.u32 2147483647, %v147
        %vm1171 = vcmp.le.f32.partialorder %v1170, 0.7853982
        %vm1172 = vcmp.lt.s32.totalorder %v147, 0
        %v1173 = vand.u32 %v147, 2139095040
        %v1174 = vshrl.u32 %v1173, 23
        %v1175 = vsub.s32 %v1174, 127
        %v1176 = vand.u32 2147483647, %v147
        %v1177 = vand.u32 %v1176, 8388607
        %v1178 = vor.u32 %v1177, 8388608
        %v1179 = vsub.s32 0, %v1178
        %v1180 = vadd.s32 %v1175, 1
        %vm1181 = vcmp.gt.s32.totalorder %v1180, 0
        %v1182 = vsel %vm1181, %v1180, 0
        %v1183 = vshrl.u32 %v1182, 5
        %v1184 = vand.u32 %v1182, 31
        %v1185 = vsub.s32 32, %v1184
        %v1186 = vshrl.u32 683565275, %v1185
        %v1187 = vshll.u32 683565275, %v1184
        %v1188 = vshrl.u32 2475754826, %v1185
        %v1189 = vor.u32 %v1187, %v1188
        %v1190 = vshll.u32 2475754826, %v1184
        %v1191 = vshrl.u32 2131351028, %v1185
        %v1192 = vor.u32 %v1190, %v1191
        %v1193 = vshll.u32 2131351028, %v1184
        %v1194 = vshrl.u32 2102212464, %v1185
        %v1195 = vor.u32 %v1193, %v1194
        %v1196 = vshll.u32 2102212464, %v1184
        %v1197 = vshrl.u32 920167782, %v1185
        %v1198 = vor.u32 %v1196, %v1197
        %v1199 = vshll.u32 920167782, %v1184
        %v1200 = vshrl.u32 1326507024, %v1185
        %v1201 = vor.u32 %v1199, %v1200
        %vm1202 = vcmp.lt.s32.totalorder %v1183, 1
        %vm1203 = vcmp.lt.s32.totalorder %v1183, 2
        %vm1204 = vcmp.lt.s32.totalorder %v1183, 3
        %vm1205 = vcmp.lt.s32.totalorder %v1183, 4
        %v1206 = vsel %vm1202, %v1186, %v1189
        %v1207 = vsel %vm1205, %v1195, 2102212464
        %v1208 = vsel %vm1204, %v1192, %v1207
        %v1209 = vsel %vm1203, %v1206, %v1208
        %v1210 = vsel %vm1202, %v1189, %v1192
        %v1211 = vsel %vm1205, %v1198, 920167782
        %v1212 = vsel %vm1204, %v1195, %v1211
        %v1213 = vsel %vm1203, %v1210, %v1212
        %v1214 = vsel %vm1202, %v1192, %v1195
        %v1215 = vsel %vm1205, %v1201, 1326507024
        %v1216 = vsel %vm1204, %v1198, %v1215
        %v1217 = vsel %vm1203, %v1214, %v1216
        %v1218 = vshll.u32 %v1178, 8
        %v1219 = vmul.u32.u64.compose %v1218, %v1217
        %v1220 = vextract.low.u32 %v1219
        %v1221 = vextract.high.u32 %v1219
        %v1222 = vmul.u32.u64.compose %v1218, %v1213
        %v1223 = vextract.low.u32 %v1222
        %v1224 = vextract.high.u32 %v1222
        %v1225 = vmul.u32 %v1218, %v1209
        %v1226 = vadd.s32 %v1221, %v1223
        %vm1227 = vc.u32 %v1221, %v1223
        %v1228 = vadd.s32 %v1224, 1
        %v1229 = vsel %vm1227, %v1228, %v1224
        %v1230 = vadd.s32 %v1225, %v1229
        %v1231 = vadd.s32 %v1230, 536870912
        %v1232 = vshrl.u32 %v1231, 30
        %v1233 = vshll.u32 %v1232, 30
        %v1234 = vsub.s32 %v1230, %v1233
        %vm1235 = vcmp.lt.s32.totalorder %v1234, 0
        %v1236 = vsub.s32 0, %v1234
        %v1237 = vsel %vm1235, %v1236, %v1234
        %v1238 = vclz %v1237
        %v1239 = vsub.s32 %v1238, 2
        %vm1240 = vcmp.gt.s32.totalorder 0, %v1239
        %v1241 = vsel %vm1240, 0, %v1239
        %v1242 = vsub.s32 32, %v1241
        %v1243 = vshll.u32 %v1234, %v1241
        %v1244 = vshrl.u32 %v1226, %v1242
        %v1245 = vor.u32 %v1243, %v1244
        %v1246 = vsub.s32 4294967266, %v1241
        %v1247 = vadd.s32 %v1246, 127
        %v1248 = vshll.u32 %v1247, 23
        %v1249 = vor.u32 4788187, %v1248
        %v1250 = vand.u32 2147483647, %v1249
        %v1252 = vcvt.s32.f32 %v1245
        %v1253 = vmul.f32 %v1252, %v1250
        %v1254 = vxor.u32 %v1253, 2147483648
        %v1255 = vsel %vm1172, %v1254, %v1253
        %v1256 = vsub.s32 4, %v1232
        %v1257 = vsel %vm1172, %v1256, %v1232
        %v1258 = vsel %vm1171, %v147, %v1255
        %v1259 = vsel %vm1171, 0, %v1257
        %v1260 = vcosq.f32.pop %v1258
        %v1261 = vsinq.f32.pop %v1258
        %vm1262 = vweird.f32 %v147
        %v1263 = vadd.s32 %v1259, 3
        %v1264 = vand.u32 %v1263, 3
        %vm1265 = vcmp.lt.s32.totalorder %v1264, 2
        %vm1266 = vcmp.eq.s32.totalorder %v1264, 0
        %v1267 = vxor.u32 %v1261, 2147483648
        %v1268 = vsel %vm1266, %v1260, %v1267
        %vm1269 = vcmp.eq.s32.totalorder %v1264, 2
        %v1270 = vxor.u32 %v1260, 2147483648
        %v1271 = vsel %vm1269, %v1270, %v1261
        %v1272 = vsel %vm1265, %v1268, %v1271
        %v1273 = vsel %vm1262, nan, %v1272
        %v1274 = vand.u32 2147483647, %v148
        %vm1275 = vcmp.le.f32.partialorder %v1274, 0.7853982
        %vm1276 = vcmp.lt.s32.totalorder %v148, 0
        %v1277 = vand.u32 %v148, 2139095040
        %v1278 = vshrl.u32 %v1277, 23
        %v1279 = vsub.s32 %v1278, 127
        %v1280 = vand.u32 2147483647, %v148
        %v1281 = vand.u32 %v1280, 8388607
        %v1282 = vor.u32 %v1281, 8388608
        %v1283 = vsub.s32 0, %v1282
        %v1284 = vadd.s32 %v1279, 1
        %vm1285 = vcmp.gt.s32.totalorder %v1284, 0
        %v1286 = vsel %vm1285, %v1284, 0
        %v1287 = vshrl.u32 %v1286, 5
        %v1288 = vand.u32 %v1286, 31
        %v1289 = vsub.s32 32, %v1288
        %v1290 = vshrl.u32 683565275, %v1289
        %v1291 = vshll.u32 683565275, %v1288
        %v1292 = vshrl.u32 2475754826, %v1289
        %v1293 = vor.u32 %v1291, %v1292
        %v1294 = vshll.u32 2475754826, %v1288
        %v1295 = vshrl.u32 2131351028, %v1289
        %v1296 = vor.u32 %v1294, %v1295
        %v1297 = vshll.u32 2131351028, %v1288
        %v1298 = vshrl.u32 2102212464, %v1289
        %v1299 = vor.u32 %v1297, %v1298
        %v1300 = vshll.u32 2102212464, %v1288
        %v1301 = vshrl.u32 920167782, %v1289
        %v1302 = vor.u32 %v1300, %v1301
        %v1303 = vshll.u32 920167782, %v1288
        %v1304 = vshrl.u32 1326507024, %v1289
        %v1305 = vor.u32 %v1303, %v1304
        %vm1306 = vcmp.lt.s32.totalorder %v1287, 1
        %vm1307 = vcmp.lt.s32.totalorder %v1287, 2
        %vm1308 = vcmp.lt.s32.totalorder %v1287, 3
        %vm1309 = vcmp.lt.s32.totalorder %v1287, 4
        %v1310 = vsel %vm1306, %v1290, %v1293
        %v1311 = vsel %vm1309, %v1299, 2102212464
        %v1312 = vsel %vm1308, %v1296, %v1311
        %v1313 = vsel %vm1307, %v1310, %v1312
        %v1314 = vsel %vm1306, %v1293, %v1296
        %v1315 = vsel %vm1309, %v1302, 920167782
        %v1316 = vsel %vm1308, %v1299, %v1315
        %v1317 = vsel %vm1307, %v1314, %v1316
        %v1318 = vsel %vm1306, %v1296, %v1299
        %v1319 = vsel %vm1309, %v1305, 1326507024
        %v1320 = vsel %vm1308, %v1302, %v1319
        %v1321 = vsel %vm1307, %v1318, %v1320
        %v1322 = vshll.u32 %v1282, 8
        %v1323 = vmul.u32.u64.compose %v1322, %v1321
        %v1324 = vextract.low.u32 %v1323
        %v1325 = vextract.high.u32 %v1323
        %v1326 = vmul.u32.u64.compose %v1322, %v1317
        %v1327 = vextract.low.u32 %v1326
        %v1328 = vextract.high.u32 %v1326
        %v1329 = vmul.u32 %v1322, %v1313
        %v1330 = vadd.s32 %v1325, %v1327
        %vm1331 = vc.u32 %v1325, %v1327
        %v1332 = vadd.s32 %v1328, 1
        %v1333 = vsel %vm1331, %v1332, %v1328
        %v1334 = vadd.s32 %v1329, %v1333
        %v1335 = vadd.s32 %v1334, 536870912
        %v1336 = vshrl.u32 %v1335, 30
        %v1337 = vshll.u32 %v1336, 30
        %v1338 = vsub.s32 %v1334, %v1337
        %vm1339 = vcmp.lt.s32.totalorder %v1338, 0
        %v1340 = vsub.s32 0, %v1338
        %v1341 = vsel %vm1339, %v1340, %v1338
        %v1342 = vclz %v1341
        %v1343 = vsub.s32 %v1342, 2
        %vm1344 = vcmp.gt.s32.totalorder 0, %v1343
        %v1345 = vsel %vm1344, 0, %v1343
        %v1346 = vsub.s32 32, %v1345
        %v1347 = vshll.u32 %v1338, %v1345
        %v1348 = vshrl.u32 %v1330, %v1346
        %v1349 = vor.u32 %v1347, %v1348
        %v1350 = vsub.s32 4294967266, %v1345
        %v1351 = vadd.s32 %v1350, 127
        %v1352 = vshll.u32 %v1351, 23
        %v1353 = vor.u32 4788187, %v1352
        %v1354 = vand.u32 2147483647, %v1353
        %v1356 = vcvt.s32.f32 %v1349
        %v1357 = vmul.f32 %v1356, %v1354
        %v1358 = vxor.u32 %v1357, 2147483648
        %v1359 = vsel %vm1276, %v1358, %v1357
        %v1360 = vsub.s32 4, %v1336
        %v1361 = vsel %vm1276, %v1360, %v1336
        %v1362 = vsel %vm1275, %v148, %v1359
        %v1363 = vsel %vm1275, 0, %v1361
        %v1364 = vcosq.f32.pop %v1362
        %v1365 = vsinq.f32.pop %v1362
        %vm1366 = vweird.f32 %v148
        %v1367 = vadd.s32 %v1363, 3
        %v1368 = vand.u32 %v1367, 3
        %vm1369 = vcmp.lt.s32.totalorder %v1368, 2
        %vm1370 = vcmp.eq.s32.totalorder %v1368, 0
        %v1371 = vxor.u32 %v1365, 2147483648
        %v1372 = vsel %vm1370, %v1364, %v1371
        %vm1373 = vcmp.eq.s32.totalorder %v1368, 2
        %v1374 = vxor.u32 %v1364, 2147483648
        %v1375 = vsel %vm1373, %v1374, %v1365
        %v1376 = vsel %vm1369, %v1372, %v1375
        %v1377 = vsel %vm1366, nan, %v1376
        %v1378 = vand.u32 2147483647, %v149
        %vm1379 = vcmp.le.f32.partialorder %v1378, 0.7853982
        %vm1380 = vcmp.lt.s32.totalorder %v149, 0
        %v1381 = vand.u32 %v149, 2139095040
        %v1382 = vshrl.u32 %v1381, 23
        %v1383 = vsub.s32 %v1382, 127
        %v1384 = vand.u32 2147483647, %v149
        %v1385 = vand.u32 %v1384, 8388607
        %v1386 = vor.u32 %v1385, 8388608
        %v1387 = vsub.s32 0, %v1386
        %v1388 = vadd.s32 %v1383, 1
        %vm1389 = vcmp.gt.s32.totalorder %v1388, 0
        %v1390 = vsel %vm1389, %v1388, 0
        %v1391 = vshrl.u32 %v1390, 5
        %v1392 = vand.u32 %v1390, 31
        %v1393 = vsub.s32 32, %v1392
        %v1394 = vshrl.u32 683565275, %v1393
        %v1395 = vshll.u32 683565275, %v1392
        %v1396 = vshrl.u32 2475754826, %v1393
        %v1397 = vor.u32 %v1395, %v1396
        %v1398 = vshll.u32 2475754826, %v1392
        %v1399 = vshrl.u32 2131351028, %v1393
        %v1400 = vor.u32 %v1398, %v1399
        %v1401 = vshll.u32 2131351028, %v1392
        %v1402 = vshrl.u32 2102212464, %v1393
        %v1403 = vor.u32 %v1401, %v1402
        %v1404 = vshll.u32 2102212464, %v1392
        %v1405 = vshrl.u32 920167782, %v1393
        %v1406 = vor.u32 %v1404, %v1405
        %v1407 = vshll.u32 920167782, %v1392
        %v1408 = vshrl.u32 1326507024, %v1393
        %v1409 = vor.u32 %v1407, %v1408
        %vm1410 = vcmp.lt.s32.totalorder %v1391, 1
        %vm1411 = vcmp.lt.s32.totalorder %v1391, 2
        %vm1412 = vcmp.lt.s32.totalorder %v1391, 3
        %vm1413 = vcmp.lt.s32.totalorder %v1391, 4
        %v1414 = vsel %vm1410, %v1394, %v1397
        %v1415 = vsel %vm1413, %v1403, 2102212464
        %v1416 = vsel %vm1412, %v1400, %v1415
        %v1417 = vsel %vm1411, %v1414, %v1416
        %v1418 = vsel %vm1410, %v1397, %v1400
        %v1419 = vsel %vm1413, %v1406, 920167782
        %v1420 = vsel %vm1412, %v1403, %v1419
        %v1421 = vsel %vm1411, %v1418, %v1420
        %v1422 = vsel %vm1410, %v1400, %v1403
        %v1423 = vsel %vm1413, %v1409, 1326507024
        %v1424 = vsel %vm1412, %v1406, %v1423
        %v1425 = vsel %vm1411, %v1422, %v1424
        %v1426 = vshll.u32 %v1386, 8
        %v1427 = vmul.u32.u64.compose %v1426, %v1425
        %v1428 = vextract.low.u32 %v1427
        %v1429 = vextract.high.u32 %v1427
        %v1430 = vmul.u32.u64.compose %v1426, %v1421
        %v1431 = vextract.low.u32 %v1430
        %v1432 = vextract.high.u32 %v1430
        %v1433 = vmul.u32 %v1426, %v1417
        %v1434 = vadd.s32 %v1429, %v1431
        %vm1435 = vc.u32 %v1429, %v1431
        %v1436 = vadd.s32 %v1432, 1
        %v1437 = vsel %vm1435, %v1436, %v1432
        %v1438 = vadd.s32 %v1433, %v1437
        %v1439 = vadd.s32 %v1438, 536870912
        %v1440 = vshrl.u32 %v1439, 30
        %v1441 = vshll.u32 %v1440, 30
        %v1442 = vsub.s32 %v1438, %v1441
        %vm1443 = vcmp.lt.s32.totalorder %v1442, 0
        %v1444 = vsub.s32 0, %v1442
        %v1445 = vsel %vm1443, %v1444, %v1442
        %v1446 = vclz %v1445
        %v1447 = vsub.s32 %v1446, 2
        %vm1448 = vcmp.gt.s32.totalorder 0, %v1447
        %v1449 = vsel %vm1448, 0, %v1447
        %v1450 = vsub.s32 32, %v1449
        %v1451 = vshll.u32 %v1442, %v1449
        %v1452 = vshrl.u32 %v1434, %v1450
        %v1453 = vor.u32 %v1451, %v1452
        %v1454 = vsub.s32 4294967266, %v1449
        %v1455 = vadd.s32 %v1454, 127
        %v1456 = vshll.u32 %v1455, 23
        %v1457 = vor.u32 4788187, %v1456
        %v1458 = vand.u32 2147483647, %v1457
        %v1460 = vcvt.s32.f32 %v1453
        %v1461 = vmul.f32 %v1460, %v1458
        %v1462 = vxor.u32 %v1461, 2147483648
        %v1463 = vsel %vm1380, %v1462, %v1461
        %v1464 = vsub.s32 4, %v1440
        %v1465 = vsel %vm1380, %v1464, %v1440
        %v1466 = vsel %vm1379, %v149, %v1463
        %v1467 = vsel %vm1379, 0, %v1465
        %v1468 = vcosq.f32.pop %v1466
        %v1469 = vsinq.f32.pop %v1466
        %vm1470 = vweird.f32 %v149
        %v1471 = vadd.s32 %v1467, 3
        %v1472 = vand.u32 %v1471, 3
        %vm1473 = vcmp.lt.s32.totalorder %v1472, 2
        %vm1474 = vcmp.eq.s32.totalorder %v1472, 0
        %v1475 = vxor.u32 %v1469, 2147483648
        %v1476 = vsel %vm1474, %v1468, %v1475
        %vm1477 = vcmp.eq.s32.totalorder %v1472, 2
        %v1478 = vxor.u32 %v1468, 2147483648
        %v1479 = vsel %vm1477, %v1478, %v1469
        %v1480 = vsel %vm1473, %v1476, %v1479
        %v1481 = vsel %vm1470, nan, %v1480
        %v1482 = vand.u32 2147483647, %v150
        %vm1483 = vcmp.le.f32.partialorder %v1482, 0.7853982
        %vm1484 = vcmp.lt.s32.totalorder %v150, 0
        %v1485 = vand.u32 %v150, 2139095040
        %v1486 = vshrl.u32 %v1485, 23
        %v1487 = vsub.s32 %v1486, 127
        %v1488 = vand.u32 2147483647, %v150
        %v1489 = vand.u32 %v1488, 8388607
        %v1490 = vor.u32 %v1489, 8388608
        %v1491 = vsub.s32 0, %v1490
        %v1492 = vadd.s32 %v1487, 1
        %vm1493 = vcmp.gt.s32.totalorder %v1492, 0
        %v1494 = vsel %vm1493, %v1492, 0
        %v1495 = vshrl.u32 %v1494, 5
        %v1496 = vand.u32 %v1494, 31
        %v1497 = vsub.s32 32, %v1496
        %v1498 = vshrl.u32 683565275, %v1497
        %v1499 = vshll.u32 683565275, %v1496
        %v1500 = vshrl.u32 2475754826, %v1497
        %v1501 = vor.u32 %v1499, %v1500
        %v1502 = vshll.u32 2475754826, %v1496
        %v1503 = vshrl.u32 2131351028, %v1497
        %v1504 = vor.u32 %v1502, %v1503
        %v1505 = vshll.u32 2131351028, %v1496
        %v1506 = vshrl.u32 2102212464, %v1497
        %v1507 = vor.u32 %v1505, %v1506
        %v1508 = vshll.u32 2102212464, %v1496
        %v1509 = vshrl.u32 920167782, %v1497
        %v1510 = vor.u32 %v1508, %v1509
        %v1511 = vshll.u32 920167782, %v1496
        %v1512 = vshrl.u32 1326507024, %v1497
        %v1513 = vor.u32 %v1511, %v1512
        %vm1514 = vcmp.lt.s32.totalorder %v1495, 1
        %vm1515 = vcmp.lt.s32.totalorder %v1495, 2
        %vm1516 = vcmp.lt.s32.totalorder %v1495, 3
        %vm1517 = vcmp.lt.s32.totalorder %v1495, 4
        %v1518 = vsel %vm1514, %v1498, %v1501
        %v1519 = vsel %vm1517, %v1507, 2102212464
        %v1520 = vsel %vm1516, %v1504, %v1519
        %v1521 = vsel %vm1515, %v1518, %v1520
        %v1522 = vsel %vm1514, %v1501, %v1504
        %v1523 = vsel %vm1517, %v1510, 920167782
        %v1524 = vsel %vm1516, %v1507, %v1523
        %v1525 = vsel %vm1515, %v1522, %v1524
        %v1526 = vsel %vm1514, %v1504, %v1507
        %v1527 = vsel %vm1517, %v1513, 1326507024
        %v1528 = vsel %vm1516, %v1510, %v1527
        %v1529 = vsel %vm1515, %v1526, %v1528
        %v1530 = vshll.u32 %v1490, 8
        %v1531 = vmul.u32.u64.compose %v1530, %v1529
        %v1532 = vextract.low.u32 %v1531
        %v1533 = vextract.high.u32 %v1531
        %v1534 = vmul.u32.u64.compose %v1530, %v1525
        %v1535 = vextract.low.u32 %v1534
        %v1536 = vextract.high.u32 %v1534
        %v1537 = vmul.u32 %v1530, %v1521
        %v1538 = vadd.s32 %v1533, %v1535
        %vm1539 = vc.u32 %v1533, %v1535
        %v1540 = vadd.s32 %v1536, 1
        %v1541 = vsel %vm1539, %v1540, %v1536
        %v1542 = vadd.s32 %v1537, %v1541
        %v1543 = vadd.s32 %v1542, 536870912
        %v1544 = vshrl.u32 %v1543, 30
        %v1545 = vshll.u32 %v1544, 30
        %v1546 = vsub.s32 %v1542, %v1545
        %vm1547 = vcmp.lt.s32.totalorder %v1546, 0
        %v1548 = vsub.s32 0, %v1546
        %v1549 = vsel %vm1547, %v1548, %v1546
        %v1550 = vclz %v1549
        %v1551 = vsub.s32 %v1550, 2
        %vm1552 = vcmp.gt.s32.totalorder 0, %v1551
        %v1553 = vsel %vm1552, 0, %v1551
        %v1554 = vsub.s32 32, %v1553
        %v1555 = vshll.u32 %v1546, %v1553
        %v1556 = vshrl.u32 %v1538, %v1554
        %v1557 = vor.u32 %v1555, %v1556
        %v1558 = vsub.s32 4294967266, %v1553
        %v1559 = vadd.s32 %v1558, 127
        %v1560 = vshll.u32 %v1559, 23
        %v1561 = vor.u32 4788187, %v1560
        %v1562 = vand.u32 2147483647, %v1561
        %v1564 = vcvt.s32.f32 %v1557
        %v1565 = vmul.f32 %v1564, %v1562
        %v1566 = vxor.u32 %v1565, 2147483648
        %v1567 = vsel %vm1484, %v1566, %v1565
        %v1568 = vsub.s32 4, %v1544
        %v1569 = vsel %vm1484, %v1568, %v1544
        %v1570 = vsel %vm1483, %v150, %v1567
        %v1571 = vsel %vm1483, 0, %v1569
        %v1572 = vcosq.f32.pop %v1570
        %v1573 = vsinq.f32.pop %v1570
        %vm1574 = vweird.f32 %v150
        %v1575 = vadd.s32 %v1571, 3
        %v1576 = vand.u32 %v1575, 3
        %vm1577 = vcmp.lt.s32.totalorder %v1576, 2
        %vm1578 = vcmp.eq.s32.totalorder %v1576, 0
        %v1579 = vxor.u32 %v1573, 2147483648
        %v1580 = vsel %vm1578, %v1572, %v1579
        %vm1581 = vcmp.eq.s32.totalorder %v1576, 2
        %v1582 = vxor.u32 %v1572, 2147483648
        %v1583 = vsel %vm1581, %v1582, %v1573
        %v1584 = vsel %vm1577, %v1580, %v1583
        %v1585 = vsel %vm1574, nan, %v1584
        %v1586 = vand.u32 2147483647, %v151
        %vm1587 = vcmp.le.f32.partialorder %v1586, 0.7853982
        %vm1588 = vcmp.lt.s32.totalorder %v151, 0
        %v1589 = vand.u32 %v151, 2139095040
        %v1590 = vshrl.u32 %v1589, 23
        %v1591 = vsub.s32 %v1590, 127
        %v1592 = vand.u32 2147483647, %v151
        %v1593 = vand.u32 %v1592, 8388607
        %v1594 = vor.u32 %v1593, 8388608
        %v1595 = vsub.s32 0, %v1594
        %v1596 = vadd.s32 %v1591, 1
        %vm1597 = vcmp.gt.s32.totalorder %v1596, 0
        %v1598 = vsel %vm1597, %v1596, 0
        %v1599 = vshrl.u32 %v1598, 5
        %v1600 = vand.u32 %v1598, 31
        %v1601 = vsub.s32 32, %v1600
        %v1602 = vshrl.u32 683565275, %v1601
        %v1603 = vshll.u32 683565275, %v1600
        %v1604 = vshrl.u32 2475754826, %v1601
        %v1605 = vor.u32 %v1603, %v1604
        %v1606 = vshll.u32 2475754826, %v1600
        %v1607 = vshrl.u32 2131351028, %v1601
        %v1608 = vor.u32 %v1606, %v1607
        %v1609 = vshll.u32 2131351028, %v1600
        %v1610 = vshrl.u32 2102212464, %v1601
        %v1611 = vor.u32 %v1609, %v1610
        %v1612 = vshll.u32 2102212464, %v1600
        %v1613 = vshrl.u32 920167782, %v1601
        %v1614 = vor.u32 %v1612, %v1613
        %v1615 = vshll.u32 920167782, %v1600
        %v1616 = vshrl.u32 1326507024, %v1601
        %v1617 = vor.u32 %v1615, %v1616
        %vm1618 = vcmp.lt.s32.totalorder %v1599, 1
        %vm1619 = vcmp.lt.s32.totalorder %v1599, 2
        %vm1620 = vcmp.lt.s32.totalorder %v1599, 3
        %vm1621 = vcmp.lt.s32.totalorder %v1599, 4
        %v1622 = vsel %vm1618, %v1602, %v1605
        %v1623 = vsel %vm1621, %v1611, 2102212464
        %v1624 = vsel %vm1620, %v1608, %v1623
        %v1625 = vsel %vm1619, %v1622, %v1624
        %v1626 = vsel %vm1618, %v1605, %v1608
        %v1627 = vsel %vm1621, %v1614, 920167782
        %v1628 = vsel %vm1620, %v1611, %v1627
        %v1629 = vsel %vm1619, %v1626, %v1628
        %v1630 = vsel %vm1618, %v1608, %v1611
        %v1631 = vsel %vm1621, %v1617, 1326507024
        %v1632 = vsel %vm1620, %v1614, %v1631
        %v1633 = vsel %vm1619, %v1630, %v1632
        %v1634 = vshll.u32 %v1594, 8
        %v1635 = vmul.u32.u64.compose %v1634, %v1633
        %v1636 = vextract.low.u32 %v1635
        %v1637 = vextract.high.u32 %v1635
        %v1638 = vmul.u32.u64.compose %v1634, %v1629
        %v1639 = vextract.low.u32 %v1638
        %v1640 = vextract.high.u32 %v1638
        %v1641 = vmul.u32 %v1634, %v1625
        %v1642 = vadd.s32 %v1637, %v1639
        %vm1643 = vc.u32 %v1637, %v1639
        %v1644 = vadd.s32 %v1640, 1
        %v1645 = vsel %vm1643, %v1644, %v1640
        %v1646 = vadd.s32 %v1641, %v1645
        %v1647 = vadd.s32 %v1646, 536870912
        %v1648 = vshrl.u32 %v1647, 30
        %v1649 = vshll.u32 %v1648, 30
        %v1650 = vsub.s32 %v1646, %v1649
        %vm1651 = vcmp.lt.s32.totalorder %v1650, 0
        %v1652 = vsub.s32 0, %v1650
        %v1653 = vsel %vm1651, %v1652, %v1650
        %v1654 = vclz %v1653
        %v1655 = vsub.s32 %v1654, 2
        %vm1656 = vcmp.gt.s32.totalorder 0, %v1655
        %v1657 = vsel %vm1656, 0, %v1655
        %v1658 = vsub.s32 32, %v1657
        %v1659 = vshll.u32 %v1650, %v1657
        %v1660 = vshrl.u32 %v1642, %v1658
        %v1661 = vor.u32 %v1659, %v1660
        %v1662 = vsub.s32 4294967266, %v1657
        %v1663 = vadd.s32 %v1662, 127
        %v1664 = vshll.u32 %v1663, 23
        %v1665 = vor.u32 4788187, %v1664
        %v1666 = vand.u32 2147483647, %v1665
        %v1668 = vcvt.s32.f32 %v1661
        %v1669 = vmul.f32 %v1668, %v1666
        %v1670 = vxor.u32 %v1669, 2147483648
        %v1671 = vsel %vm1588, %v1670, %v1669
        %v1672 = vsub.s32 4, %v1648
        %v1673 = vsel %vm1588, %v1672, %v1648
        %v1674 = vsel %vm1587, %v151, %v1671
        %v1675 = vsel %vm1587, 0, %v1673
        %v1676 = vcosq.f32.pop %v1674
        %v1677 = vsinq.f32.pop %v1674
        %vm1678 = vweird.f32 %v151
        %v1679 = vadd.s32 %v1675, 3
        %v1680 = vand.u32 %v1679, 3
        %vm1681 = vcmp.lt.s32.totalorder %v1680, 2
        %vm1682 = vcmp.eq.s32.totalorder %v1680, 0
        %v1683 = vxor.u32 %v1677, 2147483648
        %v1684 = vsel %vm1682, %v1676, %v1683
        %vm1685 = vcmp.eq.s32.totalorder %v1680, 2
        %v1686 = vxor.u32 %v1676, 2147483648
        %v1687 = vsel %vm1685, %v1686, %v1677
        %v1688 = vsel %vm1681, %v1684, %v1687
        %v1689 = vsel %vm1678, nan, %v1688
        %v1690 = vand.u32 2147483647, %v152
        %vm1691 = vcmp.le.f32.partialorder %v1690, 0.7853982
        %vm1692 = vcmp.lt.s32.totalorder %v152, 0
        %v1693 = vand.u32 %v152, 2139095040
        %v1694 = vshrl.u32 %v1693, 23
        %v1695 = vsub.s32 %v1694, 127
        %v1696 = vand.u32 2147483647, %v152
        %v1697 = vand.u32 %v1696, 8388607
        %v1698 = vor.u32 %v1697, 8388608
        %v1699 = vsub.s32 0, %v1698
        %v1700 = vadd.s32 %v1695, 1
        %vm1701 = vcmp.gt.s32.totalorder %v1700, 0
        %v1702 = vsel %vm1701, %v1700, 0
        %v1703 = vshrl.u32 %v1702, 5
        %v1704 = vand.u32 %v1702, 31
        %v1705 = vsub.s32 32, %v1704
        %v1706 = vshrl.u32 683565275, %v1705
        %v1707 = vshll.u32 683565275, %v1704
        %v1708 = vshrl.u32 2475754826, %v1705
        %v1709 = vor.u32 %v1707, %v1708
        %v1710 = vshll.u32 2475754826, %v1704
        %v1711 = vshrl.u32 2131351028, %v1705
        %v1712 = vor.u32 %v1710, %v1711
        %v1713 = vshll.u32 2131351028, %v1704
        %v1714 = vshrl.u32 2102212464, %v1705
        %v1715 = vor.u32 %v1713, %v1714
        %v1716 = vshll.u32 2102212464, %v1704
        %v1717 = vshrl.u32 920167782, %v1705
        %v1718 = vor.u32 %v1716, %v1717
        %v1719 = vshll.u32 920167782, %v1704
        %v1720 = vshrl.u32 1326507024, %v1705
        %v1721 = vor.u32 %v1719, %v1720
        %vm1722 = vcmp.lt.s32.totalorder %v1703, 1
        %vm1723 = vcmp.lt.s32.totalorder %v1703, 2
        %vm1724 = vcmp.lt.s32.totalorder %v1703, 3
        %vm1725 = vcmp.lt.s32.totalorder %v1703, 4
        %v1726 = vsel %vm1722, %v1706, %v1709
        %v1727 = vsel %vm1725, %v1715, 2102212464
        %v1728 = vsel %vm1724, %v1712, %v1727
        %v1729 = vsel %vm1723, %v1726, %v1728
        %v1730 = vsel %vm1722, %v1709, %v1712
        %v1731 = vsel %vm1725, %v1718, 920167782
        %v1732 = vsel %vm1724, %v1715, %v1731
        %v1733 = vsel %vm1723, %v1730, %v1732
        %v1734 = vsel %vm1722, %v1712, %v1715
        %v1735 = vsel %vm1725, %v1721, 1326507024
        %v1736 = vsel %vm1724, %v1718, %v1735
        %v1737 = vsel %vm1723, %v1734, %v1736
        %v1738 = vshll.u32 %v1698, 8
        %v1739 = vmul.u32.u64.compose %v1738, %v1737
        %v1740 = vextract.low.u32 %v1739
        %v1741 = vextract.high.u32 %v1739
        %v1742 = vmul.u32.u64.compose %v1738, %v1733
        %v1743 = vextract.low.u32 %v1742
        %v1744 = vextract.high.u32 %v1742
        %v1745 = vmul.u32 %v1738, %v1729
        %v1746 = vadd.s32 %v1741, %v1743
        %vm1747 = vc.u32 %v1741, %v1743
        %v1748 = vadd.s32 %v1744, 1
        %v1749 = vsel %vm1747, %v1748, %v1744
        %v1750 = vadd.s32 %v1745, %v1749
        %v1751 = vadd.s32 %v1750, 536870912
        %v1752 = vshrl.u32 %v1751, 30
        %v1753 = vshll.u32 %v1752, 30
        %v1754 = vsub.s32 %v1750, %v1753
        %vm1755 = vcmp.lt.s32.totalorder %v1754, 0
        %v1756 = vsub.s32 0, %v1754
        %v1757 = vsel %vm1755, %v1756, %v1754
        %v1758 = vclz %v1757
        %v1759 = vsub.s32 %v1758, 2
        %vm1760 = vcmp.gt.s32.totalorder 0, %v1759
        %v1761 = vsel %vm1760, 0, %v1759
        %v1762 = vsub.s32 32, %v1761
        %v1763 = vshll.u32 %v1754, %v1761
        %v1764 = vshrl.u32 %v1746, %v1762
        %v1765 = vor.u32 %v1763, %v1764
        %v1766 = vsub.s32 4294967266, %v1761
        %v1767 = vadd.s32 %v1766, 127
        %v1768 = vshll.u32 %v1767, 23
        %v1769 = vor.u32 4788187, %v1768
        %v1770 = vand.u32 2147483647, %v1769
        %v1772 = vcvt.s32.f32 %v1765
        %v1773 = vmul.f32 %v1772, %v1770
        %v1774 = vxor.u32 %v1773, 2147483648
        %v1775 = vsel %vm1692, %v1774, %v1773
        %v1776 = vsub.s32 4, %v1752
        %v1777 = vsel %vm1692, %v1776, %v1752
        %v1778 = vsel %vm1691, %v152, %v1775
        %v1779 = vsel %vm1691, 0, %v1777
        %v1780 = vcosq.f32.pop %v1778
        %v1781 = vsinq.f32.pop %v1778
        %vm1782 = vweird.f32 %v152
        %v1783 = vadd.s32 %v1779, 3
        %v1784 = vand.u32 %v1783, 3
        %vm1785 = vcmp.lt.s32.totalorder %v1784, 2
        %vm1786 = vcmp.eq.s32.totalorder %v1784, 0
        %v1787 = vxor.u32 %v1781, 2147483648
        %v1788 = vsel %vm1786, %v1780, %v1787
        %vm1789 = vcmp.eq.s32.totalorder %v1784, 2
        %v1790 = vxor.u32 %v1780, 2147483648
        %v1791 = vsel %vm1789, %v1790, %v1781
        %v1792 = vsel %vm1785, %v1788, %v1791
        %v1793 = vsel %vm1782, nan, %v1792
        %v1794 = vand.u32 2147483647, %v153
        %vm1795 = vcmp.le.f32.partialorder %v1794, 0.7853982
        %vm1796 = vcmp.lt.s32.totalorder %v153, 0
        %v1797 = vand.u32 %v153, 2139095040
        %v1798 = vshrl.u32 %v1797, 23
        %v1799 = vsub.s32 %v1798, 127
        %v1800 = vand.u32 2147483647, %v153
        %v1801 = vand.u32 %v1800, 8388607
        %v1802 = vor.u32 %v1801, 8388608
        %v1803 = vsub.s32 0, %v1802
        %v1804 = vadd.s32 %v1799, 1
        %vm1805 = vcmp.gt.s32.totalorder %v1804, 0
        %v1806 = vsel %vm1805, %v1804, 0
        %v1807 = vshrl.u32 %v1806, 5
        %v1808 = vand.u32 %v1806, 31
        %v1809 = vsub.s32 32, %v1808
        %v1810 = vshrl.u32 683565275, %v1809
        %v1811 = vshll.u32 683565275, %v1808
        %v1812 = vshrl.u32 2475754826, %v1809
        %v1813 = vor.u32 %v1811, %v1812
        %v1814 = vshll.u32 2475754826, %v1808
        %v1815 = vshrl.u32 2131351028, %v1809
        %v1816 = vor.u32 %v1814, %v1815
        %v1817 = vshll.u32 2131351028, %v1808
        %v1818 = vshrl.u32 2102212464, %v1809
        %v1819 = vor.u32 %v1817, %v1818
        %v1820 = vshll.u32 2102212464, %v1808
        %v1821 = vshrl.u32 920167782, %v1809
        %v1822 = vor.u32 %v1820, %v1821
        %v1823 = vshll.u32 920167782, %v1808
        %v1824 = vshrl.u32 1326507024, %v1809
        %v1825 = vor.u32 %v1823, %v1824
        %vm1826 = vcmp.lt.s32.totalorder %v1807, 1
        %vm1827 = vcmp.lt.s32.totalorder %v1807, 2
        %vm1828 = vcmp.lt.s32.totalorder %v1807, 3
        %vm1829 = vcmp.lt.s32.totalorder %v1807, 4
        %v1830 = vsel %vm1826, %v1810, %v1813
        %v1831 = vsel %vm1829, %v1819, 2102212464
        %v1832 = vsel %vm1828, %v1816, %v1831
        %v1833 = vsel %vm1827, %v1830, %v1832
        %v1834 = vsel %vm1826, %v1813, %v1816
        %v1835 = vsel %vm1829, %v1822, 920167782
        %v1836 = vsel %vm1828, %v1819, %v1835
        %v1837 = vsel %vm1827, %v1834, %v1836
        %v1838 = vsel %vm1826, %v1816, %v1819
        %v1839 = vsel %vm1829, %v1825, 1326507024
        %v1840 = vsel %vm1828, %v1822, %v1839
        %v1841 = vsel %vm1827, %v1838, %v1840
        %v1842 = vshll.u32 %v1802, 8
        %v1843 = vmul.u32.u64.compose %v1842, %v1841
        %v1844 = vextract.low.u32 %v1843
        %v1845 = vextract.high.u32 %v1843
        %v1846 = vmul.u32.u64.compose %v1842, %v1837
        %v1847 = vextract.low.u32 %v1846
        %v1848 = vextract.high.u32 %v1846
        %v1849 = vmul.u32 %v1842, %v1833
        %v1850 = vadd.s32 %v1845, %v1847
        %vm1851 = vc.u32 %v1845, %v1847
        %v1852 = vadd.s32 %v1848, 1
        %v1853 = vsel %vm1851, %v1852, %v1848
        %v1854 = vadd.s32 %v1849, %v1853
        %v1855 = vadd.s32 %v1854, 536870912
        %v1856 = vshrl.u32 %v1855, 30
        %v1857 = vshll.u32 %v1856, 30
        %v1858 = vsub.s32 %v1854, %v1857
        %vm1859 = vcmp.lt.s32.totalorder %v1858, 0
        %v1860 = vsub.s32 0, %v1858
        %v1861 = vsel %vm1859, %v1860, %v1858
        %v1862 = vclz %v1861
        %v1863 = vsub.s32 %v1862, 2
        %vm1864 = vcmp.gt.s32.totalorder 0, %v1863
        %v1865 = vsel %vm1864, 0, %v1863
        %v1866 = vsub.s32 32, %v1865
        %v1867 = vshll.u32 %v1858, %v1865
        %v1868 = vshrl.u32 %v1850, %v1866
        %v1869 = vor.u32 %v1867, %v1868
        %v1870 = vsub.s32 4294967266, %v1865
        %v1871 = vadd.s32 %v1870, 127
        %v1872 = vshll.u32 %v1871, 23
        %v1873 = vor.u32 4788187, %v1872
        %v1874 = vand.u32 2147483647, %v1873
        %v1876 = vcvt.s32.f32 %v1869
        %v1877 = vmul.f32 %v1876, %v1874
        %v1878 = vxor.u32 %v1877, 2147483648
        %v1879 = vsel %vm1796, %v1878, %v1877
        %v1880 = vsub.s32 4, %v1856
        %v1881 = vsel %vm1796, %v1880, %v1856
        %v1882 = vsel %vm1795, %v153, %v1879
        %v1883 = vsel %vm1795, 0, %v1881
        %v1884 = vcosq.f32.pop %v1882
        %v1885 = vsinq.f32.pop %v1882
        %vm1886 = vweird.f32 %v153
        %v1887 = vadd.s32 %v1883, 3
        %v1888 = vand.u32 %v1887, 3
        %vm1889 = vcmp.lt.s32.totalorder %v1888, 2
        %vm1890 = vcmp.eq.s32.totalorder %v1888, 0
        %v1891 = vxor.u32 %v1885, 2147483648
        %v1892 = vsel %vm1890, %v1884, %v1891
        %vm1893 = vcmp.eq.s32.totalorder %v1888, 2
        %v1894 = vxor.u32 %v1884, 2147483648
        %v1895 = vsel %vm1893, %v1894, %v1885
        %v1896 = vsel %vm1889, %v1892, %v1895
        %v1897 = vsel %vm1886, nan, %v1896
        %v1898 = vand.u32 2147483647, %v154
        %vm1899 = vcmp.le.f32.partialorder %v1898, 0.7853982
        %vm1900 = vcmp.lt.s32.totalorder %v154, 0
        %v1901 = vand.u32 %v154, 2139095040
        %v1902 = vshrl.u32 %v1901, 23
        %v1903 = vsub.s32 %v1902, 127
        %v1904 = vand.u32 2147483647, %v154
        %v1905 = vand.u32 %v1904, 8388607
        %v1906 = vor.u32 %v1905, 8388608
        %v1907 = vsub.s32 0, %v1906
        %v1908 = vadd.s32 %v1903, 1
        %vm1909 = vcmp.gt.s32.totalorder %v1908, 0
        %v1910 = vsel %vm1909, %v1908, 0
        %v1911 = vshrl.u32 %v1910, 5
        %v1912 = vand.u32 %v1910, 31
        %v1913 = vsub.s32 32, %v1912
        %v1914 = vshrl.u32 683565275, %v1913
        %v1915 = vshll.u32 683565275, %v1912
        %v1916 = vshrl.u32 2475754826, %v1913
        %v1917 = vor.u32 %v1915, %v1916
        %v1918 = vshll.u32 2475754826, %v1912
        %v1919 = vshrl.u32 2131351028, %v1913
        %v1920 = vor.u32 %v1918, %v1919
        %v1921 = vshll.u32 2131351028, %v1912
        %v1922 = vshrl.u32 2102212464, %v1913
        %v1923 = vor.u32 %v1921, %v1922
        %v1924 = vshll.u32 2102212464, %v1912
        %v1925 = vshrl.u32 920167782, %v1913
        %v1926 = vor.u32 %v1924, %v1925
        %v1927 = vshll.u32 920167782, %v1912
        %v1928 = vshrl.u32 1326507024, %v1913
        %v1929 = vor.u32 %v1927, %v1928
        %vm1930 = vcmp.lt.s32.totalorder %v1911, 1
        %vm1931 = vcmp.lt.s32.totalorder %v1911, 2
        %vm1932 = vcmp.lt.s32.totalorder %v1911, 3
        %vm1933 = vcmp.lt.s32.totalorder %v1911, 4
        %v1934 = vsel %vm1930, %v1914, %v1917
        %v1935 = vsel %vm1933, %v1923, 2102212464
        %v1936 = vsel %vm1932, %v1920, %v1935
        %v1937 = vsel %vm1931, %v1934, %v1936
        %v1938 = vsel %vm1930, %v1917, %v1920
        %v1939 = vsel %vm1933, %v1926, 920167782
        %v1940 = vsel %vm1932, %v1923, %v1939
        %v1941 = vsel %vm1931, %v1938, %v1940
        %v1942 = vsel %vm1930, %v1920, %v1923
        %v1943 = vsel %vm1933, %v1929, 1326507024
        %v1944 = vsel %vm1932, %v1926, %v1943
        %v1945 = vsel %vm1931, %v1942, %v1944
        %v1946 = vshll.u32 %v1906, 8
        %v1947 = vmul.u32.u64.compose %v1946, %v1945
        %v1948 = vextract.low.u32 %v1947
        %v1949 = vextract.high.u32 %v1947
        %v1950 = vmul.u32.u64.compose %v1946, %v1941
        %v1951 = vextract.low.u32 %v1950
        %v1952 = vextract.high.u32 %v1950
        %v1953 = vmul.u32 %v1946, %v1937
        %v1954 = vadd.s32 %v1949, %v1951
        %vm1955 = vc.u32 %v1949, %v1951
        %v1956 = vadd.s32 %v1952, 1
        %v1957 = vsel %vm1955, %v1956, %v1952
        %v1958 = vadd.s32 %v1953, %v1957
        %v1959 = vadd.s32 %v1958, 536870912
        %v1960 = vshrl.u32 %v1959, 30
        %v1961 = vshll.u32 %v1960, 30
        %v1962 = vsub.s32 %v1958, %v1961
        %vm1963 = vcmp.lt.s32.totalorder %v1962, 0
        %v1964 = vsub.s32 0, %v1962
        %v1965 = vsel %vm1963, %v1964, %v1962
        %v1966 = vclz %v1965
        %v1967 = vsub.s32 %v1966, 2
        %vm1968 = vcmp.gt.s32.totalorder 0, %v1967
        %v1969 = vsel %vm1968, 0, %v1967
        %v1970 = vsub.s32 32, %v1969
        %v1971 = vshll.u32 %v1962, %v1969
        %v1972 = vshrl.u32 %v1954, %v1970
        %v1973 = vor.u32 %v1971, %v1972
        %v1974 = vsub.s32 4294967266, %v1969
        %v1975 = vadd.s32 %v1974, 127
        %v1976 = vshll.u32 %v1975, 23
        %v1977 = vor.u32 4788187, %v1976
        %v1978 = vand.u32 2147483647, %v1977
        %v1980 = vcvt.s32.f32 %v1973
        %v1981 = vmul.f32 %v1980, %v1978
        %v1982 = vxor.u32 %v1981, 2147483648
        %v1983 = vsel %vm1900, %v1982, %v1981
        %v1984 = vsub.s32 4, %v1960
        %v1985 = vsel %vm1900, %v1984, %v1960
        %v1986 = vsel %vm1899, %v154, %v1983
        %v1987 = vsel %vm1899, 0, %v1985
        %v1988 = vcosq.f32.pop %v1986
        %v1989 = vsinq.f32.pop %v1986
        %vm1990 = vweird.f32 %v154
        %v1991 = vadd.s32 %v1987, 3
        %v1992 = vand.u32 %v1991, 3
        %vm1993 = vcmp.lt.s32.totalorder %v1992, 2
        %vm1994 = vcmp.eq.s32.totalorder %v1992, 0
        %v1995 = vxor.u32 %v1989, 2147483648
        %v1996 = vsel %vm1994, %v1988, %v1995
        %vm1997 = vcmp.eq.s32.totalorder %v1992, 2
        %v1998 = vxor.u32 %v1988, 2147483648
        %v1999 = vsel %vm1997, %v1998, %v1989
        %v2000 = vsel %vm1993, %v1996, %v1999
        %v2001 = vsel %vm1990, nan, %v2000
        %v2002 = vand.u32 2147483647, %v155
        %vm2003 = vcmp.le.f32.partialorder %v2002, 0.7853982
        %vm2004 = vcmp.lt.s32.totalorder %v155, 0
        %v2005 = vand.u32 %v155, 2139095040
        %v2006 = vshrl.u32 %v2005, 23
        %v2007 = vsub.s32 %v2006, 127
        %v2008 = vand.u32 2147483647, %v155
        %v2009 = vand.u32 %v2008, 8388607
        %v2010 = vor.u32 %v2009, 8388608
        %v2011 = vsub.s32 0, %v2010
        %v2012 = vadd.s32 %v2007, 1
        %vm2013 = vcmp.gt.s32.totalorder %v2012, 0
        %v2014 = vsel %vm2013, %v2012, 0
        %v2015 = vshrl.u32 %v2014, 5
        %v2016 = vand.u32 %v2014, 31
        %v2017 = vsub.s32 32, %v2016
        %v2018 = vshrl.u32 683565275, %v2017
        %v2019 = vshll.u32 683565275, %v2016
        %v2020 = vshrl.u32 2475754826, %v2017
        %v2021 = vor.u32 %v2019, %v2020
        %v2022 = vshll.u32 2475754826, %v2016
        %v2023 = vshrl.u32 2131351028, %v2017
        %v2024 = vor.u32 %v2022, %v2023
        %v2025 = vshll.u32 2131351028, %v2016
        %v2026 = vshrl.u32 2102212464, %v2017
        %v2027 = vor.u32 %v2025, %v2026
        %v2028 = vshll.u32 2102212464, %v2016
        %v2029 = vshrl.u32 920167782, %v2017
        %v2030 = vor.u32 %v2028, %v2029
        %v2031 = vshll.u32 920167782, %v2016
        %v2032 = vshrl.u32 1326507024, %v2017
        %v2033 = vor.u32 %v2031, %v2032
        %vm2034 = vcmp.lt.s32.totalorder %v2015, 1
        %vm2035 = vcmp.lt.s32.totalorder %v2015, 2
        %vm2036 = vcmp.lt.s32.totalorder %v2015, 3
        %vm2037 = vcmp.lt.s32.totalorder %v2015, 4
        %v2038 = vsel %vm2034, %v2018, %v2021
        %v2039 = vsel %vm2037, %v2027, 2102212464
        %v2040 = vsel %vm2036, %v2024, %v2039
        %v2041 = vsel %vm2035, %v2038, %v2040
        %v2042 = vsel %vm2034, %v2021, %v2024
        %v2043 = vsel %vm2037, %v2030, 920167782
        %v2044 = vsel %vm2036, %v2027, %v2043
        %v2045 = vsel %vm2035, %v2042, %v2044
        %v2046 = vsel %vm2034, %v2024, %v2027
        %v2047 = vsel %vm2037, %v2033, 1326507024
        %v2048 = vsel %vm2036, %v2030, %v2047
        %v2049 = vsel %vm2035, %v2046, %v2048
        %v2050 = vshll.u32 %v2010, 8
        %v2051 = vmul.u32.u64.compose %v2050, %v2049
        %v2052 = vextract.low.u32 %v2051
        %v2053 = vextract.high.u32 %v2051
        %v2054 = vmul.u32.u64.compose %v2050, %v2045
        %v2055 = vextract.low.u32 %v2054
        %v2056 = vextract.high.u32 %v2054
        %v2057 = vmul.u32 %v2050, %v2041
        %v2058 = vadd.s32 %v2053, %v2055
        %vm2059 = vc.u32 %v2053, %v2055
        %v2060 = vadd.s32 %v2056, 1
        %v2061 = vsel %vm2059, %v2060, %v2056
        %v2062 = vadd.s32 %v2057, %v2061
        %v2063 = vadd.s32 %v2062, 536870912
        %v2064 = vshrl.u32 %v2063, 30
        %v2065 = vshll.u32 %v2064, 30
        %v2066 = vsub.s32 %v2062, %v2065
        %vm2067 = vcmp.lt.s32.totalorder %v2066, 0
        %v2068 = vsub.s32 0, %v2066
        %v2069 = vsel %vm2067, %v2068, %v2066
        %v2070 = vclz %v2069
        %v2071 = vsub.s32 %v2070, 2
        %vm2072 = vcmp.gt.s32.totalorder 0, %v2071
        %v2073 = vsel %vm2072, 0, %v2071
        %v2074 = vsub.s32 32, %v2073
        %v2075 = vshll.u32 %v2066, %v2073
        %v2076 = vshrl.u32 %v2058, %v2074
        %v2077 = vor.u32 %v2075, %v2076
        %v2078 = vsub.s32 4294967266, %v2073
        %v2079 = vadd.s32 %v2078, 127
        %v2080 = vshll.u32 %v2079, 23
        %v2081 = vor.u32 4788187, %v2080
        %v2082 = vand.u32 2147483647, %v2081
        %v2084 = vcvt.s32.f32 %v2077
        %v2085 = vmul.f32 %v2084, %v2082
        %v2086 = vxor.u32 %v2085, 2147483648
        %v2087 = vsel %vm2004, %v2086, %v2085
        %v2088 = vsub.s32 4, %v2064
        %v2089 = vsel %vm2004, %v2088, %v2064
        %v2090 = vsel %vm2003, %v155, %v2087
        %v2091 = vsel %vm2003, 0, %v2089
        %v2092 = vcosq.f32.pop %v2090
        %v2093 = vsinq.f32.pop %v2090
        %vm2094 = vweird.f32 %v155
        %v2095 = vadd.s32 %v2091, 3
        %v2096 = vand.u32 %v2095, 3
        %vm2097 = vcmp.lt.s32.totalorder %v2096, 2
        %vm2098 = vcmp.eq.s32.totalorder %v2096, 0
        %v2099 = vxor.u32 %v2093, 2147483648
        %v2100 = vsel %vm2098, %v2092, %v2099
        %vm2101 = vcmp.eq.s32.totalorder %v2096, 2
        %v2102 = vxor.u32 %v2092, 2147483648
        %v2103 = vsel %vm2101, %v2102, %v2093
        %v2104 = vsel %vm2097, %v2100, %v2103
        %v2105 = vsel %vm2094, nan, %v2104
        %v2106 = vand.u32 2147483647, %v156
        %vm2107 = vcmp.le.f32.partialorder %v2106, 0.7853982
        %vm2108 = vcmp.lt.s32.totalorder %v156, 0
        %v2109 = vand.u32 %v156, 2139095040
        %v2110 = vshrl.u32 %v2109, 23
        %v2111 = vsub.s32 %v2110, 127
        %v2112 = vand.u32 2147483647, %v156
        %v2113 = vand.u32 %v2112, 8388607
        %v2114 = vor.u32 %v2113, 8388608
        %v2115 = vsub.s32 0, %v2114
        %v2116 = vadd.s32 %v2111, 1
        %vm2117 = vcmp.gt.s32.totalorder %v2116, 0
        %v2118 = vsel %vm2117, %v2116, 0
        %v2119 = vshrl.u32 %v2118, 5
        %v2120 = vand.u32 %v2118, 31
        %v2121 = vsub.s32 32, %v2120
        %v2122 = vshrl.u32 683565275, %v2121
        %v2123 = vshll.u32 683565275, %v2120
        %v2124 = vshrl.u32 2475754826, %v2121
        %v2125 = vor.u32 %v2123, %v2124
        %v2126 = vshll.u32 2475754826, %v2120
        %v2127 = vshrl.u32 2131351028, %v2121
        %v2128 = vor.u32 %v2126, %v2127
        %v2129 = vshll.u32 2131351028, %v2120
        %v2130 = vshrl.u32 2102212464, %v2121
        %v2131 = vor.u32 %v2129, %v2130
        %v2132 = vshll.u32 2102212464, %v2120
        %v2133 = vshrl.u32 920167782, %v2121
        %v2134 = vor.u32 %v2132, %v2133
        %v2135 = vshll.u32 920167782, %v2120
        %v2136 = vshrl.u32 1326507024, %v2121
        %v2137 = vor.u32 %v2135, %v2136
        %vm2138 = vcmp.lt.s32.totalorder %v2119, 1
        %vm2139 = vcmp.lt.s32.totalorder %v2119, 2
        %vm2140 = vcmp.lt.s32.totalorder %v2119, 3
        %vm2141 = vcmp.lt.s32.totalorder %v2119, 4
        %v2142 = vsel %vm2138, %v2122, %v2125
        %v2143 = vsel %vm2141, %v2131, 2102212464
        %v2144 = vsel %vm2140, %v2128, %v2143
        %v2145 = vsel %vm2139, %v2142, %v2144
        %v2146 = vsel %vm2138, %v2125, %v2128
        %v2147 = vsel %vm2141, %v2134, 920167782
        %v2148 = vsel %vm2140, %v2131, %v2147
        %v2149 = vsel %vm2139, %v2146, %v2148
        %v2150 = vsel %vm2138, %v2128, %v2131
        %v2151 = vsel %vm2141, %v2137, 1326507024
        %v2152 = vsel %vm2140, %v2134, %v2151
        %v2153 = vsel %vm2139, %v2150, %v2152
        %v2154 = vshll.u32 %v2114, 8
        %v2155 = vmul.u32.u64.compose %v2154, %v2153
        %v2156 = vextract.low.u32 %v2155
        %v2157 = vextract.high.u32 %v2155
        %v2158 = vmul.u32.u64.compose %v2154, %v2149
        %v2159 = vextract.low.u32 %v2158
        %v2160 = vextract.high.u32 %v2158
        %v2161 = vmul.u32 %v2154, %v2145
        %v2162 = vadd.s32 %v2157, %v2159
        %vm2163 = vc.u32 %v2157, %v2159
        %v2164 = vadd.s32 %v2160, 1
        %v2165 = vsel %vm2163, %v2164, %v2160
        %v2166 = vadd.s32 %v2161, %v2165
        %v2167 = vadd.s32 %v2166, 536870912
        %v2168 = vshrl.u32 %v2167, 30
        %v2169 = vshll.u32 %v2168, 30
        %v2170 = vsub.s32 %v2166, %v2169
        %vm2171 = vcmp.lt.s32.totalorder %v2170, 0
        %v2172 = vsub.s32 0, %v2170
        %v2173 = vsel %vm2171, %v2172, %v2170
        %v2174 = vclz %v2173
        %v2175 = vsub.s32 %v2174, 2
        %vm2176 = vcmp.gt.s32.totalorder 0, %v2175
        %v2177 = vsel %vm2176, 0, %v2175
        %v2178 = vsub.s32 32, %v2177
        %v2179 = vshll.u32 %v2170, %v2177
        %v2180 = vshrl.u32 %v2162, %v2178
        %v2181 = vor.u32 %v2179, %v2180
        %v2182 = vsub.s32 4294967266, %v2177
        %v2183 = vadd.s32 %v2182, 127
        %v2184 = vshll.u32 %v2183, 23
        %v2185 = vor.u32 4788187, %v2184
        %v2186 = vand.u32 2147483647, %v2185
        %v2188 = vcvt.s32.f32 %v2181
        %v2189 = vmul.f32 %v2188, %v2186
        %v2190 = vxor.u32 %v2189, 2147483648
        %v2191 = vsel %vm2108, %v2190, %v2189
        %v2192 = vsub.s32 4, %v2168
        %v2193 = vsel %vm2108, %v2192, %v2168
        %v2194 = vsel %vm2107, %v156, %v2191
        %v2195 = vsel %vm2107, 0, %v2193
        %v2196 = vcosq.f32.pop %v2194
        %v2197 = vsinq.f32.pop %v2194
        %vm2198 = vweird.f32 %v156
        %v2199 = vadd.s32 %v2195, 3
        %v2200 = vand.u32 %v2199, 3
        %vm2201 = vcmp.lt.s32.totalorder %v2200, 2
        %vm2202 = vcmp.eq.s32.totalorder %v2200, 0
        %v2203 = vxor.u32 %v2197, 2147483648
        %v2204 = vsel %vm2202, %v2196, %v2203
        %vm2205 = vcmp.eq.s32.totalorder %v2200, 2
        %v2206 = vxor.u32 %v2196, 2147483648
        %v2207 = vsel %vm2205, %v2206, %v2197
        %v2208 = vsel %vm2201, %v2204, %v2207
        %v2209 = vsel %vm2198, nan, %v2208
        %v2210 = vand.u32 2147483647, %v157
        %vm2211 = vcmp.le.f32.partialorder %v2210, 0.7853982
        %vm2212 = vcmp.lt.s32.totalorder %v157, 0
        %v2213 = vand.u32 %v157, 2139095040
        %v2214 = vshrl.u32 %v2213, 23
        %v2215 = vsub.s32 %v2214, 127
        %v2216 = vand.u32 2147483647, %v157
        %v2217 = vand.u32 %v2216, 8388607
        %v2218 = vor.u32 %v2217, 8388608
        %v2219 = vsub.s32 0, %v2218
        %v2220 = vadd.s32 %v2215, 1
        %vm2221 = vcmp.gt.s32.totalorder %v2220, 0
        %v2222 = vsel %vm2221, %v2220, 0
        %v2223 = vshrl.u32 %v2222, 5
        %v2224 = vand.u32 %v2222, 31
        %v2225 = vsub.s32 32, %v2224
        %v2226 = vshrl.u32 683565275, %v2225
        %v2227 = vshll.u32 683565275, %v2224
        %v2228 = vshrl.u32 2475754826, %v2225
        %v2229 = vor.u32 %v2227, %v2228
        %v2230 = vshll.u32 2475754826, %v2224
        %v2231 = vshrl.u32 2131351028, %v2225
        %v2232 = vor.u32 %v2230, %v2231
        %v2233 = vshll.u32 2131351028, %v2224
        %v2234 = vshrl.u32 2102212464, %v2225
        %v2235 = vor.u32 %v2233, %v2234
        %v2236 = vshll.u32 2102212464, %v2224
        %v2237 = vshrl.u32 920167782, %v2225
        %v2238 = vor.u32 %v2236, %v2237
        %v2239 = vshll.u32 920167782, %v2224
        %v2240 = vshrl.u32 1326507024, %v2225
        %v2241 = vor.u32 %v2239, %v2240
        %vm2242 = vcmp.lt.s32.totalorder %v2223, 1
        %vm2243 = vcmp.lt.s32.totalorder %v2223, 2
        %vm2244 = vcmp.lt.s32.totalorder %v2223, 3
        %vm2245 = vcmp.lt.s32.totalorder %v2223, 4
        %v2246 = vsel %vm2242, %v2226, %v2229
        %v2247 = vsel %vm2245, %v2235, 2102212464
        %v2248 = vsel %vm2244, %v2232, %v2247
        %v2249 = vsel %vm2243, %v2246, %v2248
        %v2250 = vsel %vm2242, %v2229, %v2232
        %v2251 = vsel %vm2245, %v2238, 920167782
        %v2252 = vsel %vm2244, %v2235, %v2251
        %v2253 = vsel %vm2243, %v2250, %v2252
        %v2254 = vsel %vm2242, %v2232, %v2235
        %v2255 = vsel %vm2245, %v2241, 1326507024
        %v2256 = vsel %vm2244, %v2238, %v2255
        %v2257 = vsel %vm2243, %v2254, %v2256
        %v2258 = vshll.u32 %v2218, 8
        %v2259 = vmul.u32.u64.compose %v2258, %v2257
        %v2260 = vextract.low.u32 %v2259
        %v2261 = vextract.high.u32 %v2259
        %v2262 = vmul.u32.u64.compose %v2258, %v2253
        %v2263 = vextract.low.u32 %v2262
        %v2264 = vextract.high.u32 %v2262
        %v2265 = vmul.u32 %v2258, %v2249
        %v2266 = vadd.s32 %v2261, %v2263
        %vm2267 = vc.u32 %v2261, %v2263
        %v2268 = vadd.s32 %v2264, 1
        %v2269 = vsel %vm2267, %v2268, %v2264
        %v2270 = vadd.s32 %v2265, %v2269
        %v2271 = vadd.s32 %v2270, 536870912
        %v2272 = vshrl.u32 %v2271, 30
        %v2273 = vshll.u32 %v2272, 30
        %v2274 = vsub.s32 %v2270, %v2273
        %vm2275 = vcmp.lt.s32.totalorder %v2274, 0
        %v2276 = vsub.s32 0, %v2274
        %v2277 = vsel %vm2275, %v2276, %v2274
        %v2278 = vclz %v2277
        %v2279 = vsub.s32 %v2278, 2
        %vm2280 = vcmp.gt.s32.totalorder 0, %v2279
        %v2281 = vsel %vm2280, 0, %v2279
        %v2282 = vsub.s32 32, %v2281
        %v2283 = vshll.u32 %v2274, %v2281
        %v2284 = vshrl.u32 %v2266, %v2282
        %v2285 = vor.u32 %v2283, %v2284
        %v2286 = vsub.s32 4294967266, %v2281
        %v2287 = vadd.s32 %v2286, 127
        %v2288 = vshll.u32 %v2287, 23
        %v2289 = vor.u32 4788187, %v2288
        %v2290 = vand.u32 2147483647, %v2289
        %v2292 = vcvt.s32.f32 %v2285
        %v2293 = vmul.f32 %v2292, %v2290
        %v2294 = vxor.u32 %v2293, 2147483648
        %v2295 = vsel %vm2212, %v2294, %v2293
        %v2296 = vsub.s32 4, %v2272
        %v2297 = vsel %vm2212, %v2296, %v2272
        %v2298 = vsel %vm2211, %v157, %v2295
        %v2299 = vsel %vm2211, 0, %v2297
        %v2300 = vcosq.f32.pop %v2298
        %v2301 = vsinq.f32.pop %v2298
        %vm2302 = vweird.f32 %v157
        %v2303 = vadd.s32 %v2299, 3
        %v2304 = vand.u32 %v2303, 3
        %vm2305 = vcmp.lt.s32.totalorder %v2304, 2
        %vm2306 = vcmp.eq.s32.totalorder %v2304, 0
        %v2307 = vxor.u32 %v2301, 2147483648
        %v2308 = vsel %vm2306, %v2300, %v2307
        %vm2309 = vcmp.eq.s32.totalorder %v2304, 2
        %v2310 = vxor.u32 %v2300, 2147483648
        %v2311 = vsel %vm2309, %v2310, %v2301
        %v2312 = vsel %vm2305, %v2308, %v2311
        %v2313 = vsel %vm2302, nan, %v2312
        %v2314 = vand.u32 2147483647, %v158
        %vm2315 = vcmp.le.f32.partialorder %v2314, 0.7853982
        %vm2316 = vcmp.lt.s32.totalorder %v158, 0
        %v2317 = vand.u32 %v158, 2139095040
        %v2318 = vshrl.u32 %v2317, 23
        %v2319 = vsub.s32 %v2318, 127
        %v2320 = vand.u32 2147483647, %v158
        %v2321 = vand.u32 %v2320, 8388607
        %v2322 = vor.u32 %v2321, 8388608
        %v2323 = vsub.s32 0, %v2322
        %v2324 = vadd.s32 %v2319, 1
        %vm2325 = vcmp.gt.s32.totalorder %v2324, 0
        %v2326 = vsel %vm2325, %v2324, 0
        %v2327 = vshrl.u32 %v2326, 5
        %v2328 = vand.u32 %v2326, 31
        %v2329 = vsub.s32 32, %v2328
        %v2330 = vshrl.u32 683565275, %v2329
        %v2331 = vshll.u32 683565275, %v2328
        %v2332 = vshrl.u32 2475754826, %v2329
        %v2333 = vor.u32 %v2331, %v2332
        %v2334 = vshll.u32 2475754826, %v2328
        %v2335 = vshrl.u32 2131351028, %v2329
        %v2336 = vor.u32 %v2334, %v2335
        %v2337 = vshll.u32 2131351028, %v2328
        %v2338 = vshrl.u32 2102212464, %v2329
        %v2339 = vor.u32 %v2337, %v2338
        %v2340 = vshll.u32 2102212464, %v2328
        %v2341 = vshrl.u32 920167782, %v2329
        %v2342 = vor.u32 %v2340, %v2341
        %v2343 = vshll.u32 920167782, %v2328
        %v2344 = vshrl.u32 1326507024, %v2329
        %v2345 = vor.u32 %v2343, %v2344
        %vm2346 = vcmp.lt.s32.totalorder %v2327, 1
        %vm2347 = vcmp.lt.s32.totalorder %v2327, 2
        %vm2348 = vcmp.lt.s32.totalorder %v2327, 3
        %vm2349 = vcmp.lt.s32.totalorder %v2327, 4
        %v2350 = vsel %vm2346, %v2330, %v2333
        %v2351 = vsel %vm2349, %v2339, 2102212464
        %v2352 = vsel %vm2348, %v2336, %v2351
        %v2353 = vsel %vm2347, %v2350, %v2352
        %v2354 = vsel %vm2346, %v2333, %v2336
        %v2355 = vsel %vm2349, %v2342, 920167782
        %v2356 = vsel %vm2348, %v2339, %v2355
        %v2357 = vsel %vm2347, %v2354, %v2356
        %v2358 = vsel %vm2346, %v2336, %v2339
        %v2359 = vsel %vm2349, %v2345, 1326507024
        %v2360 = vsel %vm2348, %v2342, %v2359
        %v2361 = vsel %vm2347, %v2358, %v2360
        %v2362 = vshll.u32 %v2322, 8
        %v2363 = vmul.u32.u64.compose %v2362, %v2361
        %v2364 = vextract.low.u32 %v2363
        %v2365 = vextract.high.u32 %v2363
        %v2366 = vmul.u32.u64.compose %v2362, %v2357
        %v2367 = vextract.low.u32 %v2366
        %v2368 = vextract.high.u32 %v2366
        %v2369 = vmul.u32 %v2362, %v2353
        %v2370 = vadd.s32 %v2365, %v2367
        %vm2371 = vc.u32 %v2365, %v2367
        %v2372 = vadd.s32 %v2368, 1
        %v2373 = vsel %vm2371, %v2372, %v2368
        %v2374 = vadd.s32 %v2369, %v2373
        %v2375 = vadd.s32 %v2374, 536870912
        %v2376 = vshrl.u32 %v2375, 30
        %v2377 = vshll.u32 %v2376, 30
        %v2378 = vsub.s32 %v2374, %v2377
        %vm2379 = vcmp.lt.s32.totalorder %v2378, 0
        %v2380 = vsub.s32 0, %v2378
        %v2381 = vsel %vm2379, %v2380, %v2378
        %v2382 = vclz %v2381
        %v2383 = vsub.s32 %v2382, 2
        %vm2384 = vcmp.gt.s32.totalorder 0, %v2383
        %v2385 = vsel %vm2384, 0, %v2383
        %v2386 = vsub.s32 32, %v2385
        %v2387 = vshll.u32 %v2378, %v2385
        %v2388 = vshrl.u32 %v2370, %v2386
        %v2389 = vor.u32 %v2387, %v2388
        %v2390 = vsub.s32 4294967266, %v2385
        %v2391 = vadd.s32 %v2390, 127
        %v2392 = vshll.u32 %v2391, 23
        %v2393 = vor.u32 4788187, %v2392
        %v2394 = vand.u32 2147483647, %v2393
        %v2396 = vcvt.s32.f32 %v2389
        %v2397 = vmul.f32 %v2396, %v2394
        %v2398 = vxor.u32 %v2397, 2147483648
        %v2399 = vsel %vm2316, %v2398, %v2397
        %v2400 = vsub.s32 4, %v2376
        %v2401 = vsel %vm2316, %v2400, %v2376
        %v2402 = vsel %vm2315, %v158, %v2399
        %v2403 = vsel %vm2315, 0, %v2401
        %v2404 = vcosq.f32.pop %v2402
        %v2405 = vsinq.f32.pop %v2402
        %vm2406 = vweird.f32 %v158
        %v2407 = vadd.s32 %v2403, 3
        %v2408 = vand.u32 %v2407, 3
        %vm2409 = vcmp.lt.s32.totalorder %v2408, 2
        %vm2410 = vcmp.eq.s32.totalorder %v2408, 0
        %v2411 = vxor.u32 %v2405, 2147483648
        %v2412 = vsel %vm2410, %v2404, %v2411
        %vm2413 = vcmp.eq.s32.totalorder %v2408, 2
        %v2414 = vxor.u32 %v2404, 2147483648
        %v2415 = vsel %vm2413, %v2414, %v2405
        %v2416 = vsel %vm2409, %v2412, %v2415
        %v2417 = vsel %vm2406, nan, %v2416
        %v2418 = vand.u32 2147483647, %v159
        %vm2419 = vcmp.le.f32.partialorder %v2418, 0.7853982
        %vm2420 = vcmp.lt.s32.totalorder %v159, 0
        %v2421 = vand.u32 %v159, 2139095040
        %v2422 = vshrl.u32 %v2421, 23
        %v2423 = vsub.s32 %v2422, 127
        %v2424 = vand.u32 2147483647, %v159
        %v2425 = vand.u32 %v2424, 8388607
        %v2426 = vor.u32 %v2425, 8388608
        %v2427 = vsub.s32 0, %v2426
        %v2428 = vadd.s32 %v2423, 1
        %vm2429 = vcmp.gt.s32.totalorder %v2428, 0
        %v2430 = vsel %vm2429, %v2428, 0
        %v2431 = vshrl.u32 %v2430, 5
        %v2432 = vand.u32 %v2430, 31
        %v2433 = vsub.s32 32, %v2432
        %v2434 = vshrl.u32 683565275, %v2433
        %v2435 = vshll.u32 683565275, %v2432
        %v2436 = vshrl.u32 2475754826, %v2433
        %v2437 = vor.u32 %v2435, %v2436
        %v2438 = vshll.u32 2475754826, %v2432
        %v2439 = vshrl.u32 2131351028, %v2433
        %v2440 = vor.u32 %v2438, %v2439
        %v2441 = vshll.u32 2131351028, %v2432
        %v2442 = vshrl.u32 2102212464, %v2433
        %v2443 = vor.u32 %v2441, %v2442
        %v2444 = vshll.u32 2102212464, %v2432
        %v2445 = vshrl.u32 920167782, %v2433
        %v2446 = vor.u32 %v2444, %v2445
        %v2447 = vshll.u32 920167782, %v2432
        %v2448 = vshrl.u32 1326507024, %v2433
        %v2449 = vor.u32 %v2447, %v2448
        %vm2450 = vcmp.lt.s32.totalorder %v2431, 1
        %vm2451 = vcmp.lt.s32.totalorder %v2431, 2
        %vm2452 = vcmp.lt.s32.totalorder %v2431, 3
        %vm2453 = vcmp.lt.s32.totalorder %v2431, 4
        %v2454 = vsel %vm2450, %v2434, %v2437
        %v2455 = vsel %vm2453, %v2443, 2102212464
        %v2456 = vsel %vm2452, %v2440, %v2455
        %v2457 = vsel %vm2451, %v2454, %v2456
        %v2458 = vsel %vm2450, %v2437, %v2440
        %v2459 = vsel %vm2453, %v2446, 920167782
        %v2460 = vsel %vm2452, %v2443, %v2459
        %v2461 = vsel %vm2451, %v2458, %v2460
        %v2462 = vsel %vm2450, %v2440, %v2443
        %v2463 = vsel %vm2453, %v2449, 1326507024
        %v2464 = vsel %vm2452, %v2446, %v2463
        %v2465 = vsel %vm2451, %v2462, %v2464
        %v2466 = vshll.u32 %v2426, 8
        %v2467 = vmul.u32.u64.compose %v2466, %v2465
        %v2468 = vextract.low.u32 %v2467
        %v2469 = vextract.high.u32 %v2467
        %v2470 = vmul.u32.u64.compose %v2466, %v2461
        %v2471 = vextract.low.u32 %v2470
        %v2472 = vextract.high.u32 %v2470
        %v2473 = vmul.u32 %v2466, %v2457
        %v2474 = vadd.s32 %v2469, %v2471
        %vm2475 = vc.u32 %v2469, %v2471
        %v2476 = vadd.s32 %v2472, 1
        %v2477 = vsel %vm2475, %v2476, %v2472
        %v2478 = vadd.s32 %v2473, %v2477
        %v2479 = vadd.s32 %v2478, 536870912
        %v2480 = vshrl.u32 %v2479, 30
        %v2481 = vshll.u32 %v2480, 30
        %v2482 = vsub.s32 %v2478, %v2481
        %vm2483 = vcmp.lt.s32.totalorder %v2482, 0
        %v2484 = vsub.s32 0, %v2482
        %v2485 = vsel %vm2483, %v2484, %v2482
        %v2486 = vclz %v2485
        %v2487 = vsub.s32 %v2486, 2
        %vm2488 = vcmp.gt.s32.totalorder 0, %v2487
        %v2489 = vsel %vm2488, 0, %v2487
        %v2490 = vsub.s32 32, %v2489
        %v2491 = vshll.u32 %v2482, %v2489
        %v2492 = vshrl.u32 %v2474, %v2490
        %v2493 = vor.u32 %v2491, %v2492
        %v2494 = vsub.s32 4294967266, %v2489
        %v2495 = vadd.s32 %v2494, 127
        %v2496 = vshll.u32 %v2495, 23
        %v2497 = vor.u32 4788187, %v2496
        %v2498 = vand.u32 2147483647, %v2497
        %v2500 = vcvt.s32.f32 %v2493
        %v2501 = vmul.f32 %v2500, %v2498
        %v2502 = vxor.u32 %v2501, 2147483648
        %v2503 = vsel %vm2420, %v2502, %v2501
        %v2504 = vsub.s32 4, %v2480
        %v2505 = vsel %vm2420, %v2504, %v2480
        %v2506 = vsel %vm2419, %v159, %v2503
        %v2507 = vsel %vm2419, 0, %v2505
        %v2508 = vcosq.f32.pop %v2506
        %v2509 = vsinq.f32.pop %v2506
        %vm2510 = vweird.f32 %v159
        %v2511 = vadd.s32 %v2507, 3
        %v2512 = vand.u32 %v2511, 3
        %vm2513 = vcmp.lt.s32.totalorder %v2512, 2
        %vm2514 = vcmp.eq.s32.totalorder %v2512, 0
        %v2515 = vxor.u32 %v2509, 2147483648
        %v2516 = vsel %vm2514, %v2508, %v2515
        %vm2517 = vcmp.eq.s32.totalorder %v2512, 2
        %v2518 = vxor.u32 %v2508, 2147483648
        %v2519 = vsel %vm2517, %v2518, %v2509
        %v2520 = vsel %vm2513, %v2516, %v2519
        %v2521 = vsel %vm2510, nan, %v2520
        %v2522 = vand.u32 2147483647, %v160
        %vm2523 = vcmp.le.f32.partialorder %v2522, 0.7853982
        %vm2524 = vcmp.lt.s32.totalorder %v160, 0
        %v2525 = vand.u32 %v160, 2139095040
        %v2526 = vshrl.u32 %v2525, 23
        %v2527 = vsub.s32 %v2526, 127
        %v2528 = vand.u32 2147483647, %v160
        %v2529 = vand.u32 %v2528, 8388607
        %v2530 = vor.u32 %v2529, 8388608
        %v2531 = vsub.s32 0, %v2530
        %v2532 = vadd.s32 %v2527, 1
        %vm2533 = vcmp.gt.s32.totalorder %v2532, 0
        %v2534 = vsel %vm2533, %v2532, 0
        %v2535 = vshrl.u32 %v2534, 5
        %v2536 = vand.u32 %v2534, 31
        %v2537 = vsub.s32 32, %v2536
        %v2538 = vshrl.u32 683565275, %v2537
        %v2539 = vshll.u32 683565275, %v2536
        %v2540 = vshrl.u32 2475754826, %v2537
        %v2541 = vor.u32 %v2539, %v2540
        %v2542 = vshll.u32 2475754826, %v2536
        %v2543 = vshrl.u32 2131351028, %v2537
        %v2544 = vor.u32 %v2542, %v2543
        %v2545 = vshll.u32 2131351028, %v2536
        %v2546 = vshrl.u32 2102212464, %v2537
        %v2547 = vor.u32 %v2545, %v2546
        %v2548 = vshll.u32 2102212464, %v2536
        %v2549 = vshrl.u32 920167782, %v2537
        %v2550 = vor.u32 %v2548, %v2549
        %v2551 = vshll.u32 920167782, %v2536
        %v2552 = vshrl.u32 1326507024, %v2537
        %v2553 = vor.u32 %v2551, %v2552
        %vm2554 = vcmp.lt.s32.totalorder %v2535, 1
        %vm2555 = vcmp.lt.s32.totalorder %v2535, 2
        %vm2556 = vcmp.lt.s32.totalorder %v2535, 3
        %vm2557 = vcmp.lt.s32.totalorder %v2535, 4
        %v2558 = vsel %vm2554, %v2538, %v2541
        %v2559 = vsel %vm2557, %v2547, 2102212464
        %v2560 = vsel %vm2556, %v2544, %v2559
        %v2561 = vsel %vm2555, %v2558, %v2560
        %v2562 = vsel %vm2554, %v2541, %v2544
        %v2563 = vsel %vm2557, %v2550, 920167782
        %v2564 = vsel %vm2556, %v2547, %v2563
        %v2565 = vsel %vm2555, %v2562, %v2564
        %v2566 = vsel %vm2554, %v2544, %v2547
        %v2567 = vsel %vm2557, %v2553, 1326507024
        %v2568 = vsel %vm2556, %v2550, %v2567
        %v2569 = vsel %vm2555, %v2566, %v2568
        %v2570 = vshll.u32 %v2530, 8
        %v2571 = vmul.u32.u64.compose %v2570, %v2569
        %v2572 = vextract.low.u32 %v2571
        %v2573 = vextract.high.u32 %v2571
        %v2574 = vmul.u32.u64.compose %v2570, %v2565
        %v2575 = vextract.low.u32 %v2574
        %v2576 = vextract.high.u32 %v2574
        %v2577 = vmul.u32 %v2570, %v2561
        %v2578 = vadd.s32 %v2573, %v2575
        %vm2579 = vc.u32 %v2573, %v2575
        %v2580 = vadd.s32 %v2576, 1
        %v2581 = vsel %vm2579, %v2580, %v2576
        %v2582 = vadd.s32 %v2577, %v2581
        %v2583 = vadd.s32 %v2582, 536870912
        %v2584 = vshrl.u32 %v2583, 30
        %v2585 = vshll.u32 %v2584, 30
        %v2586 = vsub.s32 %v2582, %v2585
        %vm2587 = vcmp.lt.s32.totalorder %v2586, 0
        %v2588 = vsub.s32 0, %v2586
        %v2589 = vsel %vm2587, %v2588, %v2586
        %v2590 = vclz %v2589
        %v2591 = vsub.s32 %v2590, 2
        %vm2592 = vcmp.gt.s32.totalorder 0, %v2591
        %v2593 = vsel %vm2592, 0, %v2591
        %v2594 = vsub.s32 32, %v2593
        %v2595 = vshll.u32 %v2586, %v2593
        %v2596 = vshrl.u32 %v2578, %v2594
        %v2597 = vor.u32 %v2595, %v2596
        %v2598 = vsub.s32 4294967266, %v2593
        %v2599 = vadd.s32 %v2598, 127
        %v2600 = vshll.u32 %v2599, 23
        %v2601 = vor.u32 4788187, %v2600
        %v2602 = vand.u32 2147483647, %v2601
        %v2604 = vcvt.s32.f32 %v2597
        %v2605 = vmul.f32 %v2604, %v2602
        %v2606 = vxor.u32 %v2605, 2147483648
        %v2607 = vsel %vm2524, %v2606, %v2605
        %v2608 = vsub.s32 4, %v2584
        %v2609 = vsel %vm2524, %v2608, %v2584
        %v2610 = vsel %vm2523, %v160, %v2607
        %v2611 = vsel %vm2523, 0, %v2609
        %v2612 = vcosq.f32.pop %v2610
        %v2613 = vsinq.f32.pop %v2610
        %vm2614 = vweird.f32 %v160
        %v2615 = vadd.s32 %v2611, 3
        %v2616 = vand.u32 %v2615, 3
        %vm2617 = vcmp.lt.s32.totalorder %v2616, 2
        %vm2618 = vcmp.eq.s32.totalorder %v2616, 0
        %v2619 = vxor.u32 %v2613, 2147483648
        %v2620 = vsel %vm2618, %v2612, %v2619
        %vm2621 = vcmp.eq.s32.totalorder %v2616, 2
        %v2622 = vxor.u32 %v2612, 2147483648
        %v2623 = vsel %vm2621, %v2622, %v2613
        %v2624 = vsel %vm2617, %v2620, %v2623
        %v2625 = vsel %vm2614, nan, %v2624
        %v2626 = vand.u32 2147483647, %v161
        %vm2627 = vcmp.le.f32.partialorder %v2626, 0.7853982
        %vm2628 = vcmp.lt.s32.totalorder %v161, 0
        %v2629 = vand.u32 %v161, 2139095040
        %v2630 = vshrl.u32 %v2629, 23
        %v2631 = vsub.s32 %v2630, 127
        %v2632 = vand.u32 2147483647, %v161
        %v2633 = vand.u32 %v2632, 8388607
        %v2634 = vor.u32 %v2633, 8388608
        %v2635 = vsub.s32 0, %v2634
        %v2636 = vadd.s32 %v2631, 1
        %vm2637 = vcmp.gt.s32.totalorder %v2636, 0
        %v2638 = vsel %vm2637, %v2636, 0
        %v2639 = vshrl.u32 %v2638, 5
        %v2640 = vand.u32 %v2638, 31
        %v2641 = vsub.s32 32, %v2640
        %v2642 = vshrl.u32 683565275, %v2641
        %v2643 = vshll.u32 683565275, %v2640
        %v2644 = vshrl.u32 2475754826, %v2641
        %v2645 = vor.u32 %v2643, %v2644
        %v2646 = vshll.u32 2475754826, %v2640
        %v2647 = vshrl.u32 2131351028, %v2641
        %v2648 = vor.u32 %v2646, %v2647
        %v2649 = vshll.u32 2131351028, %v2640
        %v2650 = vshrl.u32 2102212464, %v2641
        %v2651 = vor.u32 %v2649, %v2650
        %v2652 = vshll.u32 2102212464, %v2640
        %v2653 = vshrl.u32 920167782, %v2641
        %v2654 = vor.u32 %v2652, %v2653
        %v2655 = vshll.u32 920167782, %v2640
        %v2656 = vshrl.u32 1326507024, %v2641
        %v2657 = vor.u32 %v2655, %v2656
        %vm2658 = vcmp.lt.s32.totalorder %v2639, 1
        %vm2659 = vcmp.lt.s32.totalorder %v2639, 2
        %vm2660 = vcmp.lt.s32.totalorder %v2639, 3
        %vm2661 = vcmp.lt.s32.totalorder %v2639, 4
        %v2662 = vsel %vm2658, %v2642, %v2645
        %v2663 = vsel %vm2661, %v2651, 2102212464
        %v2664 = vsel %vm2660, %v2648, %v2663
        %v2665 = vsel %vm2659, %v2662, %v2664
        %v2666 = vsel %vm2658, %v2645, %v2648
        %v2667 = vsel %vm2661, %v2654, 920167782
        %v2668 = vsel %vm2660, %v2651, %v2667
        %v2669 = vsel %vm2659, %v2666, %v2668
        %v2670 = vsel %vm2658, %v2648, %v2651
        %v2671 = vsel %vm2661, %v2657, 1326507024
        %v2672 = vsel %vm2660, %v2654, %v2671
        %v2673 = vsel %vm2659, %v2670, %v2672
        %v2674 = vshll.u32 %v2634, 8
        %v2675 = vmul.u32.u64.compose %v2674, %v2673
        %v2676 = vextract.low.u32 %v2675
        %v2677 = vextract.high.u32 %v2675
        %v2678 = vmul.u32.u64.compose %v2674, %v2669
        %v2679 = vextract.low.u32 %v2678
        %v2680 = vextract.high.u32 %v2678
        %v2681 = vmul.u32 %v2674, %v2665
        %v2682 = vadd.s32 %v2677, %v2679
        %vm2683 = vc.u32 %v2677, %v2679
        %v2684 = vadd.s32 %v2680, 1
        %v2685 = vsel %vm2683, %v2684, %v2680
        %v2686 = vadd.s32 %v2681, %v2685
        %v2687 = vadd.s32 %v2686, 536870912
        %v2688 = vshrl.u32 %v2687, 30
        %v2689 = vshll.u32 %v2688, 30
        %v2690 = vsub.s32 %v2686, %v2689
        %vm2691 = vcmp.lt.s32.totalorder %v2690, 0
        %v2692 = vsub.s32 0, %v2690
        %v2693 = vsel %vm2691, %v2692, %v2690
        %v2694 = vclz %v2693
        %v2695 = vsub.s32 %v2694, 2
        %vm2696 = vcmp.gt.s32.totalorder 0, %v2695
        %v2697 = vsel %vm2696, 0, %v2695
        %v2698 = vsub.s32 32, %v2697
        %v2699 = vshll.u32 %v2690, %v2697
        %v2700 = vshrl.u32 %v2682, %v2698
        %v2701 = vor.u32 %v2699, %v2700
        %v2702 = vsub.s32 4294967266, %v2697
        %v2703 = vadd.s32 %v2702, 127
        %v2704 = vshll.u32 %v2703, 23
        %v2705 = vor.u32 4788187, %v2704
        %v2706 = vand.u32 2147483647, %v2705
        %v2708 = vcvt.s32.f32 %v2701
        %v2709 = vmul.f32 %v2708, %v2706
        %v2710 = vxor.u32 %v2709, 2147483648
        %v2711 = vsel %vm2628, %v2710, %v2709
        %v2712 = vsub.s32 4, %v2688
        %v2713 = vsel %vm2628, %v2712, %v2688
        %v2714 = vsel %vm2627, %v161, %v2711
        %v2715 = vsel %vm2627, 0, %v2713
        %v2716 = vcosq.f32.pop %v2714
        %v2717 = vsinq.f32.pop %v2714
        %vm2718 = vweird.f32 %v161
        %v2719 = vadd.s32 %v2715, 3
        %v2720 = vand.u32 %v2719, 3
        %vm2721 = vcmp.lt.s32.totalorder %v2720, 2
        %vm2722 = vcmp.eq.s32.totalorder %v2720, 0
        %v2723 = vxor.u32 %v2717, 2147483648
        %v2724 = vsel %vm2722, %v2716, %v2723
        %vm2725 = vcmp.eq.s32.totalorder %v2720, 2
        %v2726 = vxor.u32 %v2716, 2147483648
        %v2727 = vsel %vm2725, %v2726, %v2717
        %v2728 = vsel %vm2721, %v2724, %v2727
        %v2729 = vsel %vm2718, nan, %v2728
        %v2730 = vand.u32 2147483647, %v162
        %vm2731 = vcmp.le.f32.partialorder %v2730, 0.7853982
        %vm2732 = vcmp.lt.s32.totalorder %v162, 0
        %v2733 = vand.u32 %v162, 2139095040
        %v2734 = vshrl.u32 %v2733, 23
        %v2735 = vsub.s32 %v2734, 127
        %v2736 = vand.u32 2147483647, %v162
        %v2737 = vand.u32 %v2736, 8388607
        %v2738 = vor.u32 %v2737, 8388608
        %v2739 = vsub.s32 0, %v2738
        %v2740 = vadd.s32 %v2735, 1
        %vm2741 = vcmp.gt.s32.totalorder %v2740, 0
        %v2742 = vsel %vm2741, %v2740, 0
        %v2743 = vshrl.u32 %v2742, 5
        %v2744 = vand.u32 %v2742, 31
        %v2745 = vsub.s32 32, %v2744
        %v2746 = vshrl.u32 683565275, %v2745
        %v2747 = vshll.u32 683565275, %v2744
        %v2748 = vshrl.u32 2475754826, %v2745
        %v2749 = vor.u32 %v2747, %v2748
        %v2750 = vshll.u32 2475754826, %v2744
        %v2751 = vshrl.u32 2131351028, %v2745
        %v2752 = vor.u32 %v2750, %v2751
        %v2753 = vshll.u32 2131351028, %v2744
        %v2754 = vshrl.u32 2102212464, %v2745
        %v2755 = vor.u32 %v2753, %v2754
        %v2756 = vshll.u32 2102212464, %v2744
        %v2757 = vshrl.u32 920167782, %v2745
        %v2758 = vor.u32 %v2756, %v2757
        %v2759 = vshll.u32 920167782, %v2744
        %v2760 = vshrl.u32 1326507024, %v2745
        %v2761 = vor.u32 %v2759, %v2760
        %vm2762 = vcmp.lt.s32.totalorder %v2743, 1
        %vm2763 = vcmp.lt.s32.totalorder %v2743, 2
        %vm2764 = vcmp.lt.s32.totalorder %v2743, 3
        %vm2765 = vcmp.lt.s32.totalorder %v2743, 4
        %v2766 = vsel %vm2762, %v2746, %v2749
        %v2767 = vsel %vm2765, %v2755, 2102212464
        %v2768 = vsel %vm2764, %v2752, %v2767
        %v2769 = vsel %vm2763, %v2766, %v2768
        %v2770 = vsel %vm2762, %v2749, %v2752
        %v2771 = vsel %vm2765, %v2758, 920167782
        %v2772 = vsel %vm2764, %v2755, %v2771
        %v2773 = vsel %vm2763, %v2770, %v2772
        %v2774 = vsel %vm2762, %v2752, %v2755
        %v2775 = vsel %vm2765, %v2761, 1326507024
        %v2776 = vsel %vm2764, %v2758, %v2775
        %v2777 = vsel %vm2763, %v2774, %v2776
        %v2778 = vshll.u32 %v2738, 8
        %v2779 = vmul.u32.u64.compose %v2778, %v2777
        %v2780 = vextract.low.u32 %v2779
        %v2781 = vextract.high.u32 %v2779
        %v2782 = vmul.u32.u64.compose %v2778, %v2773
        %v2783 = vextract.low.u32 %v2782
        %v2784 = vextract.high.u32 %v2782
        %v2785 = vmul.u32 %v2778, %v2769
        %v2786 = vadd.s32 %v2781, %v2783
        %vm2787 = vc.u32 %v2781, %v2783
        %v2788 = vadd.s32 %v2784, 1
        %v2789 = vsel %vm2787, %v2788, %v2784
        %v2790 = vadd.s32 %v2785, %v2789
        %v2791 = vadd.s32 %v2790, 536870912
        %v2792 = vshrl.u32 %v2791, 30
        %v2793 = vshll.u32 %v2792, 30
        %v2794 = vsub.s32 %v2790, %v2793
        %vm2795 = vcmp.lt.s32.totalorder %v2794, 0
        %v2796 = vsub.s32 0, %v2794
        %v2797 = vsel %vm2795, %v2796, %v2794
        %v2798 = vclz %v2797
        %v2799 = vsub.s32 %v2798, 2
        %vm2800 = vcmp.gt.s32.totalorder 0, %v2799
        %v2801 = vsel %vm2800, 0, %v2799
        %v2802 = vsub.s32 32, %v2801
        %v2803 = vshll.u32 %v2794, %v2801
        %v2804 = vshrl.u32 %v2786, %v2802
        %v2805 = vor.u32 %v2803, %v2804
        %v2806 = vsub.s32 4294967266, %v2801
        %v2807 = vadd.s32 %v2806, 127
        %v2808 = vshll.u32 %v2807, 23
        %v2809 = vor.u32 4788187, %v2808
        %v2810 = vand.u32 2147483647, %v2809
        %v2812 = vcvt.s32.f32 %v2805
        %v2813 = vmul.f32 %v2812, %v2810
        %v2814 = vxor.u32 %v2813, 2147483648
        %v2815 = vsel %vm2732, %v2814, %v2813
        %v2816 = vsub.s32 4, %v2792
        %v2817 = vsel %vm2732, %v2816, %v2792
        %v2818 = vsel %vm2731, %v162, %v2815
        %v2819 = vsel %vm2731, 0, %v2817
        %v2820 = vcosq.f32.pop %v2818
        %v2821 = vsinq.f32.pop %v2818
        %vm2822 = vweird.f32 %v162
        %v2823 = vadd.s32 %v2819, 3
        %v2824 = vand.u32 %v2823, 3
        %vm2825 = vcmp.lt.s32.totalorder %v2824, 2
        %vm2826 = vcmp.eq.s32.totalorder %v2824, 0
        %v2827 = vxor.u32 %v2821, 2147483648
        %v2828 = vsel %vm2826, %v2820, %v2827
        %vm2829 = vcmp.eq.s32.totalorder %v2824, 2
        %v2830 = vxor.u32 %v2820, 2147483648
        %v2831 = vsel %vm2829, %v2830, %v2821
        %v2832 = vsel %vm2825, %v2828, %v2831
        %v2833 = vsel %vm2822, nan, %v2832
        %v2834 = vand.u32 2147483647, %v163
        %vm2835 = vcmp.le.f32.partialorder %v2834, 0.7853982
        %vm2836 = vcmp.lt.s32.totalorder %v163, 0
        %v2837 = vand.u32 %v163, 2139095040
        %v2838 = vshrl.u32 %v2837, 23
        %v2839 = vsub.s32 %v2838, 127
        %v2840 = vand.u32 2147483647, %v163
        %v2841 = vand.u32 %v2840, 8388607
        %v2842 = vor.u32 %v2841, 8388608
        %v2843 = vsub.s32 0, %v2842
        %v2844 = vadd.s32 %v2839, 1
        %vm2845 = vcmp.gt.s32.totalorder %v2844, 0
        %v2846 = vsel %vm2845, %v2844, 0
        %v2847 = vshrl.u32 %v2846, 5
        %v2848 = vand.u32 %v2846, 31
        %v2849 = vsub.s32 32, %v2848
        %v2850 = vshrl.u32 683565275, %v2849
        %v2851 = vshll.u32 683565275, %v2848
        %v2852 = vshrl.u32 2475754826, %v2849
        %v2853 = vor.u32 %v2851, %v2852
        %v2854 = vshll.u32 2475754826, %v2848
        %v2855 = vshrl.u32 2131351028, %v2849
        %v2856 = vor.u32 %v2854, %v2855
        %v2857 = vshll.u32 2131351028, %v2848
        %v2858 = vshrl.u32 2102212464, %v2849
        %v2859 = vor.u32 %v2857, %v2858
        %v2860 = vshll.u32 2102212464, %v2848
        %v2861 = vshrl.u32 920167782, %v2849
        %v2862 = vor.u32 %v2860, %v2861
        %v2863 = vshll.u32 920167782, %v2848
        %v2864 = vshrl.u32 1326507024, %v2849
        %v2865 = vor.u32 %v2863, %v2864
        %vm2866 = vcmp.lt.s32.totalorder %v2847, 1
        %vm2867 = vcmp.lt.s32.totalorder %v2847, 2
        %vm2868 = vcmp.lt.s32.totalorder %v2847, 3
        %vm2869 = vcmp.lt.s32.totalorder %v2847, 4
        %v2870 = vsel %vm2866, %v2850, %v2853
        %v2871 = vsel %vm2869, %v2859, 2102212464
        %v2872 = vsel %vm2868, %v2856, %v2871
        %v2873 = vsel %vm2867, %v2870, %v2872
        %v2874 = vsel %vm2866, %v2853, %v2856
        %v2875 = vsel %vm2869, %v2862, 920167782
        %v2876 = vsel %vm2868, %v2859, %v2875
        %v2877 = vsel %vm2867, %v2874, %v2876
        %v2878 = vsel %vm2866, %v2856, %v2859
        %v2879 = vsel %vm2869, %v2865, 1326507024
        %v2880 = vsel %vm2868, %v2862, %v2879
        %v2881 = vsel %vm2867, %v2878, %v2880
        %v2882 = vshll.u32 %v2842, 8
        %v2883 = vmul.u32.u64.compose %v2882, %v2881
        %v2884 = vextract.low.u32 %v2883
        %v2885 = vextract.high.u32 %v2883
        %v2886 = vmul.u32.u64.compose %v2882, %v2877
        %v2887 = vextract.low.u32 %v2886
        %v2888 = vextract.high.u32 %v2886
        %v2889 = vmul.u32 %v2882, %v2873
        %v2890 = vadd.s32 %v2885, %v2887
        %vm2891 = vc.u32 %v2885, %v2887
        %v2892 = vadd.s32 %v2888, 1
        %v2893 = vsel %vm2891, %v2892, %v2888
        %v2894 = vadd.s32 %v2889, %v2893
        %v2895 = vadd.s32 %v2894, 536870912
        %v2896 = vshrl.u32 %v2895, 30
        %v2897 = vshll.u32 %v2896, 30
        %v2898 = vsub.s32 %v2894, %v2897
        %vm2899 = vcmp.lt.s32.totalorder %v2898, 0
        %v2900 = vsub.s32 0, %v2898
        %v2901 = vsel %vm2899, %v2900, %v2898
        %v2902 = vclz %v2901
        %v2903 = vsub.s32 %v2902, 2
        %vm2904 = vcmp.gt.s32.totalorder 0, %v2903
        %v2905 = vsel %vm2904, 0, %v2903
        %v2906 = vsub.s32 32, %v2905
        %v2907 = vshll.u32 %v2898, %v2905
        %v2908 = vshrl.u32 %v2890, %v2906
        %v2909 = vor.u32 %v2907, %v2908
        %v2910 = vsub.s32 4294967266, %v2905
        %v2911 = vadd.s32 %v2910, 127
        %v2912 = vshll.u32 %v2911, 23
        %v2913 = vor.u32 4788187, %v2912
        %v2914 = vand.u32 2147483647, %v2913
        %v2916 = vcvt.s32.f32 %v2909
        %v2917 = vmul.f32 %v2916, %v2914
        %v2918 = vxor.u32 %v2917, 2147483648
        %v2919 = vsel %vm2836, %v2918, %v2917
        %v2920 = vsub.s32 4, %v2896
        %v2921 = vsel %vm2836, %v2920, %v2896
        %v2922 = vsel %vm2835, %v163, %v2919
        %v2923 = vsel %vm2835, 0, %v2921
        %v2924 = vcosq.f32.pop %v2922
        %v2925 = vsinq.f32.pop %v2922
        %vm2926 = vweird.f32 %v163
        %v2927 = vadd.s32 %v2923, 3
        %v2928 = vand.u32 %v2927, 3
        %vm2929 = vcmp.lt.s32.totalorder %v2928, 2
        %vm2930 = vcmp.eq.s32.totalorder %v2928, 0
        %v2931 = vxor.u32 %v2925, 2147483648
        %v2932 = vsel %vm2930, %v2924, %v2931
        %vm2933 = vcmp.eq.s32.totalorder %v2928, 2
        %v2934 = vxor.u32 %v2924, 2147483648
        %v2935 = vsel %vm2933, %v2934, %v2925
        %v2936 = vsel %vm2929, %v2932, %v2935
        %v2937 = vsel %vm2926, nan, %v2936
        %v2938 = vand.u32 2147483647, %v164
        %vm2939 = vcmp.le.f32.partialorder %v2938, 0.7853982
        %vm2940 = vcmp.lt.s32.totalorder %v164, 0
        %v2941 = vand.u32 %v164, 2139095040
        %v2942 = vshrl.u32 %v2941, 23
        %v2943 = vsub.s32 %v2942, 127
        %v2944 = vand.u32 2147483647, %v164
        %v2945 = vand.u32 %v2944, 8388607
        %v2946 = vor.u32 %v2945, 8388608
        %v2947 = vsub.s32 0, %v2946
        %v2948 = vadd.s32 %v2943, 1
        %vm2949 = vcmp.gt.s32.totalorder %v2948, 0
        %v2950 = vsel %vm2949, %v2948, 0
        %v2951 = vshrl.u32 %v2950, 5
        %v2952 = vand.u32 %v2950, 31
        %v2953 = vsub.s32 32, %v2952
        %v2954 = vshrl.u32 683565275, %v2953
        %v2955 = vshll.u32 683565275, %v2952
        %v2956 = vshrl.u32 2475754826, %v2953
        %v2957 = vor.u32 %v2955, %v2956
        %v2958 = vshll.u32 2475754826, %v2952
        %v2959 = vshrl.u32 2131351028, %v2953
        %v2960 = vor.u32 %v2958, %v2959
        %v2961 = vshll.u32 2131351028, %v2952
        %v2962 = vshrl.u32 2102212464, %v2953
        %v2963 = vor.u32 %v2961, %v2962
        %v2964 = vshll.u32 2102212464, %v2952
        %v2965 = vshrl.u32 920167782, %v2953
        %v2966 = vor.u32 %v2964, %v2965
        %v2967 = vshll.u32 920167782, %v2952
        %v2968 = vshrl.u32 1326507024, %v2953
        %v2969 = vor.u32 %v2967, %v2968
        %vm2970 = vcmp.lt.s32.totalorder %v2951, 1
        %vm2971 = vcmp.lt.s32.totalorder %v2951, 2
        %vm2972 = vcmp.lt.s32.totalorder %v2951, 3
        %vm2973 = vcmp.lt.s32.totalorder %v2951, 4
        %v2974 = vsel %vm2970, %v2954, %v2957
        %v2975 = vsel %vm2973, %v2963, 2102212464
        %v2976 = vsel %vm2972, %v2960, %v2975
        %v2977 = vsel %vm2971, %v2974, %v2976
        %v2978 = vsel %vm2970, %v2957, %v2960
        %v2979 = vsel %vm2973, %v2966, 920167782
        %v2980 = vsel %vm2972, %v2963, %v2979
        %v2981 = vsel %vm2971, %v2978, %v2980
        %v2982 = vsel %vm2970, %v2960, %v2963
        %v2983 = vsel %vm2973, %v2969, 1326507024
        %v2984 = vsel %vm2972, %v2966, %v2983
        %v2985 = vsel %vm2971, %v2982, %v2984
        %v2986 = vshll.u32 %v2946, 8
        %v2987 = vmul.u32.u64.compose %v2986, %v2985
        %v2988 = vextract.low.u32 %v2987
        %v2989 = vextract.high.u32 %v2987
        %v2990 = vmul.u32.u64.compose %v2986, %v2981
        %v2991 = vextract.low.u32 %v2990
        %v2992 = vextract.high.u32 %v2990
        %v2993 = vmul.u32 %v2986, %v2977
        %v2994 = vadd.s32 %v2989, %v2991
        %vm2995 = vc.u32 %v2989, %v2991
        %v2996 = vadd.s32 %v2992, 1
        %v2997 = vsel %vm2995, %v2996, %v2992
        %v2998 = vadd.s32 %v2993, %v2997
        %v2999 = vadd.s32 %v2998, 536870912
        %v3000 = vshrl.u32 %v2999, 30
        %v3001 = vshll.u32 %v3000, 30
        %v3002 = vsub.s32 %v2998, %v3001
        %vm3003 = vcmp.lt.s32.totalorder %v3002, 0
        %v3004 = vsub.s32 0, %v3002
        %v3005 = vsel %vm3003, %v3004, %v3002
        %v3006 = vclz %v3005
        %v3007 = vsub.s32 %v3006, 2
        %vm3008 = vcmp.gt.s32.totalorder 0, %v3007
        %v3009 = vsel %vm3008, 0, %v3007
        %v3010 = vsub.s32 32, %v3009
        %v3011 = vshll.u32 %v3002, %v3009
        %v3012 = vshrl.u32 %v2994, %v3010
        %v3013 = vor.u32 %v3011, %v3012
        %v3014 = vsub.s32 4294967266, %v3009
        %v3015 = vadd.s32 %v3014, 127
        %v3016 = vshll.u32 %v3015, 23
        %v3017 = vor.u32 4788187, %v3016
        %v3018 = vand.u32 2147483647, %v3017
        %v3020 = vcvt.s32.f32 %v3013
        %v3021 = vmul.f32 %v3020, %v3018
        %v3022 = vxor.u32 %v3021, 2147483648
        %v3023 = vsel %vm2940, %v3022, %v3021
        %v3024 = vsub.s32 4, %v3000
        %v3025 = vsel %vm2940, %v3024, %v3000
        %v3026 = vsel %vm2939, %v164, %v3023
        %v3027 = vsel %vm2939, 0, %v3025
        %v3028 = vcosq.f32.pop %v3026
        %v3029 = vsinq.f32.pop %v3026
        %vm3030 = vweird.f32 %v164
        %v3031 = vadd.s32 %v3027, 3
        %v3032 = vand.u32 %v3031, 3
        %vm3033 = vcmp.lt.s32.totalorder %v3032, 2
        %vm3034 = vcmp.eq.s32.totalorder %v3032, 0
        %v3035 = vxor.u32 %v3029, 2147483648
        %v3036 = vsel %vm3034, %v3028, %v3035
        %vm3037 = vcmp.eq.s32.totalorder %v3032, 2
        %v3038 = vxor.u32 %v3028, 2147483648
        %v3039 = vsel %vm3037, %v3038, %v3029
        %v3040 = vsel %vm3033, %v3036, %v3039
        %v3041 = vsel %vm3030, nan, %v3040
        %v3042 = vand.u32 2147483647, %v165
        %vm3043 = vcmp.le.f32.partialorder %v3042, 0.7853982
        %vm3044 = vcmp.lt.s32.totalorder %v165, 0
        %v3045 = vand.u32 %v165, 2139095040
        %v3046 = vshrl.u32 %v3045, 23
        %v3047 = vsub.s32 %v3046, 127
        %v3048 = vand.u32 2147483647, %v165
        %v3049 = vand.u32 %v3048, 8388607
        %v3050 = vor.u32 %v3049, 8388608
        %v3051 = vsub.s32 0, %v3050
        %v3052 = vadd.s32 %v3047, 1
        %vm3053 = vcmp.gt.s32.totalorder %v3052, 0
        %v3054 = vsel %vm3053, %v3052, 0
        %v3055 = vshrl.u32 %v3054, 5
        %v3056 = vand.u32 %v3054, 31
        %v3057 = vsub.s32 32, %v3056
        %v3058 = vshrl.u32 683565275, %v3057
        %v3059 = vshll.u32 683565275, %v3056
        %v3060 = vshrl.u32 2475754826, %v3057
        %v3061 = vor.u32 %v3059, %v3060
        %v3062 = vshll.u32 2475754826, %v3056
        %v3063 = vshrl.u32 2131351028, %v3057
        %v3064 = vor.u32 %v3062, %v3063
        %v3065 = vshll.u32 2131351028, %v3056
        %v3066 = vshrl.u32 2102212464, %v3057
        %v3067 = vor.u32 %v3065, %v3066
        %v3068 = vshll.u32 2102212464, %v3056
        %v3069 = vshrl.u32 920167782, %v3057
        %v3070 = vor.u32 %v3068, %v3069
        %v3071 = vshll.u32 920167782, %v3056
        %v3072 = vshrl.u32 1326507024, %v3057
        %v3073 = vor.u32 %v3071, %v3072
        %vm3074 = vcmp.lt.s32.totalorder %v3055, 1
        %vm3075 = vcmp.lt.s32.totalorder %v3055, 2
        %vm3076 = vcmp.lt.s32.totalorder %v3055, 3
        %vm3077 = vcmp.lt.s32.totalorder %v3055, 4
        %v3078 = vsel %vm3074, %v3058, %v3061
        %v3079 = vsel %vm3077, %v3067, 2102212464
        %v3080 = vsel %vm3076, %v3064, %v3079
        %v3081 = vsel %vm3075, %v3078, %v3080
        %v3082 = vsel %vm3074, %v3061, %v3064
        %v3083 = vsel %vm3077, %v3070, 920167782
        %v3084 = vsel %vm3076, %v3067, %v3083
        %v3085 = vsel %vm3075, %v3082, %v3084
        %v3086 = vsel %vm3074, %v3064, %v3067
        %v3087 = vsel %vm3077, %v3073, 1326507024
        %v3088 = vsel %vm3076, %v3070, %v3087
        %v3089 = vsel %vm3075, %v3086, %v3088
        %v3090 = vshll.u32 %v3050, 8
        %v3091 = vmul.u32.u64.compose %v3090, %v3089
        %v3092 = vextract.low.u32 %v3091
        %v3093 = vextract.high.u32 %v3091
        %v3094 = vmul.u32.u64.compose %v3090, %v3085
        %v3095 = vextract.low.u32 %v3094
        %v3096 = vextract.high.u32 %v3094
        %v3097 = vmul.u32 %v3090, %v3081
        %v3098 = vadd.s32 %v3093, %v3095
        %vm3099 = vc.u32 %v3093, %v3095
        %v3100 = vadd.s32 %v3096, 1
        %v3101 = vsel %vm3099, %v3100, %v3096
        %v3102 = vadd.s32 %v3097, %v3101
        %v3103 = vadd.s32 %v3102, 536870912
        %v3104 = vshrl.u32 %v3103, 30
        %v3105 = vshll.u32 %v3104, 30
        %v3106 = vsub.s32 %v3102, %v3105
        %vm3107 = vcmp.lt.s32.totalorder %v3106, 0
        %v3108 = vsub.s32 0, %v3106
        %v3109 = vsel %vm3107, %v3108, %v3106
        %v3110 = vclz %v3109
        %v3111 = vsub.s32 %v3110, 2
        %vm3112 = vcmp.gt.s32.totalorder 0, %v3111
        %v3113 = vsel %vm3112, 0, %v3111
        %v3114 = vsub.s32 32, %v3113
        %v3115 = vshll.u32 %v3106, %v3113
        %v3116 = vshrl.u32 %v3098, %v3114
        %v3117 = vor.u32 %v3115, %v3116
        %v3118 = vsub.s32 4294967266, %v3113
        %v3119 = vadd.s32 %v3118, 127
        %v3120 = vshll.u32 %v3119, 23
        %v3121 = vor.u32 4788187, %v3120
        %v3122 = vand.u32 2147483647, %v3121
        %v3124 = vcvt.s32.f32 %v3117
        %v3125 = vmul.f32 %v3124, %v3122
        %v3126 = vxor.u32 %v3125, 2147483648
        %v3127 = vsel %vm3044, %v3126, %v3125
        %v3128 = vsub.s32 4, %v3104
        %v3129 = vsel %vm3044, %v3128, %v3104
        %v3130 = vsel %vm3043, %v165, %v3127
        %v3131 = vsel %vm3043, 0, %v3129
        %v3132 = vcosq.f32.pop %v3130
        %v3133 = vsinq.f32.pop %v3130
        %vm3134 = vweird.f32 %v165
        %v3135 = vadd.s32 %v3131, 3
        %v3136 = vand.u32 %v3135, 3
        %vm3137 = vcmp.lt.s32.totalorder %v3136, 2
        %vm3138 = vcmp.eq.s32.totalorder %v3136, 0
        %v3139 = vxor.u32 %v3133, 2147483648
        %v3140 = vsel %vm3138, %v3132, %v3139
        %vm3141 = vcmp.eq.s32.totalorder %v3136, 2
        %v3142 = vxor.u32 %v3132, 2147483648
        %v3143 = vsel %vm3141, %v3142, %v3133
        %v3144 = vsel %vm3137, %v3140, %v3143
        %v3145 = vsel %vm3134, nan, %v3144
        %v3146 = vand.u32 2147483647, %v166
        %vm3147 = vcmp.le.f32.partialorder %v3146, 0.7853982
        %vm3148 = vcmp.lt.s32.totalorder %v166, 0
        %v3149 = vand.u32 %v166, 2139095040
        %v3150 = vshrl.u32 %v3149, 23
        %v3151 = vsub.s32 %v3150, 127
        %v3152 = vand.u32 2147483647, %v166
        %v3153 = vand.u32 %v3152, 8388607
        %v3154 = vor.u32 %v3153, 8388608
        %v3155 = vsub.s32 0, %v3154
        %v3156 = vadd.s32 %v3151, 1
        %vm3157 = vcmp.gt.s32.totalorder %v3156, 0
        %v3158 = vsel %vm3157, %v3156, 0
        %v3159 = vshrl.u32 %v3158, 5
        %v3160 = vand.u32 %v3158, 31
        %v3161 = vsub.s32 32, %v3160
        %v3162 = vshrl.u32 683565275, %v3161
        %v3163 = vshll.u32 683565275, %v3160
        %v3164 = vshrl.u32 2475754826, %v3161
        %v3165 = vor.u32 %v3163, %v3164
        %v3166 = vshll.u32 2475754826, %v3160
        %v3167 = vshrl.u32 2131351028, %v3161
        %v3168 = vor.u32 %v3166, %v3167
        %v3169 = vshll.u32 2131351028, %v3160
        %v3170 = vshrl.u32 2102212464, %v3161
        %v3171 = vor.u32 %v3169, %v3170
        %v3172 = vshll.u32 2102212464, %v3160
        %v3173 = vshrl.u32 920167782, %v3161
        %v3174 = vor.u32 %v3172, %v3173
        %v3175 = vshll.u32 920167782, %v3160
        %v3176 = vshrl.u32 1326507024, %v3161
        %v3177 = vor.u32 %v3175, %v3176
        %vm3178 = vcmp.lt.s32.totalorder %v3159, 1
        %vm3179 = vcmp.lt.s32.totalorder %v3159, 2
        %vm3180 = vcmp.lt.s32.totalorder %v3159, 3
        %vm3181 = vcmp.lt.s32.totalorder %v3159, 4
        %v3182 = vsel %vm3178, %v3162, %v3165
        %v3183 = vsel %vm3181, %v3171, 2102212464
        %v3184 = vsel %vm3180, %v3168, %v3183
        %v3185 = vsel %vm3179, %v3182, %v3184
        %v3186 = vsel %vm3178, %v3165, %v3168
        %v3187 = vsel %vm3181, %v3174, 920167782
        %v3188 = vsel %vm3180, %v3171, %v3187
        %v3189 = vsel %vm3179, %v3186, %v3188
        %v3190 = vsel %vm3178, %v3168, %v3171
        %v3191 = vsel %vm3181, %v3177, 1326507024
        %v3192 = vsel %vm3180, %v3174, %v3191
        %v3193 = vsel %vm3179, %v3190, %v3192
        %v3194 = vshll.u32 %v3154, 8
        %v3195 = vmul.u32.u64.compose %v3194, %v3193
        %v3196 = vextract.low.u32 %v3195
        %v3197 = vextract.high.u32 %v3195
        %v3198 = vmul.u32.u64.compose %v3194, %v3189
        %v3199 = vextract.low.u32 %v3198
        %v3200 = vextract.high.u32 %v3198
        %v3201 = vmul.u32 %v3194, %v3185
        %v3202 = vadd.s32 %v3197, %v3199
        %vm3203 = vc.u32 %v3197, %v3199
        %v3204 = vadd.s32 %v3200, 1
        %v3205 = vsel %vm3203, %v3204, %v3200
        %v3206 = vadd.s32 %v3201, %v3205
        %v3207 = vadd.s32 %v3206, 536870912
        %v3208 = vshrl.u32 %v3207, 30
        %v3209 = vshll.u32 %v3208, 30
        %v3210 = vsub.s32 %v3206, %v3209
        %vm3211 = vcmp.lt.s32.totalorder %v3210, 0
        %v3212 = vsub.s32 0, %v3210
        %v3213 = vsel %vm3211, %v3212, %v3210
        %v3214 = vclz %v3213
        %v3215 = vsub.s32 %v3214, 2
        %vm3216 = vcmp.gt.s32.totalorder 0, %v3215
        %v3217 = vsel %vm3216, 0, %v3215
        %v3218 = vsub.s32 32, %v3217
        %v3219 = vshll.u32 %v3210, %v3217
        %v3220 = vshrl.u32 %v3202, %v3218
        %v3221 = vor.u32 %v3219, %v3220
        %v3222 = vsub.s32 4294967266, %v3217
        %v3223 = vadd.s32 %v3222, 127
        %v3224 = vshll.u32 %v3223, 23
        %v3225 = vor.u32 4788187, %v3224
        %v3226 = vand.u32 2147483647, %v3225
        %v3228 = vcvt.s32.f32 %v3221
        %v3229 = vmul.f32 %v3228, %v3226
        %v3230 = vxor.u32 %v3229, 2147483648
        %v3231 = vsel %vm3148, %v3230, %v3229
        %v3232 = vsub.s32 4, %v3208
        %v3233 = vsel %vm3148, %v3232, %v3208
        %v3234 = vsel %vm3147, %v166, %v3231
        %v3235 = vsel %vm3147, 0, %v3233
        %v3236 = vcosq.f32.pop %v3234
        %v3237 = vsinq.f32.pop %v3234
        %vm3238 = vweird.f32 %v166
        %v3239 = vadd.s32 %v3235, 3
        %v3240 = vand.u32 %v3239, 3
        %vm3241 = vcmp.lt.s32.totalorder %v3240, 2
        %vm3242 = vcmp.eq.s32.totalorder %v3240, 0
        %v3243 = vxor.u32 %v3237, 2147483648
        %v3244 = vsel %vm3242, %v3236, %v3243
        %vm3245 = vcmp.eq.s32.totalorder %v3240, 2
        %v3246 = vxor.u32 %v3236, 2147483648
        %v3247 = vsel %vm3245, %v3246, %v3237
        %v3248 = vsel %vm3241, %v3244, %v3247
        %v3249 = vsel %vm3238, nan, %v3248
        %v3250 = vand.u32 2147483647, %v167
        %vm3251 = vcmp.le.f32.partialorder %v3250, 0.7853982
        %vm3252 = vcmp.lt.s32.totalorder %v167, 0
        %v3253 = vand.u32 %v167, 2139095040
        %v3254 = vshrl.u32 %v3253, 23
        %v3255 = vsub.s32 %v3254, 127
        %v3256 = vand.u32 2147483647, %v167
        %v3257 = vand.u32 %v3256, 8388607
        %v3258 = vor.u32 %v3257, 8388608
        %v3259 = vsub.s32 0, %v3258
        %v3260 = vadd.s32 %v3255, 1
        %vm3261 = vcmp.gt.s32.totalorder %v3260, 0
        %v3262 = vsel %vm3261, %v3260, 0
        %v3263 = vshrl.u32 %v3262, 5
        %v3264 = vand.u32 %v3262, 31
        %v3265 = vsub.s32 32, %v3264
        %v3266 = vshrl.u32 683565275, %v3265
        %v3267 = vshll.u32 683565275, %v3264
        %v3268 = vshrl.u32 2475754826, %v3265
        %v3269 = vor.u32 %v3267, %v3268
        %v3270 = vshll.u32 2475754826, %v3264
        %v3271 = vshrl.u32 2131351028, %v3265
        %v3272 = vor.u32 %v3270, %v3271
        %v3273 = vshll.u32 2131351028, %v3264
        %v3274 = vshrl.u32 2102212464, %v3265
        %v3275 = vor.u32 %v3273, %v3274
        %v3276 = vshll.u32 2102212464, %v3264
        %v3277 = vshrl.u32 920167782, %v3265
        %v3278 = vor.u32 %v3276, %v3277
        %v3279 = vshll.u32 920167782, %v3264
        %v3280 = vshrl.u32 1326507024, %v3265
        %v3281 = vor.u32 %v3279, %v3280
        %vm3282 = vcmp.lt.s32.totalorder %v3263, 1
        %vm3283 = vcmp.lt.s32.totalorder %v3263, 2
        %vm3284 = vcmp.lt.s32.totalorder %v3263, 3
        %vm3285 = vcmp.lt.s32.totalorder %v3263, 4
        %v3286 = vsel %vm3282, %v3266, %v3269
        %v3287 = vsel %vm3285, %v3275, 2102212464
        %v3288 = vsel %vm3284, %v3272, %v3287
        %v3289 = vsel %vm3283, %v3286, %v3288
        %v3290 = vsel %vm3282, %v3269, %v3272
        %v3291 = vsel %vm3285, %v3278, 920167782
        %v3292 = vsel %vm3284, %v3275, %v3291
        %v3293 = vsel %vm3283, %v3290, %v3292
        %v3294 = vsel %vm3282, %v3272, %v3275
        %v3295 = vsel %vm3285, %v3281, 1326507024
        %v3296 = vsel %vm3284, %v3278, %v3295
        %v3297 = vsel %vm3283, %v3294, %v3296
        %v3298 = vshll.u32 %v3258, 8
        %v3299 = vmul.u32.u64.compose %v3298, %v3297
        %v3300 = vextract.low.u32 %v3299
        %v3301 = vextract.high.u32 %v3299
        %v3302 = vmul.u32.u64.compose %v3298, %v3293
        %v3303 = vextract.low.u32 %v3302
        %v3304 = vextract.high.u32 %v3302
        %v3305 = vmul.u32 %v3298, %v3289
        %v3306 = vadd.s32 %v3301, %v3303
        %vm3307 = vc.u32 %v3301, %v3303
        %v3308 = vadd.s32 %v3304, 1
        %v3309 = vsel %vm3307, %v3308, %v3304
        %v3310 = vadd.s32 %v3305, %v3309
        %v3311 = vadd.s32 %v3310, 536870912
        %v3312 = vshrl.u32 %v3311, 30
        %v3313 = vshll.u32 %v3312, 30
        %v3314 = vsub.s32 %v3310, %v3313
        %vm3315 = vcmp.lt.s32.totalorder %v3314, 0
        %v3316 = vsub.s32 0, %v3314
        %v3317 = vsel %vm3315, %v3316, %v3314
        %v3318 = vclz %v3317
        %v3319 = vsub.s32 %v3318, 2
        %vm3320 = vcmp.gt.s32.totalorder 0, %v3319
        %v3321 = vsel %vm3320, 0, %v3319
        %v3322 = vsub.s32 32, %v3321
        %v3323 = vshll.u32 %v3314, %v3321
        %v3324 = vshrl.u32 %v3306, %v3322
        %v3325 = vor.u32 %v3323, %v3324
        %v3326 = vsub.s32 4294967266, %v3321
        %v3327 = vadd.s32 %v3326, 127
        %v3328 = vshll.u32 %v3327, 23
        %v3329 = vor.u32 4788187, %v3328
        %v3330 = vand.u32 2147483647, %v3329
        %v3332 = vcvt.s32.f32 %v3325
        %v3333 = vmul.f32 %v3332, %v3330
        %v3334 = vxor.u32 %v3333, 2147483648
        %v3335 = vsel %vm3252, %v3334, %v3333
        %v3336 = vsub.s32 4, %v3312
        %v3337 = vsel %vm3252, %v3336, %v3312
        %v3338 = vsel %vm3251, %v167, %v3335
        %v3339 = vsel %vm3251, 0, %v3337
        %v3340 = vcosq.f32.pop %v3338
        %v3341 = vsinq.f32.pop %v3338
        %vm3342 = vweird.f32 %v167
        %v3343 = vadd.s32 %v3339, 3
        %v3344 = vand.u32 %v3343, 3
        %vm3345 = vcmp.lt.s32.totalorder %v3344, 2
        %vm3346 = vcmp.eq.s32.totalorder %v3344, 0
        %v3347 = vxor.u32 %v3341, 2147483648
        %v3348 = vsel %vm3346, %v3340, %v3347
        %vm3349 = vcmp.eq.s32.totalorder %v3344, 2
        %v3350 = vxor.u32 %v3340, 2147483648
        %v3351 = vsel %vm3349, %v3350, %v3341
        %v3352 = vsel %vm3345, %v3348, %v3351
        %v3353 = vsel %vm3342, nan, %v3352
        %v3354 = vand.u32 2147483647, %v168
        %vm3355 = vcmp.le.f32.partialorder %v3354, 0.7853982
        %vm3356 = vcmp.lt.s32.totalorder %v168, 0
        %v3357 = vand.u32 %v168, 2139095040
        %v3358 = vshrl.u32 %v3357, 23
        %v3359 = vsub.s32 %v3358, 127
        %v3360 = vand.u32 2147483647, %v168
        %v3361 = vand.u32 %v3360, 8388607
        %v3362 = vor.u32 %v3361, 8388608
        %v3363 = vsub.s32 0, %v3362
        %v3364 = vadd.s32 %v3359, 1
        %vm3365 = vcmp.gt.s32.totalorder %v3364, 0
        %v3366 = vsel %vm3365, %v3364, 0
        %v3367 = vshrl.u32 %v3366, 5
        %v3368 = vand.u32 %v3366, 31
        %v3369 = vsub.s32 32, %v3368
        %v3370 = vshrl.u32 683565275, %v3369
        %v3371 = vshll.u32 683565275, %v3368
        %v3372 = vshrl.u32 2475754826, %v3369
        %v3373 = vor.u32 %v3371, %v3372
        %v3374 = vshll.u32 2475754826, %v3368
        %v3375 = vshrl.u32 2131351028, %v3369
        %v3376 = vor.u32 %v3374, %v3375
        %v3377 = vshll.u32 2131351028, %v3368
        %v3378 = vshrl.u32 2102212464, %v3369
        %v3379 = vor.u32 %v3377, %v3378
        %v3380 = vshll.u32 2102212464, %v3368
        %v3381 = vshrl.u32 920167782, %v3369
        %v3382 = vor.u32 %v3380, %v3381
        %v3383 = vshll.u32 920167782, %v3368
        %v3384 = vshrl.u32 1326507024, %v3369
        %v3385 = vor.u32 %v3383, %v3384
        %vm3386 = vcmp.lt.s32.totalorder %v3367, 1
        %vm3387 = vcmp.lt.s32.totalorder %v3367, 2
        %vm3388 = vcmp.lt.s32.totalorder %v3367, 3
        %vm3389 = vcmp.lt.s32.totalorder %v3367, 4
        %v3390 = vsel %vm3386, %v3370, %v3373
        %v3391 = vsel %vm3389, %v3379, 2102212464
        %v3392 = vsel %vm3388, %v3376, %v3391
        %v3393 = vsel %vm3387, %v3390, %v3392
        %v3394 = vsel %vm3386, %v3373, %v3376
        %v3395 = vsel %vm3389, %v3382, 920167782
        %v3396 = vsel %vm3388, %v3379, %v3395
        %v3397 = vsel %vm3387, %v3394, %v3396
        %v3398 = vsel %vm3386, %v3376, %v3379
        %v3399 = vsel %vm3389, %v3385, 1326507024
        %v3400 = vsel %vm3388, %v3382, %v3399
        %v3401 = vsel %vm3387, %v3398, %v3400
        %v3402 = vshll.u32 %v3362, 8
        %v3403 = vmul.u32.u64.compose %v3402, %v3401
        %v3404 = vextract.low.u32 %v3403
        %v3405 = vextract.high.u32 %v3403
        %v3406 = vmul.u32.u64.compose %v3402, %v3397
        %v3407 = vextract.low.u32 %v3406
        %v3408 = vextract.high.u32 %v3406
        %v3409 = vmul.u32 %v3402, %v3393
        %v3410 = vadd.s32 %v3405, %v3407
        %vm3411 = vc.u32 %v3405, %v3407
        %v3412 = vadd.s32 %v3408, 1
        %v3413 = vsel %vm3411, %v3412, %v3408
        %v3414 = vadd.s32 %v3409, %v3413
        %v3415 = vadd.s32 %v3414, 536870912
        %v3416 = vshrl.u32 %v3415, 30
        %v3417 = vshll.u32 %v3416, 30
        %v3418 = vsub.s32 %v3414, %v3417
        %vm3419 = vcmp.lt.s32.totalorder %v3418, 0
        %v3420 = vsub.s32 0, %v3418
        %v3421 = vsel %vm3419, %v3420, %v3418
        %v3422 = vclz %v3421
        %v3423 = vsub.s32 %v3422, 2
        %vm3424 = vcmp.gt.s32.totalorder 0, %v3423
        %v3425 = vsel %vm3424, 0, %v3423
        %v3426 = vsub.s32 32, %v3425
        %v3427 = vshll.u32 %v3418, %v3425
        %v3428 = vshrl.u32 %v3410, %v3426
        %v3429 = vor.u32 %v3427, %v3428
        %v3430 = vsub.s32 4294967266, %v3425
        %v3431 = vadd.s32 %v3430, 127
        %v3432 = vshll.u32 %v3431, 23
        %v3433 = vor.u32 4788187, %v3432
        %v3434 = vand.u32 2147483647, %v3433
        %v3436 = vcvt.s32.f32 %v3429
        %v3437 = vmul.f32 %v3436, %v3434
        %v3438 = vxor.u32 %v3437, 2147483648
        %v3439 = vsel %vm3356, %v3438, %v3437
        %v3440 = vsub.s32 4, %v3416
        %v3441 = vsel %vm3356, %v3440, %v3416
        %v3442 = vsel %vm3355, %v168, %v3439
        %v3443 = vsel %vm3355, 0, %v3441
        %v3444 = vcosq.f32.pop %v3442
        %v3445 = vsinq.f32.pop %v3442
        %vm3446 = vweird.f32 %v168
        %v3447 = vadd.s32 %v3443, 3
        %v3448 = vand.u32 %v3447, 3
        %vm3449 = vcmp.lt.s32.totalorder %v3448, 2
        %vm3450 = vcmp.eq.s32.totalorder %v3448, 0
        %v3451 = vxor.u32 %v3445, 2147483648
        %v3452 = vsel %vm3450, %v3444, %v3451
        %vm3453 = vcmp.eq.s32.totalorder %v3448, 2
        %v3454 = vxor.u32 %v3444, 2147483648
        %v3455 = vsel %vm3453, %v3454, %v3445
        %v3456 = vsel %vm3449, %v3452, %v3455
        %v3457 = vsel %vm3446, nan, %v3456
        %v3458 = vand.u32 2147483647, %v169
        %vm3459 = vcmp.le.f32.partialorder %v3458, 0.7853982
        %vm3460 = vcmp.lt.s32.totalorder %v169, 0
        %v3461 = vand.u32 %v169, 2139095040
        %v3462 = vshrl.u32 %v3461, 23
        %v3463 = vsub.s32 %v3462, 127
        %v3464 = vand.u32 2147483647, %v169
        %v3465 = vand.u32 %v3464, 8388607
        %v3466 = vor.u32 %v3465, 8388608
        %v3467 = vsub.s32 0, %v3466
        %v3468 = vadd.s32 %v3463, 1
        %vm3469 = vcmp.gt.s32.totalorder %v3468, 0
        %v3470 = vsel %vm3469, %v3468, 0
        %v3471 = vshrl.u32 %v3470, 5
        %v3472 = vand.u32 %v3470, 31
        %v3473 = vsub.s32 32, %v3472
        %v3474 = vshrl.u32 683565275, %v3473
        %v3475 = vshll.u32 683565275, %v3472
        %v3476 = vshrl.u32 2475754826, %v3473
        %v3477 = vor.u32 %v3475, %v3476
        %v3478 = vshll.u32 2475754826, %v3472
        %v3479 = vshrl.u32 2131351028, %v3473
        %v3480 = vor.u32 %v3478, %v3479
        %v3481 = vshll.u32 2131351028, %v3472
        %v3482 = vshrl.u32 2102212464, %v3473
        %v3483 = vor.u32 %v3481, %v3482
        %v3484 = vshll.u32 2102212464, %v3472
        %v3485 = vshrl.u32 920167782, %v3473
        %v3486 = vor.u32 %v3484, %v3485
        %v3487 = vshll.u32 920167782, %v3472
        %v3488 = vshrl.u32 1326507024, %v3473
        %v3489 = vor.u32 %v3487, %v3488
        %vm3490 = vcmp.lt.s32.totalorder %v3471, 1
        %vm3491 = vcmp.lt.s32.totalorder %v3471, 2
        %vm3492 = vcmp.lt.s32.totalorder %v3471, 3
        %vm3493 = vcmp.lt.s32.totalorder %v3471, 4
        %v3494 = vsel %vm3490, %v3474, %v3477
        %v3495 = vsel %vm3493, %v3483, 2102212464
        %v3496 = vsel %vm3492, %v3480, %v3495
        %v3497 = vsel %vm3491, %v3494, %v3496
        %v3498 = vsel %vm3490, %v3477, %v3480
        %v3499 = vsel %vm3493, %v3486, 920167782
        %v3500 = vsel %vm3492, %v3483, %v3499
        %v3501 = vsel %vm3491, %v3498, %v3500
        %v3502 = vsel %vm3490, %v3480, %v3483
        %v3503 = vsel %vm3493, %v3489, 1326507024
        %v3504 = vsel %vm3492, %v3486, %v3503
        %v3505 = vsel %vm3491, %v3502, %v3504
        %v3506 = vshll.u32 %v3466, 8
        %v3507 = vmul.u32.u64.compose %v3506, %v3505
        %v3508 = vextract.low.u32 %v3507
        %v3509 = vextract.high.u32 %v3507
        %v3510 = vmul.u32.u64.compose %v3506, %v3501
        %v3511 = vextract.low.u32 %v3510
        %v3512 = vextract.high.u32 %v3510
        %v3513 = vmul.u32 %v3506, %v3497
        %v3514 = vadd.s32 %v3509, %v3511
        %vm3515 = vc.u32 %v3509, %v3511
        %v3516 = vadd.s32 %v3512, 1
        %v3517 = vsel %vm3515, %v3516, %v3512
        %v3518 = vadd.s32 %v3513, %v3517
        %v3519 = vadd.s32 %v3518, 536870912
        %v3520 = vshrl.u32 %v3519, 30
        %v3521 = vshll.u32 %v3520, 30
        %v3522 = vsub.s32 %v3518, %v3521
        %vm3523 = vcmp.lt.s32.totalorder %v3522, 0
        %v3524 = vsub.s32 0, %v3522
        %v3525 = vsel %vm3523, %v3524, %v3522
        %v3526 = vclz %v3525
        %v3527 = vsub.s32 %v3526, 2
        %vm3528 = vcmp.gt.s32.totalorder 0, %v3527
        %v3529 = vsel %vm3528, 0, %v3527
        %v3530 = vsub.s32 32, %v3529
        %v3531 = vshll.u32 %v3522, %v3529
        %v3532 = vshrl.u32 %v3514, %v3530
        %v3533 = vor.u32 %v3531, %v3532
        %v3534 = vsub.s32 4294967266, %v3529
        %v3535 = vadd.s32 %v3534, 127
        %v3536 = vshll.u32 %v3535, 23
        %v3537 = vor.u32 4788187, %v3536
        %v3538 = vand.u32 2147483647, %v3537
        %v3540 = vcvt.s32.f32 %v3533
        %v3541 = vmul.f32 %v3540, %v3538
        %v3542 = vxor.u32 %v3541, 2147483648
        %v3543 = vsel %vm3460, %v3542, %v3541
        %v3544 = vsub.s32 4, %v3520
        %v3545 = vsel %vm3460, %v3544, %v3520
        %v3546 = vsel %vm3459, %v169, %v3543
        %v3547 = vsel %vm3459, 0, %v3545
        %v3548 = vcosq.f32.pop %v3546
        %v3549 = vsinq.f32.pop %v3546
        %vm3550 = vweird.f32 %v169
        %v3551 = vadd.s32 %v3547, 3
        %v3552 = vand.u32 %v3551, 3
        %vm3553 = vcmp.lt.s32.totalorder %v3552, 2
        %vm3554 = vcmp.eq.s32.totalorder %v3552, 0
        %v3555 = vxor.u32 %v3549, 2147483648
        %v3556 = vsel %vm3554, %v3548, %v3555
        %vm3557 = vcmp.eq.s32.totalorder %v3552, 2
        %v3558 = vxor.u32 %v3548, 2147483648
        %v3559 = vsel %vm3557, %v3558, %v3549
        %v3560 = vsel %vm3553, %v3556, %v3559
        %v3561 = vsel %vm3550, nan, %v3560
        %v3562 = vand.u32 2147483647, %v170
        %vm3563 = vcmp.le.f32.partialorder %v3562, 0.7853982
        %vm3564 = vcmp.lt.s32.totalorder %v170, 0
        %v3565 = vand.u32 %v170, 2139095040
        %v3566 = vshrl.u32 %v3565, 23
        %v3567 = vsub.s32 %v3566, 127
        %v3568 = vand.u32 2147483647, %v170
        %v3569 = vand.u32 %v3568, 8388607
        %v3570 = vor.u32 %v3569, 8388608
        %v3571 = vsub.s32 0, %v3570
        %v3572 = vadd.s32 %v3567, 1
        %vm3573 = vcmp.gt.s32.totalorder %v3572, 0
        %v3574 = vsel %vm3573, %v3572, 0
        %v3575 = vshrl.u32 %v3574, 5
        %v3576 = vand.u32 %v3574, 31
        %v3577 = vsub.s32 32, %v3576
        %v3578 = vshrl.u32 683565275, %v3577
        %v3579 = vshll.u32 683565275, %v3576
        %v3580 = vshrl.u32 2475754826, %v3577
        %v3581 = vor.u32 %v3579, %v3580
        %v3582 = vshll.u32 2475754826, %v3576
        %v3583 = vshrl.u32 2131351028, %v3577
        %v3584 = vor.u32 %v3582, %v3583
        %v3585 = vshll.u32 2131351028, %v3576
        %v3586 = vshrl.u32 2102212464, %v3577
        %v3587 = vor.u32 %v3585, %v3586
        %v3588 = vshll.u32 2102212464, %v3576
        %v3589 = vshrl.u32 920167782, %v3577
        %v3590 = vor.u32 %v3588, %v3589
        %v3591 = vshll.u32 920167782, %v3576
        %v3592 = vshrl.u32 1326507024, %v3577
        %v3593 = vor.u32 %v3591, %v3592
        %vm3594 = vcmp.lt.s32.totalorder %v3575, 1
        %vm3595 = vcmp.lt.s32.totalorder %v3575, 2
        %vm3596 = vcmp.lt.s32.totalorder %v3575, 3
        %vm3597 = vcmp.lt.s32.totalorder %v3575, 4
        %v3598 = vsel %vm3594, %v3578, %v3581
        %v3599 = vsel %vm3597, %v3587, 2102212464
        %v3600 = vsel %vm3596, %v3584, %v3599
        %v3601 = vsel %vm3595, %v3598, %v3600
        %v3602 = vsel %vm3594, %v3581, %v3584
        %v3603 = vsel %vm3597, %v3590, 920167782
        %v3604 = vsel %vm3596, %v3587, %v3603
        %v3605 = vsel %vm3595, %v3602, %v3604
        %v3606 = vsel %vm3594, %v3584, %v3587
        %v3607 = vsel %vm3597, %v3593, 1326507024
        %v3608 = vsel %vm3596, %v3590, %v3607
        %v3609 = vsel %vm3595, %v3606, %v3608
        %v3610 = vshll.u32 %v3570, 8
        %v3611 = vmul.u32.u64.compose %v3610, %v3609
        %v3612 = vextract.low.u32 %v3611
        %v3613 = vextract.high.u32 %v3611
        %v3614 = vmul.u32.u64.compose %v3610, %v3605
        %v3615 = vextract.low.u32 %v3614
        %v3616 = vextract.high.u32 %v3614
        %v3617 = vmul.u32 %v3610, %v3601
        %v3618 = vadd.s32 %v3613, %v3615
        %vm3619 = vc.u32 %v3613, %v3615
        %v3620 = vadd.s32 %v3616, 1
        %v3621 = vsel %vm3619, %v3620, %v3616
        %v3622 = vadd.s32 %v3617, %v3621
        %v3623 = vadd.s32 %v3622, 536870912
        %v3624 = vshrl.u32 %v3623, 30
        %v3625 = vshll.u32 %v3624, 30
        %v3626 = vsub.s32 %v3622, %v3625
        %vm3627 = vcmp.lt.s32.totalorder %v3626, 0
        %v3628 = vsub.s32 0, %v3626
        %v3629 = vsel %vm3627, %v3628, %v3626
        %v3630 = vclz %v3629
        %v3631 = vsub.s32 %v3630, 2
        %vm3632 = vcmp.gt.s32.totalorder 0, %v3631
        %v3633 = vsel %vm3632, 0, %v3631
        %v3634 = vsub.s32 32, %v3633
        %v3635 = vshll.u32 %v3626, %v3633
        %v3636 = vshrl.u32 %v3618, %v3634
        %v3637 = vor.u32 %v3635, %v3636
        %v3638 = vsub.s32 4294967266, %v3633
        %v3639 = vadd.s32 %v3638, 127
        %v3640 = vshll.u32 %v3639, 23
        %v3641 = vor.u32 4788187, %v3640
        %v3642 = vand.u32 2147483647, %v3641
        %v3644 = vcvt.s32.f32 %v3637
        %v3645 = vmul.f32 %v3644, %v3642
        %v3646 = vxor.u32 %v3645, 2147483648
        %v3647 = vsel %vm3564, %v3646, %v3645
        %v3648 = vsub.s32 4, %v3624
        %v3649 = vsel %vm3564, %v3648, %v3624
        %v3650 = vsel %vm3563, %v170, %v3647
        %v3651 = vsel %vm3563, 0, %v3649
        %v3652 = vcosq.f32.pop %v3650
        %v3653 = vsinq.f32.pop %v3650
        %vm3654 = vweird.f32 %v170
        %v3655 = vadd.s32 %v3651, 3
        %v3656 = vand.u32 %v3655, 3
        %vm3657 = vcmp.lt.s32.totalorder %v3656, 2
        %vm3658 = vcmp.eq.s32.totalorder %v3656, 0
        %v3659 = vxor.u32 %v3653, 2147483648
        %v3660 = vsel %vm3658, %v3652, %v3659
        %vm3661 = vcmp.eq.s32.totalorder %v3656, 2
        %v3662 = vxor.u32 %v3652, 2147483648
        %v3663 = vsel %vm3661, %v3662, %v3653
        %v3664 = vsel %vm3657, %v3660, %v3663
        %v3665 = vsel %vm3654, nan, %v3664
        %v3666 = vand.u32 2147483647, %v171
        %vm3667 = vcmp.le.f32.partialorder %v3666, 0.7853982
        %vm3668 = vcmp.lt.s32.totalorder %v171, 0
        %v3669 = vand.u32 %v171, 2139095040
        %v3670 = vshrl.u32 %v3669, 23
        %v3671 = vsub.s32 %v3670, 127
        %v3672 = vand.u32 2147483647, %v171
        %v3673 = vand.u32 %v3672, 8388607
        %v3674 = vor.u32 %v3673, 8388608
        %v3675 = vsub.s32 0, %v3674
        %v3676 = vadd.s32 %v3671, 1
        %vm3677 = vcmp.gt.s32.totalorder %v3676, 0
        %v3678 = vsel %vm3677, %v3676, 0
        %v3679 = vshrl.u32 %v3678, 5
        %v3680 = vand.u32 %v3678, 31
        %v3681 = vsub.s32 32, %v3680
        %v3682 = vshrl.u32 683565275, %v3681
        %v3683 = vshll.u32 683565275, %v3680
        %v3684 = vshrl.u32 2475754826, %v3681
        %v3685 = vor.u32 %v3683, %v3684
        %v3686 = vshll.u32 2475754826, %v3680
        %v3687 = vshrl.u32 2131351028, %v3681
        %v3688 = vor.u32 %v3686, %v3687
        %v3689 = vshll.u32 2131351028, %v3680
        %v3690 = vshrl.u32 2102212464, %v3681
        %v3691 = vor.u32 %v3689, %v3690
        %v3692 = vshll.u32 2102212464, %v3680
        %v3693 = vshrl.u32 920167782, %v3681
        %v3694 = vor.u32 %v3692, %v3693
        %v3695 = vshll.u32 920167782, %v3680
        %v3696 = vshrl.u32 1326507024, %v3681
        %v3697 = vor.u32 %v3695, %v3696
        %vm3698 = vcmp.lt.s32.totalorder %v3679, 1
        %vm3699 = vcmp.lt.s32.totalorder %v3679, 2
        %vm3700 = vcmp.lt.s32.totalorder %v3679, 3
        %vm3701 = vcmp.lt.s32.totalorder %v3679, 4
        %v3702 = vsel %vm3698, %v3682, %v3685
        %v3703 = vsel %vm3701, %v3691, 2102212464
        %v3704 = vsel %vm3700, %v3688, %v3703
        %v3705 = vsel %vm3699, %v3702, %v3704
        %v3706 = vsel %vm3698, %v3685, %v3688
        %v3707 = vsel %vm3701, %v3694, 920167782
        %v3708 = vsel %vm3700, %v3691, %v3707
        %v3709 = vsel %vm3699, %v3706, %v3708
        %v3710 = vsel %vm3698, %v3688, %v3691
        %v3711 = vsel %vm3701, %v3697, 1326507024
        %v3712 = vsel %vm3700, %v3694, %v3711
        %v3713 = vsel %vm3699, %v3710, %v3712
        %v3714 = vshll.u32 %v3674, 8
        %v3715 = vmul.u32.u64.compose %v3714, %v3713
        %v3716 = vextract.low.u32 %v3715
        %v3717 = vextract.high.u32 %v3715
        %v3718 = vmul.u32.u64.compose %v3714, %v3709
        %v3719 = vextract.low.u32 %v3718
        %v3720 = vextract.high.u32 %v3718
        %v3721 = vmul.u32 %v3714, %v3705
        %v3722 = vadd.s32 %v3717, %v3719
        %vm3723 = vc.u32 %v3717, %v3719
        %v3724 = vadd.s32 %v3720, 1
        %v3725 = vsel %vm3723, %v3724, %v3720
        %v3726 = vadd.s32 %v3721, %v3725
        %v3727 = vadd.s32 %v3726, 536870912
        %v3728 = vshrl.u32 %v3727, 30
        %v3729 = vshll.u32 %v3728, 30
        %v3730 = vsub.s32 %v3726, %v3729
        %vm3731 = vcmp.lt.s32.totalorder %v3730, 0
        %v3732 = vsub.s32 0, %v3730
        %v3733 = vsel %vm3731, %v3732, %v3730
        %v3734 = vclz %v3733
        %v3735 = vsub.s32 %v3734, 2
        %vm3736 = vcmp.gt.s32.totalorder 0, %v3735
        %v3737 = vsel %vm3736, 0, %v3735
        %v3738 = vsub.s32 32, %v3737
        %v3739 = vshll.u32 %v3730, %v3737
        %v3740 = vshrl.u32 %v3722, %v3738
        %v3741 = vor.u32 %v3739, %v3740
        %v3742 = vsub.s32 4294967266, %v3737
        %v3743 = vadd.s32 %v3742, 127
        %v3744 = vshll.u32 %v3743, 23
        %v3745 = vor.u32 4788187, %v3744
        %v3746 = vand.u32 2147483647, %v3745
        %v3748 = vcvt.s32.f32 %v3741
        %v3749 = vmul.f32 %v3748, %v3746
        %v3750 = vxor.u32 %v3749, 2147483648
        %v3751 = vsel %vm3668, %v3750, %v3749
        %v3752 = vsub.s32 4, %v3728
        %v3753 = vsel %vm3668, %v3752, %v3728
        %v3754 = vsel %vm3667, %v171, %v3751
        %v3755 = vsel %vm3667, 0, %v3753
        %v3756 = vcosq.f32.pop %v3754
        %v3757 = vsinq.f32.pop %v3754
        %vm3758 = vweird.f32 %v171
        %v3759 = vadd.s32 %v3755, 3
        %v3760 = vand.u32 %v3759, 3
        %vm3761 = vcmp.lt.s32.totalorder %v3760, 2
        %vm3762 = vcmp.eq.s32.totalorder %v3760, 0
        %v3763 = vxor.u32 %v3757, 2147483648
        %v3764 = vsel %vm3762, %v3756, %v3763
        %vm3765 = vcmp.eq.s32.totalorder %v3760, 2
        %v3766 = vxor.u32 %v3756, 2147483648
        %v3767 = vsel %vm3765, %v3766, %v3757
        %v3768 = vsel %vm3761, %v3764, %v3767
        %v3769 = vsel %vm3758, nan, %v3768
        %v3770 = vand.u32 2147483647, %v172
        %vm3771 = vcmp.le.f32.partialorder %v3770, 0.7853982
        %vm3772 = vcmp.lt.s32.totalorder %v172, 0
        %v3773 = vand.u32 %v172, 2139095040
        %v3774 = vshrl.u32 %v3773, 23
        %v3775 = vsub.s32 %v3774, 127
        %v3776 = vand.u32 2147483647, %v172
        %v3777 = vand.u32 %v3776, 8388607
        %v3778 = vor.u32 %v3777, 8388608
        %v3779 = vsub.s32 0, %v3778
        %v3780 = vadd.s32 %v3775, 1
        %vm3781 = vcmp.gt.s32.totalorder %v3780, 0
        %v3782 = vsel %vm3781, %v3780, 0
        %v3783 = vshrl.u32 %v3782, 5
        %v3784 = vand.u32 %v3782, 31
        %v3785 = vsub.s32 32, %v3784
        %v3786 = vshrl.u32 683565275, %v3785
        %v3787 = vshll.u32 683565275, %v3784
        %v3788 = vshrl.u32 2475754826, %v3785
        %v3789 = vor.u32 %v3787, %v3788
        %v3790 = vshll.u32 2475754826, %v3784
        %v3791 = vshrl.u32 2131351028, %v3785
        %v3792 = vor.u32 %v3790, %v3791
        %v3793 = vshll.u32 2131351028, %v3784
        %v3794 = vshrl.u32 2102212464, %v3785
        %v3795 = vor.u32 %v3793, %v3794
        %v3796 = vshll.u32 2102212464, %v3784
        %v3797 = vshrl.u32 920167782, %v3785
        %v3798 = vor.u32 %v3796, %v3797
        %v3799 = vshll.u32 920167782, %v3784
        %v3800 = vshrl.u32 1326507024, %v3785
        %v3801 = vor.u32 %v3799, %v3800
        %vm3802 = vcmp.lt.s32.totalorder %v3783, 1
        %vm3803 = vcmp.lt.s32.totalorder %v3783, 2
        %vm3804 = vcmp.lt.s32.totalorder %v3783, 3
        %vm3805 = vcmp.lt.s32.totalorder %v3783, 4
        %v3806 = vsel %vm3802, %v3786, %v3789
        %v3807 = vsel %vm3805, %v3795, 2102212464
        %v3808 = vsel %vm3804, %v3792, %v3807
        %v3809 = vsel %vm3803, %v3806, %v3808
        %v3810 = vsel %vm3802, %v3789, %v3792
        %v3811 = vsel %vm3805, %v3798, 920167782
        %v3812 = vsel %vm3804, %v3795, %v3811
        %v3813 = vsel %vm3803, %v3810, %v3812
        %v3814 = vsel %vm3802, %v3792, %v3795
        %v3815 = vsel %vm3805, %v3801, 1326507024
        %v3816 = vsel %vm3804, %v3798, %v3815
        %v3817 = vsel %vm3803, %v3814, %v3816
        %v3818 = vshll.u32 %v3778, 8
        %v3819 = vmul.u32.u64.compose %v3818, %v3817
        %v3820 = vextract.low.u32 %v3819
        %v3821 = vextract.high.u32 %v3819
        %v3822 = vmul.u32.u64.compose %v3818, %v3813
        %v3823 = vextract.low.u32 %v3822
        %v3824 = vextract.high.u32 %v3822
        %v3825 = vmul.u32 %v3818, %v3809
        %v3826 = vadd.s32 %v3821, %v3823
        %vm3827 = vc.u32 %v3821, %v3823
        %v3828 = vadd.s32 %v3824, 1
        %v3829 = vsel %vm3827, %v3828, %v3824
        %v3830 = vadd.s32 %v3825, %v3829
        %v3831 = vadd.s32 %v3830, 536870912
        %v3832 = vshrl.u32 %v3831, 30
        %v3833 = vshll.u32 %v3832, 30
        %v3834 = vsub.s32 %v3830, %v3833
        %vm3835 = vcmp.lt.s32.totalorder %v3834, 0
        %v3836 = vsub.s32 0, %v3834
        %v3837 = vsel %vm3835, %v3836, %v3834
        %v3838 = vclz %v3837
        %v3839 = vsub.s32 %v3838, 2
        %vm3840 = vcmp.gt.s32.totalorder 0, %v3839
        %v3841 = vsel %vm3840, 0, %v3839
        %v3842 = vsub.s32 32, %v3841
        %v3843 = vshll.u32 %v3834, %v3841
        %v3844 = vshrl.u32 %v3826, %v3842
        %v3845 = vor.u32 %v3843, %v3844
        %v3846 = vsub.s32 4294967266, %v3841
        %v3847 = vadd.s32 %v3846, 127
        %v3848 = vshll.u32 %v3847, 23
        %v3849 = vor.u32 4788187, %v3848
        %v3850 = vand.u32 2147483647, %v3849
        %v3852 = vcvt.s32.f32 %v3845
        %v3853 = vmul.f32 %v3852, %v3850
        %v3854 = vxor.u32 %v3853, 2147483648
        %v3855 = vsel %vm3772, %v3854, %v3853
        %v3856 = vsub.s32 4, %v3832
        %v3857 = vsel %vm3772, %v3856, %v3832
        %v3858 = vsel %vm3771, %v172, %v3855
        %v3859 = vsel %vm3771, 0, %v3857
        %v3860 = vcosq.f32.pop %v3858
        %v3861 = vsinq.f32.pop %v3858
        %vm3862 = vweird.f32 %v172
        %v3863 = vadd.s32 %v3859, 3
        %v3864 = vand.u32 %v3863, 3
        %vm3865 = vcmp.lt.s32.totalorder %v3864, 2
        %vm3866 = vcmp.eq.s32.totalorder %v3864, 0
        %v3867 = vxor.u32 %v3861, 2147483648
        %v3868 = vsel %vm3866, %v3860, %v3867
        %vm3869 = vcmp.eq.s32.totalorder %v3864, 2
        %v3870 = vxor.u32 %v3860, 2147483648
        %v3871 = vsel %vm3869, %v3870, %v3861
        %v3872 = vsel %vm3865, %v3868, %v3871
        %v3873 = vsel %vm3862, nan, %v3872
        %v3874 = vand.u32 2147483647, %v173
        %vm3875 = vcmp.le.f32.partialorder %v3874, 0.7853982
        %vm3876 = vcmp.lt.s32.totalorder %v173, 0
        %v3877 = vand.u32 %v173, 2139095040
        %v3878 = vshrl.u32 %v3877, 23
        %v3879 = vsub.s32 %v3878, 127
        %v3880 = vand.u32 2147483647, %v173
        %v3881 = vand.u32 %v3880, 8388607
        %v3882 = vor.u32 %v3881, 8388608
        %v3883 = vsub.s32 0, %v3882
        %v3884 = vadd.s32 %v3879, 1
        %vm3885 = vcmp.gt.s32.totalorder %v3884, 0
        %v3886 = vsel %vm3885, %v3884, 0
        %v3887 = vshrl.u32 %v3886, 5
        %v3888 = vand.u32 %v3886, 31
        %v3889 = vsub.s32 32, %v3888
        %v3890 = vshrl.u32 683565275, %v3889
        %v3891 = vshll.u32 683565275, %v3888
        %v3892 = vshrl.u32 2475754826, %v3889
        %v3893 = vor.u32 %v3891, %v3892
        %v3894 = vshll.u32 2475754826, %v3888
        %v3895 = vshrl.u32 2131351028, %v3889
        %v3896 = vor.u32 %v3894, %v3895
        %v3897 = vshll.u32 2131351028, %v3888
        %v3898 = vshrl.u32 2102212464, %v3889
        %v3899 = vor.u32 %v3897, %v3898
        %v3900 = vshll.u32 2102212464, %v3888
        %v3901 = vshrl.u32 920167782, %v3889
        %v3902 = vor.u32 %v3900, %v3901
        %v3903 = vshll.u32 920167782, %v3888
        %v3904 = vshrl.u32 1326507024, %v3889
        %v3905 = vor.u32 %v3903, %v3904
        %vm3906 = vcmp.lt.s32.totalorder %v3887, 1
        %vm3907 = vcmp.lt.s32.totalorder %v3887, 2
        %vm3908 = vcmp.lt.s32.totalorder %v3887, 3
        %vm3909 = vcmp.lt.s32.totalorder %v3887, 4
        %v3910 = vsel %vm3906, %v3890, %v3893
        %v3911 = vsel %vm3909, %v3899, 2102212464
        %v3912 = vsel %vm3908, %v3896, %v3911
        %v3913 = vsel %vm3907, %v3910, %v3912
        %v3914 = vsel %vm3906, %v3893, %v3896
        %v3915 = vsel %vm3909, %v3902, 920167782
        %v3916 = vsel %vm3908, %v3899, %v3915
        %v3917 = vsel %vm3907, %v3914, %v3916
        %v3918 = vsel %vm3906, %v3896, %v3899
        %v3919 = vsel %vm3909, %v3905, 1326507024
        %v3920 = vsel %vm3908, %v3902, %v3919
        %v3921 = vsel %vm3907, %v3918, %v3920
        %v3922 = vshll.u32 %v3882, 8
        %v3923 = vmul.u32.u64.compose %v3922, %v3921
        %v3924 = vextract.low.u32 %v3923
        %v3925 = vextract.high.u32 %v3923
        %v3926 = vmul.u32.u64.compose %v3922, %v3917
        %v3927 = vextract.low.u32 %v3926
        %v3928 = vextract.high.u32 %v3926
        %v3929 = vmul.u32 %v3922, %v3913
        %v3930 = vadd.s32 %v3925, %v3927
        %vm3931 = vc.u32 %v3925, %v3927
        %v3932 = vadd.s32 %v3928, 1
        %v3933 = vsel %vm3931, %v3932, %v3928
        %v3934 = vadd.s32 %v3929, %v3933
        %v3935 = vadd.s32 %v3934, 536870912
        %v3936 = vshrl.u32 %v3935, 30
        %v3937 = vshll.u32 %v3936, 30
        %v3938 = vsub.s32 %v3934, %v3937
        %vm3939 = vcmp.lt.s32.totalorder %v3938, 0
        %v3940 = vsub.s32 0, %v3938
        %v3941 = vsel %vm3939, %v3940, %v3938
        %v3942 = vclz %v3941
        %v3943 = vsub.s32 %v3942, 2
        %vm3944 = vcmp.gt.s32.totalorder 0, %v3943
        %v3945 = vsel %vm3944, 0, %v3943
        %v3946 = vsub.s32 32, %v3945
        %v3947 = vshll.u32 %v3938, %v3945
        %v3948 = vshrl.u32 %v3930, %v3946
        %v3949 = vor.u32 %v3947, %v3948
        %v3950 = vsub.s32 4294967266, %v3945
        %v3951 = vadd.s32 %v3950, 127
        %v3952 = vshll.u32 %v3951, 23
        %v3953 = vor.u32 4788187, %v3952
        %v3954 = vand.u32 2147483647, %v3953
        %v3956 = vcvt.s32.f32 %v3949
        %v3957 = vmul.f32 %v3956, %v3954
        %v3958 = vxor.u32 %v3957, 2147483648
        %v3959 = vsel %vm3876, %v3958, %v3957
        %v3960 = vsub.s32 4, %v3936
        %v3961 = vsel %vm3876, %v3960, %v3936
        %v3962 = vsel %vm3875, %v173, %v3959
        %v3963 = vsel %vm3875, 0, %v3961
        %v3964 = vcosq.f32.pop %v3962
        %v3965 = vsinq.f32.pop %v3962
        %vm3966 = vweird.f32 %v173
        %v3967 = vadd.s32 %v3963, 3
        %v3968 = vand.u32 %v3967, 3
        %vm3969 = vcmp.lt.s32.totalorder %v3968, 2
        %vm3970 = vcmp.eq.s32.totalorder %v3968, 0
        %v3971 = vxor.u32 %v3965, 2147483648
        %v3972 = vsel %vm3970, %v3964, %v3971
        %vm3973 = vcmp.eq.s32.totalorder %v3968, 2
        %v3974 = vxor.u32 %v3964, 2147483648
        %v3975 = vsel %vm3973, %v3974, %v3965
        %v3976 = vsel %vm3969, %v3972, %v3975
        %v3977 = vsel %vm3966, nan, %v3976
        %v3978 = vand.u32 2147483647, %v174
        %vm3979 = vcmp.le.f32.partialorder %v3978, 0.7853982
        %vm3980 = vcmp.lt.s32.totalorder %v174, 0
        %v3981 = vand.u32 %v174, 2139095040
        %v3982 = vshrl.u32 %v3981, 23
        %v3983 = vsub.s32 %v3982, 127
        %v3984 = vand.u32 2147483647, %v174
        %v3985 = vand.u32 %v3984, 8388607
        %v3986 = vor.u32 %v3985, 8388608
        %v3987 = vsub.s32 0, %v3986
        %v3988 = vadd.s32 %v3983, 1
        %vm3989 = vcmp.gt.s32.totalorder %v3988, 0
        %v3990 = vsel %vm3989, %v3988, 0
        %v3991 = vshrl.u32 %v3990, 5
        %v3992 = vand.u32 %v3990, 31
        %v3993 = vsub.s32 32, %v3992
        %v3994 = vshrl.u32 683565275, %v3993
        %v3995 = vshll.u32 683565275, %v3992
        %v3996 = vshrl.u32 2475754826, %v3993
        %v3997 = vor.u32 %v3995, %v3996
        %v3998 = vshll.u32 2475754826, %v3992
        %v3999 = vshrl.u32 2131351028, %v3993
        %v4000 = vor.u32 %v3998, %v3999
        %v4001 = vshll.u32 2131351028, %v3992
        %v4002 = vshrl.u32 2102212464, %v3993
        %v4003 = vor.u32 %v4001, %v4002
        %v4004 = vshll.u32 2102212464, %v3992
        %v4005 = vshrl.u32 920167782, %v3993
        %v4006 = vor.u32 %v4004, %v4005
        %v4007 = vshll.u32 920167782, %v3992
        %v4008 = vshrl.u32 1326507024, %v3993
        %v4009 = vor.u32 %v4007, %v4008
        %vm4010 = vcmp.lt.s32.totalorder %v3991, 1
        %vm4011 = vcmp.lt.s32.totalorder %v3991, 2
        %vm4012 = vcmp.lt.s32.totalorder %v3991, 3
        %vm4013 = vcmp.lt.s32.totalorder %v3991, 4
        %v4014 = vsel %vm4010, %v3994, %v3997
        %v4015 = vsel %vm4013, %v4003, 2102212464
        %v4016 = vsel %vm4012, %v4000, %v4015
        %v4017 = vsel %vm4011, %v4014, %v4016
        %v4018 = vsel %vm4010, %v3997, %v4000
        %v4019 = vsel %vm4013, %v4006, 920167782
        %v4020 = vsel %vm4012, %v4003, %v4019
        %v4021 = vsel %vm4011, %v4018, %v4020
        %v4022 = vsel %vm4010, %v4000, %v4003
        %v4023 = vsel %vm4013, %v4009, 1326507024
        %v4024 = vsel %vm4012, %v4006, %v4023
        %v4025 = vsel %vm4011, %v4022, %v4024
        %v4026 = vshll.u32 %v3986, 8
        %v4027 = vmul.u32.u64.compose %v4026, %v4025
        %v4028 = vextract.low.u32 %v4027
        %v4029 = vextract.high.u32 %v4027
        %v4030 = vmul.u32.u64.compose %v4026, %v4021
        %v4031 = vextract.low.u32 %v4030
        %v4032 = vextract.high.u32 %v4030
        %v4033 = vmul.u32 %v4026, %v4017
        %v4034 = vadd.s32 %v4029, %v4031
        %vm4035 = vc.u32 %v4029, %v4031
        %v4036 = vadd.s32 %v4032, 1
        %v4037 = vsel %vm4035, %v4036, %v4032
        %v4038 = vadd.s32 %v4033, %v4037
        %v4039 = vadd.s32 %v4038, 536870912
        %v4040 = vshrl.u32 %v4039, 30
        %v4041 = vshll.u32 %v4040, 30
        %v4042 = vsub.s32 %v4038, %v4041
        %vm4043 = vcmp.lt.s32.totalorder %v4042, 0
        %v4044 = vsub.s32 0, %v4042
        %v4045 = vsel %vm4043, %v4044, %v4042
        %v4046 = vclz %v4045
        %v4047 = vsub.s32 %v4046, 2
        %vm4048 = vcmp.gt.s32.totalorder 0, %v4047
        %v4049 = vsel %vm4048, 0, %v4047
        %v4050 = vsub.s32 32, %v4049
        %v4051 = vshll.u32 %v4042, %v4049
        %v4052 = vshrl.u32 %v4034, %v4050
        %v4053 = vor.u32 %v4051, %v4052
        %v4054 = vsub.s32 4294967266, %v4049
        %v4055 = vadd.s32 %v4054, 127
        %v4056 = vshll.u32 %v4055, 23
        %v4057 = vor.u32 4788187, %v4056
        %v4058 = vand.u32 2147483647, %v4057
        %v4060 = vcvt.s32.f32 %v4053
        %v4061 = vmul.f32 %v4060, %v4058
        %v4062 = vxor.u32 %v4061, 2147483648
        %v4063 = vsel %vm3980, %v4062, %v4061
        %v4064 = vsub.s32 4, %v4040
        %v4065 = vsel %vm3980, %v4064, %v4040
        %v4066 = vsel %vm3979, %v174, %v4063
        %v4067 = vsel %vm3979, 0, %v4065
        %v4068 = vcosq.f32.pop %v4066
        %v4069 = vsinq.f32.pop %v4066
        %vm4070 = vweird.f32 %v174
        %v4071 = vadd.s32 %v4067, 3
        %v4072 = vand.u32 %v4071, 3
        %vm4073 = vcmp.lt.s32.totalorder %v4072, 2
        %vm4074 = vcmp.eq.s32.totalorder %v4072, 0
        %v4075 = vxor.u32 %v4069, 2147483648
        %v4076 = vsel %vm4074, %v4068, %v4075
        %vm4077 = vcmp.eq.s32.totalorder %v4072, 2
        %v4078 = vxor.u32 %v4068, 2147483648
        %v4079 = vsel %vm4077, %v4078, %v4069
        %v4080 = vsel %vm4073, %v4076, %v4079
        %v4081 = vsel %vm4070, nan, %v4080
        %v4082 = vand.u32 2147483647, %v175
        %vm4083 = vcmp.le.f32.partialorder %v4082, 0.7853982
        %vm4084 = vcmp.lt.s32.totalorder %v175, 0
        %v4085 = vand.u32 %v175, 2139095040
        %v4086 = vshrl.u32 %v4085, 23
        %v4087 = vsub.s32 %v4086, 127
        %v4088 = vand.u32 2147483647, %v175
        %v4089 = vand.u32 %v4088, 8388607
        %v4090 = vor.u32 %v4089, 8388608
        %v4091 = vsub.s32 0, %v4090
        %v4092 = vadd.s32 %v4087, 1
        %vm4093 = vcmp.gt.s32.totalorder %v4092, 0
        %v4094 = vsel %vm4093, %v4092, 0
        %v4095 = vshrl.u32 %v4094, 5
        %v4096 = vand.u32 %v4094, 31
        %v4097 = vsub.s32 32, %v4096
        %v4098 = vshrl.u32 683565275, %v4097
        %v4099 = vshll.u32 683565275, %v4096
        %v4100 = vshrl.u32 2475754826, %v4097
        %v4101 = vor.u32 %v4099, %v4100
        %v4102 = vshll.u32 2475754826, %v4096
        %v4103 = vshrl.u32 2131351028, %v4097
        %v4104 = vor.u32 %v4102, %v4103
        %v4105 = vshll.u32 2131351028, %v4096
        %v4106 = vshrl.u32 2102212464, %v4097
        %v4107 = vor.u32 %v4105, %v4106
        %v4108 = vshll.u32 2102212464, %v4096
        %v4109 = vshrl.u32 920167782, %v4097
        %v4110 = vor.u32 %v4108, %v4109
        %v4111 = vshll.u32 920167782, %v4096
        %v4112 = vshrl.u32 1326507024, %v4097
        %v4113 = vor.u32 %v4111, %v4112
        %vm4114 = vcmp.lt.s32.totalorder %v4095, 1
        %vm4115 = vcmp.lt.s32.totalorder %v4095, 2
        %vm4116 = vcmp.lt.s32.totalorder %v4095, 3
        %vm4117 = vcmp.lt.s32.totalorder %v4095, 4
        %v4118 = vsel %vm4114, %v4098, %v4101
        %v4119 = vsel %vm4117, %v4107, 2102212464
        %v4120 = vsel %vm4116, %v4104, %v4119
        %v4121 = vsel %vm4115, %v4118, %v4120
        %v4122 = vsel %vm4114, %v4101, %v4104
        %v4123 = vsel %vm4117, %v4110, 920167782
        %v4124 = vsel %vm4116, %v4107, %v4123
        %v4125 = vsel %vm4115, %v4122, %v4124
        %v4126 = vsel %vm4114, %v4104, %v4107
        %v4127 = vsel %vm4117, %v4113, 1326507024
        %v4128 = vsel %vm4116, %v4110, %v4127
        %v4129 = vsel %vm4115, %v4126, %v4128
        %v4130 = vshll.u32 %v4090, 8
        %v4131 = vmul.u32.u64.compose %v4130, %v4129
        %v4132 = vextract.low.u32 %v4131
        %v4133 = vextract.high.u32 %v4131
        %v4134 = vmul.u32.u64.compose %v4130, %v4125
        %v4135 = vextract.low.u32 %v4134
        %v4136 = vextract.high.u32 %v4134
        %v4137 = vmul.u32 %v4130, %v4121
        %v4138 = vadd.s32 %v4133, %v4135
        %vm4139 = vc.u32 %v4133, %v4135
        %v4140 = vadd.s32 %v4136, 1
        %v4141 = vsel %vm4139, %v4140, %v4136
        %v4142 = vadd.s32 %v4137, %v4141
        %v4143 = vadd.s32 %v4142, 536870912
        %v4144 = vshrl.u32 %v4143, 30
        %v4145 = vshll.u32 %v4144, 30
        %v4146 = vsub.s32 %v4142, %v4145
        %vm4147 = vcmp.lt.s32.totalorder %v4146, 0
        %v4148 = vsub.s32 0, %v4146
        %v4149 = vsel %vm4147, %v4148, %v4146
        %v4150 = vclz %v4149
        %v4151 = vsub.s32 %v4150, 2
        %vm4152 = vcmp.gt.s32.totalorder 0, %v4151
        %v4153 = vsel %vm4152, 0, %v4151
        %v4154 = vsub.s32 32, %v4153
        %v4155 = vshll.u32 %v4146, %v4153
        %v4156 = vshrl.u32 %v4138, %v4154
        %v4157 = vor.u32 %v4155, %v4156
        %v4158 = vsub.s32 4294967266, %v4153
        %v4159 = vadd.s32 %v4158, 127
        %v4160 = vshll.u32 %v4159, 23
        %v4161 = vor.u32 4788187, %v4160
        %v4162 = vand.u32 2147483647, %v4161
        %v4164 = vcvt.s32.f32 %v4157
        %v4165 = vmul.f32 %v4164, %v4162
        %v4166 = vxor.u32 %v4165, 2147483648
        %v4167 = vsel %vm4084, %v4166, %v4165
        %v4168 = vsub.s32 4, %v4144
        %v4169 = vsel %vm4084, %v4168, %v4144
        %v4170 = vsel %vm4083, %v175, %v4167
        %v4171 = vsel %vm4083, 0, %v4169
        %v4172 = vcosq.f32.pop %v4170
        %v4173 = vsinq.f32.pop %v4170
        %vm4174 = vweird.f32 %v175
        %v4175 = vadd.s32 %v4171, 3
        %v4176 = vand.u32 %v4175, 3
        %vm4177 = vcmp.lt.s32.totalorder %v4176, 2
        %vm4178 = vcmp.eq.s32.totalorder %v4176, 0
        %v4179 = vxor.u32 %v4173, 2147483648
        %v4180 = vsel %vm4178, %v4172, %v4179
        %vm4181 = vcmp.eq.s32.totalorder %v4176, 2
        %v4182 = vxor.u32 %v4172, 2147483648
        %v4183 = vsel %vm4181, %v4182, %v4173
        %v4184 = vsel %vm4177, %v4180, %v4183
        %v4185 = vsel %vm4174, nan, %v4184
        %v4186 = vand.u32 2147483647, %v176
        %vm4187 = vcmp.le.f32.partialorder %v4186, 0.7853982
        %vm4188 = vcmp.lt.s32.totalorder %v176, 0
        %v4189 = vand.u32 %v176, 2139095040
        %v4190 = vshrl.u32 %v4189, 23
        %v4191 = vsub.s32 %v4190, 127
        %v4192 = vand.u32 2147483647, %v176
        %v4193 = vand.u32 %v4192, 8388607
        %v4194 = vor.u32 %v4193, 8388608
        %v4195 = vsub.s32 0, %v4194
        %v4196 = vadd.s32 %v4191, 1
        %vm4197 = vcmp.gt.s32.totalorder %v4196, 0
        %v4198 = vsel %vm4197, %v4196, 0
        %v4199 = vshrl.u32 %v4198, 5
        %v4200 = vand.u32 %v4198, 31
        %v4201 = vsub.s32 32, %v4200
        %v4202 = vshrl.u32 683565275, %v4201
        %v4203 = vshll.u32 683565275, %v4200
        %v4204 = vshrl.u32 2475754826, %v4201
        %v4205 = vor.u32 %v4203, %v4204
        %v4206 = vshll.u32 2475754826, %v4200
        %v4207 = vshrl.u32 2131351028, %v4201
        %v4208 = vor.u32 %v4206, %v4207
        %v4209 = vshll.u32 2131351028, %v4200
        %v4210 = vshrl.u32 2102212464, %v4201
        %v4211 = vor.u32 %v4209, %v4210
        %v4212 = vshll.u32 2102212464, %v4200
        %v4213 = vshrl.u32 920167782, %v4201
        %v4214 = vor.u32 %v4212, %v4213
        %v4215 = vshll.u32 920167782, %v4200
        %v4216 = vshrl.u32 1326507024, %v4201
        %v4217 = vor.u32 %v4215, %v4216
        %vm4218 = vcmp.lt.s32.totalorder %v4199, 1
        %vm4219 = vcmp.lt.s32.totalorder %v4199, 2
        %vm4220 = vcmp.lt.s32.totalorder %v4199, 3
        %vm4221 = vcmp.lt.s32.totalorder %v4199, 4
        %v4222 = vsel %vm4218, %v4202, %v4205
        %v4223 = vsel %vm4221, %v4211, 2102212464
        %v4224 = vsel %vm4220, %v4208, %v4223
        %v4225 = vsel %vm4219, %v4222, %v4224
        %v4226 = vsel %vm4218, %v4205, %v4208
        %v4227 = vsel %vm4221, %v4214, 920167782
        %v4228 = vsel %vm4220, %v4211, %v4227
        %v4229 = vsel %vm4219, %v4226, %v4228
        %v4230 = vsel %vm4218, %v4208, %v4211
        %v4231 = vsel %vm4221, %v4217, 1326507024
        %v4232 = vsel %vm4220, %v4214, %v4231
        %v4233 = vsel %vm4219, %v4230, %v4232
        %v4234 = vshll.u32 %v4194, 8
        %v4235 = vmul.u32.u64.compose %v4234, %v4233
        %v4236 = vextract.low.u32 %v4235
        %v4237 = vextract.high.u32 %v4235
        %v4238 = vmul.u32.u64.compose %v4234, %v4229
        %v4239 = vextract.low.u32 %v4238
        %v4240 = vextract.high.u32 %v4238
        %v4241 = vmul.u32 %v4234, %v4225
        %v4242 = vadd.s32 %v4237, %v4239
        %vm4243 = vc.u32 %v4237, %v4239
        %v4244 = vadd.s32 %v4240, 1
        %v4245 = vsel %vm4243, %v4244, %v4240
        %v4246 = vadd.s32 %v4241, %v4245
        %v4247 = vadd.s32 %v4246, 536870912
        %v4248 = vshrl.u32 %v4247, 30
        %v4249 = vshll.u32 %v4248, 30
        %v4250 = vsub.s32 %v4246, %v4249
        %vm4251 = vcmp.lt.s32.totalorder %v4250, 0
        %v4252 = vsub.s32 0, %v4250
        %v4253 = vsel %vm4251, %v4252, %v4250
        %v4254 = vclz %v4253
        %v4255 = vsub.s32 %v4254, 2
        %vm4256 = vcmp.gt.s32.totalorder 0, %v4255
        %v4257 = vsel %vm4256, 0, %v4255
        %v4258 = vsub.s32 32, %v4257
        %v4259 = vshll.u32 %v4250, %v4257
        %v4260 = vshrl.u32 %v4242, %v4258
        %v4261 = vor.u32 %v4259, %v4260
        %v4262 = vsub.s32 4294967266, %v4257
        %v4263 = vadd.s32 %v4262, 127
        %v4264 = vshll.u32 %v4263, 23
        %v4265 = vor.u32 4788187, %v4264
        %v4266 = vand.u32 2147483647, %v4265
        %v4268 = vcvt.s32.f32 %v4261
        %v4269 = vmul.f32 %v4268, %v4266
        %v4270 = vxor.u32 %v4269, 2147483648
        %v4271 = vsel %vm4188, %v4270, %v4269
        %v4272 = vsub.s32 4, %v4248
        %v4273 = vsel %vm4188, %v4272, %v4248
        %v4274 = vsel %vm4187, %v176, %v4271
        %v4275 = vsel %vm4187, 0, %v4273
        %v4276 = vcosq.f32.pop %v4274
        %v4277 = vsinq.f32.pop %v4274
        %vm4278 = vweird.f32 %v176
        %v4279 = vadd.s32 %v4275, 3
        %v4280 = vand.u32 %v4279, 3
        %vm4281 = vcmp.lt.s32.totalorder %v4280, 2
        %vm4282 = vcmp.eq.s32.totalorder %v4280, 0
        %v4283 = vxor.u32 %v4277, 2147483648
        %v4284 = vsel %vm4282, %v4276, %v4283
        %vm4285 = vcmp.eq.s32.totalorder %v4280, 2
        %v4286 = vxor.u32 %v4276, 2147483648
        %v4287 = vsel %vm4285, %v4286, %v4277
        %v4288 = vsel %vm4281, %v4284, %v4287
        %v4289 = vsel %vm4278, nan, %v4288
        %v4290 = vand.u32 2147483647, %v177
        %vm4291 = vcmp.le.f32.partialorder %v4290, 0.7853982
        %vm4292 = vcmp.lt.s32.totalorder %v177, 0
        %v4293 = vand.u32 %v177, 2139095040
        %v4294 = vshrl.u32 %v4293, 23
        %v4295 = vsub.s32 %v4294, 127
        %v4296 = vand.u32 2147483647, %v177
        %v4297 = vand.u32 %v4296, 8388607
        %v4298 = vor.u32 %v4297, 8388608
        %v4299 = vsub.s32 0, %v4298
        %v4300 = vadd.s32 %v4295, 1
        %vm4301 = vcmp.gt.s32.totalorder %v4300, 0
        %v4302 = vsel %vm4301, %v4300, 0
        %v4303 = vshrl.u32 %v4302, 5
        %v4304 = vand.u32 %v4302, 31
        %v4305 = vsub.s32 32, %v4304
        %v4306 = vshrl.u32 683565275, %v4305
        %v4307 = vshll.u32 683565275, %v4304
        %v4308 = vshrl.u32 2475754826, %v4305
        %v4309 = vor.u32 %v4307, %v4308
        %v4310 = vshll.u32 2475754826, %v4304
        %v4311 = vshrl.u32 2131351028, %v4305
        %v4312 = vor.u32 %v4310, %v4311
        %v4313 = vshll.u32 2131351028, %v4304
        %v4314 = vshrl.u32 2102212464, %v4305
        %v4315 = vor.u32 %v4313, %v4314
        %v4316 = vshll.u32 2102212464, %v4304
        %v4317 = vshrl.u32 920167782, %v4305
        %v4318 = vor.u32 %v4316, %v4317
        %v4319 = vshll.u32 920167782, %v4304
        %v4320 = vshrl.u32 1326507024, %v4305
        %v4321 = vor.u32 %v4319, %v4320
        %vm4322 = vcmp.lt.s32.totalorder %v4303, 1
        %vm4323 = vcmp.lt.s32.totalorder %v4303, 2
        %vm4324 = vcmp.lt.s32.totalorder %v4303, 3
        %vm4325 = vcmp.lt.s32.totalorder %v4303, 4
        %v4326 = vsel %vm4322, %v4306, %v4309
        %v4327 = vsel %vm4325, %v4315, 2102212464
        %v4328 = vsel %vm4324, %v4312, %v4327
        %v4329 = vsel %vm4323, %v4326, %v4328
        %v4330 = vsel %vm4322, %v4309, %v4312
        %v4331 = vsel %vm4325, %v4318, 920167782
        %v4332 = vsel %vm4324, %v4315, %v4331
        %v4333 = vsel %vm4323, %v4330, %v4332
        %v4334 = vsel %vm4322, %v4312, %v4315
        %v4335 = vsel %vm4325, %v4321, 1326507024
        %v4336 = vsel %vm4324, %v4318, %v4335
        %v4337 = vsel %vm4323, %v4334, %v4336
        %v4338 = vshll.u32 %v4298, 8
        %v4339 = vmul.u32.u64.compose %v4338, %v4337
        %v4340 = vextract.low.u32 %v4339
        %v4341 = vextract.high.u32 %v4339
        %v4342 = vmul.u32.u64.compose %v4338, %v4333
        %v4343 = vextract.low.u32 %v4342
        %v4344 = vextract.high.u32 %v4342
        %v4345 = vmul.u32 %v4338, %v4329
        %v4346 = vadd.s32 %v4341, %v4343
        %vm4347 = vc.u32 %v4341, %v4343
        %v4348 = vadd.s32 %v4344, 1
        %v4349 = vsel %vm4347, %v4348, %v4344
        %v4350 = vadd.s32 %v4345, %v4349
        %v4351 = vadd.s32 %v4350, 536870912
        %v4352 = vshrl.u32 %v4351, 30
        %v4353 = vshll.u32 %v4352, 30
        %v4354 = vsub.s32 %v4350, %v4353
        %vm4355 = vcmp.lt.s32.totalorder %v4354, 0
        %v4356 = vsub.s32 0, %v4354
        %v4357 = vsel %vm4355, %v4356, %v4354
        %v4358 = vclz %v4357
        %v4359 = vsub.s32 %v4358, 2
        %vm4360 = vcmp.gt.s32.totalorder 0, %v4359
        %v4361 = vsel %vm4360, 0, %v4359
        %v4362 = vsub.s32 32, %v4361
        %v4363 = vshll.u32 %v4354, %v4361
        %v4364 = vshrl.u32 %v4346, %v4362
        %v4365 = vor.u32 %v4363, %v4364
        %v4366 = vsub.s32 4294967266, %v4361
        %v4367 = vadd.s32 %v4366, 127
        %v4368 = vshll.u32 %v4367, 23
        %v4369 = vor.u32 4788187, %v4368
        %v4370 = vand.u32 2147483647, %v4369
        %v4372 = vcvt.s32.f32 %v4365
        %v4373 = vmul.f32 %v4372, %v4370
        %v4374 = vxor.u32 %v4373, 2147483648
        %v4375 = vsel %vm4292, %v4374, %v4373
        %v4376 = vsub.s32 4, %v4352
        %v4377 = vsel %vm4292, %v4376, %v4352
        %v4378 = vsel %vm4291, %v177, %v4375
        %v4379 = vsel %vm4291, 0, %v4377
        %v4380 = vcosq.f32.pop %v4378
        %v4381 = vsinq.f32.pop %v4378
        %vm4382 = vweird.f32 %v177
        %v4383 = vadd.s32 %v4379, 3
        %v4384 = vand.u32 %v4383, 3
        %vm4385 = vcmp.lt.s32.totalorder %v4384, 2
        %vm4386 = vcmp.eq.s32.totalorder %v4384, 0
        %v4387 = vxor.u32 %v4381, 2147483648
        %v4388 = vsel %vm4386, %v4380, %v4387
        %vm4389 = vcmp.eq.s32.totalorder %v4384, 2
        %v4390 = vxor.u32 %v4380, 2147483648
        %v4391 = vsel %vm4389, %v4390, %v4381
        %v4392 = vsel %vm4385, %v4388, %v4391
        %v4393 = vsel %vm4382, nan, %v4392
        %v4394 = vand.u32 2147483647, %v178
        %vm4395 = vcmp.le.f32.partialorder %v4394, 0.7853982
        %vm4396 = vcmp.lt.s32.totalorder %v178, 0
        %v4397 = vand.u32 %v178, 2139095040
        %v4398 = vshrl.u32 %v4397, 23
        %v4399 = vsub.s32 %v4398, 127
        %v4400 = vand.u32 2147483647, %v178
        %v4401 = vand.u32 %v4400, 8388607
        %v4402 = vor.u32 %v4401, 8388608
        %v4403 = vsub.s32 0, %v4402
        %v4404 = vadd.s32 %v4399, 1
        %vm4405 = vcmp.gt.s32.totalorder %v4404, 0
        %v4406 = vsel %vm4405, %v4404, 0
        %v4407 = vshrl.u32 %v4406, 5
        %v4408 = vand.u32 %v4406, 31
        %v4409 = vsub.s32 32, %v4408
        %v4410 = vshrl.u32 683565275, %v4409
        %v4411 = vshll.u32 683565275, %v4408
        %v4412 = vshrl.u32 2475754826, %v4409
        %v4413 = vor.u32 %v4411, %v4412
        %v4414 = vshll.u32 2475754826, %v4408
        %v4415 = vshrl.u32 2131351028, %v4409
        %v4416 = vor.u32 %v4414, %v4415
        %v4417 = vshll.u32 2131351028, %v4408
        %v4418 = vshrl.u32 2102212464, %v4409
        %v4419 = vor.u32 %v4417, %v4418
        %v4420 = vshll.u32 2102212464, %v4408
        %v4421 = vshrl.u32 920167782, %v4409
        %v4422 = vor.u32 %v4420, %v4421
        %v4423 = vshll.u32 920167782, %v4408
        %v4424 = vshrl.u32 1326507024, %v4409
        %v4425 = vor.u32 %v4423, %v4424
        %vm4426 = vcmp.lt.s32.totalorder %v4407, 1
        %vm4427 = vcmp.lt.s32.totalorder %v4407, 2
        %vm4428 = vcmp.lt.s32.totalorder %v4407, 3
        %vm4429 = vcmp.lt.s32.totalorder %v4407, 4
        %v4430 = vsel %vm4426, %v4410, %v4413
        %v4431 = vsel %vm4429, %v4419, 2102212464
        %v4432 = vsel %vm4428, %v4416, %v4431
        %v4433 = vsel %vm4427, %v4430, %v4432
        %v4434 = vsel %vm4426, %v4413, %v4416
        %v4435 = vsel %vm4429, %v4422, 920167782
        %v4436 = vsel %vm4428, %v4419, %v4435
        %v4437 = vsel %vm4427, %v4434, %v4436
        %v4438 = vsel %vm4426, %v4416, %v4419
        %v4439 = vsel %vm4429, %v4425, 1326507024
        %v4440 = vsel %vm4428, %v4422, %v4439
        %v4441 = vsel %vm4427, %v4438, %v4440
        %v4442 = vshll.u32 %v4402, 8
        %v4443 = vmul.u32.u64.compose %v4442, %v4441
        %v4444 = vextract.low.u32 %v4443
        %v4445 = vextract.high.u32 %v4443
        %v4446 = vmul.u32.u64.compose %v4442, %v4437
        %v4447 = vextract.low.u32 %v4446
        %v4448 = vextract.high.u32 %v4446
        %v4449 = vmul.u32 %v4442, %v4433
        %v4450 = vadd.s32 %v4445, %v4447
        %vm4451 = vc.u32 %v4445, %v4447
        %v4452 = vadd.s32 %v4448, 1
        %v4453 = vsel %vm4451, %v4452, %v4448
        %v4454 = vadd.s32 %v4449, %v4453
        %v4455 = vadd.s32 %v4454, 536870912
        %v4456 = vshrl.u32 %v4455, 30
        %v4457 = vshll.u32 %v4456, 30
        %v4458 = vsub.s32 %v4454, %v4457
        %vm4459 = vcmp.lt.s32.totalorder %v4458, 0
        %v4460 = vsub.s32 0, %v4458
        %v4461 = vsel %vm4459, %v4460, %v4458
        %v4462 = vclz %v4461
        %v4463 = vsub.s32 %v4462, 2
        %vm4464 = vcmp.gt.s32.totalorder 0, %v4463
        %v4465 = vsel %vm4464, 0, %v4463
        %v4466 = vsub.s32 32, %v4465
        %v4467 = vshll.u32 %v4458, %v4465
        %v4468 = vshrl.u32 %v4450, %v4466
        %v4469 = vor.u32 %v4467, %v4468
        %v4470 = vsub.s32 4294967266, %v4465
        %v4471 = vadd.s32 %v4470, 127
        %v4472 = vshll.u32 %v4471, 23
        %v4473 = vor.u32 4788187, %v4472
        %v4474 = vand.u32 2147483647, %v4473
        %v4476 = vcvt.s32.f32 %v4469
        %v4477 = vmul.f32 %v4476, %v4474
        %v4478 = vxor.u32 %v4477, 2147483648
        %v4479 = vsel %vm4396, %v4478, %v4477
        %v4480 = vsub.s32 4, %v4456
        %v4481 = vsel %vm4396, %v4480, %v4456
        %v4482 = vsel %vm4395, %v178, %v4479
        %v4483 = vsel %vm4395, 0, %v4481
        %v4484 = vcosq.f32.pop %v4482
        %v4485 = vsinq.f32.pop %v4482
        %vm4486 = vweird.f32 %v178
        %v4487 = vadd.s32 %v4483, 3
        %v4488 = vand.u32 %v4487, 3
        %vm4489 = vcmp.lt.s32.totalorder %v4488, 2
        %vm4490 = vcmp.eq.s32.totalorder %v4488, 0
        %v4491 = vxor.u32 %v4485, 2147483648
        %v4492 = vsel %vm4490, %v4484, %v4491
        %vm4493 = vcmp.eq.s32.totalorder %v4488, 2
        %v4494 = vxor.u32 %v4484, 2147483648
        %v4495 = vsel %vm4493, %v4494, %v4485
        %v4496 = vsel %vm4489, %v4492, %v4495
        %v4497 = vsel %vm4486, nan, %v4496
        %v4498 = vand.u32 2147483647, %v179
        %vm4499 = vcmp.le.f32.partialorder %v4498, 0.7853982
        %vm4500 = vcmp.lt.s32.totalorder %v179, 0
        %v4501 = vand.u32 %v179, 2139095040
        %v4502 = vshrl.u32 %v4501, 23
        %v4503 = vsub.s32 %v4502, 127
        %v4504 = vand.u32 2147483647, %v179
        %v4505 = vand.u32 %v4504, 8388607
        %v4506 = vor.u32 %v4505, 8388608
        %v4507 = vsub.s32 0, %v4506
        %v4508 = vadd.s32 %v4503, 1
        %vm4509 = vcmp.gt.s32.totalorder %v4508, 0
        %v4510 = vsel %vm4509, %v4508, 0
        %v4511 = vshrl.u32 %v4510, 5
        %v4512 = vand.u32 %v4510, 31
        %v4513 = vsub.s32 32, %v4512
        %v4514 = vshrl.u32 683565275, %v4513
        %v4515 = vshll.u32 683565275, %v4512
        %v4516 = vshrl.u32 2475754826, %v4513
        %v4517 = vor.u32 %v4515, %v4516
        %v4518 = vshll.u32 2475754826, %v4512
        %v4519 = vshrl.u32 2131351028, %v4513
        %v4520 = vor.u32 %v4518, %v4519
        %v4521 = vshll.u32 2131351028, %v4512
        %v4522 = vshrl.u32 2102212464, %v4513
        %v4523 = vor.u32 %v4521, %v4522
        %v4524 = vshll.u32 2102212464, %v4512
        %v4525 = vshrl.u32 920167782, %v4513
        %v4526 = vor.u32 %v4524, %v4525
        %v4527 = vshll.u32 920167782, %v4512
        %v4528 = vshrl.u32 1326507024, %v4513
        %v4529 = vor.u32 %v4527, %v4528
        %vm4530 = vcmp.lt.s32.totalorder %v4511, 1
        %vm4531 = vcmp.lt.s32.totalorder %v4511, 2
        %vm4532 = vcmp.lt.s32.totalorder %v4511, 3
        %vm4533 = vcmp.lt.s32.totalorder %v4511, 4
        %v4534 = vsel %vm4530, %v4514, %v4517
        %v4535 = vsel %vm4533, %v4523, 2102212464
        %v4536 = vsel %vm4532, %v4520, %v4535
        %v4537 = vsel %vm4531, %v4534, %v4536
        %v4538 = vsel %vm4530, %v4517, %v4520
        %v4539 = vsel %vm4533, %v4526, 920167782
        %v4540 = vsel %vm4532, %v4523, %v4539
        %v4541 = vsel %vm4531, %v4538, %v4540
        %v4542 = vsel %vm4530, %v4520, %v4523
        %v4543 = vsel %vm4533, %v4529, 1326507024
        %v4544 = vsel %vm4532, %v4526, %v4543
        %v4545 = vsel %vm4531, %v4542, %v4544
        %v4546 = vshll.u32 %v4506, 8
        %v4547 = vmul.u32.u64.compose %v4546, %v4545
        %v4548 = vextract.low.u32 %v4547
        %v4549 = vextract.high.u32 %v4547
        %v4550 = vmul.u32.u64.compose %v4546, %v4541
        %v4551 = vextract.low.u32 %v4550
        %v4552 = vextract.high.u32 %v4550
        %v4553 = vmul.u32 %v4546, %v4537
        %v4554 = vadd.s32 %v4549, %v4551
        %vm4555 = vc.u32 %v4549, %v4551
        %v4556 = vadd.s32 %v4552, 1
        %v4557 = vsel %vm4555, %v4556, %v4552
        %v4558 = vadd.s32 %v4553, %v4557
        %v4559 = vadd.s32 %v4558, 536870912
        %v4560 = vshrl.u32 %v4559, 30
        %v4561 = vshll.u32 %v4560, 30
        %v4562 = vsub.s32 %v4558, %v4561
        %vm4563 = vcmp.lt.s32.totalorder %v4562, 0
        %v4564 = vsub.s32 0, %v4562
        %v4565 = vsel %vm4563, %v4564, %v4562
        %v4566 = vclz %v4565
        %v4567 = vsub.s32 %v4566, 2
        %vm4568 = vcmp.gt.s32.totalorder 0, %v4567
        %v4569 = vsel %vm4568, 0, %v4567
        %v4570 = vsub.s32 32, %v4569
        %v4571 = vshll.u32 %v4562, %v4569
        %v4572 = vshrl.u32 %v4554, %v4570
        %v4573 = vor.u32 %v4571, %v4572
        %v4574 = vsub.s32 4294967266, %v4569
        %v4575 = vadd.s32 %v4574, 127
        %v4576 = vshll.u32 %v4575, 23
        %v4577 = vor.u32 4788187, %v4576
        %v4578 = vand.u32 2147483647, %v4577
        %v4580 = vcvt.s32.f32 %v4573
        %v4581 = vmul.f32 %v4580, %v4578
        %v4582 = vxor.u32 %v4581, 2147483648
        %v4583 = vsel %vm4500, %v4582, %v4581
        %v4584 = vsub.s32 4, %v4560
        %v4585 = vsel %vm4500, %v4584, %v4560
        %v4586 = vsel %vm4499, %v179, %v4583
        %v4587 = vsel %vm4499, 0, %v4585
        %v4588 = vcosq.f32.pop %v4586
        %v4589 = vsinq.f32.pop %v4586
        %vm4590 = vweird.f32 %v179
        %v4591 = vadd.s32 %v4587, 3
        %v4592 = vand.u32 %v4591, 3
        %vm4593 = vcmp.lt.s32.totalorder %v4592, 2
        %vm4594 = vcmp.eq.s32.totalorder %v4592, 0
        %v4595 = vxor.u32 %v4589, 2147483648
        %v4596 = vsel %vm4594, %v4588, %v4595
        %vm4597 = vcmp.eq.s32.totalorder %v4592, 2
        %v4598 = vxor.u32 %v4588, 2147483648
        %v4599 = vsel %vm4597, %v4598, %v4589
        %v4600 = vsel %vm4593, %v4596, %v4599
        %v4601 = vsel %vm4590, nan, %v4600
        %v4602 = vand.u32 2147483647, %v180
        %vm4603 = vcmp.le.f32.partialorder %v4602, 0.7853982
        %vm4604 = vcmp.lt.s32.totalorder %v180, 0
        %v4605 = vand.u32 %v180, 2139095040
        %v4606 = vshrl.u32 %v4605, 23
        %v4607 = vsub.s32 %v4606, 127
        %v4608 = vand.u32 2147483647, %v180
        %v4609 = vand.u32 %v4608, 8388607
        %v4610 = vor.u32 %v4609, 8388608
        %v4611 = vsub.s32 0, %v4610
        %v4612 = vadd.s32 %v4607, 1
        %vm4613 = vcmp.gt.s32.totalorder %v4612, 0
        %v4614 = vsel %vm4613, %v4612, 0
        %v4615 = vshrl.u32 %v4614, 5
        %v4616 = vand.u32 %v4614, 31
        %v4617 = vsub.s32 32, %v4616
        %v4618 = vshrl.u32 683565275, %v4617
        %v4619 = vshll.u32 683565275, %v4616
        %v4620 = vshrl.u32 2475754826, %v4617
        %v4621 = vor.u32 %v4619, %v4620
        %v4622 = vshll.u32 2475754826, %v4616
        %v4623 = vshrl.u32 2131351028, %v4617
        %v4624 = vor.u32 %v4622, %v4623
        %v4625 = vshll.u32 2131351028, %v4616
        %v4626 = vshrl.u32 2102212464, %v4617
        %v4627 = vor.u32 %v4625, %v4626
        %v4628 = vshll.u32 2102212464, %v4616
        %v4629 = vshrl.u32 920167782, %v4617
        %v4630 = vor.u32 %v4628, %v4629
        %v4631 = vshll.u32 920167782, %v4616
        %v4632 = vshrl.u32 1326507024, %v4617
        %v4633 = vor.u32 %v4631, %v4632
        %vm4634 = vcmp.lt.s32.totalorder %v4615, 1
        %vm4635 = vcmp.lt.s32.totalorder %v4615, 2
        %vm4636 = vcmp.lt.s32.totalorder %v4615, 3
        %vm4637 = vcmp.lt.s32.totalorder %v4615, 4
        %v4638 = vsel %vm4634, %v4618, %v4621
        %v4639 = vsel %vm4637, %v4627, 2102212464
        %v4640 = vsel %vm4636, %v4624, %v4639
        %v4641 = vsel %vm4635, %v4638, %v4640
        %v4642 = vsel %vm4634, %v4621, %v4624
        %v4643 = vsel %vm4637, %v4630, 920167782
        %v4644 = vsel %vm4636, %v4627, %v4643
        %v4645 = vsel %vm4635, %v4642, %v4644
        %v4646 = vsel %vm4634, %v4624, %v4627
        %v4647 = vsel %vm4637, %v4633, 1326507024
        %v4648 = vsel %vm4636, %v4630, %v4647
        %v4649 = vsel %vm4635, %v4646, %v4648
        %v4650 = vshll.u32 %v4610, 8
        %v4651 = vmul.u32.u64.compose %v4650, %v4649
        %v4652 = vextract.low.u32 %v4651
        %v4653 = vextract.high.u32 %v4651
        %v4654 = vmul.u32.u64.compose %v4650, %v4645
        %v4655 = vextract.low.u32 %v4654
        %v4656 = vextract.high.u32 %v4654
        %v4657 = vmul.u32 %v4650, %v4641
        %v4658 = vadd.s32 %v4653, %v4655
        %vm4659 = vc.u32 %v4653, %v4655
        %v4660 = vadd.s32 %v4656, 1
        %v4661 = vsel %vm4659, %v4660, %v4656
        %v4662 = vadd.s32 %v4657, %v4661
        %v4663 = vadd.s32 %v4662, 536870912
        %v4664 = vshrl.u32 %v4663, 30
        %v4665 = vshll.u32 %v4664, 30
        %v4666 = vsub.s32 %v4662, %v4665
        %vm4667 = vcmp.lt.s32.totalorder %v4666, 0
        %v4668 = vsub.s32 0, %v4666
        %v4669 = vsel %vm4667, %v4668, %v4666
        %v4670 = vclz %v4669
        %v4671 = vsub.s32 %v4670, 2
        %vm4672 = vcmp.gt.s32.totalorder 0, %v4671
        %v4673 = vsel %vm4672, 0, %v4671
        %v4674 = vsub.s32 32, %v4673
        %v4675 = vshll.u32 %v4666, %v4673
        %v4676 = vshrl.u32 %v4658, %v4674
        %v4677 = vor.u32 %v4675, %v4676
        %v4678 = vsub.s32 4294967266, %v4673
        %v4679 = vadd.s32 %v4678, 127
        %v4680 = vshll.u32 %v4679, 23
        %v4681 = vor.u32 4788187, %v4680
        %v4682 = vand.u32 2147483647, %v4681
        %v4684 = vcvt.s32.f32 %v4677
        %v4685 = vmul.f32 %v4684, %v4682
        %v4686 = vxor.u32 %v4685, 2147483648
        %v4687 = vsel %vm4604, %v4686, %v4685
        %v4688 = vsub.s32 4, %v4664
        %v4689 = vsel %vm4604, %v4688, %v4664
        %v4690 = vsel %vm4603, %v180, %v4687
        %v4691 = vsel %vm4603, 0, %v4689
        %v4692 = vcosq.f32.pop %v4690
        %v4693 = vsinq.f32.pop %v4690
        %vm4694 = vweird.f32 %v180
        %v4695 = vadd.s32 %v4691, 3
        %v4696 = vand.u32 %v4695, 3
        %vm4697 = vcmp.lt.s32.totalorder %v4696, 2
        %vm4698 = vcmp.eq.s32.totalorder %v4696, 0
        %v4699 = vxor.u32 %v4693, 2147483648
        %v4700 = vsel %vm4698, %v4692, %v4699
        %vm4701 = vcmp.eq.s32.totalorder %v4696, 2
        %v4702 = vxor.u32 %v4692, 2147483648
        %v4703 = vsel %vm4701, %v4702, %v4693
        %v4704 = vsel %vm4697, %v4700, %v4703
        %v4705 = vsel %vm4694, nan, %v4704
        %v4706 = vand.u32 2147483647, %v181
        %vm4707 = vcmp.le.f32.partialorder %v4706, 0.7853982
        %vm4708 = vcmp.lt.s32.totalorder %v181, 0
        %v4709 = vand.u32 %v181, 2139095040
        %v4710 = vshrl.u32 %v4709, 23
        %v4711 = vsub.s32 %v4710, 127
        %v4712 = vand.u32 2147483647, %v181
        %v4713 = vand.u32 %v4712, 8388607
        %v4714 = vor.u32 %v4713, 8388608
        %v4715 = vsub.s32 0, %v4714
        %v4716 = vadd.s32 %v4711, 1
        %vm4717 = vcmp.gt.s32.totalorder %v4716, 0
        %v4718 = vsel %vm4717, %v4716, 0
        %v4719 = vshrl.u32 %v4718, 5
        %v4720 = vand.u32 %v4718, 31
        %v4721 = vsub.s32 32, %v4720
        %v4722 = vshrl.u32 683565275, %v4721
        %v4723 = vshll.u32 683565275, %v4720
        %v4724 = vshrl.u32 2475754826, %v4721
        %v4725 = vor.u32 %v4723, %v4724
        %v4726 = vshll.u32 2475754826, %v4720
        %v4727 = vshrl.u32 2131351028, %v4721
        %v4728 = vor.u32 %v4726, %v4727
        %v4729 = vshll.u32 2131351028, %v4720
        %v4730 = vshrl.u32 2102212464, %v4721
        %v4731 = vor.u32 %v4729, %v4730
        %v4732 = vshll.u32 2102212464, %v4720
        %v4733 = vshrl.u32 920167782, %v4721
        %v4734 = vor.u32 %v4732, %v4733
        %v4735 = vshll.u32 920167782, %v4720
        %v4736 = vshrl.u32 1326507024, %v4721
        %v4737 = vor.u32 %v4735, %v4736
        %vm4738 = vcmp.lt.s32.totalorder %v4719, 1
        %vm4739 = vcmp.lt.s32.totalorder %v4719, 2
        %vm4740 = vcmp.lt.s32.totalorder %v4719, 3
        %vm4741 = vcmp.lt.s32.totalorder %v4719, 4
        %v4742 = vsel %vm4738, %v4722, %v4725
        %v4743 = vsel %vm4741, %v4731, 2102212464
        %v4744 = vsel %vm4740, %v4728, %v4743
        %v4745 = vsel %vm4739, %v4742, %v4744
        %v4746 = vsel %vm4738, %v4725, %v4728
        %v4747 = vsel %vm4741, %v4734, 920167782
        %v4748 = vsel %vm4740, %v4731, %v4747
        %v4749 = vsel %vm4739, %v4746, %v4748
        %v4750 = vsel %vm4738, %v4728, %v4731
        %v4751 = vsel %vm4741, %v4737, 1326507024
        %v4752 = vsel %vm4740, %v4734, %v4751
        %v4753 = vsel %vm4739, %v4750, %v4752
        %v4754 = vshll.u32 %v4714, 8
        %v4755 = vmul.u32.u64.compose %v4754, %v4753
        %v4756 = vextract.low.u32 %v4755
        %v4757 = vextract.high.u32 %v4755
        %v4758 = vmul.u32.u64.compose %v4754, %v4749
        %v4759 = vextract.low.u32 %v4758
        %v4760 = vextract.high.u32 %v4758
        %v4761 = vmul.u32 %v4754, %v4745
        %v4762 = vadd.s32 %v4757, %v4759
        %vm4763 = vc.u32 %v4757, %v4759
        %v4764 = vadd.s32 %v4760, 1
        %v4765 = vsel %vm4763, %v4764, %v4760
        %v4766 = vadd.s32 %v4761, %v4765
        %v4767 = vadd.s32 %v4766, 536870912
        %v4768 = vshrl.u32 %v4767, 30
        %v4769 = vshll.u32 %v4768, 30
        %v4770 = vsub.s32 %v4766, %v4769
        %vm4771 = vcmp.lt.s32.totalorder %v4770, 0
        %v4772 = vsub.s32 0, %v4770
        %v4773 = vsel %vm4771, %v4772, %v4770
        %v4774 = vclz %v4773
        %v4775 = vsub.s32 %v4774, 2
        %vm4776 = vcmp.gt.s32.totalorder 0, %v4775
        %v4777 = vsel %vm4776, 0, %v4775
        %v4778 = vsub.s32 32, %v4777
        %v4779 = vshll.u32 %v4770, %v4777
        %v4780 = vshrl.u32 %v4762, %v4778
        %v4781 = vor.u32 %v4779, %v4780
        %v4782 = vsub.s32 4294967266, %v4777
        %v4783 = vadd.s32 %v4782, 127
        %v4784 = vshll.u32 %v4783, 23
        %v4785 = vor.u32 4788187, %v4784
        %v4786 = vand.u32 2147483647, %v4785
        %v4788 = vcvt.s32.f32 %v4781
        %v4789 = vmul.f32 %v4788, %v4786
        %v4790 = vxor.u32 %v4789, 2147483648
        %v4791 = vsel %vm4708, %v4790, %v4789
        %v4792 = vsub.s32 4, %v4768
        %v4793 = vsel %vm4708, %v4792, %v4768
        %v4794 = vsel %vm4707, %v181, %v4791
        %v4795 = vsel %vm4707, 0, %v4793
        %v4796 = vcosq.f32.pop %v4794
        %v4797 = vsinq.f32.pop %v4794
        %vm4798 = vweird.f32 %v181
        %v4799 = vadd.s32 %v4795, 3
        %v4800 = vand.u32 %v4799, 3
        %vm4801 = vcmp.lt.s32.totalorder %v4800, 2
        %vm4802 = vcmp.eq.s32.totalorder %v4800, 0
        %v4803 = vxor.u32 %v4797, 2147483648
        %v4804 = vsel %vm4802, %v4796, %v4803
        %vm4805 = vcmp.eq.s32.totalorder %v4800, 2
        %v4806 = vxor.u32 %v4796, 2147483648
        %v4807 = vsel %vm4805, %v4806, %v4797
        %v4808 = vsel %vm4801, %v4804, %v4807
        %v4809 = vsel %vm4798, nan, %v4808
        %v4810 = vand.u32 2147483647, %v182
        %vm4811 = vcmp.le.f32.partialorder %v4810, 0.7853982
        %vm4812 = vcmp.lt.s32.totalorder %v182, 0
        %v4813 = vand.u32 %v182, 2139095040
        %v4814 = vshrl.u32 %v4813, 23
        %v4815 = vsub.s32 %v4814, 127
        %v4816 = vand.u32 2147483647, %v182
        %v4817 = vand.u32 %v4816, 8388607
        %v4818 = vor.u32 %v4817, 8388608
        %v4819 = vsub.s32 0, %v4818
        %v4820 = vadd.s32 %v4815, 1
        %vm4821 = vcmp.gt.s32.totalorder %v4820, 0
        %v4822 = vsel %vm4821, %v4820, 0
        %v4823 = vshrl.u32 %v4822, 5
        %v4824 = vand.u32 %v4822, 31
        %v4825 = vsub.s32 32, %v4824
        %v4826 = vshrl.u32 683565275, %v4825
        %v4827 = vshll.u32 683565275, %v4824
        %v4828 = vshrl.u32 2475754826, %v4825
        %v4829 = vor.u32 %v4827, %v4828
        %v4830 = vshll.u32 2475754826, %v4824
        %v4831 = vshrl.u32 2131351028, %v4825
        %v4832 = vor.u32 %v4830, %v4831
        %v4833 = vshll.u32 2131351028, %v4824
        %v4834 = vshrl.u32 2102212464, %v4825
        %v4835 = vor.u32 %v4833, %v4834
        %v4836 = vshll.u32 2102212464, %v4824
        %v4837 = vshrl.u32 920167782, %v4825
        %v4838 = vor.u32 %v4836, %v4837
        %v4839 = vshll.u32 920167782, %v4824
        %v4840 = vshrl.u32 1326507024, %v4825
        %v4841 = vor.u32 %v4839, %v4840
        %vm4842 = vcmp.lt.s32.totalorder %v4823, 1
        %vm4843 = vcmp.lt.s32.totalorder %v4823, 2
        %vm4844 = vcmp.lt.s32.totalorder %v4823, 3
        %vm4845 = vcmp.lt.s32.totalorder %v4823, 4
        %v4846 = vsel %vm4842, %v4826, %v4829
        %v4847 = vsel %vm4845, %v4835, 2102212464
        %v4848 = vsel %vm4844, %v4832, %v4847
        %v4849 = vsel %vm4843, %v4846, %v4848
        %v4850 = vsel %vm4842, %v4829, %v4832
        %v4851 = vsel %vm4845, %v4838, 920167782
        %v4852 = vsel %vm4844, %v4835, %v4851
        %v4853 = vsel %vm4843, %v4850, %v4852
        %v4854 = vsel %vm4842, %v4832, %v4835
        %v4855 = vsel %vm4845, %v4841, 1326507024
        %v4856 = vsel %vm4844, %v4838, %v4855
        %v4857 = vsel %vm4843, %v4854, %v4856
        %v4858 = vshll.u32 %v4818, 8
        %v4859 = vmul.u32.u64.compose %v4858, %v4857
        %v4860 = vextract.low.u32 %v4859
        %v4861 = vextract.high.u32 %v4859
        %v4862 = vmul.u32.u64.compose %v4858, %v4853
        %v4863 = vextract.low.u32 %v4862
        %v4864 = vextract.high.u32 %v4862
        %v4865 = vmul.u32 %v4858, %v4849
        %v4866 = vadd.s32 %v4861, %v4863
        %vm4867 = vc.u32 %v4861, %v4863
        %v4868 = vadd.s32 %v4864, 1
        %v4869 = vsel %vm4867, %v4868, %v4864
        %v4870 = vadd.s32 %v4865, %v4869
        %v4871 = vadd.s32 %v4870, 536870912
        %v4872 = vshrl.u32 %v4871, 30
        %v4873 = vshll.u32 %v4872, 30
        %v4874 = vsub.s32 %v4870, %v4873
        %vm4875 = vcmp.lt.s32.totalorder %v4874, 0
        %v4876 = vsub.s32 0, %v4874
        %v4877 = vsel %vm4875, %v4876, %v4874
        %v4878 = vclz %v4877
        %v4879 = vsub.s32 %v4878, 2
        %vm4880 = vcmp.gt.s32.totalorder 0, %v4879
        %v4881 = vsel %vm4880, 0, %v4879
        %v4882 = vsub.s32 32, %v4881
        %v4883 = vshll.u32 %v4874, %v4881
        %v4884 = vshrl.u32 %v4866, %v4882
        %v4885 = vor.u32 %v4883, %v4884
        %v4886 = vsub.s32 4294967266, %v4881
        %v4887 = vadd.s32 %v4886, 127
        %v4888 = vshll.u32 %v4887, 23
        %v4889 = vor.u32 4788187, %v4888
        %v4890 = vand.u32 2147483647, %v4889
        %v4892 = vcvt.s32.f32 %v4885
        %v4893 = vmul.f32 %v4892, %v4890
        %v4894 = vxor.u32 %v4893, 2147483648
        %v4895 = vsel %vm4812, %v4894, %v4893
        %v4896 = vsub.s32 4, %v4872
        %v4897 = vsel %vm4812, %v4896, %v4872
        %v4898 = vsel %vm4811, %v182, %v4895
        %v4899 = vsel %vm4811, 0, %v4897
        %v4900 = vcosq.f32.pop %v4898
        %v4901 = vsinq.f32.pop %v4898
        %vm4902 = vweird.f32 %v182
        %v4903 = vadd.s32 %v4899, 3
        %v4904 = vand.u32 %v4903, 3
        %vm4905 = vcmp.lt.s32.totalorder %v4904, 2
        %vm4906 = vcmp.eq.s32.totalorder %v4904, 0
        %v4907 = vxor.u32 %v4901, 2147483648
        %v4908 = vsel %vm4906, %v4900, %v4907
        %vm4909 = vcmp.eq.s32.totalorder %v4904, 2
        %v4910 = vxor.u32 %v4900, 2147483648
        %v4911 = vsel %vm4909, %v4910, %v4901
        %v4912 = vsel %vm4905, %v4908, %v4911
        %v4913 = vsel %vm4902, nan, %v4912
        %v4914 = vand.u32 2147483647, %v183
        %vm4915 = vcmp.le.f32.partialorder %v4914, 0.7853982
        %vm4916 = vcmp.lt.s32.totalorder %v183, 0
        %v4917 = vand.u32 %v183, 2139095040
        %v4918 = vshrl.u32 %v4917, 23
        %v4919 = vsub.s32 %v4918, 127
        %v4920 = vand.u32 2147483647, %v183
        %v4921 = vand.u32 %v4920, 8388607
        %v4922 = vor.u32 %v4921, 8388608
        %v4923 = vsub.s32 0, %v4922
        %v4924 = vadd.s32 %v4919, 1
        %vm4925 = vcmp.gt.s32.totalorder %v4924, 0
        %v4926 = vsel %vm4925, %v4924, 0
        %v4927 = vshrl.u32 %v4926, 5
        %v4928 = vand.u32 %v4926, 31
        %v4929 = vsub.s32 32, %v4928
        %v4930 = vshrl.u32 683565275, %v4929
        %v4931 = vshll.u32 683565275, %v4928
        %v4932 = vshrl.u32 2475754826, %v4929
        %v4933 = vor.u32 %v4931, %v4932
        %v4934 = vshll.u32 2475754826, %v4928
        %v4935 = vshrl.u32 2131351028, %v4929
        %v4936 = vor.u32 %v4934, %v4935
        %v4937 = vshll.u32 2131351028, %v4928
        %v4938 = vshrl.u32 2102212464, %v4929
        %v4939 = vor.u32 %v4937, %v4938
        %v4940 = vshll.u32 2102212464, %v4928
        %v4941 = vshrl.u32 920167782, %v4929
        %v4942 = vor.u32 %v4940, %v4941
        %v4943 = vshll.u32 920167782, %v4928
        %v4944 = vshrl.u32 1326507024, %v4929
        %v4945 = vor.u32 %v4943, %v4944
        %vm4946 = vcmp.lt.s32.totalorder %v4927, 1
        %vm4947 = vcmp.lt.s32.totalorder %v4927, 2
        %vm4948 = vcmp.lt.s32.totalorder %v4927, 3
        %vm4949 = vcmp.lt.s32.totalorder %v4927, 4
        %v4950 = vsel %vm4946, %v4930, %v4933
        %v4951 = vsel %vm4949, %v4939, 2102212464
        %v4952 = vsel %vm4948, %v4936, %v4951
        %v4953 = vsel %vm4947, %v4950, %v4952
        %v4954 = vsel %vm4946, %v4933, %v4936
        %v4955 = vsel %vm4949, %v4942, 920167782
        %v4956 = vsel %vm4948, %v4939, %v4955
        %v4957 = vsel %vm4947, %v4954, %v4956
        %v4958 = vsel %vm4946, %v4936, %v4939
        %v4959 = vsel %vm4949, %v4945, 1326507024
        %v4960 = vsel %vm4948, %v4942, %v4959
        %v4961 = vsel %vm4947, %v4958, %v4960
        %v4962 = vshll.u32 %v4922, 8
        %v4963 = vmul.u32.u64.compose %v4962, %v4961
        %v4964 = vextract.low.u32 %v4963
        %v4965 = vextract.high.u32 %v4963
        %v4966 = vmul.u32.u64.compose %v4962, %v4957
        %v4967 = vextract.low.u32 %v4966
        %v4968 = vextract.high.u32 %v4966
        %v4969 = vmul.u32 %v4962, %v4953
        %v4970 = vadd.s32 %v4965, %v4967
        %vm4971 = vc.u32 %v4965, %v4967
        %v4972 = vadd.s32 %v4968, 1
        %v4973 = vsel %vm4971, %v4972, %v4968
        %v4974 = vadd.s32 %v4969, %v4973
        %v4975 = vadd.s32 %v4974, 536870912
        %v4976 = vshrl.u32 %v4975, 30
        %v4977 = vshll.u32 %v4976, 30
        %v4978 = vsub.s32 %v4974, %v4977
        %vm4979 = vcmp.lt.s32.totalorder %v4978, 0
        %v4980 = vsub.s32 0, %v4978
        %v4981 = vsel %vm4979, %v4980, %v4978
        %v4982 = vclz %v4981
        %v4983 = vsub.s32 %v4982, 2
        %vm4984 = vcmp.gt.s32.totalorder 0, %v4983
        %v4985 = vsel %vm4984, 0, %v4983
        %v4986 = vsub.s32 32, %v4985
        %v4987 = vshll.u32 %v4978, %v4985
        %v4988 = vshrl.u32 %v4970, %v4986
        %v4989 = vor.u32 %v4987, %v4988
        %v4990 = vsub.s32 4294967266, %v4985
        %v4991 = vadd.s32 %v4990, 127
        %v4992 = vshll.u32 %v4991, 23
        %v4993 = vor.u32 4788187, %v4992
        %v4994 = vand.u32 2147483647, %v4993
        %v4996 = vcvt.s32.f32 %v4989
        %v4997 = vmul.f32 %v4996, %v4994
        %v4998 = vxor.u32 %v4997, 2147483648
        %v4999 = vsel %vm4916, %v4998, %v4997
        %v5000 = vsub.s32 4, %v4976
        %v5001 = vsel %vm4916, %v5000, %v4976
        %v5002 = vsel %vm4915, %v183, %v4999
        %v5003 = vsel %vm4915, 0, %v5001
        %v5004 = vcosq.f32.pop %v5002
        %v5005 = vsinq.f32.pop %v5002
        %vm5006 = vweird.f32 %v183
        %v5007 = vadd.s32 %v5003, 3
        %v5008 = vand.u32 %v5007, 3
        %vm5009 = vcmp.lt.s32.totalorder %v5008, 2
        %vm5010 = vcmp.eq.s32.totalorder %v5008, 0
        %v5011 = vxor.u32 %v5005, 2147483648
        %v5012 = vsel %vm5010, %v5004, %v5011
        %vm5013 = vcmp.eq.s32.totalorder %v5008, 2
        %v5014 = vxor.u32 %v5004, 2147483648
        %v5015 = vsel %vm5013, %v5014, %v5005
        %v5016 = vsel %vm5009, %v5012, %v5015
        %v5017 = vsel %vm5006, nan, %v5016
        %v5018 = vand.u32 2147483647, %v184
        %vm5019 = vcmp.le.f32.partialorder %v5018, 0.7853982
        %vm5020 = vcmp.lt.s32.totalorder %v184, 0
        %v5021 = vand.u32 %v184, 2139095040
        %v5022 = vshrl.u32 %v5021, 23
        %v5023 = vsub.s32 %v5022, 127
        %v5024 = vand.u32 2147483647, %v184
        %v5025 = vand.u32 %v5024, 8388607
        %v5026 = vor.u32 %v5025, 8388608
        %v5027 = vsub.s32 0, %v5026
        %v5028 = vadd.s32 %v5023, 1
        %vm5029 = vcmp.gt.s32.totalorder %v5028, 0
        %v5030 = vsel %vm5029, %v5028, 0
        %v5031 = vshrl.u32 %v5030, 5
        %v5032 = vand.u32 %v5030, 31
        %v5033 = vsub.s32 32, %v5032
        %v5034 = vshrl.u32 683565275, %v5033
        %v5035 = vshll.u32 683565275, %v5032
        %v5036 = vshrl.u32 2475754826, %v5033
        %v5037 = vor.u32 %v5035, %v5036
        %v5038 = vshll.u32 2475754826, %v5032
        %v5039 = vshrl.u32 2131351028, %v5033
        %v5040 = vor.u32 %v5038, %v5039
        %v5041 = vshll.u32 2131351028, %v5032
        %v5042 = vshrl.u32 2102212464, %v5033
        %v5043 = vor.u32 %v5041, %v5042
        %v5044 = vshll.u32 2102212464, %v5032
        %v5045 = vshrl.u32 920167782, %v5033
        %v5046 = vor.u32 %v5044, %v5045
        %v5047 = vshll.u32 920167782, %v5032
        %v5048 = vshrl.u32 1326507024, %v5033
        %v5049 = vor.u32 %v5047, %v5048
        %vm5050 = vcmp.lt.s32.totalorder %v5031, 1
        %vm5051 = vcmp.lt.s32.totalorder %v5031, 2
        %vm5052 = vcmp.lt.s32.totalorder %v5031, 3
        %vm5053 = vcmp.lt.s32.totalorder %v5031, 4
        %v5054 = vsel %vm5050, %v5034, %v5037
        %v5055 = vsel %vm5053, %v5043, 2102212464
        %v5056 = vsel %vm5052, %v5040, %v5055
        %v5057 = vsel %vm5051, %v5054, %v5056
        %v5058 = vsel %vm5050, %v5037, %v5040
        %v5059 = vsel %vm5053, %v5046, 920167782
        %v5060 = vsel %vm5052, %v5043, %v5059
        %v5061 = vsel %vm5051, %v5058, %v5060
        %v5062 = vsel %vm5050, %v5040, %v5043
        %v5063 = vsel %vm5053, %v5049, 1326507024
        %v5064 = vsel %vm5052, %v5046, %v5063
        %v5065 = vsel %vm5051, %v5062, %v5064
        %v5066 = vshll.u32 %v5026, 8
        %v5067 = vmul.u32.u64.compose %v5066, %v5065
        %v5068 = vextract.low.u32 %v5067
        %v5069 = vextract.high.u32 %v5067
        %v5070 = vmul.u32.u64.compose %v5066, %v5061
        %v5071 = vextract.low.u32 %v5070
        %v5072 = vextract.high.u32 %v5070
        %v5073 = vmul.u32 %v5066, %v5057
        %v5074 = vadd.s32 %v5069, %v5071
        %vm5075 = vc.u32 %v5069, %v5071
        %v5076 = vadd.s32 %v5072, 1
        %v5077 = vsel %vm5075, %v5076, %v5072
        %v5078 = vadd.s32 %v5073, %v5077
        %v5079 = vadd.s32 %v5078, 536870912
        %v5080 = vshrl.u32 %v5079, 30
        %v5081 = vshll.u32 %v5080, 30
        %v5082 = vsub.s32 %v5078, %v5081
        %vm5083 = vcmp.lt.s32.totalorder %v5082, 0
        %v5084 = vsub.s32 0, %v5082
        %v5085 = vsel %vm5083, %v5084, %v5082
        %v5086 = vclz %v5085
        %v5087 = vsub.s32 %v5086, 2
        %vm5088 = vcmp.gt.s32.totalorder 0, %v5087
        %v5089 = vsel %vm5088, 0, %v5087
        %v5090 = vsub.s32 32, %v5089
        %v5091 = vshll.u32 %v5082, %v5089
        %v5092 = vshrl.u32 %v5074, %v5090
        %v5093 = vor.u32 %v5091, %v5092
        %v5094 = vsub.s32 4294967266, %v5089
        %v5095 = vadd.s32 %v5094, 127
        %v5096 = vshll.u32 %v5095, 23
        %v5097 = vor.u32 4788187, %v5096
        %v5098 = vand.u32 2147483647, %v5097
        %v5100 = vcvt.s32.f32 %v5093
        %v5101 = vmul.f32 %v5100, %v5098
        %v5102 = vxor.u32 %v5101, 2147483648
        %v5103 = vsel %vm5020, %v5102, %v5101
        %v5104 = vsub.s32 4, %v5080
        %v5105 = vsel %vm5020, %v5104, %v5080
        %v5106 = vsel %vm5019, %v184, %v5103
        %v5107 = vsel %vm5019, 0, %v5105
        %v5108 = vcosq.f32.pop %v5106
        %v5109 = vsinq.f32.pop %v5106
        %vm5110 = vweird.f32 %v184
        %v5111 = vadd.s32 %v5107, 3
        %v5112 = vand.u32 %v5111, 3
        %vm5113 = vcmp.lt.s32.totalorder %v5112, 2
        %vm5114 = vcmp.eq.s32.totalorder %v5112, 0
        %v5115 = vxor.u32 %v5109, 2147483648
        %v5116 = vsel %vm5114, %v5108, %v5115
        %vm5117 = vcmp.eq.s32.totalorder %v5112, 2
        %v5118 = vxor.u32 %v5108, 2147483648
        %v5119 = vsel %vm5117, %v5118, %v5109
        %v5120 = vsel %vm5113, %v5116, %v5119
        %v5121 = vsel %vm5110, nan, %v5120
        %v5122 = vand.u32 2147483647, %v185
        %vm5123 = vcmp.le.f32.partialorder %v5122, 0.7853982
        %vm5124 = vcmp.lt.s32.totalorder %v185, 0
        %v5125 = vand.u32 %v185, 2139095040
        %v5126 = vshrl.u32 %v5125, 23
        %v5127 = vsub.s32 %v5126, 127
        %v5128 = vand.u32 2147483647, %v185
        %v5129 = vand.u32 %v5128, 8388607
        %v5130 = vor.u32 %v5129, 8388608
        %v5131 = vsub.s32 0, %v5130
        %v5132 = vadd.s32 %v5127, 1
        %vm5133 = vcmp.gt.s32.totalorder %v5132, 0
        %v5134 = vsel %vm5133, %v5132, 0
        %v5135 = vshrl.u32 %v5134, 5
        %v5136 = vand.u32 %v5134, 31
        %v5137 = vsub.s32 32, %v5136
        %v5138 = vshrl.u32 683565275, %v5137
        %v5139 = vshll.u32 683565275, %v5136
        %v5140 = vshrl.u32 2475754826, %v5137
        %v5141 = vor.u32 %v5139, %v5140
        %v5142 = vshll.u32 2475754826, %v5136
        %v5143 = vshrl.u32 2131351028, %v5137
        %v5144 = vor.u32 %v5142, %v5143
        %v5145 = vshll.u32 2131351028, %v5136
        %v5146 = vshrl.u32 2102212464, %v5137
        %v5147 = vor.u32 %v5145, %v5146
        %v5148 = vshll.u32 2102212464, %v5136
        %v5149 = vshrl.u32 920167782, %v5137
        %v5150 = vor.u32 %v5148, %v5149
        %v5151 = vshll.u32 920167782, %v5136
        %v5152 = vshrl.u32 1326507024, %v5137
        %v5153 = vor.u32 %v5151, %v5152
        %vm5154 = vcmp.lt.s32.totalorder %v5135, 1
        %vm5155 = vcmp.lt.s32.totalorder %v5135, 2
        %vm5156 = vcmp.lt.s32.totalorder %v5135, 3
        %vm5157 = vcmp.lt.s32.totalorder %v5135, 4
        %v5158 = vsel %vm5154, %v5138, %v5141
        %v5159 = vsel %vm5157, %v5147, 2102212464
        %v5160 = vsel %vm5156, %v5144, %v5159
        %v5161 = vsel %vm5155, %v5158, %v5160
        %v5162 = vsel %vm5154, %v5141, %v5144
        %v5163 = vsel %vm5157, %v5150, 920167782
        %v5164 = vsel %vm5156, %v5147, %v5163
        %v5165 = vsel %vm5155, %v5162, %v5164
        %v5166 = vsel %vm5154, %v5144, %v5147
        %v5167 = vsel %vm5157, %v5153, 1326507024
        %v5168 = vsel %vm5156, %v5150, %v5167
        %v5169 = vsel %vm5155, %v5166, %v5168
        %v5170 = vshll.u32 %v5130, 8
        %v5171 = vmul.u32.u64.compose %v5170, %v5169
        %v5172 = vextract.low.u32 %v5171
        %v5173 = vextract.high.u32 %v5171
        %v5174 = vmul.u32.u64.compose %v5170, %v5165
        %v5175 = vextract.low.u32 %v5174
        %v5176 = vextract.high.u32 %v5174
        %v5177 = vmul.u32 %v5170, %v5161
        %v5178 = vadd.s32 %v5173, %v5175
        %vm5179 = vc.u32 %v5173, %v5175
        %v5180 = vadd.s32 %v5176, 1
        %v5181 = vsel %vm5179, %v5180, %v5176
        %v5182 = vadd.s32 %v5177, %v5181
        %v5183 = vadd.s32 %v5182, 536870912
        %v5184 = vshrl.u32 %v5183, 30
        %v5185 = vshll.u32 %v5184, 30
        %v5186 = vsub.s32 %v5182, %v5185
        %vm5187 = vcmp.lt.s32.totalorder %v5186, 0
        %v5188 = vsub.s32 0, %v5186
        %v5189 = vsel %vm5187, %v5188, %v5186
        %v5190 = vclz %v5189
        %v5191 = vsub.s32 %v5190, 2
        %vm5192 = vcmp.gt.s32.totalorder 0, %v5191
        %v5193 = vsel %vm5192, 0, %v5191
        %v5194 = vsub.s32 32, %v5193
        %v5195 = vshll.u32 %v5186, %v5193
        %v5196 = vshrl.u32 %v5178, %v5194
        %v5197 = vor.u32 %v5195, %v5196
        %v5198 = vsub.s32 4294967266, %v5193
        %v5199 = vadd.s32 %v5198, 127
        %v5200 = vshll.u32 %v5199, 23
        %v5201 = vor.u32 4788187, %v5200
        %v5202 = vand.u32 2147483647, %v5201
        %v5204 = vcvt.s32.f32 %v5197
        %v5205 = vmul.f32 %v5204, %v5202
        %v5206 = vxor.u32 %v5205, 2147483648
        %v5207 = vsel %vm5124, %v5206, %v5205
        %v5208 = vsub.s32 4, %v5184
        %v5209 = vsel %vm5124, %v5208, %v5184
        %v5210 = vsel %vm5123, %v185, %v5207
        %v5211 = vsel %vm5123, 0, %v5209
        %v5212 = vcosq.f32.pop %v5210
        %v5213 = vsinq.f32.pop %v5210
        %vm5214 = vweird.f32 %v185
        %v5215 = vadd.s32 %v5211, 3
        %v5216 = vand.u32 %v5215, 3
        %vm5217 = vcmp.lt.s32.totalorder %v5216, 2
        %vm5218 = vcmp.eq.s32.totalorder %v5216, 0
        %v5219 = vxor.u32 %v5213, 2147483648
        %v5220 = vsel %vm5218, %v5212, %v5219
        %vm5221 = vcmp.eq.s32.totalorder %v5216, 2
        %v5222 = vxor.u32 %v5212, 2147483648
        %v5223 = vsel %vm5221, %v5222, %v5213
        %v5224 = vsel %vm5217, %v5220, %v5223
        %v5225 = vsel %vm5214, nan, %v5224
        %v5226 = vand.u32 2147483647, %v186
        %vm5227 = vcmp.le.f32.partialorder %v5226, 0.7853982
        %vm5228 = vcmp.lt.s32.totalorder %v186, 0
        %v5229 = vand.u32 %v186, 2139095040
        %v5230 = vshrl.u32 %v5229, 23
        %v5231 = vsub.s32 %v5230, 127
        %v5232 = vand.u32 2147483647, %v186
        %v5233 = vand.u32 %v5232, 8388607
        %v5234 = vor.u32 %v5233, 8388608
        %v5235 = vsub.s32 0, %v5234
        %v5236 = vadd.s32 %v5231, 1
        %vm5237 = vcmp.gt.s32.totalorder %v5236, 0
        %v5238 = vsel %vm5237, %v5236, 0
        %v5239 = vshrl.u32 %v5238, 5
        %v5240 = vand.u32 %v5238, 31
        %v5241 = vsub.s32 32, %v5240
        %v5242 = vshrl.u32 683565275, %v5241
        %v5243 = vshll.u32 683565275, %v5240
        %v5244 = vshrl.u32 2475754826, %v5241
        %v5245 = vor.u32 %v5243, %v5244
        %v5246 = vshll.u32 2475754826, %v5240
        %v5247 = vshrl.u32 2131351028, %v5241
        %v5248 = vor.u32 %v5246, %v5247
        %v5249 = vshll.u32 2131351028, %v5240
        %v5250 = vshrl.u32 2102212464, %v5241
        %v5251 = vor.u32 %v5249, %v5250
        %v5252 = vshll.u32 2102212464, %v5240
        %v5253 = vshrl.u32 920167782, %v5241
        %v5254 = vor.u32 %v5252, %v5253
        %v5255 = vshll.u32 920167782, %v5240
        %v5256 = vshrl.u32 1326507024, %v5241
        %v5257 = vor.u32 %v5255, %v5256
        %vm5258 = vcmp.lt.s32.totalorder %v5239, 1
        %vm5259 = vcmp.lt.s32.totalorder %v5239, 2
        %vm5260 = vcmp.lt.s32.totalorder %v5239, 3
        %vm5261 = vcmp.lt.s32.totalorder %v5239, 4
        %v5262 = vsel %vm5258, %v5242, %v5245
        %v5263 = vsel %vm5261, %v5251, 2102212464
        %v5264 = vsel %vm5260, %v5248, %v5263
        %v5265 = vsel %vm5259, %v5262, %v5264
        %v5266 = vsel %vm5258, %v5245, %v5248
        %v5267 = vsel %vm5261, %v5254, 920167782
        %v5268 = vsel %vm5260, %v5251, %v5267
        %v5269 = vsel %vm5259, %v5266, %v5268
        %v5270 = vsel %vm5258, %v5248, %v5251
        %v5271 = vsel %vm5261, %v5257, 1326507024
        %v5272 = vsel %vm5260, %v5254, %v5271
        %v5273 = vsel %vm5259, %v5270, %v5272
        %v5274 = vshll.u32 %v5234, 8
        %v5275 = vmul.u32.u64.compose %v5274, %v5273
        %v5276 = vextract.low.u32 %v5275
        %v5277 = vextract.high.u32 %v5275
        %v5278 = vmul.u32.u64.compose %v5274, %v5269
        %v5279 = vextract.low.u32 %v5278
        %v5280 = vextract.high.u32 %v5278
        %v5281 = vmul.u32 %v5274, %v5265
        %v5282 = vadd.s32 %v5277, %v5279
        %vm5283 = vc.u32 %v5277, %v5279
        %v5284 = vadd.s32 %v5280, 1
        %v5285 = vsel %vm5283, %v5284, %v5280
        %v5286 = vadd.s32 %v5281, %v5285
        %v5287 = vadd.s32 %v5286, 536870912
        %v5288 = vshrl.u32 %v5287, 30
        %v5289 = vshll.u32 %v5288, 30
        %v5290 = vsub.s32 %v5286, %v5289
        %vm5291 = vcmp.lt.s32.totalorder %v5290, 0
        %v5292 = vsub.s32 0, %v5290
        %v5293 = vsel %vm5291, %v5292, %v5290
        %v5294 = vclz %v5293
        %v5295 = vsub.s32 %v5294, 2
        %vm5296 = vcmp.gt.s32.totalorder 0, %v5295
        %v5297 = vsel %vm5296, 0, %v5295
        %v5298 = vsub.s32 32, %v5297
        %v5299 = vshll.u32 %v5290, %v5297
        %v5300 = vshrl.u32 %v5282, %v5298
        %v5301 = vor.u32 %v5299, %v5300
        %v5302 = vsub.s32 4294967266, %v5297
        %v5303 = vadd.s32 %v5302, 127
        %v5304 = vshll.u32 %v5303, 23
        %v5305 = vor.u32 4788187, %v5304
        %v5306 = vand.u32 2147483647, %v5305
        %v5308 = vcvt.s32.f32 %v5301
        %v5309 = vmul.f32 %v5308, %v5306
        %v5310 = vxor.u32 %v5309, 2147483648
        %v5311 = vsel %vm5228, %v5310, %v5309
        %v5312 = vsub.s32 4, %v5288
        %v5313 = vsel %vm5228, %v5312, %v5288
        %v5314 = vsel %vm5227, %v186, %v5311
        %v5315 = vsel %vm5227, 0, %v5313
        %v5316 = vcosq.f32.pop %v5314
        %v5317 = vsinq.f32.pop %v5314
        %vm5318 = vweird.f32 %v186
        %v5319 = vadd.s32 %v5315, 3
        %v5320 = vand.u32 %v5319, 3
        %vm5321 = vcmp.lt.s32.totalorder %v5320, 2
        %vm5322 = vcmp.eq.s32.totalorder %v5320, 0
        %v5323 = vxor.u32 %v5317, 2147483648
        %v5324 = vsel %vm5322, %v5316, %v5323
        %vm5325 = vcmp.eq.s32.totalorder %v5320, 2
        %v5326 = vxor.u32 %v5316, 2147483648
        %v5327 = vsel %vm5325, %v5326, %v5317
        %v5328 = vsel %vm5321, %v5324, %v5327
        %v5329 = vsel %vm5318, nan, %v5328
        %v5330 = vand.u32 2147483647, %v187
        %vm5331 = vcmp.le.f32.partialorder %v5330, 0.7853982
        %vm5332 = vcmp.lt.s32.totalorder %v187, 0
        %v5333 = vand.u32 %v187, 2139095040
        %v5334 = vshrl.u32 %v5333, 23
        %v5335 = vsub.s32 %v5334, 127
        %v5336 = vand.u32 2147483647, %v187
        %v5337 = vand.u32 %v5336, 8388607
        %v5338 = vor.u32 %v5337, 8388608
        %v5339 = vsub.s32 0, %v5338
        %v5340 = vadd.s32 %v5335, 1
        %vm5341 = vcmp.gt.s32.totalorder %v5340, 0
        %v5342 = vsel %vm5341, %v5340, 0
        %v5343 = vshrl.u32 %v5342, 5
        %v5344 = vand.u32 %v5342, 31
        %v5345 = vsub.s32 32, %v5344
        %v5346 = vshrl.u32 683565275, %v5345
        %v5347 = vshll.u32 683565275, %v5344
        %v5348 = vshrl.u32 2475754826, %v5345
        %v5349 = vor.u32 %v5347, %v5348
        %v5350 = vshll.u32 2475754826, %v5344
        %v5351 = vshrl.u32 2131351028, %v5345
        %v5352 = vor.u32 %v5350, %v5351
        %v5353 = vshll.u32 2131351028, %v5344
        %v5354 = vshrl.u32 2102212464, %v5345
        %v5355 = vor.u32 %v5353, %v5354
        %v5356 = vshll.u32 2102212464, %v5344
        %v5357 = vshrl.u32 920167782, %v5345
        %v5358 = vor.u32 %v5356, %v5357
        %v5359 = vshll.u32 920167782, %v5344
        %v5360 = vshrl.u32 1326507024, %v5345
        %v5361 = vor.u32 %v5359, %v5360
        %vm5362 = vcmp.lt.s32.totalorder %v5343, 1
        %vm5363 = vcmp.lt.s32.totalorder %v5343, 2
        %vm5364 = vcmp.lt.s32.totalorder %v5343, 3
        %vm5365 = vcmp.lt.s32.totalorder %v5343, 4
        %v5366 = vsel %vm5362, %v5346, %v5349
        %v5367 = vsel %vm5365, %v5355, 2102212464
        %v5368 = vsel %vm5364, %v5352, %v5367
        %v5369 = vsel %vm5363, %v5366, %v5368
        %v5370 = vsel %vm5362, %v5349, %v5352
        %v5371 = vsel %vm5365, %v5358, 920167782
        %v5372 = vsel %vm5364, %v5355, %v5371
        %v5373 = vsel %vm5363, %v5370, %v5372
        %v5374 = vsel %vm5362, %v5352, %v5355
        %v5375 = vsel %vm5365, %v5361, 1326507024
        %v5376 = vsel %vm5364, %v5358, %v5375
        %v5377 = vsel %vm5363, %v5374, %v5376
        %v5378 = vshll.u32 %v5338, 8
        %v5379 = vmul.u32.u64.compose %v5378, %v5377
        %v5380 = vextract.low.u32 %v5379
        %v5381 = vextract.high.u32 %v5379
        %v5382 = vmul.u32.u64.compose %v5378, %v5373
        %v5383 = vextract.low.u32 %v5382
        %v5384 = vextract.high.u32 %v5382
        %v5385 = vmul.u32 %v5378, %v5369
        %v5386 = vadd.s32 %v5381, %v5383
        %vm5387 = vc.u32 %v5381, %v5383
        %v5388 = vadd.s32 %v5384, 1
        %v5389 = vsel %vm5387, %v5388, %v5384
        %v5390 = vadd.s32 %v5385, %v5389
        %v5391 = vadd.s32 %v5390, 536870912
        %v5392 = vshrl.u32 %v5391, 30
        %v5393 = vshll.u32 %v5392, 30
        %v5394 = vsub.s32 %v5390, %v5393
        %vm5395 = vcmp.lt.s32.totalorder %v5394, 0
        %v5396 = vsub.s32 0, %v5394
        %v5397 = vsel %vm5395, %v5396, %v5394
        %v5398 = vclz %v5397
        %v5399 = vsub.s32 %v5398, 2
        %vm5400 = vcmp.gt.s32.totalorder 0, %v5399
        %v5401 = vsel %vm5400, 0, %v5399
        %v5402 = vsub.s32 32, %v5401
        %v5403 = vshll.u32 %v5394, %v5401
        %v5404 = vshrl.u32 %v5386, %v5402
        %v5405 = vor.u32 %v5403, %v5404
        %v5406 = vsub.s32 4294967266, %v5401
        %v5407 = vadd.s32 %v5406, 127
        %v5408 = vshll.u32 %v5407, 23
        %v5409 = vor.u32 4788187, %v5408
        %v5410 = vand.u32 2147483647, %v5409
        %v5412 = vcvt.s32.f32 %v5405
        %v5413 = vmul.f32 %v5412, %v5410
        %v5414 = vxor.u32 %v5413, 2147483648
        %v5415 = vsel %vm5332, %v5414, %v5413
        %v5416 = vsub.s32 4, %v5392
        %v5417 = vsel %vm5332, %v5416, %v5392
        %v5418 = vsel %vm5331, %v187, %v5415
        %v5419 = vsel %vm5331, 0, %v5417
        %v5420 = vcosq.f32.pop %v5418
        %v5421 = vsinq.f32.pop %v5418
        %vm5422 = vweird.f32 %v187
        %v5423 = vadd.s32 %v5419, 3
        %v5424 = vand.u32 %v5423, 3
        %vm5425 = vcmp.lt.s32.totalorder %v5424, 2
        %vm5426 = vcmp.eq.s32.totalorder %v5424, 0
        %v5427 = vxor.u32 %v5421, 2147483648
        %v5428 = vsel %vm5426, %v5420, %v5427
        %vm5429 = vcmp.eq.s32.totalorder %v5424, 2
        %v5430 = vxor.u32 %v5420, 2147483648
        %v5431 = vsel %vm5429, %v5430, %v5421
        %v5432 = vsel %vm5425, %v5428, %v5431
        %v5433 = vsel %vm5422, nan, %v5432
        %v5434 = vand.u32 2147483647, %v188
        %vm5435 = vcmp.le.f32.partialorder %v5434, 0.7853982
        %vm5436 = vcmp.lt.s32.totalorder %v188, 0
        %v5437 = vand.u32 %v188, 2139095040
        %v5438 = vshrl.u32 %v5437, 23
        %v5439 = vsub.s32 %v5438, 127
        %v5440 = vand.u32 2147483647, %v188
        %v5441 = vand.u32 %v5440, 8388607
        %v5442 = vor.u32 %v5441, 8388608
        %v5443 = vsub.s32 0, %v5442
        %v5444 = vadd.s32 %v5439, 1
        %vm5445 = vcmp.gt.s32.totalorder %v5444, 0
        %v5446 = vsel %vm5445, %v5444, 0
        %v5447 = vshrl.u32 %v5446, 5
        %v5448 = vand.u32 %v5446, 31
        %v5449 = vsub.s32 32, %v5448
        %v5450 = vshrl.u32 683565275, %v5449
        %v5451 = vshll.u32 683565275, %v5448
        %v5452 = vshrl.u32 2475754826, %v5449
        %v5453 = vor.u32 %v5451, %v5452
        %v5454 = vshll.u32 2475754826, %v5448
        %v5455 = vshrl.u32 2131351028, %v5449
        %v5456 = vor.u32 %v5454, %v5455
        %v5457 = vshll.u32 2131351028, %v5448
        %v5458 = vshrl.u32 2102212464, %v5449
        %v5459 = vor.u32 %v5457, %v5458
        %v5460 = vshll.u32 2102212464, %v5448
        %v5461 = vshrl.u32 920167782, %v5449
        %v5462 = vor.u32 %v5460, %v5461
        %v5463 = vshll.u32 920167782, %v5448
        %v5464 = vshrl.u32 1326507024, %v5449
        %v5465 = vor.u32 %v5463, %v5464
        %vm5466 = vcmp.lt.s32.totalorder %v5447, 1
        %vm5467 = vcmp.lt.s32.totalorder %v5447, 2
        %vm5468 = vcmp.lt.s32.totalorder %v5447, 3
        %vm5469 = vcmp.lt.s32.totalorder %v5447, 4
        %v5470 = vsel %vm5466, %v5450, %v5453
        %v5471 = vsel %vm5469, %v5459, 2102212464
        %v5472 = vsel %vm5468, %v5456, %v5471
        %v5473 = vsel %vm5467, %v5470, %v5472
        %v5474 = vsel %vm5466, %v5453, %v5456
        %v5475 = vsel %vm5469, %v5462, 920167782
        %v5476 = vsel %vm5468, %v5459, %v5475
        %v5477 = vsel %vm5467, %v5474, %v5476
        %v5478 = vsel %vm5466, %v5456, %v5459
        %v5479 = vsel %vm5469, %v5465, 1326507024
        %v5480 = vsel %vm5468, %v5462, %v5479
        %v5481 = vsel %vm5467, %v5478, %v5480
        %v5482 = vshll.u32 %v5442, 8
        %v5483 = vmul.u32.u64.compose %v5482, %v5481
        %v5484 = vextract.low.u32 %v5483
        %v5485 = vextract.high.u32 %v5483
        %v5486 = vmul.u32.u64.compose %v5482, %v5477
        %v5487 = vextract.low.u32 %v5486
        %v5488 = vextract.high.u32 %v5486
        %v5489 = vmul.u32 %v5482, %v5473
        %v5490 = vadd.s32 %v5485, %v5487
        %vm5491 = vc.u32 %v5485, %v5487
        %v5492 = vadd.s32 %v5488, 1
        %v5493 = vsel %vm5491, %v5492, %v5488
        %v5494 = vadd.s32 %v5489, %v5493
        %v5495 = vadd.s32 %v5494, 536870912
        %v5496 = vshrl.u32 %v5495, 30
        %v5497 = vshll.u32 %v5496, 30
        %v5498 = vsub.s32 %v5494, %v5497
        %vm5499 = vcmp.lt.s32.totalorder %v5498, 0
        %v5500 = vsub.s32 0, %v5498
        %v5501 = vsel %vm5499, %v5500, %v5498
        %v5502 = vclz %v5501
        %v5503 = vsub.s32 %v5502, 2
        %vm5504 = vcmp.gt.s32.totalorder 0, %v5503
        %v5505 = vsel %vm5504, 0, %v5503
        %v5506 = vsub.s32 32, %v5505
        %v5507 = vshll.u32 %v5498, %v5505
        %v5508 = vshrl.u32 %v5490, %v5506
        %v5509 = vor.u32 %v5507, %v5508
        %v5510 = vsub.s32 4294967266, %v5505
        %v5511 = vadd.s32 %v5510, 127
        %v5512 = vshll.u32 %v5511, 23
        %v5513 = vor.u32 4788187, %v5512
        %v5514 = vand.u32 2147483647, %v5513
        %v5516 = vcvt.s32.f32 %v5509
        %v5517 = vmul.f32 %v5516, %v5514
        %v5518 = vxor.u32 %v5517, 2147483648
        %v5519 = vsel %vm5436, %v5518, %v5517
        %v5520 = vsub.s32 4, %v5496
        %v5521 = vsel %vm5436, %v5520, %v5496
        %v5522 = vsel %vm5435, %v188, %v5519
        %v5523 = vsel %vm5435, 0, %v5521
        %v5524 = vcosq.f32.pop %v5522
        %v5525 = vsinq.f32.pop %v5522
        %vm5526 = vweird.f32 %v188
        %v5527 = vadd.s32 %v5523, 3
        %v5528 = vand.u32 %v5527, 3
        %vm5529 = vcmp.lt.s32.totalorder %v5528, 2
        %vm5530 = vcmp.eq.s32.totalorder %v5528, 0
        %v5531 = vxor.u32 %v5525, 2147483648
        %v5532 = vsel %vm5530, %v5524, %v5531
        %vm5533 = vcmp.eq.s32.totalorder %v5528, 2
        %v5534 = vxor.u32 %v5524, 2147483648
        %v5535 = vsel %vm5533, %v5534, %v5525
        %v5536 = vsel %vm5529, %v5532, %v5535
        %v5537 = vsel %vm5526, nan, %v5536
        %v5538 = vand.u32 2147483647, %v189
        %vm5539 = vcmp.le.f32.partialorder %v5538, 0.7853982
        %vm5540 = vcmp.lt.s32.totalorder %v189, 0
        %v5541 = vand.u32 %v189, 2139095040
        %v5542 = vshrl.u32 %v5541, 23
        %v5543 = vsub.s32 %v5542, 127
        %v5544 = vand.u32 2147483647, %v189
        %v5545 = vand.u32 %v5544, 8388607
        %v5546 = vor.u32 %v5545, 8388608
        %v5547 = vsub.s32 0, %v5546
        %v5548 = vadd.s32 %v5543, 1
        %vm5549 = vcmp.gt.s32.totalorder %v5548, 0
        %v5550 = vsel %vm5549, %v5548, 0
        %v5551 = vshrl.u32 %v5550, 5
        %v5552 = vand.u32 %v5550, 31
        %v5553 = vsub.s32 32, %v5552
        %v5554 = vshrl.u32 683565275, %v5553
        %v5555 = vshll.u32 683565275, %v5552
        %v5556 = vshrl.u32 2475754826, %v5553
        %v5557 = vor.u32 %v5555, %v5556
        %v5558 = vshll.u32 2475754826, %v5552
        %v5559 = vshrl.u32 2131351028, %v5553
        %v5560 = vor.u32 %v5558, %v5559
        %v5561 = vshll.u32 2131351028, %v5552
        %v5562 = vshrl.u32 2102212464, %v5553
        %v5563 = vor.u32 %v5561, %v5562
        %v5564 = vshll.u32 2102212464, %v5552
        %v5565 = vshrl.u32 920167782, %v5553
        %v5566 = vor.u32 %v5564, %v5565
        %v5567 = vshll.u32 920167782, %v5552
        %v5568 = vshrl.u32 1326507024, %v5553
        %v5569 = vor.u32 %v5567, %v5568
        %vm5570 = vcmp.lt.s32.totalorder %v5551, 1
        %vm5571 = vcmp.lt.s32.totalorder %v5551, 2
        %vm5572 = vcmp.lt.s32.totalorder %v5551, 3
        %vm5573 = vcmp.lt.s32.totalorder %v5551, 4
        %v5574 = vsel %vm5570, %v5554, %v5557
        %v5575 = vsel %vm5573, %v5563, 2102212464
        %v5576 = vsel %vm5572, %v5560, %v5575
        %v5577 = vsel %vm5571, %v5574, %v5576
        %v5578 = vsel %vm5570, %v5557, %v5560
        %v5579 = vsel %vm5573, %v5566, 920167782
        %v5580 = vsel %vm5572, %v5563, %v5579
        %v5581 = vsel %vm5571, %v5578, %v5580
        %v5582 = vsel %vm5570, %v5560, %v5563
        %v5583 = vsel %vm5573, %v5569, 1326507024
        %v5584 = vsel %vm5572, %v5566, %v5583
        %v5585 = vsel %vm5571, %v5582, %v5584
        %v5586 = vshll.u32 %v5546, 8
        %v5587 = vmul.u32.u64.compose %v5586, %v5585
        %v5588 = vextract.low.u32 %v5587
        %v5589 = vextract.high.u32 %v5587
        %v5590 = vmul.u32.u64.compose %v5586, %v5581
        %v5591 = vextract.low.u32 %v5590
        %v5592 = vextract.high.u32 %v5590
        %v5593 = vmul.u32 %v5586, %v5577
        %v5594 = vadd.s32 %v5589, %v5591
        %vm5595 = vc.u32 %v5589, %v5591
        %v5596 = vadd.s32 %v5592, 1
        %v5597 = vsel %vm5595, %v5596, %v5592
        %v5598 = vadd.s32 %v5593, %v5597
        %v5599 = vadd.s32 %v5598, 536870912
        %v5600 = vshrl.u32 %v5599, 30
        %v5601 = vshll.u32 %v5600, 30
        %v5602 = vsub.s32 %v5598, %v5601
        %vm5603 = vcmp.lt.s32.totalorder %v5602, 0
        %v5604 = vsub.s32 0, %v5602
        %v5605 = vsel %vm5603, %v5604, %v5602
        %v5606 = vclz %v5605
        %v5607 = vsub.s32 %v5606, 2
        %vm5608 = vcmp.gt.s32.totalorder 0, %v5607
        %v5609 = vsel %vm5608, 0, %v5607
        %v5610 = vsub.s32 32, %v5609
        %v5611 = vshll.u32 %v5602, %v5609
        %v5612 = vshrl.u32 %v5594, %v5610
        %v5613 = vor.u32 %v5611, %v5612
        %v5614 = vsub.s32 4294967266, %v5609
        %v5615 = vadd.s32 %v5614, 127
        %v5616 = vshll.u32 %v5615, 23
        %v5617 = vor.u32 4788187, %v5616
        %v5618 = vand.u32 2147483647, %v5617
        %v5620 = vcvt.s32.f32 %v5613
        %v5621 = vmul.f32 %v5620, %v5618
        %v5622 = vxor.u32 %v5621, 2147483648
        %v5623 = vsel %vm5540, %v5622, %v5621
        %v5624 = vsub.s32 4, %v5600
        %v5625 = vsel %vm5540, %v5624, %v5600
        %v5626 = vsel %vm5539, %v189, %v5623
        %v5627 = vsel %vm5539, 0, %v5625
        %v5628 = vcosq.f32.pop %v5626
        %v5629 = vsinq.f32.pop %v5626
        %vm5630 = vweird.f32 %v189
        %v5631 = vadd.s32 %v5627, 3
        %v5632 = vand.u32 %v5631, 3
        %vm5633 = vcmp.lt.s32.totalorder %v5632, 2
        %vm5634 = vcmp.eq.s32.totalorder %v5632, 0
        %v5635 = vxor.u32 %v5629, 2147483648
        %v5636 = vsel %vm5634, %v5628, %v5635
        %vm5637 = vcmp.eq.s32.totalorder %v5632, 2
        %v5638 = vxor.u32 %v5628, 2147483648
        %v5639 = vsel %vm5637, %v5638, %v5629
        %v5640 = vsel %vm5633, %v5636, %v5639
        %v5641 = vsel %vm5630, nan, %v5640
        %v5642 = vand.u32 2147483647, %v190
        %vm5643 = vcmp.le.f32.partialorder %v5642, 0.7853982
        %vm5644 = vcmp.lt.s32.totalorder %v190, 0
        %v5645 = vand.u32 %v190, 2139095040
        %v5646 = vshrl.u32 %v5645, 23
        %v5647 = vsub.s32 %v5646, 127
        %v5648 = vand.u32 2147483647, %v190
        %v5649 = vand.u32 %v5648, 8388607
        %v5650 = vor.u32 %v5649, 8388608
        %v5651 = vsub.s32 0, %v5650
        %v5652 = vadd.s32 %v5647, 1
        %vm5653 = vcmp.gt.s32.totalorder %v5652, 0
        %v5654 = vsel %vm5653, %v5652, 0
        %v5655 = vshrl.u32 %v5654, 5
        %v5656 = vand.u32 %v5654, 31
        %v5657 = vsub.s32 32, %v5656
        %v5658 = vshrl.u32 683565275, %v5657
        %v5659 = vshll.u32 683565275, %v5656
        %v5660 = vshrl.u32 2475754826, %v5657
        %v5661 = vor.u32 %v5659, %v5660
        %v5662 = vshll.u32 2475754826, %v5656
        %v5663 = vshrl.u32 2131351028, %v5657
        %v5664 = vor.u32 %v5662, %v5663
        %v5665 = vshll.u32 2131351028, %v5656
        %v5666 = vshrl.u32 2102212464, %v5657
        %v5667 = vor.u32 %v5665, %v5666
        %v5668 = vshll.u32 2102212464, %v5656
        %v5669 = vshrl.u32 920167782, %v5657
        %v5670 = vor.u32 %v5668, %v5669
        %v5671 = vshll.u32 920167782, %v5656
        %v5672 = vshrl.u32 1326507024, %v5657
        %v5673 = vor.u32 %v5671, %v5672
        %vm5674 = vcmp.lt.s32.totalorder %v5655, 1
        %vm5675 = vcmp.lt.s32.totalorder %v5655, 2
        %vm5676 = vcmp.lt.s32.totalorder %v5655, 3
        %vm5677 = vcmp.lt.s32.totalorder %v5655, 4
        %v5678 = vsel %vm5674, %v5658, %v5661
        %v5679 = vsel %vm5677, %v5667, 2102212464
        %v5680 = vsel %vm5676, %v5664, %v5679
        %v5681 = vsel %vm5675, %v5678, %v5680
        %v5682 = vsel %vm5674, %v5661, %v5664
        %v5683 = vsel %vm5677, %v5670, 920167782
        %v5684 = vsel %vm5676, %v5667, %v5683
        %v5685 = vsel %vm5675, %v5682, %v5684
        %v5686 = vsel %vm5674, %v5664, %v5667
        %v5687 = vsel %vm5677, %v5673, 1326507024
        %v5688 = vsel %vm5676, %v5670, %v5687
        %v5689 = vsel %vm5675, %v5686, %v5688
        %v5690 = vshll.u32 %v5650, 8
        %v5691 = vmul.u32.u64.compose %v5690, %v5689
        %v5692 = vextract.low.u32 %v5691
        %v5693 = vextract.high.u32 %v5691
        %v5694 = vmul.u32.u64.compose %v5690, %v5685
        %v5695 = vextract.low.u32 %v5694
        %v5696 = vextract.high.u32 %v5694
        %v5697 = vmul.u32 %v5690, %v5681
        %v5698 = vadd.s32 %v5693, %v5695
        %vm5699 = vc.u32 %v5693, %v5695
        %v5700 = vadd.s32 %v5696, 1
        %v5701 = vsel %vm5699, %v5700, %v5696
        %v5702 = vadd.s32 %v5697, %v5701
        %v5703 = vadd.s32 %v5702, 536870912
        %v5704 = vshrl.u32 %v5703, 30
        %v5705 = vshll.u32 %v5704, 30
        %v5706 = vsub.s32 %v5702, %v5705
        %vm5707 = vcmp.lt.s32.totalorder %v5706, 0
        %v5708 = vsub.s32 0, %v5706
        %v5709 = vsel %vm5707, %v5708, %v5706
        %v5710 = vclz %v5709
        %v5711 = vsub.s32 %v5710, 2
        %vm5712 = vcmp.gt.s32.totalorder 0, %v5711
        %v5713 = vsel %vm5712, 0, %v5711
        %v5714 = vsub.s32 32, %v5713
        %v5715 = vshll.u32 %v5706, %v5713
        %v5716 = vshrl.u32 %v5698, %v5714
        %v5717 = vor.u32 %v5715, %v5716
        %v5718 = vsub.s32 4294967266, %v5713
        %v5719 = vadd.s32 %v5718, 127
        %v5720 = vshll.u32 %v5719, 23
        %v5721 = vor.u32 4788187, %v5720
        %v5722 = vand.u32 2147483647, %v5721
        %v5724 = vcvt.s32.f32 %v5717
        %v5725 = vmul.f32 %v5724, %v5722
        %v5726 = vxor.u32 %v5725, 2147483648
        %v5727 = vsel %vm5644, %v5726, %v5725
        %v5728 = vsub.s32 4, %v5704
        %v5729 = vsel %vm5644, %v5728, %v5704
        %v5730 = vsel %vm5643, %v190, %v5727
        %v5731 = vsel %vm5643, 0, %v5729
        %v5732 = vcosq.f32.pop %v5730
        %v5733 = vsinq.f32.pop %v5730
        %vm5734 = vweird.f32 %v190
        %v5735 = vadd.s32 %v5731, 3
        %v5736 = vand.u32 %v5735, 3
        %vm5737 = vcmp.lt.s32.totalorder %v5736, 2
        %vm5738 = vcmp.eq.s32.totalorder %v5736, 0
        %v5739 = vxor.u32 %v5733, 2147483648
        %v5740 = vsel %vm5738, %v5732, %v5739
        %vm5741 = vcmp.eq.s32.totalorder %v5736, 2
        %v5742 = vxor.u32 %v5732, 2147483648
        %v5743 = vsel %vm5741, %v5742, %v5733
        %v5744 = vsel %vm5737, %v5740, %v5743
        %v5745 = vsel %vm5734, nan, %v5744
        %v5746 = vand.u32 2147483647, %v191
        %vm5747 = vcmp.le.f32.partialorder %v5746, 0.7853982
        %vm5748 = vcmp.lt.s32.totalorder %v191, 0
        %v5749 = vand.u32 %v191, 2139095040
        %v5750 = vshrl.u32 %v5749, 23
        %v5751 = vsub.s32 %v5750, 127
        %v5752 = vand.u32 2147483647, %v191
        %v5753 = vand.u32 %v5752, 8388607
        %v5754 = vor.u32 %v5753, 8388608
        %v5755 = vsub.s32 0, %v5754
        %v5756 = vadd.s32 %v5751, 1
        %vm5757 = vcmp.gt.s32.totalorder %v5756, 0
        %v5758 = vsel %vm5757, %v5756, 0
        %v5759 = vshrl.u32 %v5758, 5
        %v5760 = vand.u32 %v5758, 31
        %v5761 = vsub.s32 32, %v5760
        %v5762 = vshrl.u32 683565275, %v5761
        %v5763 = vshll.u32 683565275, %v5760
        %v5764 = vshrl.u32 2475754826, %v5761
        %v5765 = vor.u32 %v5763, %v5764
        %v5766 = vshll.u32 2475754826, %v5760
        %v5767 = vshrl.u32 2131351028, %v5761
        %v5768 = vor.u32 %v5766, %v5767
        %v5769 = vshll.u32 2131351028, %v5760
        %v5770 = vshrl.u32 2102212464, %v5761
        %v5771 = vor.u32 %v5769, %v5770
        %v5772 = vshll.u32 2102212464, %v5760
        %v5773 = vshrl.u32 920167782, %v5761
        %v5774 = vor.u32 %v5772, %v5773
        %v5775 = vshll.u32 920167782, %v5760
        %v5776 = vshrl.u32 1326507024, %v5761
        %v5777 = vor.u32 %v5775, %v5776
        %vm5778 = vcmp.lt.s32.totalorder %v5759, 1
        %vm5779 = vcmp.lt.s32.totalorder %v5759, 2
        %vm5780 = vcmp.lt.s32.totalorder %v5759, 3
        %vm5781 = vcmp.lt.s32.totalorder %v5759, 4
        %v5782 = vsel %vm5778, %v5762, %v5765
        %v5783 = vsel %vm5781, %v5771, 2102212464
        %v5784 = vsel %vm5780, %v5768, %v5783
        %v5785 = vsel %vm5779, %v5782, %v5784
        %v5786 = vsel %vm5778, %v5765, %v5768
        %v5787 = vsel %vm5781, %v5774, 920167782
        %v5788 = vsel %vm5780, %v5771, %v5787
        %v5789 = vsel %vm5779, %v5786, %v5788
        %v5790 = vsel %vm5778, %v5768, %v5771
        %v5791 = vsel %vm5781, %v5777, 1326507024
        %v5792 = vsel %vm5780, %v5774, %v5791
        %v5793 = vsel %vm5779, %v5790, %v5792
        %v5794 = vshll.u32 %v5754, 8
        %v5795 = vmul.u32.u64.compose %v5794, %v5793
        %v5796 = vextract.low.u32 %v5795
        %v5797 = vextract.high.u32 %v5795
        %v5798 = vmul.u32.u64.compose %v5794, %v5789
        %v5799 = vextract.low.u32 %v5798
        %v5800 = vextract.high.u32 %v5798
        %v5801 = vmul.u32 %v5794, %v5785
        %v5802 = vadd.s32 %v5797, %v5799
        %vm5803 = vc.u32 %v5797, %v5799
        %v5804 = vadd.s32 %v5800, 1
        %v5805 = vsel %vm5803, %v5804, %v5800
        %v5806 = vadd.s32 %v5801, %v5805
        %v5807 = vadd.s32 %v5806, 536870912
        %v5808 = vshrl.u32 %v5807, 30
        %v5809 = vshll.u32 %v5808, 30
        %v5810 = vsub.s32 %v5806, %v5809
        %vm5811 = vcmp.lt.s32.totalorder %v5810, 0
        %v5812 = vsub.s32 0, %v5810
        %v5813 = vsel %vm5811, %v5812, %v5810
        %v5814 = vclz %v5813
        %v5815 = vsub.s32 %v5814, 2
        %vm5816 = vcmp.gt.s32.totalorder 0, %v5815
        %v5817 = vsel %vm5816, 0, %v5815
        %v5818 = vsub.s32 32, %v5817
        %v5819 = vshll.u32 %v5810, %v5817
        %v5820 = vshrl.u32 %v5802, %v5818
        %v5821 = vor.u32 %v5819, %v5820
        %v5822 = vsub.s32 4294967266, %v5817
        %v5823 = vadd.s32 %v5822, 127
        %v5824 = vshll.u32 %v5823, 23
        %v5825 = vor.u32 4788187, %v5824
        %v5826 = vand.u32 2147483647, %v5825
        %v5828 = vcvt.s32.f32 %v5821
        %v5829 = vmul.f32 %v5828, %v5826
        %v5830 = vxor.u32 %v5829, 2147483648
        %v5831 = vsel %vm5748, %v5830, %v5829
        %v5832 = vsub.s32 4, %v5808
        %v5833 = vsel %vm5748, %v5832, %v5808
        %v5834 = vsel %vm5747, %v191, %v5831
        %v5835 = vsel %vm5747, 0, %v5833
        %v5836 = vcosq.f32.pop %v5834
        %v5837 = vsinq.f32.pop %v5834
        %vm5838 = vweird.f32 %v191
        %v5839 = vadd.s32 %v5835, 3
        %v5840 = vand.u32 %v5839, 3
        %vm5841 = vcmp.lt.s32.totalorder %v5840, 2
        %vm5842 = vcmp.eq.s32.totalorder %v5840, 0
        %v5843 = vxor.u32 %v5837, 2147483648
        %v5844 = vsel %vm5842, %v5836, %v5843
        %vm5845 = vcmp.eq.s32.totalorder %v5840, 2
        %v5846 = vxor.u32 %v5836, 2147483648
        %v5847 = vsel %vm5845, %v5846, %v5837
        %v5848 = vsel %vm5841, %v5844, %v5847
        %v5849 = vsel %vm5838, nan, %v5848
        %v5850 = vand.u32 2147483647, %v192
        %vm5851 = vcmp.le.f32.partialorder %v5850, 0.7853982
        %vm5852 = vcmp.lt.s32.totalorder %v192, 0
        %v5853 = vand.u32 %v192, 2139095040
        %v5854 = vshrl.u32 %v5853, 23
        %v5855 = vsub.s32 %v5854, 127
        %v5856 = vand.u32 2147483647, %v192
        %v5857 = vand.u32 %v5856, 8388607
        %v5858 = vor.u32 %v5857, 8388608
        %v5859 = vsub.s32 0, %v5858
        %v5860 = vadd.s32 %v5855, 1
        %vm5861 = vcmp.gt.s32.totalorder %v5860, 0
        %v5862 = vsel %vm5861, %v5860, 0
        %v5863 = vshrl.u32 %v5862, 5
        %v5864 = vand.u32 %v5862, 31
        %v5865 = vsub.s32 32, %v5864
        %v5866 = vshrl.u32 683565275, %v5865
        %v5867 = vshll.u32 683565275, %v5864
        %v5868 = vshrl.u32 2475754826, %v5865
        %v5869 = vor.u32 %v5867, %v5868
        %v5870 = vshll.u32 2475754826, %v5864
        %v5871 = vshrl.u32 2131351028, %v5865
        %v5872 = vor.u32 %v5870, %v5871
        %v5873 = vshll.u32 2131351028, %v5864
        %v5874 = vshrl.u32 2102212464, %v5865
        %v5875 = vor.u32 %v5873, %v5874
        %v5876 = vshll.u32 2102212464, %v5864
        %v5877 = vshrl.u32 920167782, %v5865
        %v5878 = vor.u32 %v5876, %v5877
        %v5879 = vshll.u32 920167782, %v5864
        %v5880 = vshrl.u32 1326507024, %v5865
        %v5881 = vor.u32 %v5879, %v5880
        %vm5882 = vcmp.lt.s32.totalorder %v5863, 1
        %vm5883 = vcmp.lt.s32.totalorder %v5863, 2
        %vm5884 = vcmp.lt.s32.totalorder %v5863, 3
        %vm5885 = vcmp.lt.s32.totalorder %v5863, 4
        %v5886 = vsel %vm5882, %v5866, %v5869
        %v5887 = vsel %vm5885, %v5875, 2102212464
        %v5888 = vsel %vm5884, %v5872, %v5887
        %v5889 = vsel %vm5883, %v5886, %v5888
        %v5890 = vsel %vm5882, %v5869, %v5872
        %v5891 = vsel %vm5885, %v5878, 920167782
        %v5892 = vsel %vm5884, %v5875, %v5891
        %v5893 = vsel %vm5883, %v5890, %v5892
        %v5894 = vsel %vm5882, %v5872, %v5875
        %v5895 = vsel %vm5885, %v5881, 1326507024
        %v5896 = vsel %vm5884, %v5878, %v5895
        %v5897 = vsel %vm5883, %v5894, %v5896
        %v5898 = vshll.u32 %v5858, 8
        %v5899 = vmul.u32.u64.compose %v5898, %v5897
        %v5900 = vextract.low.u32 %v5899
        %v5901 = vextract.high.u32 %v5899
        %v5902 = vmul.u32.u64.compose %v5898, %v5893
        %v5903 = vextract.low.u32 %v5902
        %v5904 = vextract.high.u32 %v5902
        %v5905 = vmul.u32 %v5898, %v5889
        %v5906 = vadd.s32 %v5901, %v5903
        %vm5907 = vc.u32 %v5901, %v5903
        %v5908 = vadd.s32 %v5904, 1
        %v5909 = vsel %vm5907, %v5908, %v5904
        %v5910 = vadd.s32 %v5905, %v5909
        %v5911 = vadd.s32 %v5910, 536870912
        %v5912 = vshrl.u32 %v5911, 30
        %v5913 = vshll.u32 %v5912, 30
        %v5914 = vsub.s32 %v5910, %v5913
        %vm5915 = vcmp.lt.s32.totalorder %v5914, 0
        %v5916 = vsub.s32 0, %v5914
        %v5917 = vsel %vm5915, %v5916, %v5914
        %v5918 = vclz %v5917
        %v5919 = vsub.s32 %v5918, 2
        %vm5920 = vcmp.gt.s32.totalorder 0, %v5919
        %v5921 = vsel %vm5920, 0, %v5919
        %v5922 = vsub.s32 32, %v5921
        %v5923 = vshll.u32 %v5914, %v5921
        %v5924 = vshrl.u32 %v5906, %v5922
        %v5925 = vor.u32 %v5923, %v5924
        %v5926 = vsub.s32 4294967266, %v5921
        %v5927 = vadd.s32 %v5926, 127
        %v5928 = vshll.u32 %v5927, 23
        %v5929 = vor.u32 4788187, %v5928
        %v5930 = vand.u32 2147483647, %v5929
        %v5932 = vcvt.s32.f32 %v5925
        %v5933 = vmul.f32 %v5932, %v5930
        %v5934 = vxor.u32 %v5933, 2147483648
        %v5935 = vsel %vm5852, %v5934, %v5933
        %v5936 = vsub.s32 4, %v5912
        %v5937 = vsel %vm5852, %v5936, %v5912
        %v5938 = vsel %vm5851, %v192, %v5935
        %v5939 = vsel %vm5851, 0, %v5937
        %v5940 = vcosq.f32.pop %v5938
        %v5941 = vsinq.f32.pop %v5938
        %vm5942 = vweird.f32 %v192
        %v5943 = vadd.s32 %v5939, 3
        %v5944 = vand.u32 %v5943, 3
        %vm5945 = vcmp.lt.s32.totalorder %v5944, 2
        %vm5946 = vcmp.eq.s32.totalorder %v5944, 0
        %v5947 = vxor.u32 %v5941, 2147483648
        %v5948 = vsel %vm5946, %v5940, %v5947
        %vm5949 = vcmp.eq.s32.totalorder %v5944, 2
        %v5950 = vxor.u32 %v5940, 2147483648
        %v5951 = vsel %vm5949, %v5950, %v5941
        %v5952 = vsel %vm5945, %v5948, %v5951
        %v5953 = vsel %vm5942, nan, %v5952
        %v5954 = vand.u32 2147483647, %v193
        %vm5955 = vcmp.le.f32.partialorder %v5954, 0.7853982
        %vm5956 = vcmp.lt.s32.totalorder %v193, 0
        %v5957 = vand.u32 %v193, 2139095040
        %v5958 = vshrl.u32 %v5957, 23
        %v5959 = vsub.s32 %v5958, 127
        %v5960 = vand.u32 2147483647, %v193
        %v5961 = vand.u32 %v5960, 8388607
        %v5962 = vor.u32 %v5961, 8388608
        %v5963 = vsub.s32 0, %v5962
        %v5964 = vadd.s32 %v5959, 1
        %vm5965 = vcmp.gt.s32.totalorder %v5964, 0
        %v5966 = vsel %vm5965, %v5964, 0
        %v5967 = vshrl.u32 %v5966, 5
        %v5968 = vand.u32 %v5966, 31
        %v5969 = vsub.s32 32, %v5968
        %v5970 = vshrl.u32 683565275, %v5969
        %v5971 = vshll.u32 683565275, %v5968
        %v5972 = vshrl.u32 2475754826, %v5969
        %v5973 = vor.u32 %v5971, %v5972
        %v5974 = vshll.u32 2475754826, %v5968
        %v5975 = vshrl.u32 2131351028, %v5969
        %v5976 = vor.u32 %v5974, %v5975
        %v5977 = vshll.u32 2131351028, %v5968
        %v5978 = vshrl.u32 2102212464, %v5969
        %v5979 = vor.u32 %v5977, %v5978
        %v5980 = vshll.u32 2102212464, %v5968
        %v5981 = vshrl.u32 920167782, %v5969
        %v5982 = vor.u32 %v5980, %v5981
        %v5983 = vshll.u32 920167782, %v5968
        %v5984 = vshrl.u32 1326507024, %v5969
        %v5985 = vor.u32 %v5983, %v5984
        %vm5986 = vcmp.lt.s32.totalorder %v5967, 1
        %vm5987 = vcmp.lt.s32.totalorder %v5967, 2
        %vm5988 = vcmp.lt.s32.totalorder %v5967, 3
        %vm5989 = vcmp.lt.s32.totalorder %v5967, 4
        %v5990 = vsel %vm5986, %v5970, %v5973
        %v5991 = vsel %vm5989, %v5979, 2102212464
        %v5992 = vsel %vm5988, %v5976, %v5991
        %v5993 = vsel %vm5987, %v5990, %v5992
        %v5994 = vsel %vm5986, %v5973, %v5976
        %v5995 = vsel %vm5989, %v5982, 920167782
        %v5996 = vsel %vm5988, %v5979, %v5995
        %v5997 = vsel %vm5987, %v5994, %v5996
        %v5998 = vsel %vm5986, %v5976, %v5979
        %v5999 = vsel %vm5989, %v5985, 1326507024
        %v6000 = vsel %vm5988, %v5982, %v5999
        %v6001 = vsel %vm5987, %v5998, %v6000
        %v6002 = vshll.u32 %v5962, 8
        %v6003 = vmul.u32.u64.compose %v6002, %v6001
        %v6004 = vextract.low.u32 %v6003
        %v6005 = vextract.high.u32 %v6003
        %v6006 = vmul.u32.u64.compose %v6002, %v5997
        %v6007 = vextract.low.u32 %v6006
        %v6008 = vextract.high.u32 %v6006
        %v6009 = vmul.u32 %v6002, %v5993
        %v6010 = vadd.s32 %v6005, %v6007
        %vm6011 = vc.u32 %v6005, %v6007
        %v6012 = vadd.s32 %v6008, 1
        %v6013 = vsel %vm6011, %v6012, %v6008
        %v6014 = vadd.s32 %v6009, %v6013
        %v6015 = vadd.s32 %v6014, 536870912
        %v6016 = vshrl.u32 %v6015, 30
        %v6017 = vshll.u32 %v6016, 30
        %v6018 = vsub.s32 %v6014, %v6017
        %vm6019 = vcmp.lt.s32.totalorder %v6018, 0
        %v6020 = vsub.s32 0, %v6018
        %v6021 = vsel %vm6019, %v6020, %v6018
        %v6022 = vclz %v6021
        %v6023 = vsub.s32 %v6022, 2
        %vm6024 = vcmp.gt.s32.totalorder 0, %v6023
        %v6025 = vsel %vm6024, 0, %v6023
        %v6026 = vsub.s32 32, %v6025
        %v6027 = vshll.u32 %v6018, %v6025
        %v6028 = vshrl.u32 %v6010, %v6026
        %v6029 = vor.u32 %v6027, %v6028
        %v6030 = vsub.s32 4294967266, %v6025
        %v6031 = vadd.s32 %v6030, 127
        %v6032 = vshll.u32 %v6031, 23
        %v6033 = vor.u32 4788187, %v6032
        %v6034 = vand.u32 2147483647, %v6033
        %v6036 = vcvt.s32.f32 %v6029
        %v6037 = vmul.f32 %v6036, %v6034
        %v6038 = vxor.u32 %v6037, 2147483648
        %v6039 = vsel %vm5956, %v6038, %v6037
        %v6040 = vsub.s32 4, %v6016
        %v6041 = vsel %vm5956, %v6040, %v6016
        %v6042 = vsel %vm5955, %v193, %v6039
        %v6043 = vsel %vm5955, 0, %v6041
        %v6044 = vcosq.f32.pop %v6042
        %v6045 = vsinq.f32.pop %v6042
        %vm6046 = vweird.f32 %v193
        %v6047 = vadd.s32 %v6043, 3
        %v6048 = vand.u32 %v6047, 3
        %vm6049 = vcmp.lt.s32.totalorder %v6048, 2
        %vm6050 = vcmp.eq.s32.totalorder %v6048, 0
        %v6051 = vxor.u32 %v6045, 2147483648
        %v6052 = vsel %vm6050, %v6044, %v6051
        %vm6053 = vcmp.eq.s32.totalorder %v6048, 2
        %v6054 = vxor.u32 %v6044, 2147483648
        %v6055 = vsel %vm6053, %v6054, %v6045
        %v6056 = vsel %vm6049, %v6052, %v6055
        %v6057 = vsel %vm6046, nan, %v6056
        %v6058 = vand.u32 2147483647, %v194
        %vm6059 = vcmp.le.f32.partialorder %v6058, 0.7853982
        %vm6060 = vcmp.lt.s32.totalorder %v194, 0
        %v6061 = vand.u32 %v194, 2139095040
        %v6062 = vshrl.u32 %v6061, 23
        %v6063 = vsub.s32 %v6062, 127
        %v6064 = vand.u32 2147483647, %v194
        %v6065 = vand.u32 %v6064, 8388607
        %v6066 = vor.u32 %v6065, 8388608
        %v6067 = vsub.s32 0, %v6066
        %v6068 = vadd.s32 %v6063, 1
        %vm6069 = vcmp.gt.s32.totalorder %v6068, 0
        %v6070 = vsel %vm6069, %v6068, 0
        %v6071 = vshrl.u32 %v6070, 5
        %v6072 = vand.u32 %v6070, 31
        %v6073 = vsub.s32 32, %v6072
        %v6074 = vshrl.u32 683565275, %v6073
        %v6075 = vshll.u32 683565275, %v6072
        %v6076 = vshrl.u32 2475754826, %v6073
        %v6077 = vor.u32 %v6075, %v6076
        %v6078 = vshll.u32 2475754826, %v6072
        %v6079 = vshrl.u32 2131351028, %v6073
        %v6080 = vor.u32 %v6078, %v6079
        %v6081 = vshll.u32 2131351028, %v6072
        %v6082 = vshrl.u32 2102212464, %v6073
        %v6083 = vor.u32 %v6081, %v6082
        %v6084 = vshll.u32 2102212464, %v6072
        %v6085 = vshrl.u32 920167782, %v6073
        %v6086 = vor.u32 %v6084, %v6085
        %v6087 = vshll.u32 920167782, %v6072
        %v6088 = vshrl.u32 1326507024, %v6073
        %v6089 = vor.u32 %v6087, %v6088
        %vm6090 = vcmp.lt.s32.totalorder %v6071, 1
        %vm6091 = vcmp.lt.s32.totalorder %v6071, 2
        %vm6092 = vcmp.lt.s32.totalorder %v6071, 3
        %vm6093 = vcmp.lt.s32.totalorder %v6071, 4
        %v6094 = vsel %vm6090, %v6074, %v6077
        %v6095 = vsel %vm6093, %v6083, 2102212464
        %v6096 = vsel %vm6092, %v6080, %v6095
        %v6097 = vsel %vm6091, %v6094, %v6096
        %v6098 = vsel %vm6090, %v6077, %v6080
        %v6099 = vsel %vm6093, %v6086, 920167782
        %v6100 = vsel %vm6092, %v6083, %v6099
        %v6101 = vsel %vm6091, %v6098, %v6100
        %v6102 = vsel %vm6090, %v6080, %v6083
        %v6103 = vsel %vm6093, %v6089, 1326507024
        %v6104 = vsel %vm6092, %v6086, %v6103
        %v6105 = vsel %vm6091, %v6102, %v6104
        %v6106 = vshll.u32 %v6066, 8
        %v6107 = vmul.u32.u64.compose %v6106, %v6105
        %v6108 = vextract.low.u32 %v6107
        %v6109 = vextract.high.u32 %v6107
        %v6110 = vmul.u32.u64.compose %v6106, %v6101
        %v6111 = vextract.low.u32 %v6110
        %v6112 = vextract.high.u32 %v6110
        %v6113 = vmul.u32 %v6106, %v6097
        %v6114 = vadd.s32 %v6109, %v6111
        %vm6115 = vc.u32 %v6109, %v6111
        %v6116 = vadd.s32 %v6112, 1
        %v6117 = vsel %vm6115, %v6116, %v6112
        %v6118 = vadd.s32 %v6113, %v6117
        %v6119 = vadd.s32 %v6118, 536870912
        %v6120 = vshrl.u32 %v6119, 30
        %v6121 = vshll.u32 %v6120, 30
        %v6122 = vsub.s32 %v6118, %v6121
        %vm6123 = vcmp.lt.s32.totalorder %v6122, 0
        %v6124 = vsub.s32 0, %v6122
        %v6125 = vsel %vm6123, %v6124, %v6122
        %v6126 = vclz %v6125
        %v6127 = vsub.s32 %v6126, 2
        %vm6128 = vcmp.gt.s32.totalorder 0, %v6127
        %v6129 = vsel %vm6128, 0, %v6127
        %v6130 = vsub.s32 32, %v6129
        %v6131 = vshll.u32 %v6122, %v6129
        %v6132 = vshrl.u32 %v6114, %v6130
        %v6133 = vor.u32 %v6131, %v6132
        %v6134 = vsub.s32 4294967266, %v6129
        %v6135 = vadd.s32 %v6134, 127
        %v6136 = vshll.u32 %v6135, 23
        %v6137 = vor.u32 4788187, %v6136
        %v6138 = vand.u32 2147483647, %v6137
        %v6140 = vcvt.s32.f32 %v6133
        %v6141 = vmul.f32 %v6140, %v6138
        %v6142 = vxor.u32 %v6141, 2147483648
        %v6143 = vsel %vm6060, %v6142, %v6141
        %v6144 = vsub.s32 4, %v6120
        %v6145 = vsel %vm6060, %v6144, %v6120
        %v6146 = vsel %vm6059, %v194, %v6143
        %v6147 = vsel %vm6059, 0, %v6145
        %v6148 = vcosq.f32.pop %v6146
        %v6149 = vsinq.f32.pop %v6146
        %vm6150 = vweird.f32 %v194
        %v6151 = vadd.s32 %v6147, 3
        %v6152 = vand.u32 %v6151, 3
        %vm6153 = vcmp.lt.s32.totalorder %v6152, 2
        %vm6154 = vcmp.eq.s32.totalorder %v6152, 0
        %v6155 = vxor.u32 %v6149, 2147483648
        %v6156 = vsel %vm6154, %v6148, %v6155
        %vm6157 = vcmp.eq.s32.totalorder %v6152, 2
        %v6158 = vxor.u32 %v6148, 2147483648
        %v6159 = vsel %vm6157, %v6158, %v6149
        %v6160 = vsel %vm6153, %v6156, %v6159
        %v6161 = vsel %vm6150, nan, %v6160
        %v6162 = vand.u32 2147483647, %v195
        %vm6163 = vcmp.le.f32.partialorder %v6162, 0.7853982
        %vm6164 = vcmp.lt.s32.totalorder %v195, 0
        %v6165 = vand.u32 %v195, 2139095040
        %v6166 = vshrl.u32 %v6165, 23
        %v6167 = vsub.s32 %v6166, 127
        %v6168 = vand.u32 2147483647, %v195
        %v6169 = vand.u32 %v6168, 8388607
        %v6170 = vor.u32 %v6169, 8388608
        %v6171 = vsub.s32 0, %v6170
        %v6172 = vadd.s32 %v6167, 1
        %vm6173 = vcmp.gt.s32.totalorder %v6172, 0
        %v6174 = vsel %vm6173, %v6172, 0
        %v6175 = vshrl.u32 %v6174, 5
        %v6176 = vand.u32 %v6174, 31
        %v6177 = vsub.s32 32, %v6176
        %v6178 = vshrl.u32 683565275, %v6177
        %v6179 = vshll.u32 683565275, %v6176
        %v6180 = vshrl.u32 2475754826, %v6177
        %v6181 = vor.u32 %v6179, %v6180
        %v6182 = vshll.u32 2475754826, %v6176
        %v6183 = vshrl.u32 2131351028, %v6177
        %v6184 = vor.u32 %v6182, %v6183
        %v6185 = vshll.u32 2131351028, %v6176
        %v6186 = vshrl.u32 2102212464, %v6177
        %v6187 = vor.u32 %v6185, %v6186
        %v6188 = vshll.u32 2102212464, %v6176
        %v6189 = vshrl.u32 920167782, %v6177
        %v6190 = vor.u32 %v6188, %v6189
        %v6191 = vshll.u32 920167782, %v6176
        %v6192 = vshrl.u32 1326507024, %v6177
        %v6193 = vor.u32 %v6191, %v6192
        %vm6194 = vcmp.lt.s32.totalorder %v6175, 1
        %vm6195 = vcmp.lt.s32.totalorder %v6175, 2
        %vm6196 = vcmp.lt.s32.totalorder %v6175, 3
        %vm6197 = vcmp.lt.s32.totalorder %v6175, 4
        %v6198 = vsel %vm6194, %v6178, %v6181
        %v6199 = vsel %vm6197, %v6187, 2102212464
        %v6200 = vsel %vm6196, %v6184, %v6199
        %v6201 = vsel %vm6195, %v6198, %v6200
        %v6202 = vsel %vm6194, %v6181, %v6184
        %v6203 = vsel %vm6197, %v6190, 920167782
        %v6204 = vsel %vm6196, %v6187, %v6203
        %v6205 = vsel %vm6195, %v6202, %v6204
        %v6206 = vsel %vm6194, %v6184, %v6187
        %v6207 = vsel %vm6197, %v6193, 1326507024
        %v6208 = vsel %vm6196, %v6190, %v6207
        %v6209 = vsel %vm6195, %v6206, %v6208
        %v6210 = vshll.u32 %v6170, 8
        %v6211 = vmul.u32.u64.compose %v6210, %v6209
        %v6212 = vextract.low.u32 %v6211
        %v6213 = vextract.high.u32 %v6211
        %v6214 = vmul.u32.u64.compose %v6210, %v6205
        %v6215 = vextract.low.u32 %v6214
        %v6216 = vextract.high.u32 %v6214
        %v6217 = vmul.u32 %v6210, %v6201
        %v6218 = vadd.s32 %v6213, %v6215
        %vm6219 = vc.u32 %v6213, %v6215
        %v6220 = vadd.s32 %v6216, 1
        %v6221 = vsel %vm6219, %v6220, %v6216
        %v6222 = vadd.s32 %v6217, %v6221
        %v6223 = vadd.s32 %v6222, 536870912
        %v6224 = vshrl.u32 %v6223, 30
        %v6225 = vshll.u32 %v6224, 30
        %v6226 = vsub.s32 %v6222, %v6225
        %vm6227 = vcmp.lt.s32.totalorder %v6226, 0
        %v6228 = vsub.s32 0, %v6226
        %v6229 = vsel %vm6227, %v6228, %v6226
        %v6230 = vclz %v6229
        %v6231 = vsub.s32 %v6230, 2
        %vm6232 = vcmp.gt.s32.totalorder 0, %v6231
        %v6233 = vsel %vm6232, 0, %v6231
        %v6234 = vsub.s32 32, %v6233
        %v6235 = vshll.u32 %v6226, %v6233
        %v6236 = vshrl.u32 %v6218, %v6234
        %v6237 = vor.u32 %v6235, %v6236
        %v6238 = vsub.s32 4294967266, %v6233
        %v6239 = vadd.s32 %v6238, 127
        %v6240 = vshll.u32 %v6239, 23
        %v6241 = vor.u32 4788187, %v6240
        %v6242 = vand.u32 2147483647, %v6241
        %v6244 = vcvt.s32.f32 %v6237
        %v6245 = vmul.f32 %v6244, %v6242
        %v6246 = vxor.u32 %v6245, 2147483648
        %v6247 = vsel %vm6164, %v6246, %v6245
        %v6248 = vsub.s32 4, %v6224
        %v6249 = vsel %vm6164, %v6248, %v6224
        %v6250 = vsel %vm6163, %v195, %v6247
        %v6251 = vsel %vm6163, 0, %v6249
        %v6252 = vcosq.f32.pop %v6250
        %v6253 = vsinq.f32.pop %v6250
        %vm6254 = vweird.f32 %v195
        %v6255 = vadd.s32 %v6251, 3
        %v6256 = vand.u32 %v6255, 3
        %vm6257 = vcmp.lt.s32.totalorder %v6256, 2
        %vm6258 = vcmp.eq.s32.totalorder %v6256, 0
        %v6259 = vxor.u32 %v6253, 2147483648
        %v6260 = vsel %vm6258, %v6252, %v6259
        %vm6261 = vcmp.eq.s32.totalorder %v6256, 2
        %v6262 = vxor.u32 %v6252, 2147483648
        %v6263 = vsel %vm6261, %v6262, %v6253
        %v6264 = vsel %vm6257, %v6260, %v6263
        %v6265 = vsel %vm6254, nan, %v6264
        %v6266 = vand.u32 2147483647, %v196
        %vm6267 = vcmp.le.f32.partialorder %v6266, 0.7853982
        %vm6268 = vcmp.lt.s32.totalorder %v196, 0
        %v6269 = vand.u32 %v196, 2139095040
        %v6270 = vshrl.u32 %v6269, 23
        %v6271 = vsub.s32 %v6270, 127
        %v6272 = vand.u32 2147483647, %v196
        %v6273 = vand.u32 %v6272, 8388607
        %v6274 = vor.u32 %v6273, 8388608
        %v6275 = vsub.s32 0, %v6274
        %v6276 = vadd.s32 %v6271, 1
        %vm6277 = vcmp.gt.s32.totalorder %v6276, 0
        %v6278 = vsel %vm6277, %v6276, 0
        %v6279 = vshrl.u32 %v6278, 5
        %v6280 = vand.u32 %v6278, 31
        %v6281 = vsub.s32 32, %v6280
        %v6282 = vshrl.u32 683565275, %v6281
        %v6283 = vshll.u32 683565275, %v6280
        %v6284 = vshrl.u32 2475754826, %v6281
        %v6285 = vor.u32 %v6283, %v6284
        %v6286 = vshll.u32 2475754826, %v6280
        %v6287 = vshrl.u32 2131351028, %v6281
        %v6288 = vor.u32 %v6286, %v6287
        %v6289 = vshll.u32 2131351028, %v6280
        %v6290 = vshrl.u32 2102212464, %v6281
        %v6291 = vor.u32 %v6289, %v6290
        %v6292 = vshll.u32 2102212464, %v6280
        %v6293 = vshrl.u32 920167782, %v6281
        %v6294 = vor.u32 %v6292, %v6293
        %v6295 = vshll.u32 920167782, %v6280
        %v6296 = vshrl.u32 1326507024, %v6281
        %v6297 = vor.u32 %v6295, %v6296
        %vm6298 = vcmp.lt.s32.totalorder %v6279, 1
        %vm6299 = vcmp.lt.s32.totalorder %v6279, 2
        %vm6300 = vcmp.lt.s32.totalorder %v6279, 3
        %vm6301 = vcmp.lt.s32.totalorder %v6279, 4
        %v6302 = vsel %vm6298, %v6282, %v6285
        %v6303 = vsel %vm6301, %v6291, 2102212464
        %v6304 = vsel %vm6300, %v6288, %v6303
        %v6305 = vsel %vm6299, %v6302, %v6304
        %v6306 = vsel %vm6298, %v6285, %v6288
        %v6307 = vsel %vm6301, %v6294, 920167782
        %v6308 = vsel %vm6300, %v6291, %v6307
        %v6309 = vsel %vm6299, %v6306, %v6308
        %v6310 = vsel %vm6298, %v6288, %v6291
        %v6311 = vsel %vm6301, %v6297, 1326507024
        %v6312 = vsel %vm6300, %v6294, %v6311
        %v6313 = vsel %vm6299, %v6310, %v6312
        %v6314 = vshll.u32 %v6274, 8
        %v6315 = vmul.u32.u64.compose %v6314, %v6313
        %v6316 = vextract.low.u32 %v6315
        %v6317 = vextract.high.u32 %v6315
        %v6318 = vmul.u32.u64.compose %v6314, %v6309
        %v6319 = vextract.low.u32 %v6318
        %v6320 = vextract.high.u32 %v6318
        %v6321 = vmul.u32 %v6314, %v6305
        %v6322 = vadd.s32 %v6317, %v6319
        %vm6323 = vc.u32 %v6317, %v6319
        %v6324 = vadd.s32 %v6320, 1
        %v6325 = vsel %vm6323, %v6324, %v6320
        %v6326 = vadd.s32 %v6321, %v6325
        %v6327 = vadd.s32 %v6326, 536870912
        %v6328 = vshrl.u32 %v6327, 30
        %v6329 = vshll.u32 %v6328, 30
        %v6330 = vsub.s32 %v6326, %v6329
        %vm6331 = vcmp.lt.s32.totalorder %v6330, 0
        %v6332 = vsub.s32 0, %v6330
        %v6333 = vsel %vm6331, %v6332, %v6330
        %v6334 = vclz %v6333
        %v6335 = vsub.s32 %v6334, 2
        %vm6336 = vcmp.gt.s32.totalorder 0, %v6335
        %v6337 = vsel %vm6336, 0, %v6335
        %v6338 = vsub.s32 32, %v6337
        %v6339 = vshll.u32 %v6330, %v6337
        %v6340 = vshrl.u32 %v6322, %v6338
        %v6341 = vor.u32 %v6339, %v6340
        %v6342 = vsub.s32 4294967266, %v6337
        %v6343 = vadd.s32 %v6342, 127
        %v6344 = vshll.u32 %v6343, 23
        %v6345 = vor.u32 4788187, %v6344
        %v6346 = vand.u32 2147483647, %v6345
        %v6348 = vcvt.s32.f32 %v6341
        %v6349 = vmul.f32 %v6348, %v6346
        %v6350 = vxor.u32 %v6349, 2147483648
        %v6351 = vsel %vm6268, %v6350, %v6349
        %v6352 = vsub.s32 4, %v6328
        %v6353 = vsel %vm6268, %v6352, %v6328
        %v6354 = vsel %vm6267, %v196, %v6351
        %v6355 = vsel %vm6267, 0, %v6353
        %v6356 = vcosq.f32.pop %v6354
        %v6357 = vsinq.f32.pop %v6354
        %vm6358 = vweird.f32 %v196
        %v6359 = vadd.s32 %v6355, 3
        %v6360 = vand.u32 %v6359, 3
        %vm6361 = vcmp.lt.s32.totalorder %v6360, 2
        %vm6362 = vcmp.eq.s32.totalorder %v6360, 0
        %v6363 = vxor.u32 %v6357, 2147483648
        %v6364 = vsel %vm6362, %v6356, %v6363
        %vm6365 = vcmp.eq.s32.totalorder %v6360, 2
        %v6366 = vxor.u32 %v6356, 2147483648
        %v6367 = vsel %vm6365, %v6366, %v6357
        %v6368 = vsel %vm6361, %v6364, %v6367
        %v6369 = vsel %vm6358, nan, %v6368
        %v6370 = vand.u32 2147483647, %v197
        %vm6371 = vcmp.le.f32.partialorder %v6370, 0.7853982
        %vm6372 = vcmp.lt.s32.totalorder %v197, 0
        %v6373 = vand.u32 %v197, 2139095040
        %v6374 = vshrl.u32 %v6373, 23
        %v6375 = vsub.s32 %v6374, 127
        %v6376 = vand.u32 2147483647, %v197
        %v6377 = vand.u32 %v6376, 8388607
        %v6378 = vor.u32 %v6377, 8388608
        %v6379 = vsub.s32 0, %v6378
        %v6380 = vadd.s32 %v6375, 1
        %vm6381 = vcmp.gt.s32.totalorder %v6380, 0
        %v6382 = vsel %vm6381, %v6380, 0
        %v6383 = vshrl.u32 %v6382, 5
        %v6384 = vand.u32 %v6382, 31
        %v6385 = vsub.s32 32, %v6384
        %v6386 = vshrl.u32 683565275, %v6385
        %v6387 = vshll.u32 683565275, %v6384
        %v6388 = vshrl.u32 2475754826, %v6385
        %v6389 = vor.u32 %v6387, %v6388
        %v6390 = vshll.u32 2475754826, %v6384
        %v6391 = vshrl.u32 2131351028, %v6385
        %v6392 = vor.u32 %v6390, %v6391
        %v6393 = vshll.u32 2131351028, %v6384
        %v6394 = vshrl.u32 2102212464, %v6385
        %v6395 = vor.u32 %v6393, %v6394
        %v6396 = vshll.u32 2102212464, %v6384
        %v6397 = vshrl.u32 920167782, %v6385
        %v6398 = vor.u32 %v6396, %v6397
        %v6399 = vshll.u32 920167782, %v6384
        %v6400 = vshrl.u32 1326507024, %v6385
        %v6401 = vor.u32 %v6399, %v6400
        %vm6402 = vcmp.lt.s32.totalorder %v6383, 1
        %vm6403 = vcmp.lt.s32.totalorder %v6383, 2
        %vm6404 = vcmp.lt.s32.totalorder %v6383, 3
        %vm6405 = vcmp.lt.s32.totalorder %v6383, 4
        %v6406 = vsel %vm6402, %v6386, %v6389
        %v6407 = vsel %vm6405, %v6395, 2102212464
        %v6408 = vsel %vm6404, %v6392, %v6407
        %v6409 = vsel %vm6403, %v6406, %v6408
        %v6410 = vsel %vm6402, %v6389, %v6392
        %v6411 = vsel %vm6405, %v6398, 920167782
        %v6412 = vsel %vm6404, %v6395, %v6411
        %v6413 = vsel %vm6403, %v6410, %v6412
        %v6414 = vsel %vm6402, %v6392, %v6395
        %v6415 = vsel %vm6405, %v6401, 1326507024
        %v6416 = vsel %vm6404, %v6398, %v6415
        %v6417 = vsel %vm6403, %v6414, %v6416
        %v6418 = vshll.u32 %v6378, 8
        %v6419 = vmul.u32.u64.compose %v6418, %v6417
        %v6420 = vextract.low.u32 %v6419
        %v6421 = vextract.high.u32 %v6419
        %v6422 = vmul.u32.u64.compose %v6418, %v6413
        %v6423 = vextract.low.u32 %v6422
        %v6424 = vextract.high.u32 %v6422
        %v6425 = vmul.u32 %v6418, %v6409
        %v6426 = vadd.s32 %v6421, %v6423
        %vm6427 = vc.u32 %v6421, %v6423
        %v6428 = vadd.s32 %v6424, 1
        %v6429 = vsel %vm6427, %v6428, %v6424
        %v6430 = vadd.s32 %v6425, %v6429
        %v6431 = vadd.s32 %v6430, 536870912
        %v6432 = vshrl.u32 %v6431, 30
        %v6433 = vshll.u32 %v6432, 30
        %v6434 = vsub.s32 %v6430, %v6433
        %vm6435 = vcmp.lt.s32.totalorder %v6434, 0
        %v6436 = vsub.s32 0, %v6434
        %v6437 = vsel %vm6435, %v6436, %v6434
        %v6438 = vclz %v6437
        %v6439 = vsub.s32 %v6438, 2
        %vm6440 = vcmp.gt.s32.totalorder 0, %v6439
        %v6441 = vsel %vm6440, 0, %v6439
        %v6442 = vsub.s32 32, %v6441
        %v6443 = vshll.u32 %v6434, %v6441
        %v6444 = vshrl.u32 %v6426, %v6442
        %v6445 = vor.u32 %v6443, %v6444
        %v6446 = vsub.s32 4294967266, %v6441
        %v6447 = vadd.s32 %v6446, 127
        %v6448 = vshll.u32 %v6447, 23
        %v6449 = vor.u32 4788187, %v6448
        %v6450 = vand.u32 2147483647, %v6449
        %v6452 = vcvt.s32.f32 %v6445
        %v6453 = vmul.f32 %v6452, %v6450
        %v6454 = vxor.u32 %v6453, 2147483648
        %v6455 = vsel %vm6372, %v6454, %v6453
        %v6456 = vsub.s32 4, %v6432
        %v6457 = vsel %vm6372, %v6456, %v6432
        %v6458 = vsel %vm6371, %v197, %v6455
        %v6459 = vsel %vm6371, 0, %v6457
        %v6460 = vcosq.f32.pop %v6458
        %v6461 = vsinq.f32.pop %v6458
        %vm6462 = vweird.f32 %v197
        %v6463 = vadd.s32 %v6459, 3
        %v6464 = vand.u32 %v6463, 3
        %vm6465 = vcmp.lt.s32.totalorder %v6464, 2
        %vm6466 = vcmp.eq.s32.totalorder %v6464, 0
        %v6467 = vxor.u32 %v6461, 2147483648
        %v6468 = vsel %vm6466, %v6460, %v6467
        %vm6469 = vcmp.eq.s32.totalorder %v6464, 2
        %v6470 = vxor.u32 %v6460, 2147483648
        %v6471 = vsel %vm6469, %v6470, %v6461
        %v6472 = vsel %vm6465, %v6468, %v6471
        %v6473 = vsel %vm6462, nan, %v6472
        %v6474 = vand.u32 2147483647, %v198
        %vm6475 = vcmp.le.f32.partialorder %v6474, 0.7853982
        %vm6476 = vcmp.lt.s32.totalorder %v198, 0
        %v6477 = vand.u32 %v198, 2139095040
        %v6478 = vshrl.u32 %v6477, 23
        %v6479 = vsub.s32 %v6478, 127
        %v6480 = vand.u32 2147483647, %v198
        %v6481 = vand.u32 %v6480, 8388607
        %v6482 = vor.u32 %v6481, 8388608
        %v6483 = vsub.s32 0, %v6482
        %v6484 = vadd.s32 %v6479, 1
        %vm6485 = vcmp.gt.s32.totalorder %v6484, 0
        %v6486 = vsel %vm6485, %v6484, 0
        %v6487 = vshrl.u32 %v6486, 5
        %v6488 = vand.u32 %v6486, 31
        %v6489 = vsub.s32 32, %v6488
        %v6490 = vshrl.u32 683565275, %v6489
        %v6491 = vshll.u32 683565275, %v6488
        %v6492 = vshrl.u32 2475754826, %v6489
        %v6493 = vor.u32 %v6491, %v6492
        %v6494 = vshll.u32 2475754826, %v6488
        %v6495 = vshrl.u32 2131351028, %v6489
        %v6496 = vor.u32 %v6494, %v6495
        %v6497 = vshll.u32 2131351028, %v6488
        %v6498 = vshrl.u32 2102212464, %v6489
        %v6499 = vor.u32 %v6497, %v6498
        %v6500 = vshll.u32 2102212464, %v6488
        %v6501 = vshrl.u32 920167782, %v6489
        %v6502 = vor.u32 %v6500, %v6501
        %v6503 = vshll.u32 920167782, %v6488
        %v6504 = vshrl.u32 1326507024, %v6489
        %v6505 = vor.u32 %v6503, %v6504
        %vm6506 = vcmp.lt.s32.totalorder %v6487, 1
        %vm6507 = vcmp.lt.s32.totalorder %v6487, 2
        %vm6508 = vcmp.lt.s32.totalorder %v6487, 3
        %vm6509 = vcmp.lt.s32.totalorder %v6487, 4
        %v6510 = vsel %vm6506, %v6490, %v6493
        %v6511 = vsel %vm6509, %v6499, 2102212464
        %v6512 = vsel %vm6508, %v6496, %v6511
        %v6513 = vsel %vm6507, %v6510, %v6512
        %v6514 = vsel %vm6506, %v6493, %v6496
        %v6515 = vsel %vm6509, %v6502, 920167782
        %v6516 = vsel %vm6508, %v6499, %v6515
        %v6517 = vsel %vm6507, %v6514, %v6516
        %v6518 = vsel %vm6506, %v6496, %v6499
        %v6519 = vsel %vm6509, %v6505, 1326507024
        %v6520 = vsel %vm6508, %v6502, %v6519
        %v6521 = vsel %vm6507, %v6518, %v6520
        %v6522 = vshll.u32 %v6482, 8
        %v6523 = vmul.u32.u64.compose %v6522, %v6521
        %v6524 = vextract.low.u32 %v6523
        %v6525 = vextract.high.u32 %v6523
        %v6526 = vmul.u32.u64.compose %v6522, %v6517
        %v6527 = vextract.low.u32 %v6526
        %v6528 = vextract.high.u32 %v6526
        %v6529 = vmul.u32 %v6522, %v6513
        %v6530 = vadd.s32 %v6525, %v6527
        %vm6531 = vc.u32 %v6525, %v6527
        %v6532 = vadd.s32 %v6528, 1
        %v6533 = vsel %vm6531, %v6532, %v6528
        %v6534 = vadd.s32 %v6529, %v6533
        %v6535 = vadd.s32 %v6534, 536870912
        %v6536 = vshrl.u32 %v6535, 30
        %v6537 = vshll.u32 %v6536, 30
        %v6538 = vsub.s32 %v6534, %v6537
        %vm6539 = vcmp.lt.s32.totalorder %v6538, 0
        %v6540 = vsub.s32 0, %v6538
        %v6541 = vsel %vm6539, %v6540, %v6538
        %v6542 = vclz %v6541
        %v6543 = vsub.s32 %v6542, 2
        %vm6544 = vcmp.gt.s32.totalorder 0, %v6543
        %v6545 = vsel %vm6544, 0, %v6543
        %v6546 = vsub.s32 32, %v6545
        %v6547 = vshll.u32 %v6538, %v6545
        %v6548 = vshrl.u32 %v6530, %v6546
        %v6549 = vor.u32 %v6547, %v6548
        %v6550 = vsub.s32 4294967266, %v6545
        %v6551 = vadd.s32 %v6550, 127
        %v6552 = vshll.u32 %v6551, 23
        %v6553 = vor.u32 4788187, %v6552
        %v6554 = vand.u32 2147483647, %v6553
        %v6556 = vcvt.s32.f32 %v6549
        %v6557 = vmul.f32 %v6556, %v6554
        %v6558 = vxor.u32 %v6557, 2147483648
        %v6559 = vsel %vm6476, %v6558, %v6557
        %v6560 = vsub.s32 4, %v6536
        %v6561 = vsel %vm6476, %v6560, %v6536
        %v6562 = vsel %vm6475, %v198, %v6559
        %v6563 = vsel %vm6475, 0, %v6561
        %v6564 = vcosq.f32.pop %v6562
        %v6565 = vsinq.f32.pop %v6562
        %vm6566 = vweird.f32 %v198
        %v6567 = vadd.s32 %v6563, 3
        %v6568 = vand.u32 %v6567, 3
        %vm6569 = vcmp.lt.s32.totalorder %v6568, 2
        %vm6570 = vcmp.eq.s32.totalorder %v6568, 0
        %v6571 = vxor.u32 %v6565, 2147483648
        %v6572 = vsel %vm6570, %v6564, %v6571
        %vm6573 = vcmp.eq.s32.totalorder %v6568, 2
        %v6574 = vxor.u32 %v6564, 2147483648
        %v6575 = vsel %vm6573, %v6574, %v6565
        %v6576 = vsel %vm6569, %v6572, %v6575
        %v6577 = vsel %vm6566, nan, %v6576
        %v6578 = vand.u32 2147483647, %v199
        %vm6579 = vcmp.le.f32.partialorder %v6578, 0.7853982
        %vm6580 = vcmp.lt.s32.totalorder %v199, 0
        %v6581 = vand.u32 %v199, 2139095040
        %v6582 = vshrl.u32 %v6581, 23
        %v6583 = vsub.s32 %v6582, 127
        %v6584 = vand.u32 2147483647, %v199
        %v6585 = vand.u32 %v6584, 8388607
        %v6586 = vor.u32 %v6585, 8388608
        %v6587 = vsub.s32 0, %v6586
        %v6588 = vadd.s32 %v6583, 1
        %vm6589 = vcmp.gt.s32.totalorder %v6588, 0
        %v6590 = vsel %vm6589, %v6588, 0
        %v6591 = vshrl.u32 %v6590, 5
        %v6592 = vand.u32 %v6590, 31
        %v6593 = vsub.s32 32, %v6592
        %v6594 = vshrl.u32 683565275, %v6593
        %v6595 = vshll.u32 683565275, %v6592
        %v6596 = vshrl.u32 2475754826, %v6593
        %v6597 = vor.u32 %v6595, %v6596
        %v6598 = vshll.u32 2475754826, %v6592
        %v6599 = vshrl.u32 2131351028, %v6593
        %v6600 = vor.u32 %v6598, %v6599
        %v6601 = vshll.u32 2131351028, %v6592
        %v6602 = vshrl.u32 2102212464, %v6593
        %v6603 = vor.u32 %v6601, %v6602
        %v6604 = vshll.u32 2102212464, %v6592
        %v6605 = vshrl.u32 920167782, %v6593
        %v6606 = vor.u32 %v6604, %v6605
        %v6607 = vshll.u32 920167782, %v6592
        %v6608 = vshrl.u32 1326507024, %v6593
        %v6609 = vor.u32 %v6607, %v6608
        %vm6610 = vcmp.lt.s32.totalorder %v6591, 1
        %vm6611 = vcmp.lt.s32.totalorder %v6591, 2
        %vm6612 = vcmp.lt.s32.totalorder %v6591, 3
        %vm6613 = vcmp.lt.s32.totalorder %v6591, 4
        %v6614 = vsel %vm6610, %v6594, %v6597
        %v6615 = vsel %vm6613, %v6603, 2102212464
        %v6616 = vsel %vm6612, %v6600, %v6615
        %v6617 = vsel %vm6611, %v6614, %v6616
        %v6618 = vsel %vm6610, %v6597, %v6600
        %v6619 = vsel %vm6613, %v6606, 920167782
        %v6620 = vsel %vm6612, %v6603, %v6619
        %v6621 = vsel %vm6611, %v6618, %v6620
        %v6622 = vsel %vm6610, %v6600, %v6603
        %v6623 = vsel %vm6613, %v6609, 1326507024
        %v6624 = vsel %vm6612, %v6606, %v6623
        %v6625 = vsel %vm6611, %v6622, %v6624
        %v6626 = vshll.u32 %v6586, 8
        %v6627 = vmul.u32.u64.compose %v6626, %v6625
        %v6628 = vextract.low.u32 %v6627
        %v6629 = vextract.high.u32 %v6627
        %v6630 = vmul.u32.u64.compose %v6626, %v6621
        %v6631 = vextract.low.u32 %v6630
        %v6632 = vextract.high.u32 %v6630
        %v6633 = vmul.u32 %v6626, %v6617
        %v6634 = vadd.s32 %v6629, %v6631
        %vm6635 = vc.u32 %v6629, %v6631
        %v6636 = vadd.s32 %v6632, 1
        %v6637 = vsel %vm6635, %v6636, %v6632
        %v6638 = vadd.s32 %v6633, %v6637
        %v6639 = vadd.s32 %v6638, 536870912
        %v6640 = vshrl.u32 %v6639, 30
        %v6641 = vshll.u32 %v6640, 30
        %v6642 = vsub.s32 %v6638, %v6641
        %vm6643 = vcmp.lt.s32.totalorder %v6642, 0
        %v6644 = vsub.s32 0, %v6642
        %v6645 = vsel %vm6643, %v6644, %v6642
        %v6646 = vclz %v6645
        %v6647 = vsub.s32 %v6646, 2
        %vm6648 = vcmp.gt.s32.totalorder 0, %v6647
        %v6649 = vsel %vm6648, 0, %v6647
        %v6650 = vsub.s32 32, %v6649
        %v6651 = vshll.u32 %v6642, %v6649
        %v6652 = vshrl.u32 %v6634, %v6650
        %v6653 = vor.u32 %v6651, %v6652
        %v6654 = vsub.s32 4294967266, %v6649
        %v6655 = vadd.s32 %v6654, 127
        %v6656 = vshll.u32 %v6655, 23
        %v6657 = vor.u32 4788187, %v6656
        %v6658 = vand.u32 2147483647, %v6657
        %v6660 = vcvt.s32.f32 %v6653
        %v6661 = vmul.f32 %v6660, %v6658
        %v6662 = vxor.u32 %v6661, 2147483648
        %v6663 = vsel %vm6580, %v6662, %v6661
        %v6664 = vsub.s32 4, %v6640
        %v6665 = vsel %vm6580, %v6664, %v6640
        %v6666 = vsel %vm6579, %v199, %v6663
        %v6667 = vsel %vm6579, 0, %v6665
        %v6668 = vcosq.f32.pop %v6666
        %v6669 = vsinq.f32.pop %v6666
        %vm6670 = vweird.f32 %v199
        %v6671 = vadd.s32 %v6667, 3
        %v6672 = vand.u32 %v6671, 3
        %vm6673 = vcmp.lt.s32.totalorder %v6672, 2
        %vm6674 = vcmp.eq.s32.totalorder %v6672, 0
        %v6675 = vxor.u32 %v6669, 2147483648
        %v6676 = vsel %vm6674, %v6668, %v6675
        %vm6677 = vcmp.eq.s32.totalorder %v6672, 2
        %v6678 = vxor.u32 %v6668, 2147483648
        %v6679 = vsel %vm6677, %v6678, %v6669
        %v6680 = vsel %vm6673, %v6676, %v6679
        %v6681 = vsel %vm6670, nan, %v6680
        %v6682 = vand.u32 2147483647, %v200
        %vm6683 = vcmp.le.f32.partialorder %v6682, 0.7853982
        %vm6684 = vcmp.lt.s32.totalorder %v200, 0
        %v6685 = vand.u32 %v200, 2139095040
        %v6686 = vshrl.u32 %v6685, 23
        %v6687 = vsub.s32 %v6686, 127
        %v6688 = vand.u32 2147483647, %v200
        %v6689 = vand.u32 %v6688, 8388607
        %v6690 = vor.u32 %v6689, 8388608
        %v6691 = vsub.s32 0, %v6690
        %v6692 = vadd.s32 %v6687, 1
        %vm6693 = vcmp.gt.s32.totalorder %v6692, 0
        %v6694 = vsel %vm6693, %v6692, 0
        %v6695 = vshrl.u32 %v6694, 5
        %v6696 = vand.u32 %v6694, 31
        %v6697 = vsub.s32 32, %v6696
        %v6698 = vshrl.u32 683565275, %v6697
        %v6699 = vshll.u32 683565275, %v6696
        %v6700 = vshrl.u32 2475754826, %v6697
        %v6701 = vor.u32 %v6699, %v6700
        %v6702 = vshll.u32 2475754826, %v6696
        %v6703 = vshrl.u32 2131351028, %v6697
        %v6704 = vor.u32 %v6702, %v6703
        %v6705 = vshll.u32 2131351028, %v6696
        %v6706 = vshrl.u32 2102212464, %v6697
        %v6707 = vor.u32 %v6705, %v6706
        %v6708 = vshll.u32 2102212464, %v6696
        %v6709 = vshrl.u32 920167782, %v6697
        %v6710 = vor.u32 %v6708, %v6709
        %v6711 = vshll.u32 920167782, %v6696
        %v6712 = vshrl.u32 1326507024, %v6697
        %v6713 = vor.u32 %v6711, %v6712
        %vm6714 = vcmp.lt.s32.totalorder %v6695, 1
        %vm6715 = vcmp.lt.s32.totalorder %v6695, 2
        %vm6716 = vcmp.lt.s32.totalorder %v6695, 3
        %vm6717 = vcmp.lt.s32.totalorder %v6695, 4
        %v6718 = vsel %vm6714, %v6698, %v6701
        %v6719 = vsel %vm6717, %v6707, 2102212464
        %v6720 = vsel %vm6716, %v6704, %v6719
        %v6721 = vsel %vm6715, %v6718, %v6720
        %v6722 = vsel %vm6714, %v6701, %v6704
        %v6723 = vsel %vm6717, %v6710, 920167782
        %v6724 = vsel %vm6716, %v6707, %v6723
        %v6725 = vsel %vm6715, %v6722, %v6724
        %v6726 = vsel %vm6714, %v6704, %v6707
        %v6727 = vsel %vm6717, %v6713, 1326507024
        %v6728 = vsel %vm6716, %v6710, %v6727
        %v6729 = vsel %vm6715, %v6726, %v6728
        %v6730 = vshll.u32 %v6690, 8
        %v6731 = vmul.u32.u64.compose %v6730, %v6729
        %v6732 = vextract.low.u32 %v6731
        %v6733 = vextract.high.u32 %v6731
        %v6734 = vmul.u32.u64.compose %v6730, %v6725
        %v6735 = vextract.low.u32 %v6734
        %v6736 = vextract.high.u32 %v6734
        %v6737 = vmul.u32 %v6730, %v6721
        %v6738 = vadd.s32 %v6733, %v6735
        %vm6739 = vc.u32 %v6733, %v6735
        %v6740 = vadd.s32 %v6736, 1
        %v6741 = vsel %vm6739, %v6740, %v6736
        %v6742 = vadd.s32 %v6737, %v6741
        %v6743 = vadd.s32 %v6742, 536870912
        %v6744 = vshrl.u32 %v6743, 30
        %v6745 = vshll.u32 %v6744, 30
        %v6746 = vsub.s32 %v6742, %v6745
        %vm6747 = vcmp.lt.s32.totalorder %v6746, 0
        %v6748 = vsub.s32 0, %v6746
        %v6749 = vsel %vm6747, %v6748, %v6746
        %v6750 = vclz %v6749
        %v6751 = vsub.s32 %v6750, 2
        %vm6752 = vcmp.gt.s32.totalorder 0, %v6751
        %v6753 = vsel %vm6752, 0, %v6751
        %v6754 = vsub.s32 32, %v6753
        %v6755 = vshll.u32 %v6746, %v6753
        %v6756 = vshrl.u32 %v6738, %v6754
        %v6757 = vor.u32 %v6755, %v6756
        %v6758 = vsub.s32 4294967266, %v6753
        %v6759 = vadd.s32 %v6758, 127
        %v6760 = vshll.u32 %v6759, 23
        %v6761 = vor.u32 4788187, %v6760
        %v6762 = vand.u32 2147483647, %v6761
        %v6764 = vcvt.s32.f32 %v6757
        %v6765 = vmul.f32 %v6764, %v6762
        %v6766 = vxor.u32 %v6765, 2147483648
        %v6767 = vsel %vm6684, %v6766, %v6765
        %v6768 = vsub.s32 4, %v6744
        %v6769 = vsel %vm6684, %v6768, %v6744
        %v6770 = vsel %vm6683, %v200, %v6767
        %v6771 = vsel %vm6683, 0, %v6769
        %v6772 = vcosq.f32.pop %v6770
        %v6773 = vsinq.f32.pop %v6770
        %vm6774 = vweird.f32 %v200
        %v6775 = vadd.s32 %v6771, 3
        %v6776 = vand.u32 %v6775, 3
        %vm6777 = vcmp.lt.s32.totalorder %v6776, 2
        %vm6778 = vcmp.eq.s32.totalorder %v6776, 0
        %v6779 = vxor.u32 %v6773, 2147483648
        %v6780 = vsel %vm6778, %v6772, %v6779
        %vm6781 = vcmp.eq.s32.totalorder %v6776, 2
        %v6782 = vxor.u32 %v6772, 2147483648
        %v6783 = vsel %vm6781, %v6782, %v6773
        %v6784 = vsel %vm6777, %v6780, %v6783
        %v6785 = vsel %vm6774, nan, %v6784
        %v6786 = vand.u32 2147483647, %v201
        %vm6787 = vcmp.le.f32.partialorder %v6786, 0.7853982
        %vm6788 = vcmp.lt.s32.totalorder %v201, 0
        %v6789 = vand.u32 %v201, 2139095040
        %v6790 = vshrl.u32 %v6789, 23
        %v6791 = vsub.s32 %v6790, 127
        %v6792 = vand.u32 2147483647, %v201
        %v6793 = vand.u32 %v6792, 8388607
        %v6794 = vor.u32 %v6793, 8388608
        %v6795 = vsub.s32 0, %v6794
        %v6796 = vadd.s32 %v6791, 1
        %vm6797 = vcmp.gt.s32.totalorder %v6796, 0
        %v6798 = vsel %vm6797, %v6796, 0
        %v6799 = vshrl.u32 %v6798, 5
        %v6800 = vand.u32 %v6798, 31
        %v6801 = vsub.s32 32, %v6800
        %v6802 = vshrl.u32 683565275, %v6801
        %v6803 = vshll.u32 683565275, %v6800
        %v6804 = vshrl.u32 2475754826, %v6801
        %v6805 = vor.u32 %v6803, %v6804
        %v6806 = vshll.u32 2475754826, %v6800
        %v6807 = vshrl.u32 2131351028, %v6801
        %v6808 = vor.u32 %v6806, %v6807
        %v6809 = vshll.u32 2131351028, %v6800
        %v6810 = vshrl.u32 2102212464, %v6801
        %v6811 = vor.u32 %v6809, %v6810
        %v6812 = vshll.u32 2102212464, %v6800
        %v6813 = vshrl.u32 920167782, %v6801
        %v6814 = vor.u32 %v6812, %v6813
        %v6815 = vshll.u32 920167782, %v6800
        %v6816 = vshrl.u32 1326507024, %v6801
        %v6817 = vor.u32 %v6815, %v6816
        %vm6818 = vcmp.lt.s32.totalorder %v6799, 1
        %vm6819 = vcmp.lt.s32.totalorder %v6799, 2
        %vm6820 = vcmp.lt.s32.totalorder %v6799, 3
        %vm6821 = vcmp.lt.s32.totalorder %v6799, 4
        %v6822 = vsel %vm6818, %v6802, %v6805
        %v6823 = vsel %vm6821, %v6811, 2102212464
        %v6824 = vsel %vm6820, %v6808, %v6823
        %v6825 = vsel %vm6819, %v6822, %v6824
        %v6826 = vsel %vm6818, %v6805, %v6808
        %v6827 = vsel %vm6821, %v6814, 920167782
        %v6828 = vsel %vm6820, %v6811, %v6827
        %v6829 = vsel %vm6819, %v6826, %v6828
        %v6830 = vsel %vm6818, %v6808, %v6811
        %v6831 = vsel %vm6821, %v6817, 1326507024
        %v6832 = vsel %vm6820, %v6814, %v6831
        %v6833 = vsel %vm6819, %v6830, %v6832
        %v6834 = vshll.u32 %v6794, 8
        %v6835 = vmul.u32.u64.compose %v6834, %v6833
        %v6836 = vextract.low.u32 %v6835
        %v6837 = vextract.high.u32 %v6835
        %v6838 = vmul.u32.u64.compose %v6834, %v6829
        %v6839 = vextract.low.u32 %v6838
        %v6840 = vextract.high.u32 %v6838
        %v6841 = vmul.u32 %v6834, %v6825
        %v6842 = vadd.s32 %v6837, %v6839
        %vm6843 = vc.u32 %v6837, %v6839
        %v6844 = vadd.s32 %v6840, 1
        %v6845 = vsel %vm6843, %v6844, %v6840
        %v6846 = vadd.s32 %v6841, %v6845
        %v6847 = vadd.s32 %v6846, 536870912
        %v6848 = vshrl.u32 %v6847, 30
        %v6849 = vshll.u32 %v6848, 30
        %v6850 = vsub.s32 %v6846, %v6849
        %vm6851 = vcmp.lt.s32.totalorder %v6850, 0
        %v6852 = vsub.s32 0, %v6850
        %v6853 = vsel %vm6851, %v6852, %v6850
        %v6854 = vclz %v6853
        %v6855 = vsub.s32 %v6854, 2
        %vm6856 = vcmp.gt.s32.totalorder 0, %v6855
        %v6857 = vsel %vm6856, 0, %v6855
        %v6858 = vsub.s32 32, %v6857
        %v6859 = vshll.u32 %v6850, %v6857
        %v6860 = vshrl.u32 %v6842, %v6858
        %v6861 = vor.u32 %v6859, %v6860
        %v6862 = vsub.s32 4294967266, %v6857
        %v6863 = vadd.s32 %v6862, 127
        %v6864 = vshll.u32 %v6863, 23
        %v6865 = vor.u32 4788187, %v6864
        %v6866 = vand.u32 2147483647, %v6865
        %v6868 = vcvt.s32.f32 %v6861
        %v6869 = vmul.f32 %v6868, %v6866
        %v6870 = vxor.u32 %v6869, 2147483648
        %v6871 = vsel %vm6788, %v6870, %v6869
        %v6872 = vsub.s32 4, %v6848
        %v6873 = vsel %vm6788, %v6872, %v6848
        %v6874 = vsel %vm6787, %v201, %v6871
        %v6875 = vsel %vm6787, 0, %v6873
        %v6876 = vcosq.f32.pop %v6874
        %v6877 = vsinq.f32.pop %v6874
        %vm6878 = vweird.f32 %v201
        %v6879 = vadd.s32 %v6875, 3
        %v6880 = vand.u32 %v6879, 3
        %vm6881 = vcmp.lt.s32.totalorder %v6880, 2
        %vm6882 = vcmp.eq.s32.totalorder %v6880, 0
        %v6883 = vxor.u32 %v6877, 2147483648
        %v6884 = vsel %vm6882, %v6876, %v6883
        %vm6885 = vcmp.eq.s32.totalorder %v6880, 2
        %v6886 = vxor.u32 %v6876, 2147483648
        %v6887 = vsel %vm6885, %v6886, %v6877
        %v6888 = vsel %vm6881, %v6884, %v6887
        %v6889 = vsel %vm6878, nan, %v6888
        %v6890 = vand.u32 2147483647, %v202
        %vm6891 = vcmp.le.f32.partialorder %v6890, 0.7853982
        %vm6892 = vcmp.lt.s32.totalorder %v202, 0
        %v6893 = vand.u32 %v202, 2139095040
        %v6894 = vshrl.u32 %v6893, 23
        %v6895 = vsub.s32 %v6894, 127
        %v6896 = vand.u32 2147483647, %v202
        %v6897 = vand.u32 %v6896, 8388607
        %v6898 = vor.u32 %v6897, 8388608
        %v6899 = vsub.s32 0, %v6898
        %v6900 = vadd.s32 %v6895, 1
        %vm6901 = vcmp.gt.s32.totalorder %v6900, 0
        %v6902 = vsel %vm6901, %v6900, 0
        %v6903 = vshrl.u32 %v6902, 5
        %v6904 = vand.u32 %v6902, 31
        %v6905 = vsub.s32 32, %v6904
        %v6906 = vshrl.u32 683565275, %v6905
        %v6907 = vshll.u32 683565275, %v6904
        %v6908 = vshrl.u32 2475754826, %v6905
        %v6909 = vor.u32 %v6907, %v6908
        %v6910 = vshll.u32 2475754826, %v6904
        %v6911 = vshrl.u32 2131351028, %v6905
        %v6912 = vor.u32 %v6910, %v6911
        %v6913 = vshll.u32 2131351028, %v6904
        %v6914 = vshrl.u32 2102212464, %v6905
        %v6915 = vor.u32 %v6913, %v6914
        %v6916 = vshll.u32 2102212464, %v6904
        %v6917 = vshrl.u32 920167782, %v6905
        %v6918 = vor.u32 %v6916, %v6917
        %v6919 = vshll.u32 920167782, %v6904
        %v6920 = vshrl.u32 1326507024, %v6905
        %v6921 = vor.u32 %v6919, %v6920
        %vm6922 = vcmp.lt.s32.totalorder %v6903, 1
        %vm6923 = vcmp.lt.s32.totalorder %v6903, 2
        %vm6924 = vcmp.lt.s32.totalorder %v6903, 3
        %vm6925 = vcmp.lt.s32.totalorder %v6903, 4
        %v6926 = vsel %vm6922, %v6906, %v6909
        %v6927 = vsel %vm6925, %v6915, 2102212464
        %v6928 = vsel %vm6924, %v6912, %v6927
        %v6929 = vsel %vm6923, %v6926, %v6928
        %v6930 = vsel %vm6922, %v6909, %v6912
        %v6931 = vsel %vm6925, %v6918, 920167782
        %v6932 = vsel %vm6924, %v6915, %v6931
        %v6933 = vsel %vm6923, %v6930, %v6932
        %v6934 = vsel %vm6922, %v6912, %v6915
        %v6935 = vsel %vm6925, %v6921, 1326507024
        %v6936 = vsel %vm6924, %v6918, %v6935
        %v6937 = vsel %vm6923, %v6934, %v6936
        %v6938 = vshll.u32 %v6898, 8
        %v6939 = vmul.u32.u64.compose %v6938, %v6937
        %v6940 = vextract.low.u32 %v6939
        %v6941 = vextract.high.u32 %v6939
        %v6942 = vmul.u32.u64.compose %v6938, %v6933
        %v6943 = vextract.low.u32 %v6942
        %v6944 = vextract.high.u32 %v6942
        %v6945 = vmul.u32 %v6938, %v6929
        %v6946 = vadd.s32 %v6941, %v6943
        %vm6947 = vc.u32 %v6941, %v6943
        %v6948 = vadd.s32 %v6944, 1
        %v6949 = vsel %vm6947, %v6948, %v6944
        %v6950 = vadd.s32 %v6945, %v6949
        %v6951 = vadd.s32 %v6950, 536870912
        %v6952 = vshrl.u32 %v6951, 30
        %v6953 = vshll.u32 %v6952, 30
        %v6954 = vsub.s32 %v6950, %v6953
        %vm6955 = vcmp.lt.s32.totalorder %v6954, 0
        %v6956 = vsub.s32 0, %v6954
        %v6957 = vsel %vm6955, %v6956, %v6954
        %v6958 = vclz %v6957
        %v6959 = vsub.s32 %v6958, 2
        %vm6960 = vcmp.gt.s32.totalorder 0, %v6959
        %v6961 = vsel %vm6960, 0, %v6959
        %v6962 = vsub.s32 32, %v6961
        %v6963 = vshll.u32 %v6954, %v6961
        %v6964 = vshrl.u32 %v6946, %v6962
        %v6965 = vor.u32 %v6963, %v6964
        %v6966 = vsub.s32 4294967266, %v6961
        %v6967 = vadd.s32 %v6966, 127
        %v6968 = vshll.u32 %v6967, 23
        %v6969 = vor.u32 4788187, %v6968
        %v6970 = vand.u32 2147483647, %v6969
        %v6972 = vcvt.s32.f32 %v6965
        %v6973 = vmul.f32 %v6972, %v6970
        %v6974 = vxor.u32 %v6973, 2147483648
        %v6975 = vsel %vm6892, %v6974, %v6973
        %v6976 = vsub.s32 4, %v6952
        %v6977 = vsel %vm6892, %v6976, %v6952
        %v6978 = vsel %vm6891, %v202, %v6975
        %v6979 = vsel %vm6891, 0, %v6977
        %v6980 = vcosq.f32.pop %v6978
        %v6981 = vsinq.f32.pop %v6978
        %vm6982 = vweird.f32 %v202
        %v6983 = vadd.s32 %v6979, 3
        %v6984 = vand.u32 %v6983, 3
        %vm6985 = vcmp.lt.s32.totalorder %v6984, 2
        %vm6986 = vcmp.eq.s32.totalorder %v6984, 0
        %v6987 = vxor.u32 %v6981, 2147483648
        %v6988 = vsel %vm6986, %v6980, %v6987
        %vm6989 = vcmp.eq.s32.totalorder %v6984, 2
        %v6990 = vxor.u32 %v6980, 2147483648
        %v6991 = vsel %vm6989, %v6990, %v6981
        %v6992 = vsel %vm6985, %v6988, %v6991
        %v6993 = vsel %vm6982, nan, %v6992
        %v6994 = vand.u32 2147483647, %v203
        %vm6995 = vcmp.le.f32.partialorder %v6994, 0.7853982
        %vm6996 = vcmp.lt.s32.totalorder %v203, 0
        %v6997 = vand.u32 %v203, 2139095040
        %v6998 = vshrl.u32 %v6997, 23
        %v6999 = vsub.s32 %v6998, 127
        %v7000 = vand.u32 2147483647, %v203
        %v7001 = vand.u32 %v7000, 8388607
        %v7002 = vor.u32 %v7001, 8388608
        %v7003 = vsub.s32 0, %v7002
        %v7004 = vadd.s32 %v6999, 1
        %vm7005 = vcmp.gt.s32.totalorder %v7004, 0
        %v7006 = vsel %vm7005, %v7004, 0
        %v7007 = vshrl.u32 %v7006, 5
        %v7008 = vand.u32 %v7006, 31
        %v7009 = vsub.s32 32, %v7008
        %v7010 = vshrl.u32 683565275, %v7009
        %v7011 = vshll.u32 683565275, %v7008
        %v7012 = vshrl.u32 2475754826, %v7009
        %v7013 = vor.u32 %v7011, %v7012
        %v7014 = vshll.u32 2475754826, %v7008
        %v7015 = vshrl.u32 2131351028, %v7009
        %v7016 = vor.u32 %v7014, %v7015
        %v7017 = vshll.u32 2131351028, %v7008
        %v7018 = vshrl.u32 2102212464, %v7009
        %v7019 = vor.u32 %v7017, %v7018
        %v7020 = vshll.u32 2102212464, %v7008
        %v7021 = vshrl.u32 920167782, %v7009
        %v7022 = vor.u32 %v7020, %v7021
        %v7023 = vshll.u32 920167782, %v7008
        %v7024 = vshrl.u32 1326507024, %v7009
        %v7025 = vor.u32 %v7023, %v7024
        %vm7026 = vcmp.lt.s32.totalorder %v7007, 1
        %vm7027 = vcmp.lt.s32.totalorder %v7007, 2
        %vm7028 = vcmp.lt.s32.totalorder %v7007, 3
        %vm7029 = vcmp.lt.s32.totalorder %v7007, 4
        %v7030 = vsel %vm7026, %v7010, %v7013
        %v7031 = vsel %vm7029, %v7019, 2102212464
        %v7032 = vsel %vm7028, %v7016, %v7031
        %v7033 = vsel %vm7027, %v7030, %v7032
        %v7034 = vsel %vm7026, %v7013, %v7016
        %v7035 = vsel %vm7029, %v7022, 920167782
        %v7036 = vsel %vm7028, %v7019, %v7035
        %v7037 = vsel %vm7027, %v7034, %v7036
        %v7038 = vsel %vm7026, %v7016, %v7019
        %v7039 = vsel %vm7029, %v7025, 1326507024
        %v7040 = vsel %vm7028, %v7022, %v7039
        %v7041 = vsel %vm7027, %v7038, %v7040
        %v7042 = vshll.u32 %v7002, 8
        %v7043 = vmul.u32.u64.compose %v7042, %v7041
        %v7044 = vextract.low.u32 %v7043
        %v7045 = vextract.high.u32 %v7043
        %v7046 = vmul.u32.u64.compose %v7042, %v7037
        %v7047 = vextract.low.u32 %v7046
        %v7048 = vextract.high.u32 %v7046
        %v7049 = vmul.u32 %v7042, %v7033
        %v7050 = vadd.s32 %v7045, %v7047
        %vm7051 = vc.u32 %v7045, %v7047
        %v7052 = vadd.s32 %v7048, 1
        %v7053 = vsel %vm7051, %v7052, %v7048
        %v7054 = vadd.s32 %v7049, %v7053
        %v7055 = vadd.s32 %v7054, 536870912
        %v7056 = vshrl.u32 %v7055, 30
        %v7057 = vshll.u32 %v7056, 30
        %v7058 = vsub.s32 %v7054, %v7057
        %vm7059 = vcmp.lt.s32.totalorder %v7058, 0
        %v7060 = vsub.s32 0, %v7058
        %v7061 = vsel %vm7059, %v7060, %v7058
        %v7062 = vclz %v7061
        %v7063 = vsub.s32 %v7062, 2
        %vm7064 = vcmp.gt.s32.totalorder 0, %v7063
        %v7065 = vsel %vm7064, 0, %v7063
        %v7066 = vsub.s32 32, %v7065
        %v7067 = vshll.u32 %v7058, %v7065
        %v7068 = vshrl.u32 %v7050, %v7066
        %v7069 = vor.u32 %v7067, %v7068
        %v7070 = vsub.s32 4294967266, %v7065
        %v7071 = vadd.s32 %v7070, 127
        %v7072 = vshll.u32 %v7071, 23
        %v7073 = vor.u32 4788187, %v7072
        %v7074 = vand.u32 2147483647, %v7073
        %v7076 = vcvt.s32.f32 %v7069
        %v7077 = vmul.f32 %v7076, %v7074
        %v7078 = vxor.u32 %v7077, 2147483648
        %v7079 = vsel %vm6996, %v7078, %v7077
        %v7080 = vsub.s32 4, %v7056
        %v7081 = vsel %vm6996, %v7080, %v7056
        %v7082 = vsel %vm6995, %v203, %v7079
        %v7083 = vsel %vm6995, 0, %v7081
        %v7084 = vcosq.f32.pop %v7082
        %v7085 = vsinq.f32.pop %v7082
        %vm7086 = vweird.f32 %v203
        %v7087 = vadd.s32 %v7083, 3
        %v7088 = vand.u32 %v7087, 3
        %vm7089 = vcmp.lt.s32.totalorder %v7088, 2
        %vm7090 = vcmp.eq.s32.totalorder %v7088, 0
        %v7091 = vxor.u32 %v7085, 2147483648
        %v7092 = vsel %vm7090, %v7084, %v7091
        %vm7093 = vcmp.eq.s32.totalorder %v7088, 2
        %v7094 = vxor.u32 %v7084, 2147483648
        %v7095 = vsel %vm7093, %v7094, %v7085
        %v7096 = vsel %vm7089, %v7092, %v7095
        %v7097 = vsel %vm7086, nan, %v7096
        %v7098 = vand.u32 2147483647, %v204
        %vm7099 = vcmp.le.f32.partialorder %v7098, 0.7853982
        %vm7100 = vcmp.lt.s32.totalorder %v204, 0
        %v7101 = vand.u32 %v204, 2139095040
        %v7102 = vshrl.u32 %v7101, 23
        %v7103 = vsub.s32 %v7102, 127
        %v7104 = vand.u32 2147483647, %v204
        %v7105 = vand.u32 %v7104, 8388607
        %v7106 = vor.u32 %v7105, 8388608
        %v7107 = vsub.s32 0, %v7106
        %v7108 = vadd.s32 %v7103, 1
        %vm7109 = vcmp.gt.s32.totalorder %v7108, 0
        %v7110 = vsel %vm7109, %v7108, 0
        %v7111 = vshrl.u32 %v7110, 5
        %v7112 = vand.u32 %v7110, 31
        %v7113 = vsub.s32 32, %v7112
        %v7114 = vshrl.u32 683565275, %v7113
        %v7115 = vshll.u32 683565275, %v7112
        %v7116 = vshrl.u32 2475754826, %v7113
        %v7117 = vor.u32 %v7115, %v7116
        %v7118 = vshll.u32 2475754826, %v7112
        %v7119 = vshrl.u32 2131351028, %v7113
        %v7120 = vor.u32 %v7118, %v7119
        %v7121 = vshll.u32 2131351028, %v7112
        %v7122 = vshrl.u32 2102212464, %v7113
        %v7123 = vor.u32 %v7121, %v7122
        %v7124 = vshll.u32 2102212464, %v7112
        %v7125 = vshrl.u32 920167782, %v7113
        %v7126 = vor.u32 %v7124, %v7125
        %v7127 = vshll.u32 920167782, %v7112
        %v7128 = vshrl.u32 1326507024, %v7113
        %v7129 = vor.u32 %v7127, %v7128
        %vm7130 = vcmp.lt.s32.totalorder %v7111, 1
        %vm7131 = vcmp.lt.s32.totalorder %v7111, 2
        %vm7132 = vcmp.lt.s32.totalorder %v7111, 3
        %vm7133 = vcmp.lt.s32.totalorder %v7111, 4
        %v7134 = vsel %vm7130, %v7114, %v7117
        %v7135 = vsel %vm7133, %v7123, 2102212464
        %v7136 = vsel %vm7132, %v7120, %v7135
        %v7137 = vsel %vm7131, %v7134, %v7136
        %v7138 = vsel %vm7130, %v7117, %v7120
        %v7139 = vsel %vm7133, %v7126, 920167782
        %v7140 = vsel %vm7132, %v7123, %v7139
        %v7141 = vsel %vm7131, %v7138, %v7140
        %v7142 = vsel %vm7130, %v7120, %v7123
        %v7143 = vsel %vm7133, %v7129, 1326507024
        %v7144 = vsel %vm7132, %v7126, %v7143
        %v7145 = vsel %vm7131, %v7142, %v7144
        %v7146 = vshll.u32 %v7106, 8
        %v7147 = vmul.u32.u64.compose %v7146, %v7145
        %v7148 = vextract.low.u32 %v7147
        %v7149 = vextract.high.u32 %v7147
        %v7150 = vmul.u32.u64.compose %v7146, %v7141
        %v7151 = vextract.low.u32 %v7150
        %v7152 = vextract.high.u32 %v7150
        %v7153 = vmul.u32 %v7146, %v7137
        %v7154 = vadd.s32 %v7149, %v7151
        %vm7155 = vc.u32 %v7149, %v7151
        %v7156 = vadd.s32 %v7152, 1
        %v7157 = vsel %vm7155, %v7156, %v7152
        %v7158 = vadd.s32 %v7153, %v7157
        %v7159 = vadd.s32 %v7158, 536870912
        %v7160 = vshrl.u32 %v7159, 30
        %v7161 = vshll.u32 %v7160, 30
        %v7162 = vsub.s32 %v7158, %v7161
        %vm7163 = vcmp.lt.s32.totalorder %v7162, 0
        %v7164 = vsub.s32 0, %v7162
        %v7165 = vsel %vm7163, %v7164, %v7162
        %v7166 = vclz %v7165
        %v7167 = vsub.s32 %v7166, 2
        %vm7168 = vcmp.gt.s32.totalorder 0, %v7167
        %v7169 = vsel %vm7168, 0, %v7167
        %v7170 = vsub.s32 32, %v7169
        %v7171 = vshll.u32 %v7162, %v7169
        %v7172 = vshrl.u32 %v7154, %v7170
        %v7173 = vor.u32 %v7171, %v7172
        %v7174 = vsub.s32 4294967266, %v7169
        %v7175 = vadd.s32 %v7174, 127
        %v7176 = vshll.u32 %v7175, 23
        %v7177 = vor.u32 4788187, %v7176
        %v7178 = vand.u32 2147483647, %v7177
        %v7180 = vcvt.s32.f32 %v7173
        %v7181 = vmul.f32 %v7180, %v7178
        %v7182 = vxor.u32 %v7181, 2147483648
        %v7183 = vsel %vm7100, %v7182, %v7181
        %v7184 = vsub.s32 4, %v7160
        %v7185 = vsel %vm7100, %v7184, %v7160
        %v7186 = vsel %vm7099, %v204, %v7183
        %v7187 = vsel %vm7099, 0, %v7185
        %v7188 = vcosq.f32.pop %v7186
        %v7189 = vsinq.f32.pop %v7186
        %vm7190 = vweird.f32 %v204
        %v7191 = vadd.s32 %v7187, 3
        %v7192 = vand.u32 %v7191, 3
        %vm7193 = vcmp.lt.s32.totalorder %v7192, 2
        %vm7194 = vcmp.eq.s32.totalorder %v7192, 0
        %v7195 = vxor.u32 %v7189, 2147483648
        %v7196 = vsel %vm7194, %v7188, %v7195
        %vm7197 = vcmp.eq.s32.totalorder %v7192, 2
        %v7198 = vxor.u32 %v7188, 2147483648
        %v7199 = vsel %vm7197, %v7198, %v7189
        %v7200 = vsel %vm7193, %v7196, %v7199
        %v7201 = vsel %vm7190, nan, %v7200
        %v7202 = vand.u32 2147483647, %v205
        %vm7203 = vcmp.le.f32.partialorder %v7202, 0.7853982
        %vm7204 = vcmp.lt.s32.totalorder %v205, 0
        %v7205 = vand.u32 %v205, 2139095040
        %v7206 = vshrl.u32 %v7205, 23
        %v7207 = vsub.s32 %v7206, 127
        %v7208 = vand.u32 2147483647, %v205
        %v7209 = vand.u32 %v7208, 8388607
        %v7210 = vor.u32 %v7209, 8388608
        %v7211 = vsub.s32 0, %v7210
        %v7212 = vadd.s32 %v7207, 1
        %vm7213 = vcmp.gt.s32.totalorder %v7212, 0
        %v7214 = vsel %vm7213, %v7212, 0
        %v7215 = vshrl.u32 %v7214, 5
        %v7216 = vand.u32 %v7214, 31
        %v7217 = vsub.s32 32, %v7216
        %v7218 = vshrl.u32 683565275, %v7217
        %v7219 = vshll.u32 683565275, %v7216
        %v7220 = vshrl.u32 2475754826, %v7217
        %v7221 = vor.u32 %v7219, %v7220
        %v7222 = vshll.u32 2475754826, %v7216
        %v7223 = vshrl.u32 2131351028, %v7217
        %v7224 = vor.u32 %v7222, %v7223
        %v7225 = vshll.u32 2131351028, %v7216
        %v7226 = vshrl.u32 2102212464, %v7217
        %v7227 = vor.u32 %v7225, %v7226
        %v7228 = vshll.u32 2102212464, %v7216
        %v7229 = vshrl.u32 920167782, %v7217
        %v7230 = vor.u32 %v7228, %v7229
        %v7231 = vshll.u32 920167782, %v7216
        %v7232 = vshrl.u32 1326507024, %v7217
        %v7233 = vor.u32 %v7231, %v7232
        %vm7234 = vcmp.lt.s32.totalorder %v7215, 1
        %vm7235 = vcmp.lt.s32.totalorder %v7215, 2
        %vm7236 = vcmp.lt.s32.totalorder %v7215, 3
        %vm7237 = vcmp.lt.s32.totalorder %v7215, 4
        %v7238 = vsel %vm7234, %v7218, %v7221
        %v7239 = vsel %vm7237, %v7227, 2102212464
        %v7240 = vsel %vm7236, %v7224, %v7239
        %v7241 = vsel %vm7235, %v7238, %v7240
        %v7242 = vsel %vm7234, %v7221, %v7224
        %v7243 = vsel %vm7237, %v7230, 920167782
        %v7244 = vsel %vm7236, %v7227, %v7243
        %v7245 = vsel %vm7235, %v7242, %v7244
        %v7246 = vsel %vm7234, %v7224, %v7227
        %v7247 = vsel %vm7237, %v7233, 1326507024
        %v7248 = vsel %vm7236, %v7230, %v7247
        %v7249 = vsel %vm7235, %v7246, %v7248
        %v7250 = vshll.u32 %v7210, 8
        %v7251 = vmul.u32.u64.compose %v7250, %v7249
        %v7252 = vextract.low.u32 %v7251
        %v7253 = vextract.high.u32 %v7251
        %v7254 = vmul.u32.u64.compose %v7250, %v7245
        %v7255 = vextract.low.u32 %v7254
        %v7256 = vextract.high.u32 %v7254
        %v7257 = vmul.u32 %v7250, %v7241
        %v7258 = vadd.s32 %v7253, %v7255
        %vm7259 = vc.u32 %v7253, %v7255
        %v7260 = vadd.s32 %v7256, 1
        %v7261 = vsel %vm7259, %v7260, %v7256
        %v7262 = vadd.s32 %v7257, %v7261
        %v7263 = vadd.s32 %v7262, 536870912
        %v7264 = vshrl.u32 %v7263, 30
        %v7265 = vshll.u32 %v7264, 30
        %v7266 = vsub.s32 %v7262, %v7265
        %vm7267 = vcmp.lt.s32.totalorder %v7266, 0
        %v7268 = vsub.s32 0, %v7266
        %v7269 = vsel %vm7267, %v7268, %v7266
        %v7270 = vclz %v7269
        %v7271 = vsub.s32 %v7270, 2
        %vm7272 = vcmp.gt.s32.totalorder 0, %v7271
        %v7273 = vsel %vm7272, 0, %v7271
        %v7274 = vsub.s32 32, %v7273
        %v7275 = vshll.u32 %v7266, %v7273
        %v7276 = vshrl.u32 %v7258, %v7274
        %v7277 = vor.u32 %v7275, %v7276
        %v7278 = vsub.s32 4294967266, %v7273
        %v7279 = vadd.s32 %v7278, 127
        %v7280 = vshll.u32 %v7279, 23
        %v7281 = vor.u32 4788187, %v7280
        %v7282 = vand.u32 2147483647, %v7281
        %v7284 = vcvt.s32.f32 %v7277
        %v7285 = vmul.f32 %v7284, %v7282
        %v7286 = vxor.u32 %v7285, 2147483648
        %v7287 = vsel %vm7204, %v7286, %v7285
        %v7288 = vsub.s32 4, %v7264
        %v7289 = vsel %vm7204, %v7288, %v7264
        %v7290 = vsel %vm7203, %v205, %v7287
        %v7291 = vsel %vm7203, 0, %v7289
        %v7292 = vcosq.f32.pop %v7290
        %v7293 = vsinq.f32.pop %v7290
        %vm7294 = vweird.f32 %v205
        %v7295 = vadd.s32 %v7291, 3
        %v7296 = vand.u32 %v7295, 3
        %vm7297 = vcmp.lt.s32.totalorder %v7296, 2
        %vm7298 = vcmp.eq.s32.totalorder %v7296, 0
        %v7299 = vxor.u32 %v7293, 2147483648
        %v7300 = vsel %vm7298, %v7292, %v7299
        %vm7301 = vcmp.eq.s32.totalorder %v7296, 2
        %v7302 = vxor.u32 %v7292, 2147483648
        %v7303 = vsel %vm7301, %v7302, %v7293
        %v7304 = vsel %vm7297, %v7300, %v7303
        %v7305 = vsel %vm7294, nan, %v7304
        %v7306 = vand.u32 2147483647, %v206
        %vm7307 = vcmp.le.f32.partialorder %v7306, 0.7853982
        %vm7308 = vcmp.lt.s32.totalorder %v206, 0
        %v7309 = vand.u32 %v206, 2139095040
        %v7310 = vshrl.u32 %v7309, 23
        %v7311 = vsub.s32 %v7310, 127
        %v7312 = vand.u32 2147483647, %v206
        %v7313 = vand.u32 %v7312, 8388607
        %v7314 = vor.u32 %v7313, 8388608
        %v7315 = vsub.s32 0, %v7314
        %v7316 = vadd.s32 %v7311, 1
        %vm7317 = vcmp.gt.s32.totalorder %v7316, 0
        %v7318 = vsel %vm7317, %v7316, 0
        %v7319 = vshrl.u32 %v7318, 5
        %v7320 = vand.u32 %v7318, 31
        %v7321 = vsub.s32 32, %v7320
        %v7322 = vshrl.u32 683565275, %v7321
        %v7323 = vshll.u32 683565275, %v7320
        %v7324 = vshrl.u32 2475754826, %v7321
        %v7325 = vor.u32 %v7323, %v7324
        %v7326 = vshll.u32 2475754826, %v7320
        %v7327 = vshrl.u32 2131351028, %v7321
        %v7328 = vor.u32 %v7326, %v7327
        %v7329 = vshll.u32 2131351028, %v7320
        %v7330 = vshrl.u32 2102212464, %v7321
        %v7331 = vor.u32 %v7329, %v7330
        %v7332 = vshll.u32 2102212464, %v7320
        %v7333 = vshrl.u32 920167782, %v7321
        %v7334 = vor.u32 %v7332, %v7333
        %v7335 = vshll.u32 920167782, %v7320
        %v7336 = vshrl.u32 1326507024, %v7321
        %v7337 = vor.u32 %v7335, %v7336
        %vm7338 = vcmp.lt.s32.totalorder %v7319, 1
        %vm7339 = vcmp.lt.s32.totalorder %v7319, 2
        %vm7340 = vcmp.lt.s32.totalorder %v7319, 3
        %vm7341 = vcmp.lt.s32.totalorder %v7319, 4
        %v7342 = vsel %vm7338, %v7322, %v7325
        %v7343 = vsel %vm7341, %v7331, 2102212464
        %v7344 = vsel %vm7340, %v7328, %v7343
        %v7345 = vsel %vm7339, %v7342, %v7344
        %v7346 = vsel %vm7338, %v7325, %v7328
        %v7347 = vsel %vm7341, %v7334, 920167782
        %v7348 = vsel %vm7340, %v7331, %v7347
        %v7349 = vsel %vm7339, %v7346, %v7348
        %v7350 = vsel %vm7338, %v7328, %v7331
        %v7351 = vsel %vm7341, %v7337, 1326507024
        %v7352 = vsel %vm7340, %v7334, %v7351
        %v7353 = vsel %vm7339, %v7350, %v7352
        %v7354 = vshll.u32 %v7314, 8
        %v7355 = vmul.u32.u64.compose %v7354, %v7353
        %v7356 = vextract.low.u32 %v7355
        %v7357 = vextract.high.u32 %v7355
        %v7358 = vmul.u32.u64.compose %v7354, %v7349
        %v7359 = vextract.low.u32 %v7358
        %v7360 = vextract.high.u32 %v7358
        %v7361 = vmul.u32 %v7354, %v7345
        %v7362 = vadd.s32 %v7357, %v7359
        %vm7363 = vc.u32 %v7357, %v7359
        %v7364 = vadd.s32 %v7360, 1
        %v7365 = vsel %vm7363, %v7364, %v7360
        %v7366 = vadd.s32 %v7361, %v7365
        %v7367 = vadd.s32 %v7366, 536870912
        %v7368 = vshrl.u32 %v7367, 30
        %v7369 = vshll.u32 %v7368, 30
        %v7370 = vsub.s32 %v7366, %v7369
        %vm7371 = vcmp.lt.s32.totalorder %v7370, 0
        %v7372 = vsub.s32 0, %v7370
        %v7373 = vsel %vm7371, %v7372, %v7370
        %v7374 = vclz %v7373
        %v7375 = vsub.s32 %v7374, 2
        %vm7376 = vcmp.gt.s32.totalorder 0, %v7375
        %v7377 = vsel %vm7376, 0, %v7375
        %v7378 = vsub.s32 32, %v7377
        %v7379 = vshll.u32 %v7370, %v7377
        %v7380 = vshrl.u32 %v7362, %v7378
        %v7381 = vor.u32 %v7379, %v7380
        %v7382 = vsub.s32 4294967266, %v7377
        %v7383 = vadd.s32 %v7382, 127
        %v7384 = vshll.u32 %v7383, 23
        %v7385 = vor.u32 4788187, %v7384
        %v7386 = vand.u32 2147483647, %v7385
        %v7388 = vcvt.s32.f32 %v7381
        %v7389 = vmul.f32 %v7388, %v7386
        %v7390 = vxor.u32 %v7389, 2147483648
        %v7391 = vsel %vm7308, %v7390, %v7389
        %v7392 = vsub.s32 4, %v7368
        %v7393 = vsel %vm7308, %v7392, %v7368
        %v7394 = vsel %vm7307, %v206, %v7391
        %v7395 = vsel %vm7307, 0, %v7393
        %v7396 = vcosq.f32.pop %v7394
        %v7397 = vsinq.f32.pop %v7394
        %vm7398 = vweird.f32 %v206
        %v7399 = vadd.s32 %v7395, 3
        %v7400 = vand.u32 %v7399, 3
        %vm7401 = vcmp.lt.s32.totalorder %v7400, 2
        %vm7402 = vcmp.eq.s32.totalorder %v7400, 0
        %v7403 = vxor.u32 %v7397, 2147483648
        %v7404 = vsel %vm7402, %v7396, %v7403
        %vm7405 = vcmp.eq.s32.totalorder %v7400, 2
        %v7406 = vxor.u32 %v7396, 2147483648
        %v7407 = vsel %vm7405, %v7406, %v7397
        %v7408 = vsel %vm7401, %v7404, %v7407
        %v7409 = vsel %vm7398, nan, %v7408
        %v7410 = vand.u32 2147483647, %v207
        %vm7411 = vcmp.le.f32.partialorder %v7410, 0.7853982
        %vm7412 = vcmp.lt.s32.totalorder %v207, 0
        %v7413 = vand.u32 %v207, 2139095040
        %v7414 = vshrl.u32 %v7413, 23
        %v7415 = vsub.s32 %v7414, 127
        %v7416 = vand.u32 2147483647, %v207
        %v7417 = vand.u32 %v7416, 8388607
        %v7418 = vor.u32 %v7417, 8388608
        %v7419 = vsub.s32 0, %v7418
        %v7420 = vadd.s32 %v7415, 1
        %vm7421 = vcmp.gt.s32.totalorder %v7420, 0
        %v7422 = vsel %vm7421, %v7420, 0
        %v7423 = vshrl.u32 %v7422, 5
        %v7424 = vand.u32 %v7422, 31
        %v7425 = vsub.s32 32, %v7424
        %v7426 = vshrl.u32 683565275, %v7425
        %v7427 = vshll.u32 683565275, %v7424
        %v7428 = vshrl.u32 2475754826, %v7425
        %v7429 = vor.u32 %v7427, %v7428
        %v7430 = vshll.u32 2475754826, %v7424
        %v7431 = vshrl.u32 2131351028, %v7425
        %v7432 = vor.u32 %v7430, %v7431
        %v7433 = vshll.u32 2131351028, %v7424
        %v7434 = vshrl.u32 2102212464, %v7425
        %v7435 = vor.u32 %v7433, %v7434
        %v7436 = vshll.u32 2102212464, %v7424
        %v7437 = vshrl.u32 920167782, %v7425
        %v7438 = vor.u32 %v7436, %v7437
        %v7439 = vshll.u32 920167782, %v7424
        %v7440 = vshrl.u32 1326507024, %v7425
        %v7441 = vor.u32 %v7439, %v7440
        %vm7442 = vcmp.lt.s32.totalorder %v7423, 1
        %vm7443 = vcmp.lt.s32.totalorder %v7423, 2
        %vm7444 = vcmp.lt.s32.totalorder %v7423, 3
        %vm7445 = vcmp.lt.s32.totalorder %v7423, 4
        %v7446 = vsel %vm7442, %v7426, %v7429
        %v7447 = vsel %vm7445, %v7435, 2102212464
        %v7448 = vsel %vm7444, %v7432, %v7447
        %v7449 = vsel %vm7443, %v7446, %v7448
        %v7450 = vsel %vm7442, %v7429, %v7432
        %v7451 = vsel %vm7445, %v7438, 920167782
        %v7452 = vsel %vm7444, %v7435, %v7451
        %v7453 = vsel %vm7443, %v7450, %v7452
        %v7454 = vsel %vm7442, %v7432, %v7435
        %v7455 = vsel %vm7445, %v7441, 1326507024
        %v7456 = vsel %vm7444, %v7438, %v7455
        %v7457 = vsel %vm7443, %v7454, %v7456
        %v7458 = vshll.u32 %v7418, 8
        %v7459 = vmul.u32.u64.compose %v7458, %v7457
        %v7460 = vextract.low.u32 %v7459
        %v7461 = vextract.high.u32 %v7459
        %v7462 = vmul.u32.u64.compose %v7458, %v7453
        %v7463 = vextract.low.u32 %v7462
        %v7464 = vextract.high.u32 %v7462
        %v7465 = vmul.u32 %v7458, %v7449
        %v7466 = vadd.s32 %v7461, %v7463
        %vm7467 = vc.u32 %v7461, %v7463
        %v7468 = vadd.s32 %v7464, 1
        %v7469 = vsel %vm7467, %v7468, %v7464
        %v7470 = vadd.s32 %v7465, %v7469
        %v7471 = vadd.s32 %v7470, 536870912
        %v7472 = vshrl.u32 %v7471, 30
        %v7473 = vshll.u32 %v7472, 30
        %v7474 = vsub.s32 %v7470, %v7473
        %vm7475 = vcmp.lt.s32.totalorder %v7474, 0
        %v7476 = vsub.s32 0, %v7474
        %v7477 = vsel %vm7475, %v7476, %v7474
        %v7478 = vclz %v7477
        %v7479 = vsub.s32 %v7478, 2
        %vm7480 = vcmp.gt.s32.totalorder 0, %v7479
        %v7481 = vsel %vm7480, 0, %v7479
        %v7482 = vsub.s32 32, %v7481
        %v7483 = vshll.u32 %v7474, %v7481
        %v7484 = vshrl.u32 %v7466, %v7482
        %v7485 = vor.u32 %v7483, %v7484
        %v7486 = vsub.s32 4294967266, %v7481
        %v7487 = vadd.s32 %v7486, 127
        %v7488 = vshll.u32 %v7487, 23
        %v7489 = vor.u32 4788187, %v7488
        %v7490 = vand.u32 2147483647, %v7489
        %v7492 = vcvt.s32.f32 %v7485
        %v7493 = vmul.f32 %v7492, %v7490
        %v7494 = vxor.u32 %v7493, 2147483648
        %v7495 = vsel %vm7412, %v7494, %v7493
        %v7496 = vsub.s32 4, %v7472
        %v7497 = vsel %vm7412, %v7496, %v7472
        %v7498 = vsel %vm7411, %v207, %v7495
        %v7499 = vsel %vm7411, 0, %v7497
        %v7500 = vcosq.f32.pop %v7498
        %v7501 = vsinq.f32.pop %v7498
        %vm7502 = vweird.f32 %v207
        %v7503 = vadd.s32 %v7499, 3
        %v7504 = vand.u32 %v7503, 3
        %vm7505 = vcmp.lt.s32.totalorder %v7504, 2
        %vm7506 = vcmp.eq.s32.totalorder %v7504, 0
        %v7507 = vxor.u32 %v7501, 2147483648
        %v7508 = vsel %vm7506, %v7500, %v7507
        %vm7509 = vcmp.eq.s32.totalorder %v7504, 2
        %v7510 = vxor.u32 %v7500, 2147483648
        %v7511 = vsel %vm7509, %v7510, %v7501
        %v7512 = vsel %vm7505, %v7508, %v7511
        %v7513 = vsel %vm7502, nan, %v7512
        %v7514 = vand.u32 2147483647, %v208
        %vm7515 = vcmp.le.f32.partialorder %v7514, 0.7853982
        %vm7516 = vcmp.lt.s32.totalorder %v208, 0
        %v7517 = vand.u32 %v208, 2139095040
        %v7518 = vshrl.u32 %v7517, 23
        %v7519 = vsub.s32 %v7518, 127
        %v7520 = vand.u32 2147483647, %v208
        %v7521 = vand.u32 %v7520, 8388607
        %v7522 = vor.u32 %v7521, 8388608
        %v7523 = vsub.s32 0, %v7522
        %v7524 = vadd.s32 %v7519, 1
        %vm7525 = vcmp.gt.s32.totalorder %v7524, 0
        %v7526 = vsel %vm7525, %v7524, 0
        %v7527 = vshrl.u32 %v7526, 5
        %v7528 = vand.u32 %v7526, 31
        %v7529 = vsub.s32 32, %v7528
        %v7530 = vshrl.u32 683565275, %v7529
        %v7531 = vshll.u32 683565275, %v7528
        %v7532 = vshrl.u32 2475754826, %v7529
        %v7533 = vor.u32 %v7531, %v7532
        %v7534 = vshll.u32 2475754826, %v7528
        %v7535 = vshrl.u32 2131351028, %v7529
        %v7536 = vor.u32 %v7534, %v7535
        %v7537 = vshll.u32 2131351028, %v7528
        %v7538 = vshrl.u32 2102212464, %v7529
        %v7539 = vor.u32 %v7537, %v7538
        %v7540 = vshll.u32 2102212464, %v7528
        %v7541 = vshrl.u32 920167782, %v7529
        %v7542 = vor.u32 %v7540, %v7541
        %v7543 = vshll.u32 920167782, %v7528
        %v7544 = vshrl.u32 1326507024, %v7529
        %v7545 = vor.u32 %v7543, %v7544
        %vm7546 = vcmp.lt.s32.totalorder %v7527, 1
        %vm7547 = vcmp.lt.s32.totalorder %v7527, 2
        %vm7548 = vcmp.lt.s32.totalorder %v7527, 3
        %vm7549 = vcmp.lt.s32.totalorder %v7527, 4
        %v7550 = vsel %vm7546, %v7530, %v7533
        %v7551 = vsel %vm7549, %v7539, 2102212464
        %v7552 = vsel %vm7548, %v7536, %v7551
        %v7553 = vsel %vm7547, %v7550, %v7552
        %v7554 = vsel %vm7546, %v7533, %v7536
        %v7555 = vsel %vm7549, %v7542, 920167782
        %v7556 = vsel %vm7548, %v7539, %v7555
        %v7557 = vsel %vm7547, %v7554, %v7556
        %v7558 = vsel %vm7546, %v7536, %v7539
        %v7559 = vsel %vm7549, %v7545, 1326507024
        %v7560 = vsel %vm7548, %v7542, %v7559
        %v7561 = vsel %vm7547, %v7558, %v7560
        %v7562 = vshll.u32 %v7522, 8
        %v7563 = vmul.u32.u64.compose %v7562, %v7561
        %v7564 = vextract.low.u32 %v7563
        %v7565 = vextract.high.u32 %v7563
        %v7566 = vmul.u32.u64.compose %v7562, %v7557
        %v7567 = vextract.low.u32 %v7566
        %v7568 = vextract.high.u32 %v7566
        %v7569 = vmul.u32 %v7562, %v7553
        %v7570 = vadd.s32 %v7565, %v7567
        %vm7571 = vc.u32 %v7565, %v7567
        %v7572 = vadd.s32 %v7568, 1
        %v7573 = vsel %vm7571, %v7572, %v7568
        %v7574 = vadd.s32 %v7569, %v7573
        %v7575 = vadd.s32 %v7574, 536870912
        %v7576 = vshrl.u32 %v7575, 30
        %v7577 = vshll.u32 %v7576, 30
        %v7578 = vsub.s32 %v7574, %v7577
        %vm7579 = vcmp.lt.s32.totalorder %v7578, 0
        %v7580 = vsub.s32 0, %v7578
        %v7581 = vsel %vm7579, %v7580, %v7578
        %v7582 = vclz %v7581
        %v7583 = vsub.s32 %v7582, 2
        %vm7584 = vcmp.gt.s32.totalorder 0, %v7583
        %v7585 = vsel %vm7584, 0, %v7583
        %v7586 = vsub.s32 32, %v7585
        %v7587 = vshll.u32 %v7578, %v7585
        %v7588 = vshrl.u32 %v7570, %v7586
        %v7589 = vor.u32 %v7587, %v7588
        %v7590 = vsub.s32 4294967266, %v7585
        %v7591 = vadd.s32 %v7590, 127
        %v7592 = vshll.u32 %v7591, 23
        %v7593 = vor.u32 4788187, %v7592
        %v7594 = vand.u32 2147483647, %v7593
        %v7596 = vcvt.s32.f32 %v7589
        %v7597 = vmul.f32 %v7596, %v7594
        %v7598 = vxor.u32 %v7597, 2147483648
        %v7599 = vsel %vm7516, %v7598, %v7597
        %v7600 = vsub.s32 4, %v7576
        %v7601 = vsel %vm7516, %v7600, %v7576
        %v7602 = vsel %vm7515, %v208, %v7599
        %v7603 = vsel %vm7515, 0, %v7601
        %v7604 = vcosq.f32.pop %v7602
        %v7605 = vsinq.f32.pop %v7602
        %vm7606 = vweird.f32 %v208
        %v7607 = vadd.s32 %v7603, 3
        %v7608 = vand.u32 %v7607, 3
        %vm7609 = vcmp.lt.s32.totalorder %v7608, 2
        %vm7610 = vcmp.eq.s32.totalorder %v7608, 0
        %v7611 = vxor.u32 %v7605, 2147483648
        %v7612 = vsel %vm7610, %v7604, %v7611
        %vm7613 = vcmp.eq.s32.totalorder %v7608, 2
        %v7614 = vxor.u32 %v7604, 2147483648
        %v7615 = vsel %vm7613, %v7614, %v7605
        %v7616 = vsel %vm7609, %v7612, %v7615
        %v7617 = vsel %vm7606, nan, %v7616
        %v7618 = vand.u32 2147483647, %v209
        %vm7619 = vcmp.le.f32.partialorder %v7618, 0.7853982
        %vm7620 = vcmp.lt.s32.totalorder %v209, 0
        %v7621 = vand.u32 %v209, 2139095040
        %v7622 = vshrl.u32 %v7621, 23
        %v7623 = vsub.s32 %v7622, 127
        %v7624 = vand.u32 2147483647, %v209
        %v7625 = vand.u32 %v7624, 8388607
        %v7626 = vor.u32 %v7625, 8388608
        %v7627 = vsub.s32 0, %v7626
        %v7628 = vadd.s32 %v7623, 1
        %vm7629 = vcmp.gt.s32.totalorder %v7628, 0
        %v7630 = vsel %vm7629, %v7628, 0
        %v7631 = vshrl.u32 %v7630, 5
        %v7632 = vand.u32 %v7630, 31
        %v7633 = vsub.s32 32, %v7632
        %v7634 = vshrl.u32 683565275, %v7633
        %v7635 = vshll.u32 683565275, %v7632
        %v7636 = vshrl.u32 2475754826, %v7633
        %v7637 = vor.u32 %v7635, %v7636
        %v7638 = vshll.u32 2475754826, %v7632
        %v7639 = vshrl.u32 2131351028, %v7633
        %v7640 = vor.u32 %v7638, %v7639
        %v7641 = vshll.u32 2131351028, %v7632
        %v7642 = vshrl.u32 2102212464, %v7633
        %v7643 = vor.u32 %v7641, %v7642
        %v7644 = vshll.u32 2102212464, %v7632
        %v7645 = vshrl.u32 920167782, %v7633
        %v7646 = vor.u32 %v7644, %v7645
        %v7647 = vshll.u32 920167782, %v7632
        %v7648 = vshrl.u32 1326507024, %v7633
        %v7649 = vor.u32 %v7647, %v7648
        %vm7650 = vcmp.lt.s32.totalorder %v7631, 1
        %vm7651 = vcmp.lt.s32.totalorder %v7631, 2
        %vm7652 = vcmp.lt.s32.totalorder %v7631, 3
        %vm7653 = vcmp.lt.s32.totalorder %v7631, 4
        %v7654 = vsel %vm7650, %v7634, %v7637
        %v7655 = vsel %vm7653, %v7643, 2102212464
        %v7656 = vsel %vm7652, %v7640, %v7655
        %v7657 = vsel %vm7651, %v7654, %v7656
        %v7658 = vsel %vm7650, %v7637, %v7640
        %v7659 = vsel %vm7653, %v7646, 920167782
        %v7660 = vsel %vm7652, %v7643, %v7659
        %v7661 = vsel %vm7651, %v7658, %v7660
        %v7662 = vsel %vm7650, %v7640, %v7643
        %v7663 = vsel %vm7653, %v7649, 1326507024
        %v7664 = vsel %vm7652, %v7646, %v7663
        %v7665 = vsel %vm7651, %v7662, %v7664
        %v7666 = vshll.u32 %v7626, 8
        %v7667 = vmul.u32.u64.compose %v7666, %v7665
        %v7668 = vextract.low.u32 %v7667
        %v7669 = vextract.high.u32 %v7667
        %v7670 = vmul.u32.u64.compose %v7666, %v7661
        %v7671 = vextract.low.u32 %v7670
        %v7672 = vextract.high.u32 %v7670
        %v7673 = vmul.u32 %v7666, %v7657
        %v7674 = vadd.s32 %v7669, %v7671
        %vm7675 = vc.u32 %v7669, %v7671
        %v7676 = vadd.s32 %v7672, 1
        %v7677 = vsel %vm7675, %v7676, %v7672
        %v7678 = vadd.s32 %v7673, %v7677
        %v7679 = vadd.s32 %v7678, 536870912
        %v7680 = vshrl.u32 %v7679, 30
        %v7681 = vshll.u32 %v7680, 30
        %v7682 = vsub.s32 %v7678, %v7681
        %vm7683 = vcmp.lt.s32.totalorder %v7682, 0
        %v7684 = vsub.s32 0, %v7682
        %v7685 = vsel %vm7683, %v7684, %v7682
        %v7686 = vclz %v7685
        %v7687 = vsub.s32 %v7686, 2
        %vm7688 = vcmp.gt.s32.totalorder 0, %v7687
        %v7689 = vsel %vm7688, 0, %v7687
        %v7690 = vsub.s32 32, %v7689
        %v7691 = vshll.u32 %v7682, %v7689
        %v7692 = vshrl.u32 %v7674, %v7690
        %v7693 = vor.u32 %v7691, %v7692
        %v7694 = vsub.s32 4294967266, %v7689
        %v7695 = vadd.s32 %v7694, 127
        %v7696 = vshll.u32 %v7695, 23
        %v7697 = vor.u32 4788187, %v7696
        %v7698 = vand.u32 2147483647, %v7697
        %v7700 = vcvt.s32.f32 %v7693
        %v7701 = vmul.f32 %v7700, %v7698
        %v7702 = vxor.u32 %v7701, 2147483648
        %v7703 = vsel %vm7620, %v7702, %v7701
        %v7704 = vsub.s32 4, %v7680
        %v7705 = vsel %vm7620, %v7704, %v7680
        %v7706 = vsel %vm7619, %v209, %v7703
        %v7707 = vsel %vm7619, 0, %v7705
        %v7708 = vcosq.f32.pop %v7706
        %v7709 = vsinq.f32.pop %v7706
        %vm7710 = vweird.f32 %v209
        %v7711 = vadd.s32 %v7707, 3
        %v7712 = vand.u32 %v7711, 3
        %vm7713 = vcmp.lt.s32.totalorder %v7712, 2
        %vm7714 = vcmp.eq.s32.totalorder %v7712, 0
        %v7715 = vxor.u32 %v7709, 2147483648
        %v7716 = vsel %vm7714, %v7708, %v7715
        %vm7717 = vcmp.eq.s32.totalorder %v7712, 2
        %v7718 = vxor.u32 %v7708, 2147483648
        %v7719 = vsel %vm7717, %v7718, %v7709
        %v7720 = vsel %vm7713, %v7716, %v7719
        %v7721 = vsel %vm7710, nan, %v7720
        %v7722 = vand.u32 2147483647, %v210
        %vm7723 = vcmp.le.f32.partialorder %v7722, 0.7853982
        %vm7724 = vcmp.lt.s32.totalorder %v210, 0
        %v7725 = vand.u32 %v210, 2139095040
        %v7726 = vshrl.u32 %v7725, 23
        %v7727 = vsub.s32 %v7726, 127
        %v7728 = vand.u32 2147483647, %v210
        %v7729 = vand.u32 %v7728, 8388607
        %v7730 = vor.u32 %v7729, 8388608
        %v7731 = vsub.s32 0, %v7730
        %v7732 = vadd.s32 %v7727, 1
        %vm7733 = vcmp.gt.s32.totalorder %v7732, 0
        %v7734 = vsel %vm7733, %v7732, 0
        %v7735 = vshrl.u32 %v7734, 5
        %v7736 = vand.u32 %v7734, 31
        %v7737 = vsub.s32 32, %v7736
        %v7738 = vshrl.u32 683565275, %v7737
        %v7739 = vshll.u32 683565275, %v7736
        %v7740 = vshrl.u32 2475754826, %v7737
        %v7741 = vor.u32 %v7739, %v7740
        %v7742 = vshll.u32 2475754826, %v7736
        %v7743 = vshrl.u32 2131351028, %v7737
        %v7744 = vor.u32 %v7742, %v7743
        %v7745 = vshll.u32 2131351028, %v7736
        %v7746 = vshrl.u32 2102212464, %v7737
        %v7747 = vor.u32 %v7745, %v7746
        %v7748 = vshll.u32 2102212464, %v7736
        %v7749 = vshrl.u32 920167782, %v7737
        %v7750 = vor.u32 %v7748, %v7749
        %v7751 = vshll.u32 920167782, %v7736
        %v7752 = vshrl.u32 1326507024, %v7737
        %v7753 = vor.u32 %v7751, %v7752
        %vm7754 = vcmp.lt.s32.totalorder %v7735, 1
        %vm7755 = vcmp.lt.s32.totalorder %v7735, 2
        %vm7756 = vcmp.lt.s32.totalorder %v7735, 3
        %vm7757 = vcmp.lt.s32.totalorder %v7735, 4
        %v7758 = vsel %vm7754, %v7738, %v7741
        %v7759 = vsel %vm7757, %v7747, 2102212464
        %v7760 = vsel %vm7756, %v7744, %v7759
        %v7761 = vsel %vm7755, %v7758, %v7760
        %v7762 = vsel %vm7754, %v7741, %v7744
        %v7763 = vsel %vm7757, %v7750, 920167782
        %v7764 = vsel %vm7756, %v7747, %v7763
        %v7765 = vsel %vm7755, %v7762, %v7764
        %v7766 = vsel %vm7754, %v7744, %v7747
        %v7767 = vsel %vm7757, %v7753, 1326507024
        %v7768 = vsel %vm7756, %v7750, %v7767
        %v7769 = vsel %vm7755, %v7766, %v7768
        %v7770 = vshll.u32 %v7730, 8
        %v7771 = vmul.u32.u64.compose %v7770, %v7769
        %v7772 = vextract.low.u32 %v7771
        %v7773 = vextract.high.u32 %v7771
        %v7774 = vmul.u32.u64.compose %v7770, %v7765
        %v7775 = vextract.low.u32 %v7774
        %v7776 = vextract.high.u32 %v7774
        %v7777 = vmul.u32 %v7770, %v7761
        %v7778 = vadd.s32 %v7773, %v7775
        %vm7779 = vc.u32 %v7773, %v7775
        %v7780 = vadd.s32 %v7776, 1
        %v7781 = vsel %vm7779, %v7780, %v7776
        %v7782 = vadd.s32 %v7777, %v7781
        %v7783 = vadd.s32 %v7782, 536870912
        %v7784 = vshrl.u32 %v7783, 30
        %v7785 = vshll.u32 %v7784, 30
        %v7786 = vsub.s32 %v7782, %v7785
        %vm7787 = vcmp.lt.s32.totalorder %v7786, 0
        %v7788 = vsub.s32 0, %v7786
        %v7789 = vsel %vm7787, %v7788, %v7786
        %v7790 = vclz %v7789
        %v7791 = vsub.s32 %v7790, 2
        %vm7792 = vcmp.gt.s32.totalorder 0, %v7791
        %v7793 = vsel %vm7792, 0, %v7791
        %v7794 = vsub.s32 32, %v7793
        %v7795 = vshll.u32 %v7786, %v7793
        %v7796 = vshrl.u32 %v7778, %v7794
        %v7797 = vor.u32 %v7795, %v7796
        %v7798 = vsub.s32 4294967266, %v7793
        %v7799 = vadd.s32 %v7798, 127
        %v7800 = vshll.u32 %v7799, 23
        %v7801 = vor.u32 4788187, %v7800
        %v7802 = vand.u32 2147483647, %v7801
        %v7804 = vcvt.s32.f32 %v7797
        %v7805 = vmul.f32 %v7804, %v7802
        %v7806 = vxor.u32 %v7805, 2147483648
        %v7807 = vsel %vm7724, %v7806, %v7805
        %v7808 = vsub.s32 4, %v7784
        %v7809 = vsel %vm7724, %v7808, %v7784
        %v7810 = vsel %vm7723, %v210, %v7807
        %v7811 = vsel %vm7723, 0, %v7809
        %v7812 = vcosq.f32.pop %v7810
        %v7813 = vsinq.f32.pop %v7810
        %vm7814 = vweird.f32 %v210
        %v7815 = vadd.s32 %v7811, 3
        %v7816 = vand.u32 %v7815, 3
        %vm7817 = vcmp.lt.s32.totalorder %v7816, 2
        %vm7818 = vcmp.eq.s32.totalorder %v7816, 0
        %v7819 = vxor.u32 %v7813, 2147483648
        %v7820 = vsel %vm7818, %v7812, %v7819
        %vm7821 = vcmp.eq.s32.totalorder %v7816, 2
        %v7822 = vxor.u32 %v7812, 2147483648
        %v7823 = vsel %vm7821, %v7822, %v7813
        %v7824 = vsel %vm7817, %v7820, %v7823
        %v7825 = vsel %vm7814, nan, %v7824
        %v7826 = vand.u32 2147483647, %v211
        %vm7827 = vcmp.le.f32.partialorder %v7826, 0.7853982
        %vm7828 = vcmp.lt.s32.totalorder %v211, 0
        %v7829 = vand.u32 %v211, 2139095040
        %v7830 = vshrl.u32 %v7829, 23
        %v7831 = vsub.s32 %v7830, 127
        %v7832 = vand.u32 2147483647, %v211
        %v7833 = vand.u32 %v7832, 8388607
        %v7834 = vor.u32 %v7833, 8388608
        %v7835 = vsub.s32 0, %v7834
        %v7836 = vadd.s32 %v7831, 1
        %vm7837 = vcmp.gt.s32.totalorder %v7836, 0
        %v7838 = vsel %vm7837, %v7836, 0
        %v7839 = vshrl.u32 %v7838, 5
        %v7840 = vand.u32 %v7838, 31
        %v7841 = vsub.s32 32, %v7840
        %v7842 = vshrl.u32 683565275, %v7841
        %v7843 = vshll.u32 683565275, %v7840
        %v7844 = vshrl.u32 2475754826, %v7841
        %v7845 = vor.u32 %v7843, %v7844
        %v7846 = vshll.u32 2475754826, %v7840
        %v7847 = vshrl.u32 2131351028, %v7841
        %v7848 = vor.u32 %v7846, %v7847
        %v7849 = vshll.u32 2131351028, %v7840
        %v7850 = vshrl.u32 2102212464, %v7841
        %v7851 = vor.u32 %v7849, %v7850
        %v7852 = vshll.u32 2102212464, %v7840
        %v7853 = vshrl.u32 920167782, %v7841
        %v7854 = vor.u32 %v7852, %v7853
        %v7855 = vshll.u32 920167782, %v7840
        %v7856 = vshrl.u32 1326507024, %v7841
        %v7857 = vor.u32 %v7855, %v7856
        %vm7858 = vcmp.lt.s32.totalorder %v7839, 1
        %vm7859 = vcmp.lt.s32.totalorder %v7839, 2
        %vm7860 = vcmp.lt.s32.totalorder %v7839, 3
        %vm7861 = vcmp.lt.s32.totalorder %v7839, 4
        %v7862 = vsel %vm7858, %v7842, %v7845
        %v7863 = vsel %vm7861, %v7851, 2102212464
        %v7864 = vsel %vm7860, %v7848, %v7863
        %v7865 = vsel %vm7859, %v7862, %v7864
        %v7866 = vsel %vm7858, %v7845, %v7848
        %v7867 = vsel %vm7861, %v7854, 920167782
        %v7868 = vsel %vm7860, %v7851, %v7867
        %v7869 = vsel %vm7859, %v7866, %v7868
        %v7870 = vsel %vm7858, %v7848, %v7851
        %v7871 = vsel %vm7861, %v7857, 1326507024
        %v7872 = vsel %vm7860, %v7854, %v7871
        %v7873 = vsel %vm7859, %v7870, %v7872
        %v7874 = vshll.u32 %v7834, 8
        %v7875 = vmul.u32.u64.compose %v7874, %v7873
        %v7876 = vextract.low.u32 %v7875
        %v7877 = vextract.high.u32 %v7875
        %v7878 = vmul.u32.u64.compose %v7874, %v7869
        %v7879 = vextract.low.u32 %v7878
        %v7880 = vextract.high.u32 %v7878
        %v7881 = vmul.u32 %v7874, %v7865
        %v7882 = vadd.s32 %v7877, %v7879
        %vm7883 = vc.u32 %v7877, %v7879
        %v7884 = vadd.s32 %v7880, 1
        %v7885 = vsel %vm7883, %v7884, %v7880
        %v7886 = vadd.s32 %v7881, %v7885
        %v7887 = vadd.s32 %v7886, 536870912
        %v7888 = vshrl.u32 %v7887, 30
        %v7889 = vshll.u32 %v7888, 30
        %v7890 = vsub.s32 %v7886, %v7889
        %vm7891 = vcmp.lt.s32.totalorder %v7890, 0
        %v7892 = vsub.s32 0, %v7890
        %v7893 = vsel %vm7891, %v7892, %v7890
        %v7894 = vclz %v7893
        %v7895 = vsub.s32 %v7894, 2
        %vm7896 = vcmp.gt.s32.totalorder 0, %v7895
        %v7897 = vsel %vm7896, 0, %v7895
        %v7898 = vsub.s32 32, %v7897
        %v7899 = vshll.u32 %v7890, %v7897
        %v7900 = vshrl.u32 %v7882, %v7898
        %v7901 = vor.u32 %v7899, %v7900
        %v7902 = vsub.s32 4294967266, %v7897
        %v7903 = vadd.s32 %v7902, 127
        %v7904 = vshll.u32 %v7903, 23
        %v7905 = vor.u32 4788187, %v7904
        %v7906 = vand.u32 2147483647, %v7905
        %v7908 = vcvt.s32.f32 %v7901
        %v7909 = vmul.f32 %v7908, %v7906
        %v7910 = vxor.u32 %v7909, 2147483648
        %v7911 = vsel %vm7828, %v7910, %v7909
        %v7912 = vsub.s32 4, %v7888
        %v7913 = vsel %vm7828, %v7912, %v7888
        %v7914 = vsel %vm7827, %v211, %v7911
        %v7915 = vsel %vm7827, 0, %v7913
        %v7916 = vcosq.f32.pop %v7914
        %v7917 = vsinq.f32.pop %v7914
        %vm7918 = vweird.f32 %v211
        %v7919 = vadd.s32 %v7915, 3
        %v7920 = vand.u32 %v7919, 3
        %vm7921 = vcmp.lt.s32.totalorder %v7920, 2
        %vm7922 = vcmp.eq.s32.totalorder %v7920, 0
        %v7923 = vxor.u32 %v7917, 2147483648
        %v7924 = vsel %vm7922, %v7916, %v7923
        %vm7925 = vcmp.eq.s32.totalorder %v7920, 2
        %v7926 = vxor.u32 %v7916, 2147483648
        %v7927 = vsel %vm7925, %v7926, %v7917
        %v7928 = vsel %vm7921, %v7924, %v7927
        %v7929 = vsel %vm7918, nan, %v7928
        %v7930 = vand.u32 2147483647, %v212
        %vm7931 = vcmp.le.f32.partialorder %v7930, 0.7853982
        %vm7932 = vcmp.lt.s32.totalorder %v212, 0
        %v7933 = vand.u32 %v212, 2139095040
        %v7934 = vshrl.u32 %v7933, 23
        %v7935 = vsub.s32 %v7934, 127
        %v7936 = vand.u32 2147483647, %v212
        %v7937 = vand.u32 %v7936, 8388607
        %v7938 = vor.u32 %v7937, 8388608
        %v7939 = vsub.s32 0, %v7938
        %v7940 = vadd.s32 %v7935, 1
        %vm7941 = vcmp.gt.s32.totalorder %v7940, 0
        %v7942 = vsel %vm7941, %v7940, 0
        %v7943 = vshrl.u32 %v7942, 5
        %v7944 = vand.u32 %v7942, 31
        %v7945 = vsub.s32 32, %v7944
        %v7946 = vshrl.u32 683565275, %v7945
        %v7947 = vshll.u32 683565275, %v7944
        %v7948 = vshrl.u32 2475754826, %v7945
        %v7949 = vor.u32 %v7947, %v7948
        %v7950 = vshll.u32 2475754826, %v7944
        %v7951 = vshrl.u32 2131351028, %v7945
        %v7952 = vor.u32 %v7950, %v7951
        %v7953 = vshll.u32 2131351028, %v7944
        %v7954 = vshrl.u32 2102212464, %v7945
        %v7955 = vor.u32 %v7953, %v7954
        %v7956 = vshll.u32 2102212464, %v7944
        %v7957 = vshrl.u32 920167782, %v7945
        %v7958 = vor.u32 %v7956, %v7957
        %v7959 = vshll.u32 920167782, %v7944
        %v7960 = vshrl.u32 1326507024, %v7945
        %v7961 = vor.u32 %v7959, %v7960
        %vm7962 = vcmp.lt.s32.totalorder %v7943, 1
        %vm7963 = vcmp.lt.s32.totalorder %v7943, 2
        %vm7964 = vcmp.lt.s32.totalorder %v7943, 3
        %vm7965 = vcmp.lt.s32.totalorder %v7943, 4
        %v7966 = vsel %vm7962, %v7946, %v7949
        %v7967 = vsel %vm7965, %v7955, 2102212464
        %v7968 = vsel %vm7964, %v7952, %v7967
        %v7969 = vsel %vm7963, %v7966, %v7968
        %v7970 = vsel %vm7962, %v7949, %v7952
        %v7971 = vsel %vm7965, %v7958, 920167782
        %v7972 = vsel %vm7964, %v7955, %v7971
        %v7973 = vsel %vm7963, %v7970, %v7972
        %v7974 = vsel %vm7962, %v7952, %v7955
        %v7975 = vsel %vm7965, %v7961, 1326507024
        %v7976 = vsel %vm7964, %v7958, %v7975
        %v7977 = vsel %vm7963, %v7974, %v7976
        %v7978 = vshll.u32 %v7938, 8
        %v7979 = vmul.u32.u64.compose %v7978, %v7977
        %v7980 = vextract.low.u32 %v7979
        %v7981 = vextract.high.u32 %v7979
        %v7982 = vmul.u32.u64.compose %v7978, %v7973
        %v7983 = vextract.low.u32 %v7982
        %v7984 = vextract.high.u32 %v7982
        %v7985 = vmul.u32 %v7978, %v7969
        %v7986 = vadd.s32 %v7981, %v7983
        %vm7987 = vc.u32 %v7981, %v7983
        %v7988 = vadd.s32 %v7984, 1
        %v7989 = vsel %vm7987, %v7988, %v7984
        %v7990 = vadd.s32 %v7985, %v7989
        %v7991 = vadd.s32 %v7990, 536870912
        %v7992 = vshrl.u32 %v7991, 30
        %v7993 = vshll.u32 %v7992, 30
        %v7994 = vsub.s32 %v7990, %v7993
        %vm7995 = vcmp.lt.s32.totalorder %v7994, 0
        %v7996 = vsub.s32 0, %v7994
        %v7997 = vsel %vm7995, %v7996, %v7994
        %v7998 = vclz %v7997
        %v7999 = vsub.s32 %v7998, 2
        %vm8000 = vcmp.gt.s32.totalorder 0, %v7999
        %v8001 = vsel %vm8000, 0, %v7999
        %v8002 = vsub.s32 32, %v8001
        %v8003 = vshll.u32 %v7994, %v8001
        %v8004 = vshrl.u32 %v7986, %v8002
        %v8005 = vor.u32 %v8003, %v8004
        %v8006 = vsub.s32 4294967266, %v8001
        %v8007 = vadd.s32 %v8006, 127
        %v8008 = vshll.u32 %v8007, 23
        %v8009 = vor.u32 4788187, %v8008
        %v8010 = vand.u32 2147483647, %v8009
        %v8012 = vcvt.s32.f32 %v8005
        %v8013 = vmul.f32 %v8012, %v8010
        %v8014 = vxor.u32 %v8013, 2147483648
        %v8015 = vsel %vm7932, %v8014, %v8013
        %v8016 = vsub.s32 4, %v7992
        %v8017 = vsel %vm7932, %v8016, %v7992
        %v8018 = vsel %vm7931, %v212, %v8015
        %v8019 = vsel %vm7931, 0, %v8017
        %v8020 = vcosq.f32.pop %v8018
        %v8021 = vsinq.f32.pop %v8018
        %vm8022 = vweird.f32 %v212
        %v8023 = vadd.s32 %v8019, 3
        %v8024 = vand.u32 %v8023, 3
        %vm8025 = vcmp.lt.s32.totalorder %v8024, 2
        %vm8026 = vcmp.eq.s32.totalorder %v8024, 0
        %v8027 = vxor.u32 %v8021, 2147483648
        %v8028 = vsel %vm8026, %v8020, %v8027
        %vm8029 = vcmp.eq.s32.totalorder %v8024, 2
        %v8030 = vxor.u32 %v8020, 2147483648
        %v8031 = vsel %vm8029, %v8030, %v8021
        %v8032 = vsel %vm8025, %v8028, %v8031
        %v8033 = vsel %vm8022, nan, %v8032
        %v8034 = vand.u32 2147483647, %v213
        %vm8035 = vcmp.le.f32.partialorder %v8034, 0.7853982
        %vm8036 = vcmp.lt.s32.totalorder %v213, 0
        %v8037 = vand.u32 %v213, 2139095040
        %v8038 = vshrl.u32 %v8037, 23
        %v8039 = vsub.s32 %v8038, 127
        %v8040 = vand.u32 2147483647, %v213
        %v8041 = vand.u32 %v8040, 8388607
        %v8042 = vor.u32 %v8041, 8388608
        %v8043 = vsub.s32 0, %v8042
        %v8044 = vadd.s32 %v8039, 1
        %vm8045 = vcmp.gt.s32.totalorder %v8044, 0
        %v8046 = vsel %vm8045, %v8044, 0
        %v8047 = vshrl.u32 %v8046, 5
        %v8048 = vand.u32 %v8046, 31
        %v8049 = vsub.s32 32, %v8048
        %v8050 = vshrl.u32 683565275, %v8049
        %v8051 = vshll.u32 683565275, %v8048
        %v8052 = vshrl.u32 2475754826, %v8049
        %v8053 = vor.u32 %v8051, %v8052
        %v8054 = vshll.u32 2475754826, %v8048
        %v8055 = vshrl.u32 2131351028, %v8049
        %v8056 = vor.u32 %v8054, %v8055
        %v8057 = vshll.u32 2131351028, %v8048
        %v8058 = vshrl.u32 2102212464, %v8049
        %v8059 = vor.u32 %v8057, %v8058
        %v8060 = vshll.u32 2102212464, %v8048
        %v8061 = vshrl.u32 920167782, %v8049
        %v8062 = vor.u32 %v8060, %v8061
        %v8063 = vshll.u32 920167782, %v8048
        %v8064 = vshrl.u32 1326507024, %v8049
        %v8065 = vor.u32 %v8063, %v8064
        %vm8066 = vcmp.lt.s32.totalorder %v8047, 1
        %vm8067 = vcmp.lt.s32.totalorder %v8047, 2
        %vm8068 = vcmp.lt.s32.totalorder %v8047, 3
        %vm8069 = vcmp.lt.s32.totalorder %v8047, 4
        %v8070 = vsel %vm8066, %v8050, %v8053
        %v8071 = vsel %vm8069, %v8059, 2102212464
        %v8072 = vsel %vm8068, %v8056, %v8071
        %v8073 = vsel %vm8067, %v8070, %v8072
        %v8074 = vsel %vm8066, %v8053, %v8056
        %v8075 = vsel %vm8069, %v8062, 920167782
        %v8076 = vsel %vm8068, %v8059, %v8075
        %v8077 = vsel %vm8067, %v8074, %v8076
        %v8078 = vsel %vm8066, %v8056, %v8059
        %v8079 = vsel %vm8069, %v8065, 1326507024
        %v8080 = vsel %vm8068, %v8062, %v8079
        %v8081 = vsel %vm8067, %v8078, %v8080
        %v8082 = vshll.u32 %v8042, 8
        %v8083 = vmul.u32.u64.compose %v8082, %v8081
        %v8084 = vextract.low.u32 %v8083
        %v8085 = vextract.high.u32 %v8083
        %v8086 = vmul.u32.u64.compose %v8082, %v8077
        %v8087 = vextract.low.u32 %v8086
        %v8088 = vextract.high.u32 %v8086
        %v8089 = vmul.u32 %v8082, %v8073
        %v8090 = vadd.s32 %v8085, %v8087
        %vm8091 = vc.u32 %v8085, %v8087
        %v8092 = vadd.s32 %v8088, 1
        %v8093 = vsel %vm8091, %v8092, %v8088
        %v8094 = vadd.s32 %v8089, %v8093
        %v8095 = vadd.s32 %v8094, 536870912
        %v8096 = vshrl.u32 %v8095, 30
        %v8097 = vshll.u32 %v8096, 30
        %v8098 = vsub.s32 %v8094, %v8097
        %vm8099 = vcmp.lt.s32.totalorder %v8098, 0
        %v8100 = vsub.s32 0, %v8098
        %v8101 = vsel %vm8099, %v8100, %v8098
        %v8102 = vclz %v8101
        %v8103 = vsub.s32 %v8102, 2
        %vm8104 = vcmp.gt.s32.totalorder 0, %v8103
        %v8105 = vsel %vm8104, 0, %v8103
        %v8106 = vsub.s32 32, %v8105
        %v8107 = vshll.u32 %v8098, %v8105
        %v8108 = vshrl.u32 %v8090, %v8106
        %v8109 = vor.u32 %v8107, %v8108
        %v8110 = vsub.s32 4294967266, %v8105
        %v8111 = vadd.s32 %v8110, 127
        %v8112 = vshll.u32 %v8111, 23
        %v8113 = vor.u32 4788187, %v8112
        %v8114 = vand.u32 2147483647, %v8113
        %v8116 = vcvt.s32.f32 %v8109
        %v8117 = vmul.f32 %v8116, %v8114
        %v8118 = vxor.u32 %v8117, 2147483648
        %v8119 = vsel %vm8036, %v8118, %v8117
        %v8120 = vsub.s32 4, %v8096
        %v8121 = vsel %vm8036, %v8120, %v8096
        %v8122 = vsel %vm8035, %v213, %v8119
        %v8123 = vsel %vm8035, 0, %v8121
        %v8124 = vcosq.f32.pop %v8122
        %v8125 = vsinq.f32.pop %v8122
        %vm8126 = vweird.f32 %v213
        %v8127 = vadd.s32 %v8123, 3
        %v8128 = vand.u32 %v8127, 3
        %vm8129 = vcmp.lt.s32.totalorder %v8128, 2
        %vm8130 = vcmp.eq.s32.totalorder %v8128, 0
        %v8131 = vxor.u32 %v8125, 2147483648
        %v8132 = vsel %vm8130, %v8124, %v8131
        %vm8133 = vcmp.eq.s32.totalorder %v8128, 2
        %v8134 = vxor.u32 %v8124, 2147483648
        %v8135 = vsel %vm8133, %v8134, %v8125
        %v8136 = vsel %vm8129, %v8132, %v8135
        %v8137 = vsel %vm8126, nan, %v8136
        %v8138 = vand.u32 2147483647, %v214
        %vm8139 = vcmp.le.f32.partialorder %v8138, 0.7853982
        %vm8140 = vcmp.lt.s32.totalorder %v214, 0
        %v8141 = vand.u32 %v214, 2139095040
        %v8142 = vshrl.u32 %v8141, 23
        %v8143 = vsub.s32 %v8142, 127
        %v8144 = vand.u32 2147483647, %v214
        %v8145 = vand.u32 %v8144, 8388607
        %v8146 = vor.u32 %v8145, 8388608
        %v8147 = vsub.s32 0, %v8146
        %v8148 = vadd.s32 %v8143, 1
        %vm8149 = vcmp.gt.s32.totalorder %v8148, 0
        %v8150 = vsel %vm8149, %v8148, 0
        %v8151 = vshrl.u32 %v8150, 5
        %v8152 = vand.u32 %v8150, 31
        %v8153 = vsub.s32 32, %v8152
        %v8154 = vshrl.u32 683565275, %v8153
        %v8155 = vshll.u32 683565275, %v8152
        %v8156 = vshrl.u32 2475754826, %v8153
        %v8157 = vor.u32 %v8155, %v8156
        %v8158 = vshll.u32 2475754826, %v8152
        %v8159 = vshrl.u32 2131351028, %v8153
        %v8160 = vor.u32 %v8158, %v8159
        %v8161 = vshll.u32 2131351028, %v8152
        %v8162 = vshrl.u32 2102212464, %v8153
        %v8163 = vor.u32 %v8161, %v8162
        %v8164 = vshll.u32 2102212464, %v8152
        %v8165 = vshrl.u32 920167782, %v8153
        %v8166 = vor.u32 %v8164, %v8165
        %v8167 = vshll.u32 920167782, %v8152
        %v8168 = vshrl.u32 1326507024, %v8153
        %v8169 = vor.u32 %v8167, %v8168
        %vm8170 = vcmp.lt.s32.totalorder %v8151, 1
        %vm8171 = vcmp.lt.s32.totalorder %v8151, 2
        %vm8172 = vcmp.lt.s32.totalorder %v8151, 3
        %vm8173 = vcmp.lt.s32.totalorder %v8151, 4
        %v8174 = vsel %vm8170, %v8154, %v8157
        %v8175 = vsel %vm8173, %v8163, 2102212464
        %v8176 = vsel %vm8172, %v8160, %v8175
        %v8177 = vsel %vm8171, %v8174, %v8176
        %v8178 = vsel %vm8170, %v8157, %v8160
        %v8179 = vsel %vm8173, %v8166, 920167782
        %v8180 = vsel %vm8172, %v8163, %v8179
        %v8181 = vsel %vm8171, %v8178, %v8180
        %v8182 = vsel %vm8170, %v8160, %v8163
        %v8183 = vsel %vm8173, %v8169, 1326507024
        %v8184 = vsel %vm8172, %v8166, %v8183
        %v8185 = vsel %vm8171, %v8182, %v8184
        %v8186 = vshll.u32 %v8146, 8
        %v8187 = vmul.u32.u64.compose %v8186, %v8185
        %v8188 = vextract.low.u32 %v8187
        %v8189 = vextract.high.u32 %v8187
        %v8190 = vmul.u32.u64.compose %v8186, %v8181
        %v8191 = vextract.low.u32 %v8190
        %v8192 = vextract.high.u32 %v8190
        %v8193 = vmul.u32 %v8186, %v8177
        %v8194 = vadd.s32 %v8189, %v8191
        %vm8195 = vc.u32 %v8189, %v8191
        %v8196 = vadd.s32 %v8192, 1
        %v8197 = vsel %vm8195, %v8196, %v8192
        %v8198 = vadd.s32 %v8193, %v8197
        %v8199 = vadd.s32 %v8198, 536870912
        %v8200 = vshrl.u32 %v8199, 30
        %v8201 = vshll.u32 %v8200, 30
        %v8202 = vsub.s32 %v8198, %v8201
        %vm8203 = vcmp.lt.s32.totalorder %v8202, 0
        %v8204 = vsub.s32 0, %v8202
        %v8205 = vsel %vm8203, %v8204, %v8202
        %v8206 = vclz %v8205
        %v8207 = vsub.s32 %v8206, 2
        %vm8208 = vcmp.gt.s32.totalorder 0, %v8207
        %v8209 = vsel %vm8208, 0, %v8207
        %v8210 = vsub.s32 32, %v8209
        %v8211 = vshll.u32 %v8202, %v8209
        %v8212 = vshrl.u32 %v8194, %v8210
        %v8213 = vor.u32 %v8211, %v8212
        %v8214 = vsub.s32 4294967266, %v8209
        %v8215 = vadd.s32 %v8214, 127
        %v8216 = vshll.u32 %v8215, 23
        %v8217 = vor.u32 4788187, %v8216
        %v8218 = vand.u32 2147483647, %v8217
        %v8220 = vcvt.s32.f32 %v8213
        %v8221 = vmul.f32 %v8220, %v8218
        %v8222 = vxor.u32 %v8221, 2147483648
        %v8223 = vsel %vm8140, %v8222, %v8221
        %v8224 = vsub.s32 4, %v8200
        %v8225 = vsel %vm8140, %v8224, %v8200
        %v8226 = vsel %vm8139, %v214, %v8223
        %v8227 = vsel %vm8139, 0, %v8225
        %v8228 = vcosq.f32.pop %v8226
        %v8229 = vsinq.f32.pop %v8226
        %vm8230 = vweird.f32 %v214
        %v8231 = vadd.s32 %v8227, 3
        %v8232 = vand.u32 %v8231, 3
        %vm8233 = vcmp.lt.s32.totalorder %v8232, 2
        %vm8234 = vcmp.eq.s32.totalorder %v8232, 0
        %v8235 = vxor.u32 %v8229, 2147483648
        %v8236 = vsel %vm8234, %v8228, %v8235
        %vm8237 = vcmp.eq.s32.totalorder %v8232, 2
        %v8238 = vxor.u32 %v8228, 2147483648
        %v8239 = vsel %vm8237, %v8238, %v8229
        %v8240 = vsel %vm8233, %v8236, %v8239
        %v8241 = vsel %vm8230, nan, %v8240
        %v8242 = vand.u32 2147483647, %v215
        %vm8243 = vcmp.le.f32.partialorder %v8242, 0.7853982
        %vm8244 = vcmp.lt.s32.totalorder %v215, 0
        %v8245 = vand.u32 %v215, 2139095040
        %v8246 = vshrl.u32 %v8245, 23
        %v8247 = vsub.s32 %v8246, 127
        %v8248 = vand.u32 2147483647, %v215
        %v8249 = vand.u32 %v8248, 8388607
        %v8250 = vor.u32 %v8249, 8388608
        %v8251 = vsub.s32 0, %v8250
        %v8252 = vadd.s32 %v8247, 1
        %vm8253 = vcmp.gt.s32.totalorder %v8252, 0
        %v8254 = vsel %vm8253, %v8252, 0
        %v8255 = vshrl.u32 %v8254, 5
        %v8256 = vand.u32 %v8254, 31
        %v8257 = vsub.s32 32, %v8256
        %v8258 = vshrl.u32 683565275, %v8257
        %v8259 = vshll.u32 683565275, %v8256
        %v8260 = vshrl.u32 2475754826, %v8257
        %v8261 = vor.u32 %v8259, %v8260
        %v8262 = vshll.u32 2475754826, %v8256
        %v8263 = vshrl.u32 2131351028, %v8257
        %v8264 = vor.u32 %v8262, %v8263
        %v8265 = vshll.u32 2131351028, %v8256
        %v8266 = vshrl.u32 2102212464, %v8257
        %v8267 = vor.u32 %v8265, %v8266
        %v8268 = vshll.u32 2102212464, %v8256
        %v8269 = vshrl.u32 920167782, %v8257
        %v8270 = vor.u32 %v8268, %v8269
        %v8271 = vshll.u32 920167782, %v8256
        %v8272 = vshrl.u32 1326507024, %v8257
        %v8273 = vor.u32 %v8271, %v8272
        %vm8274 = vcmp.lt.s32.totalorder %v8255, 1
        %vm8275 = vcmp.lt.s32.totalorder %v8255, 2
        %vm8276 = vcmp.lt.s32.totalorder %v8255, 3
        %vm8277 = vcmp.lt.s32.totalorder %v8255, 4
        %v8278 = vsel %vm8274, %v8258, %v8261
        %v8279 = vsel %vm8277, %v8267, 2102212464
        %v8280 = vsel %vm8276, %v8264, %v8279
        %v8281 = vsel %vm8275, %v8278, %v8280
        %v8282 = vsel %vm8274, %v8261, %v8264
        %v8283 = vsel %vm8277, %v8270, 920167782
        %v8284 = vsel %vm8276, %v8267, %v8283
        %v8285 = vsel %vm8275, %v8282, %v8284
        %v8286 = vsel %vm8274, %v8264, %v8267
        %v8287 = vsel %vm8277, %v8273, 1326507024
        %v8288 = vsel %vm8276, %v8270, %v8287
        %v8289 = vsel %vm8275, %v8286, %v8288
        %v8290 = vshll.u32 %v8250, 8
        %v8291 = vmul.u32.u64.compose %v8290, %v8289
        %v8292 = vextract.low.u32 %v8291
        %v8293 = vextract.high.u32 %v8291
        %v8294 = vmul.u32.u64.compose %v8290, %v8285
        %v8295 = vextract.low.u32 %v8294
        %v8296 = vextract.high.u32 %v8294
        %v8297 = vmul.u32 %v8290, %v8281
        %v8298 = vadd.s32 %v8293, %v8295
        %vm8299 = vc.u32 %v8293, %v8295
        %v8300 = vadd.s32 %v8296, 1
        %v8301 = vsel %vm8299, %v8300, %v8296
        %v8302 = vadd.s32 %v8297, %v8301
        %v8303 = vadd.s32 %v8302, 536870912
        %v8304 = vshrl.u32 %v8303, 30
        %v8305 = vshll.u32 %v8304, 30
        %v8306 = vsub.s32 %v8302, %v8305
        %vm8307 = vcmp.lt.s32.totalorder %v8306, 0
        %v8308 = vsub.s32 0, %v8306
        %v8309 = vsel %vm8307, %v8308, %v8306
        %v8310 = vclz %v8309
        %v8311 = vsub.s32 %v8310, 2
        %vm8312 = vcmp.gt.s32.totalorder 0, %v8311
        %v8313 = vsel %vm8312, 0, %v8311
        %v8314 = vsub.s32 32, %v8313
        %v8315 = vshll.u32 %v8306, %v8313
        %v8316 = vshrl.u32 %v8298, %v8314
        %v8317 = vor.u32 %v8315, %v8316
        %v8318 = vsub.s32 4294967266, %v8313
        %v8319 = vadd.s32 %v8318, 127
        %v8320 = vshll.u32 %v8319, 23
        %v8321 = vor.u32 4788187, %v8320
        %v8322 = vand.u32 2147483647, %v8321
        %v8324 = vcvt.s32.f32 %v8317
        %v8325 = vmul.f32 %v8324, %v8322
        %v8326 = vxor.u32 %v8325, 2147483648
        %v8327 = vsel %vm8244, %v8326, %v8325
        %v8328 = vsub.s32 4, %v8304
        %v8329 = vsel %vm8244, %v8328, %v8304
        %v8330 = vsel %vm8243, %v215, %v8327
        %v8331 = vsel %vm8243, 0, %v8329
        %v8332 = vcosq.f32.pop %v8330
        %v8333 = vsinq.f32.pop %v8330
        %vm8334 = vweird.f32 %v215
        %v8335 = vadd.s32 %v8331, 3
        %v8336 = vand.u32 %v8335, 3
        %vm8337 = vcmp.lt.s32.totalorder %v8336, 2
        %vm8338 = vcmp.eq.s32.totalorder %v8336, 0
        %v8339 = vxor.u32 %v8333, 2147483648
        %v8340 = vsel %vm8338, %v8332, %v8339
        %vm8341 = vcmp.eq.s32.totalorder %v8336, 2
        %v8342 = vxor.u32 %v8332, 2147483648
        %v8343 = vsel %vm8341, %v8342, %v8333
        %v8344 = vsel %vm8337, %v8340, %v8343
        %v8345 = vsel %vm8334, nan, %v8344
        %v8346 = vand.u32 2147483647, %v216
        %vm8347 = vcmp.le.f32.partialorder %v8346, 0.7853982
        %vm8348 = vcmp.lt.s32.totalorder %v216, 0
        %v8349 = vand.u32 %v216, 2139095040
        %v8350 = vshrl.u32 %v8349, 23
        %v8351 = vsub.s32 %v8350, 127
        %v8352 = vand.u32 2147483647, %v216
        %v8353 = vand.u32 %v8352, 8388607
        %v8354 = vor.u32 %v8353, 8388608
        %v8355 = vsub.s32 0, %v8354
        %v8356 = vadd.s32 %v8351, 1
        %vm8357 = vcmp.gt.s32.totalorder %v8356, 0
        %v8358 = vsel %vm8357, %v8356, 0
        %v8359 = vshrl.u32 %v8358, 5
        %v8360 = vand.u32 %v8358, 31
        %v8361 = vsub.s32 32, %v8360
        %v8362 = vshrl.u32 683565275, %v8361
        %v8363 = vshll.u32 683565275, %v8360
        %v8364 = vshrl.u32 2475754826, %v8361
        %v8365 = vor.u32 %v8363, %v8364
        %v8366 = vshll.u32 2475754826, %v8360
        %v8367 = vshrl.u32 2131351028, %v8361
        %v8368 = vor.u32 %v8366, %v8367
        %v8369 = vshll.u32 2131351028, %v8360
        %v8370 = vshrl.u32 2102212464, %v8361
        %v8371 = vor.u32 %v8369, %v8370
        %v8372 = vshll.u32 2102212464, %v8360
        %v8373 = vshrl.u32 920167782, %v8361
        %v8374 = vor.u32 %v8372, %v8373
        %v8375 = vshll.u32 920167782, %v8360
        %v8376 = vshrl.u32 1326507024, %v8361
        %v8377 = vor.u32 %v8375, %v8376
        %vm8378 = vcmp.lt.s32.totalorder %v8359, 1
        %vm8379 = vcmp.lt.s32.totalorder %v8359, 2
        %vm8380 = vcmp.lt.s32.totalorder %v8359, 3
        %vm8381 = vcmp.lt.s32.totalorder %v8359, 4
        %v8382 = vsel %vm8378, %v8362, %v8365
        %v8383 = vsel %vm8381, %v8371, 2102212464
        %v8384 = vsel %vm8380, %v8368, %v8383
        %v8385 = vsel %vm8379, %v8382, %v8384
        %v8386 = vsel %vm8378, %v8365, %v8368
        %v8387 = vsel %vm8381, %v8374, 920167782
        %v8388 = vsel %vm8380, %v8371, %v8387
        %v8389 = vsel %vm8379, %v8386, %v8388
        %v8390 = vsel %vm8378, %v8368, %v8371
        %v8391 = vsel %vm8381, %v8377, 1326507024
        %v8392 = vsel %vm8380, %v8374, %v8391
        %v8393 = vsel %vm8379, %v8390, %v8392
        %v8394 = vshll.u32 %v8354, 8
        %v8395 = vmul.u32.u64.compose %v8394, %v8393
        %v8396 = vextract.low.u32 %v8395
        %v8397 = vextract.high.u32 %v8395
        %v8398 = vmul.u32.u64.compose %v8394, %v8389
        %v8399 = vextract.low.u32 %v8398
        %v8400 = vextract.high.u32 %v8398
        %v8401 = vmul.u32 %v8394, %v8385
        %v8402 = vadd.s32 %v8397, %v8399
        %vm8403 = vc.u32 %v8397, %v8399
        %v8404 = vadd.s32 %v8400, 1
        %v8405 = vsel %vm8403, %v8404, %v8400
        %v8406 = vadd.s32 %v8401, %v8405
        %v8407 = vadd.s32 %v8406, 536870912
        %v8408 = vshrl.u32 %v8407, 30
        %v8409 = vshll.u32 %v8408, 30
        %v8410 = vsub.s32 %v8406, %v8409
        %vm8411 = vcmp.lt.s32.totalorder %v8410, 0
        %v8412 = vsub.s32 0, %v8410
        %v8413 = vsel %vm8411, %v8412, %v8410
        %v8414 = vclz %v8413
        %v8415 = vsub.s32 %v8414, 2
        %vm8416 = vcmp.gt.s32.totalorder 0, %v8415
        %v8417 = vsel %vm8416, 0, %v8415
        %v8418 = vsub.s32 32, %v8417
        %v8419 = vshll.u32 %v8410, %v8417
        %v8420 = vshrl.u32 %v8402, %v8418
        %v8421 = vor.u32 %v8419, %v8420
        %v8422 = vsub.s32 4294967266, %v8417
        %v8423 = vadd.s32 %v8422, 127
        %v8424 = vshll.u32 %v8423, 23
        %v8425 = vor.u32 4788187, %v8424
        %v8426 = vand.u32 2147483647, %v8425
        %v8428 = vcvt.s32.f32 %v8421
        %v8429 = vmul.f32 %v8428, %v8426
        %v8430 = vxor.u32 %v8429, 2147483648
        %v8431 = vsel %vm8348, %v8430, %v8429
        %v8432 = vsub.s32 4, %v8408
        %v8433 = vsel %vm8348, %v8432, %v8408
        %v8434 = vsel %vm8347, %v216, %v8431
        %v8435 = vsel %vm8347, 0, %v8433
        %v8436 = vcosq.f32.pop %v8434
        %v8437 = vsinq.f32.pop %v8434
        %vm8438 = vweird.f32 %v216
        %v8439 = vadd.s32 %v8435, 3
        %v8440 = vand.u32 %v8439, 3
        %vm8441 = vcmp.lt.s32.totalorder %v8440, 2
        %vm8442 = vcmp.eq.s32.totalorder %v8440, 0
        %v8443 = vxor.u32 %v8437, 2147483648
        %v8444 = vsel %vm8442, %v8436, %v8443
        %vm8445 = vcmp.eq.s32.totalorder %v8440, 2
        %v8446 = vxor.u32 %v8436, 2147483648
        %v8447 = vsel %vm8445, %v8446, %v8437
        %v8448 = vsel %vm8441, %v8444, %v8447
        %v8449 = vsel %vm8438, nan, %v8448
        %v8450 = vand.u32 2147483647, %v217
        %vm8451 = vcmp.le.f32.partialorder %v8450, 0.7853982
        %vm8452 = vcmp.lt.s32.totalorder %v217, 0
        %v8453 = vand.u32 %v217, 2139095040
        %v8454 = vshrl.u32 %v8453, 23
        %v8455 = vsub.s32 %v8454, 127
        %v8456 = vand.u32 2147483647, %v217
        %v8457 = vand.u32 %v8456, 8388607
        %v8458 = vor.u32 %v8457, 8388608
        %v8459 = vsub.s32 0, %v8458
        %v8460 = vadd.s32 %v8455, 1
        %vm8461 = vcmp.gt.s32.totalorder %v8460, 0
        %v8462 = vsel %vm8461, %v8460, 0
        %v8463 = vshrl.u32 %v8462, 5
        %v8464 = vand.u32 %v8462, 31
        %v8465 = vsub.s32 32, %v8464
        %v8466 = vshrl.u32 683565275, %v8465
        %v8467 = vshll.u32 683565275, %v8464
        %v8468 = vshrl.u32 2475754826, %v8465
        %v8469 = vor.u32 %v8467, %v8468
        %v8470 = vshll.u32 2475754826, %v8464
        %v8471 = vshrl.u32 2131351028, %v8465
        %v8472 = vor.u32 %v8470, %v8471
        %v8473 = vshll.u32 2131351028, %v8464
        %v8474 = vshrl.u32 2102212464, %v8465
        %v8475 = vor.u32 %v8473, %v8474
        %v8476 = vshll.u32 2102212464, %v8464
        %v8477 = vshrl.u32 920167782, %v8465
        %v8478 = vor.u32 %v8476, %v8477
        %v8479 = vshll.u32 920167782, %v8464
        %v8480 = vshrl.u32 1326507024, %v8465
        %v8481 = vor.u32 %v8479, %v8480
        %vm8482 = vcmp.lt.s32.totalorder %v8463, 1
        %vm8483 = vcmp.lt.s32.totalorder %v8463, 2
        %vm8484 = vcmp.lt.s32.totalorder %v8463, 3
        %vm8485 = vcmp.lt.s32.totalorder %v8463, 4
        %v8486 = vsel %vm8482, %v8466, %v8469
        %v8487 = vsel %vm8485, %v8475, 2102212464
        %v8488 = vsel %vm8484, %v8472, %v8487
        %v8489 = vsel %vm8483, %v8486, %v8488
        %v8490 = vsel %vm8482, %v8469, %v8472
        %v8491 = vsel %vm8485, %v8478, 920167782
        %v8492 = vsel %vm8484, %v8475, %v8491
        %v8493 = vsel %vm8483, %v8490, %v8492
        %v8494 = vsel %vm8482, %v8472, %v8475
        %v8495 = vsel %vm8485, %v8481, 1326507024
        %v8496 = vsel %vm8484, %v8478, %v8495
        %v8497 = vsel %vm8483, %v8494, %v8496
        %v8498 = vshll.u32 %v8458, 8
        %v8499 = vmul.u32.u64.compose %v8498, %v8497
        %v8500 = vextract.low.u32 %v8499
        %v8501 = vextract.high.u32 %v8499
        %v8502 = vmul.u32.u64.compose %v8498, %v8493
        %v8503 = vextract.low.u32 %v8502
        %v8504 = vextract.high.u32 %v8502
        %v8505 = vmul.u32 %v8498, %v8489
        %v8506 = vadd.s32 %v8501, %v8503
        %vm8507 = vc.u32 %v8501, %v8503
        %v8508 = vadd.s32 %v8504, 1
        %v8509 = vsel %vm8507, %v8508, %v8504
        %v8510 = vadd.s32 %v8505, %v8509
        %v8511 = vadd.s32 %v8510, 536870912
        %v8512 = vshrl.u32 %v8511, 30
        %v8513 = vshll.u32 %v8512, 30
        %v8514 = vsub.s32 %v8510, %v8513
        %vm8515 = vcmp.lt.s32.totalorder %v8514, 0
        %v8516 = vsub.s32 0, %v8514
        %v8517 = vsel %vm8515, %v8516, %v8514
        %v8518 = vclz %v8517
        %v8519 = vsub.s32 %v8518, 2
        %vm8520 = vcmp.gt.s32.totalorder 0, %v8519
        %v8521 = vsel %vm8520, 0, %v8519
        %v8522 = vsub.s32 32, %v8521
        %v8523 = vshll.u32 %v8514, %v8521
        %v8524 = vshrl.u32 %v8506, %v8522
        %v8525 = vor.u32 %v8523, %v8524
        %v8526 = vsub.s32 4294967266, %v8521
        %v8527 = vadd.s32 %v8526, 127
        %v8528 = vshll.u32 %v8527, 23
        %v8529 = vor.u32 4788187, %v8528
        %v8530 = vand.u32 2147483647, %v8529
        %v8532 = vcvt.s32.f32 %v8525
        %v8533 = vmul.f32 %v8532, %v8530
        %v8534 = vxor.u32 %v8533, 2147483648
        %v8535 = vsel %vm8452, %v8534, %v8533
        %v8536 = vsub.s32 4, %v8512
        %v8537 = vsel %vm8452, %v8536, %v8512
        %v8538 = vsel %vm8451, %v217, %v8535
        %v8539 = vsel %vm8451, 0, %v8537
        %v8540 = vcosq.f32.pop %v8538
        %v8541 = vsinq.f32.pop %v8538
        %vm8542 = vweird.f32 %v217
        %v8543 = vadd.s32 %v8539, 3
        %v8544 = vand.u32 %v8543, 3
        %vm8545 = vcmp.lt.s32.totalorder %v8544, 2
        %vm8546 = vcmp.eq.s32.totalorder %v8544, 0
        %v8547 = vxor.u32 %v8541, 2147483648
        %v8548 = vsel %vm8546, %v8540, %v8547
        %vm8549 = vcmp.eq.s32.totalorder %v8544, 2
        %v8550 = vxor.u32 %v8540, 2147483648
        %v8551 = vsel %vm8549, %v8550, %v8541
        %v8552 = vsel %vm8545, %v8548, %v8551
        %v8553 = vsel %vm8542, nan, %v8552
        %v8554 = vand.u32 2147483647, %v218
        %vm8555 = vcmp.le.f32.partialorder %v8554, 0.7853982
        %vm8556 = vcmp.lt.s32.totalorder %v218, 0
        %v8557 = vand.u32 %v218, 2139095040
        %v8558 = vshrl.u32 %v8557, 23
        %v8559 = vsub.s32 %v8558, 127
        %v8560 = vand.u32 2147483647, %v218
        %v8561 = vand.u32 %v8560, 8388607
        %v8562 = vor.u32 %v8561, 8388608
        %v8563 = vsub.s32 0, %v8562
        %v8564 = vadd.s32 %v8559, 1
        %vm8565 = vcmp.gt.s32.totalorder %v8564, 0
        %v8566 = vsel %vm8565, %v8564, 0
        %v8567 = vshrl.u32 %v8566, 5
        %v8568 = vand.u32 %v8566, 31
        %v8569 = vsub.s32 32, %v8568
        %v8570 = vshrl.u32 683565275, %v8569
        %v8571 = vshll.u32 683565275, %v8568
        %v8572 = vshrl.u32 2475754826, %v8569
        %v8573 = vor.u32 %v8571, %v8572
        %v8574 = vshll.u32 2475754826, %v8568
        %v8575 = vshrl.u32 2131351028, %v8569
        %v8576 = vor.u32 %v8574, %v8575
        %v8577 = vshll.u32 2131351028, %v8568
        %v8578 = vshrl.u32 2102212464, %v8569
        %v8579 = vor.u32 %v8577, %v8578
        %v8580 = vshll.u32 2102212464, %v8568
        %v8581 = vshrl.u32 920167782, %v8569
        %v8582 = vor.u32 %v8580, %v8581
        %v8583 = vshll.u32 920167782, %v8568
        %v8584 = vshrl.u32 1326507024, %v8569
        %v8585 = vor.u32 %v8583, %v8584
        %vm8586 = vcmp.lt.s32.totalorder %v8567, 1
        %vm8587 = vcmp.lt.s32.totalorder %v8567, 2
        %vm8588 = vcmp.lt.s32.totalorder %v8567, 3
        %vm8589 = vcmp.lt.s32.totalorder %v8567, 4
        %v8590 = vsel %vm8586, %v8570, %v8573
        %v8591 = vsel %vm8589, %v8579, 2102212464
        %v8592 = vsel %vm8588, %v8576, %v8591
        %v8593 = vsel %vm8587, %v8590, %v8592
        %v8594 = vsel %vm8586, %v8573, %v8576
        %v8595 = vsel %vm8589, %v8582, 920167782
        %v8596 = vsel %vm8588, %v8579, %v8595
        %v8597 = vsel %vm8587, %v8594, %v8596
        %v8598 = vsel %vm8586, %v8576, %v8579
        %v8599 = vsel %vm8589, %v8585, 1326507024
        %v8600 = vsel %vm8588, %v8582, %v8599
        %v8601 = vsel %vm8587, %v8598, %v8600
        %v8602 = vshll.u32 %v8562, 8
        %v8603 = vmul.u32.u64.compose %v8602, %v8601
        %v8604 = vextract.low.u32 %v8603
        %v8605 = vextract.high.u32 %v8603
        %v8606 = vmul.u32.u64.compose %v8602, %v8597
        %v8607 = vextract.low.u32 %v8606
        %v8608 = vextract.high.u32 %v8606
        %v8609 = vmul.u32 %v8602, %v8593
        %v8610 = vadd.s32 %v8605, %v8607
        %vm8611 = vc.u32 %v8605, %v8607
        %v8612 = vadd.s32 %v8608, 1
        %v8613 = vsel %vm8611, %v8612, %v8608
        %v8614 = vadd.s32 %v8609, %v8613
        %v8615 = vadd.s32 %v8614, 536870912
        %v8616 = vshrl.u32 %v8615, 30
        %v8617 = vshll.u32 %v8616, 30
        %v8618 = vsub.s32 %v8614, %v8617
        %vm8619 = vcmp.lt.s32.totalorder %v8618, 0
        %v8620 = vsub.s32 0, %v8618
        %v8621 = vsel %vm8619, %v8620, %v8618
        %v8622 = vclz %v8621
        %v8623 = vsub.s32 %v8622, 2
        %vm8624 = vcmp.gt.s32.totalorder 0, %v8623
        %v8625 = vsel %vm8624, 0, %v8623
        %v8626 = vsub.s32 32, %v8625
        %v8627 = vshll.u32 %v8618, %v8625
        %v8628 = vshrl.u32 %v8610, %v8626
        %v8629 = vor.u32 %v8627, %v8628
        %v8630 = vsub.s32 4294967266, %v8625
        %v8631 = vadd.s32 %v8630, 127
        %v8632 = vshll.u32 %v8631, 23
        %v8633 = vor.u32 4788187, %v8632
        %v8634 = vand.u32 2147483647, %v8633
        %v8636 = vcvt.s32.f32 %v8629
        %v8637 = vmul.f32 %v8636, %v8634
        %v8638 = vxor.u32 %v8637, 2147483648
        %v8639 = vsel %vm8556, %v8638, %v8637
        %v8640 = vsub.s32 4, %v8616
        %v8641 = vsel %vm8556, %v8640, %v8616
        %v8642 = vsel %vm8555, %v218, %v8639
        %v8643 = vsel %vm8555, 0, %v8641
        %v8644 = vcosq.f32.pop %v8642
        %v8645 = vsinq.f32.pop %v8642
        %vm8646 = vweird.f32 %v218
        %v8647 = vadd.s32 %v8643, 3
        %v8648 = vand.u32 %v8647, 3
        %vm8649 = vcmp.lt.s32.totalorder %v8648, 2
        %vm8650 = vcmp.eq.s32.totalorder %v8648, 0
        %v8651 = vxor.u32 %v8645, 2147483648
        %v8652 = vsel %vm8650, %v8644, %v8651
        %vm8653 = vcmp.eq.s32.totalorder %v8648, 2
        %v8654 = vxor.u32 %v8644, 2147483648
        %v8655 = vsel %vm8653, %v8654, %v8645
        %v8656 = vsel %vm8649, %v8652, %v8655
        %v8657 = vsel %vm8646, nan, %v8656
        %v8658 = vand.u32 2147483647, %v219
        %vm8659 = vcmp.le.f32.partialorder %v8658, 0.7853982
        %vm8660 = vcmp.lt.s32.totalorder %v219, 0
        %v8661 = vand.u32 %v219, 2139095040
        %v8662 = vshrl.u32 %v8661, 23
        %v8663 = vsub.s32 %v8662, 127
        %v8664 = vand.u32 2147483647, %v219
        %v8665 = vand.u32 %v8664, 8388607
        %v8666 = vor.u32 %v8665, 8388608
        %v8667 = vsub.s32 0, %v8666
        %v8668 = vadd.s32 %v8663, 1
        %vm8669 = vcmp.gt.s32.totalorder %v8668, 0
        %v8670 = vsel %vm8669, %v8668, 0
        %v8671 = vshrl.u32 %v8670, 5
        %v8672 = vand.u32 %v8670, 31
        %v8673 = vsub.s32 32, %v8672
        %v8674 = vshrl.u32 683565275, %v8673
        %v8675 = vshll.u32 683565275, %v8672
        %v8676 = vshrl.u32 2475754826, %v8673
        %v8677 = vor.u32 %v8675, %v8676
        %v8678 = vshll.u32 2475754826, %v8672
        %v8679 = vshrl.u32 2131351028, %v8673
        %v8680 = vor.u32 %v8678, %v8679
        %v8681 = vshll.u32 2131351028, %v8672
        %v8682 = vshrl.u32 2102212464, %v8673
        %v8683 = vor.u32 %v8681, %v8682
        %v8684 = vshll.u32 2102212464, %v8672
        %v8685 = vshrl.u32 920167782, %v8673
        %v8686 = vor.u32 %v8684, %v8685
        %v8687 = vshll.u32 920167782, %v8672
        %v8688 = vshrl.u32 1326507024, %v8673
        %v8689 = vor.u32 %v8687, %v8688
        %vm8690 = vcmp.lt.s32.totalorder %v8671, 1
        %vm8691 = vcmp.lt.s32.totalorder %v8671, 2
        %vm8692 = vcmp.lt.s32.totalorder %v8671, 3
        %vm8693 = vcmp.lt.s32.totalorder %v8671, 4
        %v8694 = vsel %vm8690, %v8674, %v8677
        %v8695 = vsel %vm8693, %v8683, 2102212464
        %v8696 = vsel %vm8692, %v8680, %v8695
        %v8697 = vsel %vm8691, %v8694, %v8696
        %v8698 = vsel %vm8690, %v8677, %v8680
        %v8699 = vsel %vm8693, %v8686, 920167782
        %v8700 = vsel %vm8692, %v8683, %v8699
        %v8701 = vsel %vm8691, %v8698, %v8700
        %v8702 = vsel %vm8690, %v8680, %v8683
        %v8703 = vsel %vm8693, %v8689, 1326507024
        %v8704 = vsel %vm8692, %v8686, %v8703
        %v8705 = vsel %vm8691, %v8702, %v8704
        %v8706 = vshll.u32 %v8666, 8
        %v8707 = vmul.u32.u64.compose %v8706, %v8705
        %v8708 = vextract.low.u32 %v8707
        %v8709 = vextract.high.u32 %v8707
        %v8710 = vmul.u32.u64.compose %v8706, %v8701
        %v8711 = vextract.low.u32 %v8710
        %v8712 = vextract.high.u32 %v8710
        %v8713 = vmul.u32 %v8706, %v8697
        %v8714 = vadd.s32 %v8709, %v8711
        %vm8715 = vc.u32 %v8709, %v8711
        %v8716 = vadd.s32 %v8712, 1
        %v8717 = vsel %vm8715, %v8716, %v8712
        %v8718 = vadd.s32 %v8713, %v8717
        %v8719 = vadd.s32 %v8718, 536870912
        %v8720 = vshrl.u32 %v8719, 30
        %v8721 = vshll.u32 %v8720, 30
        %v8722 = vsub.s32 %v8718, %v8721
        %vm8723 = vcmp.lt.s32.totalorder %v8722, 0
        %v8724 = vsub.s32 0, %v8722
        %v8725 = vsel %vm8723, %v8724, %v8722
        %v8726 = vclz %v8725
        %v8727 = vsub.s32 %v8726, 2
        %vm8728 = vcmp.gt.s32.totalorder 0, %v8727
        %v8729 = vsel %vm8728, 0, %v8727
        %v8730 = vsub.s32 32, %v8729
        %v8731 = vshll.u32 %v8722, %v8729
        %v8732 = vshrl.u32 %v8714, %v8730
        %v8733 = vor.u32 %v8731, %v8732
        %v8734 = vsub.s32 4294967266, %v8729
        %v8735 = vadd.s32 %v8734, 127
        %v8736 = vshll.u32 %v8735, 23
        %v8737 = vor.u32 4788187, %v8736
        %v8738 = vand.u32 2147483647, %v8737
        %v8740 = vcvt.s32.f32 %v8733
        %v8741 = vmul.f32 %v8740, %v8738
        %v8742 = vxor.u32 %v8741, 2147483648
        %v8743 = vsel %vm8660, %v8742, %v8741
        %v8744 = vsub.s32 4, %v8720
        %v8745 = vsel %vm8660, %v8744, %v8720
        %v8746 = vsel %vm8659, %v219, %v8743
        %v8747 = vsel %vm8659, 0, %v8745
        %v8748 = vcosq.f32.pop %v8746
        %v8749 = vsinq.f32.pop %v8746
        %vm8750 = vweird.f32 %v219
        %v8751 = vadd.s32 %v8747, 3
        %v8752 = vand.u32 %v8751, 3
        %vm8753 = vcmp.lt.s32.totalorder %v8752, 2
        %vm8754 = vcmp.eq.s32.totalorder %v8752, 0
        %v8755 = vxor.u32 %v8749, 2147483648
        %v8756 = vsel %vm8754, %v8748, %v8755
        %vm8757 = vcmp.eq.s32.totalorder %v8752, 2
        %v8758 = vxor.u32 %v8748, 2147483648
        %v8759 = vsel %vm8757, %v8758, %v8749
        %v8760 = vsel %vm8753, %v8756, %v8759
        %v8761 = vsel %vm8750, nan, %v8760
        %v8762 = vand.u32 2147483647, %v220
        %vm8763 = vcmp.le.f32.partialorder %v8762, 0.7853982
        %vm8764 = vcmp.lt.s32.totalorder %v220, 0
        %v8765 = vand.u32 %v220, 2139095040
        %v8766 = vshrl.u32 %v8765, 23
        %v8767 = vsub.s32 %v8766, 127
        %v8768 = vand.u32 2147483647, %v220
        %v8769 = vand.u32 %v8768, 8388607
        %v8770 = vor.u32 %v8769, 8388608
        %v8771 = vsub.s32 0, %v8770
        %v8772 = vadd.s32 %v8767, 1
        %vm8773 = vcmp.gt.s32.totalorder %v8772, 0
        %v8774 = vsel %vm8773, %v8772, 0
        %v8775 = vshrl.u32 %v8774, 5
        %v8776 = vand.u32 %v8774, 31
        %v8777 = vsub.s32 32, %v8776
        %v8778 = vshrl.u32 683565275, %v8777
        %v8779 = vshll.u32 683565275, %v8776
        %v8780 = vshrl.u32 2475754826, %v8777
        %v8781 = vor.u32 %v8779, %v8780
        %v8782 = vshll.u32 2475754826, %v8776
        %v8783 = vshrl.u32 2131351028, %v8777
        %v8784 = vor.u32 %v8782, %v8783
        %v8785 = vshll.u32 2131351028, %v8776
        %v8786 = vshrl.u32 2102212464, %v8777
        %v8787 = vor.u32 %v8785, %v8786
        %v8788 = vshll.u32 2102212464, %v8776
        %v8789 = vshrl.u32 920167782, %v8777
        %v8790 = vor.u32 %v8788, %v8789
        %v8791 = vshll.u32 920167782, %v8776
        %v8792 = vshrl.u32 1326507024, %v8777
        %v8793 = vor.u32 %v8791, %v8792
        %vm8794 = vcmp.lt.s32.totalorder %v8775, 1
        %vm8795 = vcmp.lt.s32.totalorder %v8775, 2
        %vm8796 = vcmp.lt.s32.totalorder %v8775, 3
        %vm8797 = vcmp.lt.s32.totalorder %v8775, 4
        %v8798 = vsel %vm8794, %v8778, %v8781
        %v8799 = vsel %vm8797, %v8787, 2102212464
        %v8800 = vsel %vm8796, %v8784, %v8799
        %v8801 = vsel %vm8795, %v8798, %v8800
        %v8802 = vsel %vm8794, %v8781, %v8784
        %v8803 = vsel %vm8797, %v8790, 920167782
        %v8804 = vsel %vm8796, %v8787, %v8803
        %v8805 = vsel %vm8795, %v8802, %v8804
        %v8806 = vsel %vm8794, %v8784, %v8787
        %v8807 = vsel %vm8797, %v8793, 1326507024
        %v8808 = vsel %vm8796, %v8790, %v8807
        %v8809 = vsel %vm8795, %v8806, %v8808
        %v8810 = vshll.u32 %v8770, 8
        %v8811 = vmul.u32.u64.compose %v8810, %v8809
        %v8812 = vextract.low.u32 %v8811
        %v8813 = vextract.high.u32 %v8811
        %v8814 = vmul.u32.u64.compose %v8810, %v8805
        %v8815 = vextract.low.u32 %v8814
        %v8816 = vextract.high.u32 %v8814
        %v8817 = vmul.u32 %v8810, %v8801
        %v8818 = vadd.s32 %v8813, %v8815
        %vm8819 = vc.u32 %v8813, %v8815
        %v8820 = vadd.s32 %v8816, 1
        %v8821 = vsel %vm8819, %v8820, %v8816
        %v8822 = vadd.s32 %v8817, %v8821
        %v8823 = vadd.s32 %v8822, 536870912
        %v8824 = vshrl.u32 %v8823, 30
        %v8825 = vshll.u32 %v8824, 30
        %v8826 = vsub.s32 %v8822, %v8825
        %vm8827 = vcmp.lt.s32.totalorder %v8826, 0
        %v8828 = vsub.s32 0, %v8826
        %v8829 = vsel %vm8827, %v8828, %v8826
        %v8830 = vclz %v8829
        %v8831 = vsub.s32 %v8830, 2
        %vm8832 = vcmp.gt.s32.totalorder 0, %v8831
        %v8833 = vsel %vm8832, 0, %v8831
        %v8834 = vsub.s32 32, %v8833
        %v8835 = vshll.u32 %v8826, %v8833
        %v8836 = vshrl.u32 %v8818, %v8834
        %v8837 = vor.u32 %v8835, %v8836
        %v8838 = vsub.s32 4294967266, %v8833
        %v8839 = vadd.s32 %v8838, 127
        %v8840 = vshll.u32 %v8839, 23
        %v8841 = vor.u32 4788187, %v8840
        %v8842 = vand.u32 2147483647, %v8841
        %v8844 = vcvt.s32.f32 %v8837
        %v8845 = vmul.f32 %v8844, %v8842
        %v8846 = vxor.u32 %v8845, 2147483648
        %v8847 = vsel %vm8764, %v8846, %v8845
        %v8848 = vsub.s32 4, %v8824
        %v8849 = vsel %vm8764, %v8848, %v8824
        %v8850 = vsel %vm8763, %v220, %v8847
        %v8851 = vsel %vm8763, 0, %v8849
        %v8852 = vcosq.f32.pop %v8850
        %v8853 = vsinq.f32.pop %v8850
        %vm8854 = vweird.f32 %v220
        %v8855 = vadd.s32 %v8851, 3
        %v8856 = vand.u32 %v8855, 3
        %vm8857 = vcmp.lt.s32.totalorder %v8856, 2
        %vm8858 = vcmp.eq.s32.totalorder %v8856, 0
        %v8859 = vxor.u32 %v8853, 2147483648
        %v8860 = vsel %vm8858, %v8852, %v8859
        %vm8861 = vcmp.eq.s32.totalorder %v8856, 2
        %v8862 = vxor.u32 %v8852, 2147483648
        %v8863 = vsel %vm8861, %v8862, %v8853
        %v8864 = vsel %vm8857, %v8860, %v8863
        %v8865 = vsel %vm8854, nan, %v8864
        %v8866 = vand.u32 2147483647, %v221
        %vm8867 = vcmp.le.f32.partialorder %v8866, 0.7853982
        %vm8868 = vcmp.lt.s32.totalorder %v221, 0
        %v8869 = vand.u32 %v221, 2139095040
        %v8870 = vshrl.u32 %v8869, 23
        %v8871 = vsub.s32 %v8870, 127
        %v8872 = vand.u32 2147483647, %v221
        %v8873 = vand.u32 %v8872, 8388607
        %v8874 = vor.u32 %v8873, 8388608
        %v8875 = vsub.s32 0, %v8874
        %v8876 = vadd.s32 %v8871, 1
        %vm8877 = vcmp.gt.s32.totalorder %v8876, 0
        %v8878 = vsel %vm8877, %v8876, 0
        %v8879 = vshrl.u32 %v8878, 5
        %v8880 = vand.u32 %v8878, 31
        %v8881 = vsub.s32 32, %v8880
        %v8882 = vshrl.u32 683565275, %v8881
        %v8883 = vshll.u32 683565275, %v8880
        %v8884 = vshrl.u32 2475754826, %v8881
        %v8885 = vor.u32 %v8883, %v8884
        %v8886 = vshll.u32 2475754826, %v8880
        %v8887 = vshrl.u32 2131351028, %v8881
        %v8888 = vor.u32 %v8886, %v8887
        %v8889 = vshll.u32 2131351028, %v8880
        %v8890 = vshrl.u32 2102212464, %v8881
        %v8891 = vor.u32 %v8889, %v8890
        %v8892 = vshll.u32 2102212464, %v8880
        %v8893 = vshrl.u32 920167782, %v8881
        %v8894 = vor.u32 %v8892, %v8893
        %v8895 = vshll.u32 920167782, %v8880
        %v8896 = vshrl.u32 1326507024, %v8881
        %v8897 = vor.u32 %v8895, %v8896
        %vm8898 = vcmp.lt.s32.totalorder %v8879, 1
        %vm8899 = vcmp.lt.s32.totalorder %v8879, 2
        %vm8900 = vcmp.lt.s32.totalorder %v8879, 3
        %vm8901 = vcmp.lt.s32.totalorder %v8879, 4
        %v8902 = vsel %vm8898, %v8882, %v8885
        %v8903 = vsel %vm8901, %v8891, 2102212464
        %v8904 = vsel %vm8900, %v8888, %v8903
        %v8905 = vsel %vm8899, %v8902, %v8904
        %v8906 = vsel %vm8898, %v8885, %v8888
        %v8907 = vsel %vm8901, %v8894, 920167782
        %v8908 = vsel %vm8900, %v8891, %v8907
        %v8909 = vsel %vm8899, %v8906, %v8908
        %v8910 = vsel %vm8898, %v8888, %v8891
        %v8911 = vsel %vm8901, %v8897, 1326507024
        %v8912 = vsel %vm8900, %v8894, %v8911
        %v8913 = vsel %vm8899, %v8910, %v8912
        %v8914 = vshll.u32 %v8874, 8
        %v8915 = vmul.u32.u64.compose %v8914, %v8913
        %v8916 = vextract.low.u32 %v8915
        %v8917 = vextract.high.u32 %v8915
        %v8918 = vmul.u32.u64.compose %v8914, %v8909
        %v8919 = vextract.low.u32 %v8918
        %v8920 = vextract.high.u32 %v8918
        %v8921 = vmul.u32 %v8914, %v8905
        %v8922 = vadd.s32 %v8917, %v8919
        %vm8923 = vc.u32 %v8917, %v8919
        %v8924 = vadd.s32 %v8920, 1
        %v8925 = vsel %vm8923, %v8924, %v8920
        %v8926 = vadd.s32 %v8921, %v8925
        %v8927 = vadd.s32 %v8926, 536870912
        %v8928 = vshrl.u32 %v8927, 30
        %v8929 = vshll.u32 %v8928, 30
        %v8930 = vsub.s32 %v8926, %v8929
        %vm8931 = vcmp.lt.s32.totalorder %v8930, 0
        %v8932 = vsub.s32 0, %v8930
        %v8933 = vsel %vm8931, %v8932, %v8930
        %v8934 = vclz %v8933
        %v8935 = vsub.s32 %v8934, 2
        %vm8936 = vcmp.gt.s32.totalorder 0, %v8935
        %v8937 = vsel %vm8936, 0, %v8935
        %v8938 = vsub.s32 32, %v8937
        %v8939 = vshll.u32 %v8930, %v8937
        %v8940 = vshrl.u32 %v8922, %v8938
        %v8941 = vor.u32 %v8939, %v8940
        %v8942 = vsub.s32 4294967266, %v8937
        %v8943 = vadd.s32 %v8942, 127
        %v8944 = vshll.u32 %v8943, 23
        %v8945 = vor.u32 4788187, %v8944
        %v8946 = vand.u32 2147483647, %v8945
        %v8948 = vcvt.s32.f32 %v8941
        %v8949 = vmul.f32 %v8948, %v8946
        %v8950 = vxor.u32 %v8949, 2147483648
        %v8951 = vsel %vm8868, %v8950, %v8949
        %v8952 = vsub.s32 4, %v8928
        %v8953 = vsel %vm8868, %v8952, %v8928
        %v8954 = vsel %vm8867, %v221, %v8951
        %v8955 = vsel %vm8867, 0, %v8953
        %v8956 = vcosq.f32.pop %v8954
        %v8957 = vsinq.f32.pop %v8954
        %vm8958 = vweird.f32 %v221
        %v8959 = vadd.s32 %v8955, 3
        %v8960 = vand.u32 %v8959, 3
        %vm8961 = vcmp.lt.s32.totalorder %v8960, 2
        %vm8962 = vcmp.eq.s32.totalorder %v8960, 0
        %v8963 = vxor.u32 %v8957, 2147483648
        %v8964 = vsel %vm8962, %v8956, %v8963
        %vm8965 = vcmp.eq.s32.totalorder %v8960, 2
        %v8966 = vxor.u32 %v8956, 2147483648
        %v8967 = vsel %vm8965, %v8966, %v8957
        %v8968 = vsel %vm8961, %v8964, %v8967
        %v8969 = vsel %vm8958, nan, %v8968
        %v8970 = vand.u32 2147483647, %v222
        %vm8971 = vcmp.le.f32.partialorder %v8970, 0.7853982
        %vm8972 = vcmp.lt.s32.totalorder %v222, 0
        %v8973 = vand.u32 %v222, 2139095040
        %v8974 = vshrl.u32 %v8973, 23
        %v8975 = vsub.s32 %v8974, 127
        %v8976 = vand.u32 2147483647, %v222
        %v8977 = vand.u32 %v8976, 8388607
        %v8978 = vor.u32 %v8977, 8388608
        %v8979 = vsub.s32 0, %v8978
        %v8980 = vadd.s32 %v8975, 1
        %vm8981 = vcmp.gt.s32.totalorder %v8980, 0
        %v8982 = vsel %vm8981, %v8980, 0
        %v8983 = vshrl.u32 %v8982, 5
        %v8984 = vand.u32 %v8982, 31
        %v8985 = vsub.s32 32, %v8984
        %v8986 = vshrl.u32 683565275, %v8985
        %v8987 = vshll.u32 683565275, %v8984
        %v8988 = vshrl.u32 2475754826, %v8985
        %v8989 = vor.u32 %v8987, %v8988
        %v8990 = vshll.u32 2475754826, %v8984
        %v8991 = vshrl.u32 2131351028, %v8985
        %v8992 = vor.u32 %v8990, %v8991
        %v8993 = vshll.u32 2131351028, %v8984
        %v8994 = vshrl.u32 2102212464, %v8985
        %v8995 = vor.u32 %v8993, %v8994
        %v8996 = vshll.u32 2102212464, %v8984
        %v8997 = vshrl.u32 920167782, %v8985
        %v8998 = vor.u32 %v8996, %v8997
        %v8999 = vshll.u32 920167782, %v8984
        %v9000 = vshrl.u32 1326507024, %v8985
        %v9001 = vor.u32 %v8999, %v9000
        %vm9002 = vcmp.lt.s32.totalorder %v8983, 1
        %vm9003 = vcmp.lt.s32.totalorder %v8983, 2
        %vm9004 = vcmp.lt.s32.totalorder %v8983, 3
        %vm9005 = vcmp.lt.s32.totalorder %v8983, 4
        %v9006 = vsel %vm9002, %v8986, %v8989
        %v9007 = vsel %vm9005, %v8995, 2102212464
        %v9008 = vsel %vm9004, %v8992, %v9007
        %v9009 = vsel %vm9003, %v9006, %v9008
        %v9010 = vsel %vm9002, %v8989, %v8992
        %v9011 = vsel %vm9005, %v8998, 920167782
        %v9012 = vsel %vm9004, %v8995, %v9011
        %v9013 = vsel %vm9003, %v9010, %v9012
        %v9014 = vsel %vm9002, %v8992, %v8995
        %v9015 = vsel %vm9005, %v9001, 1326507024
        %v9016 = vsel %vm9004, %v8998, %v9015
        %v9017 = vsel %vm9003, %v9014, %v9016
        %v9018 = vshll.u32 %v8978, 8
        %v9019 = vmul.u32.u64.compose %v9018, %v9017
        %v9020 = vextract.low.u32 %v9019
        %v9021 = vextract.high.u32 %v9019
        %v9022 = vmul.u32.u64.compose %v9018, %v9013
        %v9023 = vextract.low.u32 %v9022
        %v9024 = vextract.high.u32 %v9022
        %v9025 = vmul.u32 %v9018, %v9009
        %v9026 = vadd.s32 %v9021, %v9023
        %vm9027 = vc.u32 %v9021, %v9023
        %v9028 = vadd.s32 %v9024, 1
        %v9029 = vsel %vm9027, %v9028, %v9024
        %v9030 = vadd.s32 %v9025, %v9029
        %v9031 = vadd.s32 %v9030, 536870912
        %v9032 = vshrl.u32 %v9031, 30
        %v9033 = vshll.u32 %v9032, 30
        %v9034 = vsub.s32 %v9030, %v9033
        %vm9035 = vcmp.lt.s32.totalorder %v9034, 0
        %v9036 = vsub.s32 0, %v9034
        %v9037 = vsel %vm9035, %v9036, %v9034
        %v9038 = vclz %v9037
        %v9039 = vsub.s32 %v9038, 2
        %vm9040 = vcmp.gt.s32.totalorder 0, %v9039
        %v9041 = vsel %vm9040, 0, %v9039
        %v9042 = vsub.s32 32, %v9041
        %v9043 = vshll.u32 %v9034, %v9041
        %v9044 = vshrl.u32 %v9026, %v9042
        %v9045 = vor.u32 %v9043, %v9044
        %v9046 = vsub.s32 4294967266, %v9041
        %v9047 = vadd.s32 %v9046, 127
        %v9048 = vshll.u32 %v9047, 23
        %v9049 = vor.u32 4788187, %v9048
        %v9050 = vand.u32 2147483647, %v9049
        %v9052 = vcvt.s32.f32 %v9045
        %v9053 = vmul.f32 %v9052, %v9050
        %v9054 = vxor.u32 %v9053, 2147483648
        %v9055 = vsel %vm8972, %v9054, %v9053
        %v9056 = vsub.s32 4, %v9032
        %v9057 = vsel %vm8972, %v9056, %v9032
        %v9058 = vsel %vm8971, %v222, %v9055
        %v9059 = vsel %vm8971, 0, %v9057
        %v9060 = vcosq.f32.pop %v9058
        %v9061 = vsinq.f32.pop %v9058
        %vm9062 = vweird.f32 %v222
        %v9063 = vadd.s32 %v9059, 3
        %v9064 = vand.u32 %v9063, 3
        %vm9065 = vcmp.lt.s32.totalorder %v9064, 2
        %vm9066 = vcmp.eq.s32.totalorder %v9064, 0
        %v9067 = vxor.u32 %v9061, 2147483648
        %v9068 = vsel %vm9066, %v9060, %v9067
        %vm9069 = vcmp.eq.s32.totalorder %v9064, 2
        %v9070 = vxor.u32 %v9060, 2147483648
        %v9071 = vsel %vm9069, %v9070, %v9061
        %v9072 = vsel %vm9065, %v9068, %v9071
        %v9073 = vsel %vm9062, nan, %v9072
        %v9074 = vand.u32 2147483647, %v223
        %vm9075 = vcmp.le.f32.partialorder %v9074, 0.7853982
        %vm9076 = vcmp.lt.s32.totalorder %v223, 0
        %v9077 = vand.u32 %v223, 2139095040
        %v9078 = vshrl.u32 %v9077, 23
        %v9079 = vsub.s32 %v9078, 127
        %v9080 = vand.u32 2147483647, %v223
        %v9081 = vand.u32 %v9080, 8388607
        %v9082 = vor.u32 %v9081, 8388608
        %v9083 = vsub.s32 0, %v9082
        %v9084 = vadd.s32 %v9079, 1
        %vm9085 = vcmp.gt.s32.totalorder %v9084, 0
        %v9086 = vsel %vm9085, %v9084, 0
        %v9087 = vshrl.u32 %v9086, 5
        %v9088 = vand.u32 %v9086, 31
        %v9089 = vsub.s32 32, %v9088
        %v9090 = vshrl.u32 683565275, %v9089
        %v9091 = vshll.u32 683565275, %v9088
        %v9092 = vshrl.u32 2475754826, %v9089
        %v9093 = vor.u32 %v9091, %v9092
        %v9094 = vshll.u32 2475754826, %v9088
        %v9095 = vshrl.u32 2131351028, %v9089
        %v9096 = vor.u32 %v9094, %v9095
        %v9097 = vshll.u32 2131351028, %v9088
        %v9098 = vshrl.u32 2102212464, %v9089
        %v9099 = vor.u32 %v9097, %v9098
        %v9100 = vshll.u32 2102212464, %v9088
        %v9101 = vshrl.u32 920167782, %v9089
        %v9102 = vor.u32 %v9100, %v9101
        %v9103 = vshll.u32 920167782, %v9088
        %v9104 = vshrl.u32 1326507024, %v9089
        %v9105 = vor.u32 %v9103, %v9104
        %vm9106 = vcmp.lt.s32.totalorder %v9087, 1
        %vm9107 = vcmp.lt.s32.totalorder %v9087, 2
        %vm9108 = vcmp.lt.s32.totalorder %v9087, 3
        %vm9109 = vcmp.lt.s32.totalorder %v9087, 4
        %v9110 = vsel %vm9106, %v9090, %v9093
        %v9111 = vsel %vm9109, %v9099, 2102212464
        %v9112 = vsel %vm9108, %v9096, %v9111
        %v9113 = vsel %vm9107, %v9110, %v9112
        %v9114 = vsel %vm9106, %v9093, %v9096
        %v9115 = vsel %vm9109, %v9102, 920167782
        %v9116 = vsel %vm9108, %v9099, %v9115
        %v9117 = vsel %vm9107, %v9114, %v9116
        %v9118 = vsel %vm9106, %v9096, %v9099
        %v9119 = vsel %vm9109, %v9105, 1326507024
        %v9120 = vsel %vm9108, %v9102, %v9119
        %v9121 = vsel %vm9107, %v9118, %v9120
        %v9122 = vshll.u32 %v9082, 8
        %v9123 = vmul.u32.u64.compose %v9122, %v9121
        %v9124 = vextract.low.u32 %v9123
        %v9125 = vextract.high.u32 %v9123
        %v9126 = vmul.u32.u64.compose %v9122, %v9117
        %v9127 = vextract.low.u32 %v9126
        %v9128 = vextract.high.u32 %v9126
        %v9129 = vmul.u32 %v9122, %v9113
        %v9130 = vadd.s32 %v9125, %v9127
        %vm9131 = vc.u32 %v9125, %v9127
        %v9132 = vadd.s32 %v9128, 1
        %v9133 = vsel %vm9131, %v9132, %v9128
        %v9134 = vadd.s32 %v9129, %v9133
        %v9135 = vadd.s32 %v9134, 536870912
        %v9136 = vshrl.u32 %v9135, 30
        %v9137 = vshll.u32 %v9136, 30
        %v9138 = vsub.s32 %v9134, %v9137
        %vm9139 = vcmp.lt.s32.totalorder %v9138, 0
        %v9140 = vsub.s32 0, %v9138
        %v9141 = vsel %vm9139, %v9140, %v9138
        %v9142 = vclz %v9141
        %v9143 = vsub.s32 %v9142, 2
        %vm9144 = vcmp.gt.s32.totalorder 0, %v9143
        %v9145 = vsel %vm9144, 0, %v9143
        %v9146 = vsub.s32 32, %v9145
        %v9147 = vshll.u32 %v9138, %v9145
        %v9148 = vshrl.u32 %v9130, %v9146
        %v9149 = vor.u32 %v9147, %v9148
        %v9150 = vsub.s32 4294967266, %v9145
        %v9151 = vadd.s32 %v9150, 127
        %v9152 = vshll.u32 %v9151, 23
        %v9153 = vor.u32 4788187, %v9152
        %v9154 = vand.u32 2147483647, %v9153
        %v9156 = vcvt.s32.f32 %v9149
        %v9157 = vmul.f32 %v9156, %v9154
        %v9158 = vxor.u32 %v9157, 2147483648
        %v9159 = vsel %vm9076, %v9158, %v9157
        %v9160 = vsub.s32 4, %v9136
        %v9161 = vsel %vm9076, %v9160, %v9136
        %v9162 = vsel %vm9075, %v223, %v9159
        %v9163 = vsel %vm9075, 0, %v9161
        %v9164 = vcosq.f32.pop %v9162
        %v9165 = vsinq.f32.pop %v9162
        %vm9166 = vweird.f32 %v223
        %v9167 = vadd.s32 %v9163, 3
        %v9168 = vand.u32 %v9167, 3
        %vm9169 = vcmp.lt.s32.totalorder %v9168, 2
        %vm9170 = vcmp.eq.s32.totalorder %v9168, 0
        %v9171 = vxor.u32 %v9165, 2147483648
        %v9172 = vsel %vm9170, %v9164, %v9171
        %vm9173 = vcmp.eq.s32.totalorder %v9168, 2
        %v9174 = vxor.u32 %v9164, 2147483648
        %v9175 = vsel %vm9173, %v9174, %v9165
        %v9176 = vsel %vm9169, %v9172, %v9175
        %v9177 = vsel %vm9166, nan, %v9176
        %v9178 = vand.u32 2147483647, %v224
        %vm9179 = vcmp.le.f32.partialorder %v9178, 0.7853982
        %vm9180 = vcmp.lt.s32.totalorder %v224, 0
        %v9181 = vand.u32 %v224, 2139095040
        %v9182 = vshrl.u32 %v9181, 23
        %v9183 = vsub.s32 %v9182, 127
        %v9184 = vand.u32 2147483647, %v224
        %v9185 = vand.u32 %v9184, 8388607
        %v9186 = vor.u32 %v9185, 8388608
        %v9187 = vsub.s32 0, %v9186
        %v9188 = vadd.s32 %v9183, 1
        %vm9189 = vcmp.gt.s32.totalorder %v9188, 0
        %v9190 = vsel %vm9189, %v9188, 0
        %v9191 = vshrl.u32 %v9190, 5
        %v9192 = vand.u32 %v9190, 31
        %v9193 = vsub.s32 32, %v9192
        %v9194 = vshrl.u32 683565275, %v9193
        %v9195 = vshll.u32 683565275, %v9192
        %v9196 = vshrl.u32 2475754826, %v9193
        %v9197 = vor.u32 %v9195, %v9196
        %v9198 = vshll.u32 2475754826, %v9192
        %v9199 = vshrl.u32 2131351028, %v9193
        %v9200 = vor.u32 %v9198, %v9199
        %v9201 = vshll.u32 2131351028, %v9192
        %v9202 = vshrl.u32 2102212464, %v9193
        %v9203 = vor.u32 %v9201, %v9202
        %v9204 = vshll.u32 2102212464, %v9192
        %v9205 = vshrl.u32 920167782, %v9193
        %v9206 = vor.u32 %v9204, %v9205
        %v9207 = vshll.u32 920167782, %v9192
        %v9208 = vshrl.u32 1326507024, %v9193
        %v9209 = vor.u32 %v9207, %v9208
        %vm9210 = vcmp.lt.s32.totalorder %v9191, 1
        %vm9211 = vcmp.lt.s32.totalorder %v9191, 2
        %vm9212 = vcmp.lt.s32.totalorder %v9191, 3
        %vm9213 = vcmp.lt.s32.totalorder %v9191, 4
        %v9214 = vsel %vm9210, %v9194, %v9197
        %v9215 = vsel %vm9213, %v9203, 2102212464
        %v9216 = vsel %vm9212, %v9200, %v9215
        %v9217 = vsel %vm9211, %v9214, %v9216
        %v9218 = vsel %vm9210, %v9197, %v9200
        %v9219 = vsel %vm9213, %v9206, 920167782
        %v9220 = vsel %vm9212, %v9203, %v9219
        %v9221 = vsel %vm9211, %v9218, %v9220
        %v9222 = vsel %vm9210, %v9200, %v9203
        %v9223 = vsel %vm9213, %v9209, 1326507024
        %v9224 = vsel %vm9212, %v9206, %v9223
        %v9225 = vsel %vm9211, %v9222, %v9224
        %v9226 = vshll.u32 %v9186, 8
        %v9227 = vmul.u32.u64.compose %v9226, %v9225
        %v9228 = vextract.low.u32 %v9227
        %v9229 = vextract.high.u32 %v9227
        %v9230 = vmul.u32.u64.compose %v9226, %v9221
        %v9231 = vextract.low.u32 %v9230
        %v9232 = vextract.high.u32 %v9230
        %v9233 = vmul.u32 %v9226, %v9217
        %v9234 = vadd.s32 %v9229, %v9231
        %vm9235 = vc.u32 %v9229, %v9231
        %v9236 = vadd.s32 %v9232, 1
        %v9237 = vsel %vm9235, %v9236, %v9232
        %v9238 = vadd.s32 %v9233, %v9237
        %v9239 = vadd.s32 %v9238, 536870912
        %v9240 = vshrl.u32 %v9239, 30
        %v9241 = vshll.u32 %v9240, 30
        %v9242 = vsub.s32 %v9238, %v9241
        %vm9243 = vcmp.lt.s32.totalorder %v9242, 0
        %v9244 = vsub.s32 0, %v9242
        %v9245 = vsel %vm9243, %v9244, %v9242
        %v9246 = vclz %v9245
        %v9247 = vsub.s32 %v9246, 2
        %vm9248 = vcmp.gt.s32.totalorder 0, %v9247
        %v9249 = vsel %vm9248, 0, %v9247
        %v9250 = vsub.s32 32, %v9249
        %v9251 = vshll.u32 %v9242, %v9249
        %v9252 = vshrl.u32 %v9234, %v9250
        %v9253 = vor.u32 %v9251, %v9252
        %v9254 = vsub.s32 4294967266, %v9249
        %v9255 = vadd.s32 %v9254, 127
        %v9256 = vshll.u32 %v9255, 23
        %v9257 = vor.u32 4788187, %v9256
        %v9258 = vand.u32 2147483647, %v9257
        %v9260 = vcvt.s32.f32 %v9253
        %v9261 = vmul.f32 %v9260, %v9258
        %v9262 = vxor.u32 %v9261, 2147483648
        %v9263 = vsel %vm9180, %v9262, %v9261
        %v9264 = vsub.s32 4, %v9240
        %v9265 = vsel %vm9180, %v9264, %v9240
        %v9266 = vsel %vm9179, %v224, %v9263
        %v9267 = vsel %vm9179, 0, %v9265
        %v9268 = vcosq.f32.pop %v9266
        %v9269 = vsinq.f32.pop %v9266
        %vm9270 = vweird.f32 %v224
        %v9271 = vadd.s32 %v9267, 3
        %v9272 = vand.u32 %v9271, 3
        %vm9273 = vcmp.lt.s32.totalorder %v9272, 2
        %vm9274 = vcmp.eq.s32.totalorder %v9272, 0
        %v9275 = vxor.u32 %v9269, 2147483648
        %v9276 = vsel %vm9274, %v9268, %v9275
        %vm9277 = vcmp.eq.s32.totalorder %v9272, 2
        %v9278 = vxor.u32 %v9268, 2147483648
        %v9279 = vsel %vm9277, %v9278, %v9269
        %v9280 = vsel %vm9273, %v9276, %v9279
        %v9281 = vsel %vm9270, nan, %v9280
        %v9282 = vand.u32 2147483647, %v225
        %vm9283 = vcmp.le.f32.partialorder %v9282, 0.7853982
        %vm9284 = vcmp.lt.s32.totalorder %v225, 0
        %v9285 = vand.u32 %v225, 2139095040
        %v9286 = vshrl.u32 %v9285, 23
        %v9287 = vsub.s32 %v9286, 127
        %v9288 = vand.u32 2147483647, %v225
        %v9289 = vand.u32 %v9288, 8388607
        %v9290 = vor.u32 %v9289, 8388608
        %v9291 = vsub.s32 0, %v9290
        %v9292 = vadd.s32 %v9287, 1
        %vm9293 = vcmp.gt.s32.totalorder %v9292, 0
        %v9294 = vsel %vm9293, %v9292, 0
        %v9295 = vshrl.u32 %v9294, 5
        %v9296 = vand.u32 %v9294, 31
        %v9297 = vsub.s32 32, %v9296
        %v9298 = vshrl.u32 683565275, %v9297
        %v9299 = vshll.u32 683565275, %v9296
        %v9300 = vshrl.u32 2475754826, %v9297
        %v9301 = vor.u32 %v9299, %v9300
        %v9302 = vshll.u32 2475754826, %v9296
        %v9303 = vshrl.u32 2131351028, %v9297
        %v9304 = vor.u32 %v9302, %v9303
        %v9305 = vshll.u32 2131351028, %v9296
        %v9306 = vshrl.u32 2102212464, %v9297
        %v9307 = vor.u32 %v9305, %v9306
        %v9308 = vshll.u32 2102212464, %v9296
        %v9309 = vshrl.u32 920167782, %v9297
        %v9310 = vor.u32 %v9308, %v9309
        %v9311 = vshll.u32 920167782, %v9296
        %v9312 = vshrl.u32 1326507024, %v9297
        %v9313 = vor.u32 %v9311, %v9312
        %vm9314 = vcmp.lt.s32.totalorder %v9295, 1
        %vm9315 = vcmp.lt.s32.totalorder %v9295, 2
        %vm9316 = vcmp.lt.s32.totalorder %v9295, 3
        %vm9317 = vcmp.lt.s32.totalorder %v9295, 4
        %v9318 = vsel %vm9314, %v9298, %v9301
        %v9319 = vsel %vm9317, %v9307, 2102212464
        %v9320 = vsel %vm9316, %v9304, %v9319
        %v9321 = vsel %vm9315, %v9318, %v9320
        %v9322 = vsel %vm9314, %v9301, %v9304
        %v9323 = vsel %vm9317, %v9310, 920167782
        %v9324 = vsel %vm9316, %v9307, %v9323
        %v9325 = vsel %vm9315, %v9322, %v9324
        %v9326 = vsel %vm9314, %v9304, %v9307
        %v9327 = vsel %vm9317, %v9313, 1326507024
        %v9328 = vsel %vm9316, %v9310, %v9327
        %v9329 = vsel %vm9315, %v9326, %v9328
        %v9330 = vshll.u32 %v9290, 8
        %v9331 = vmul.u32.u64.compose %v9330, %v9329
        %v9332 = vextract.low.u32 %v9331
        %v9333 = vextract.high.u32 %v9331
        %v9334 = vmul.u32.u64.compose %v9330, %v9325
        %v9335 = vextract.low.u32 %v9334
        %v9336 = vextract.high.u32 %v9334
        %v9337 = vmul.u32 %v9330, %v9321
        %v9338 = vadd.s32 %v9333, %v9335
        %vm9339 = vc.u32 %v9333, %v9335
        %v9340 = vadd.s32 %v9336, 1
        %v9341 = vsel %vm9339, %v9340, %v9336
        %v9342 = vadd.s32 %v9337, %v9341
        %v9343 = vadd.s32 %v9342, 536870912
        %v9344 = vshrl.u32 %v9343, 30
        %v9345 = vshll.u32 %v9344, 30
        %v9346 = vsub.s32 %v9342, %v9345
        %vm9347 = vcmp.lt.s32.totalorder %v9346, 0
        %v9348 = vsub.s32 0, %v9346
        %v9349 = vsel %vm9347, %v9348, %v9346
        %v9350 = vclz %v9349
        %v9351 = vsub.s32 %v9350, 2
        %vm9352 = vcmp.gt.s32.totalorder 0, %v9351
        %v9353 = vsel %vm9352, 0, %v9351
        %v9354 = vsub.s32 32, %v9353
        %v9355 = vshll.u32 %v9346, %v9353
        %v9356 = vshrl.u32 %v9338, %v9354
        %v9357 = vor.u32 %v9355, %v9356
        %v9358 = vsub.s32 4294967266, %v9353
        %v9359 = vadd.s32 %v9358, 127
        %v9360 = vshll.u32 %v9359, 23
        %v9361 = vor.u32 4788187, %v9360
        %v9362 = vand.u32 2147483647, %v9361
        %v9364 = vcvt.s32.f32 %v9357
        %v9365 = vmul.f32 %v9364, %v9362
        %v9366 = vxor.u32 %v9365, 2147483648
        %v9367 = vsel %vm9284, %v9366, %v9365
        %v9368 = vsub.s32 4, %v9344
        %v9369 = vsel %vm9284, %v9368, %v9344
        %v9370 = vsel %vm9283, %v225, %v9367
        %v9371 = vsel %vm9283, 0, %v9369
        %v9372 = vcosq.f32.pop %v9370
        %v9373 = vsinq.f32.pop %v9370
        %vm9374 = vweird.f32 %v225
        %v9375 = vadd.s32 %v9371, 3
        %v9376 = vand.u32 %v9375, 3
        %vm9377 = vcmp.lt.s32.totalorder %v9376, 2
        %vm9378 = vcmp.eq.s32.totalorder %v9376, 0
        %v9379 = vxor.u32 %v9373, 2147483648
        %v9380 = vsel %vm9378, %v9372, %v9379
        %vm9381 = vcmp.eq.s32.totalorder %v9376, 2
        %v9382 = vxor.u32 %v9372, 2147483648
        %v9383 = vsel %vm9381, %v9382, %v9373
        %v9384 = vsel %vm9377, %v9380, %v9383
        %v9385 = vsel %vm9374, nan, %v9384
        %v9386 = vand.u32 2147483647, %v226
        %vm9387 = vcmp.le.f32.partialorder %v9386, 0.7853982
        %vm9388 = vcmp.lt.s32.totalorder %v226, 0
        %v9389 = vand.u32 %v226, 2139095040
        %v9390 = vshrl.u32 %v9389, 23
        %v9391 = vsub.s32 %v9390, 127
        %v9392 = vand.u32 2147483647, %v226
        %v9393 = vand.u32 %v9392, 8388607
        %v9394 = vor.u32 %v9393, 8388608
        %v9395 = vsub.s32 0, %v9394
        %v9396 = vadd.s32 %v9391, 1
        %vm9397 = vcmp.gt.s32.totalorder %v9396, 0
        %v9398 = vsel %vm9397, %v9396, 0
        %v9399 = vshrl.u32 %v9398, 5
        %v9400 = vand.u32 %v9398, 31
        %v9401 = vsub.s32 32, %v9400
        %v9402 = vshrl.u32 683565275, %v9401
        %v9403 = vshll.u32 683565275, %v9400
        %v9404 = vshrl.u32 2475754826, %v9401
        %v9405 = vor.u32 %v9403, %v9404
        %v9406 = vshll.u32 2475754826, %v9400
        %v9407 = vshrl.u32 2131351028, %v9401
        %v9408 = vor.u32 %v9406, %v9407
        %v9409 = vshll.u32 2131351028, %v9400
        %v9410 = vshrl.u32 2102212464, %v9401
        %v9411 = vor.u32 %v9409, %v9410
        %v9412 = vshll.u32 2102212464, %v9400
        %v9413 = vshrl.u32 920167782, %v9401
        %v9414 = vor.u32 %v9412, %v9413
        %v9415 = vshll.u32 920167782, %v9400
        %v9416 = vshrl.u32 1326507024, %v9401
        %v9417 = vor.u32 %v9415, %v9416
        %vm9418 = vcmp.lt.s32.totalorder %v9399, 1
        %vm9419 = vcmp.lt.s32.totalorder %v9399, 2
        %vm9420 = vcmp.lt.s32.totalorder %v9399, 3
        %vm9421 = vcmp.lt.s32.totalorder %v9399, 4
        %v9422 = vsel %vm9418, %v9402, %v9405
        %v9423 = vsel %vm9421, %v9411, 2102212464
        %v9424 = vsel %vm9420, %v9408, %v9423
        %v9425 = vsel %vm9419, %v9422, %v9424
        %v9426 = vsel %vm9418, %v9405, %v9408
        %v9427 = vsel %vm9421, %v9414, 920167782
        %v9428 = vsel %vm9420, %v9411, %v9427
        %v9429 = vsel %vm9419, %v9426, %v9428
        %v9430 = vsel %vm9418, %v9408, %v9411
        %v9431 = vsel %vm9421, %v9417, 1326507024
        %v9432 = vsel %vm9420, %v9414, %v9431
        %v9433 = vsel %vm9419, %v9430, %v9432
        %v9434 = vshll.u32 %v9394, 8
        %v9435 = vmul.u32.u64.compose %v9434, %v9433
        %v9436 = vextract.low.u32 %v9435
        %v9437 = vextract.high.u32 %v9435
        %v9438 = vmul.u32.u64.compose %v9434, %v9429
        %v9439 = vextract.low.u32 %v9438
        %v9440 = vextract.high.u32 %v9438
        %v9441 = vmul.u32 %v9434, %v9425
        %v9442 = vadd.s32 %v9437, %v9439
        %vm9443 = vc.u32 %v9437, %v9439
        %v9444 = vadd.s32 %v9440, 1
        %v9445 = vsel %vm9443, %v9444, %v9440
        %v9446 = vadd.s32 %v9441, %v9445
        %v9447 = vadd.s32 %v9446, 536870912
        %v9448 = vshrl.u32 %v9447, 30
        %v9449 = vshll.u32 %v9448, 30
        %v9450 = vsub.s32 %v9446, %v9449
        %vm9451 = vcmp.lt.s32.totalorder %v9450, 0
        %v9452 = vsub.s32 0, %v9450
        %v9453 = vsel %vm9451, %v9452, %v9450
        %v9454 = vclz %v9453
        %v9455 = vsub.s32 %v9454, 2
        %vm9456 = vcmp.gt.s32.totalorder 0, %v9455
        %v9457 = vsel %vm9456, 0, %v9455
        %v9458 = vsub.s32 32, %v9457
        %v9459 = vshll.u32 %v9450, %v9457
        %v9460 = vshrl.u32 %v9442, %v9458
        %v9461 = vor.u32 %v9459, %v9460
        %v9462 = vsub.s32 4294967266, %v9457
        %v9463 = vadd.s32 %v9462, 127
        %v9464 = vshll.u32 %v9463, 23
        %v9465 = vor.u32 4788187, %v9464
        %v9466 = vand.u32 2147483647, %v9465
        %v9468 = vcvt.s32.f32 %v9461
        %v9469 = vmul.f32 %v9468, %v9466
        %v9470 = vxor.u32 %v9469, 2147483648
        %v9471 = vsel %vm9388, %v9470, %v9469
        %v9472 = vsub.s32 4, %v9448
        %v9473 = vsel %vm9388, %v9472, %v9448
        %v9474 = vsel %vm9387, %v226, %v9471
        %v9475 = vsel %vm9387, 0, %v9473
        %v9476 = vcosq.f32.pop %v9474
        %v9477 = vsinq.f32.pop %v9474
        %vm9478 = vweird.f32 %v226
        %v9479 = vadd.s32 %v9475, 3
        %v9480 = vand.u32 %v9479, 3
        %vm9481 = vcmp.lt.s32.totalorder %v9480, 2
        %vm9482 = vcmp.eq.s32.totalorder %v9480, 0
        %v9483 = vxor.u32 %v9477, 2147483648
        %v9484 = vsel %vm9482, %v9476, %v9483
        %vm9485 = vcmp.eq.s32.totalorder %v9480, 2
        %v9486 = vxor.u32 %v9476, 2147483648
        %v9487 = vsel %vm9485, %v9486, %v9477
        %v9488 = vsel %vm9481, %v9484, %v9487
        %v9489 = vsel %vm9478, nan, %v9488
        %v9490 = vand.u32 2147483647, %v227
        %vm9491 = vcmp.le.f32.partialorder %v9490, 0.7853982
        %vm9492 = vcmp.lt.s32.totalorder %v227, 0
        %v9493 = vand.u32 %v227, 2139095040
        %v9494 = vshrl.u32 %v9493, 23
        %v9495 = vsub.s32 %v9494, 127
        %v9496 = vand.u32 2147483647, %v227
        %v9497 = vand.u32 %v9496, 8388607
        %v9498 = vor.u32 %v9497, 8388608
        %v9499 = vsub.s32 0, %v9498
        %v9500 = vadd.s32 %v9495, 1
        %vm9501 = vcmp.gt.s32.totalorder %v9500, 0
        %v9502 = vsel %vm9501, %v9500, 0
        %v9503 = vshrl.u32 %v9502, 5
        %v9504 = vand.u32 %v9502, 31
        %v9505 = vsub.s32 32, %v9504
        %v9506 = vshrl.u32 683565275, %v9505
        %v9507 = vshll.u32 683565275, %v9504
        %v9508 = vshrl.u32 2475754826, %v9505
        %v9509 = vor.u32 %v9507, %v9508
        %v9510 = vshll.u32 2475754826, %v9504
        %v9511 = vshrl.u32 2131351028, %v9505
        %v9512 = vor.u32 %v9510, %v9511
        %v9513 = vshll.u32 2131351028, %v9504
        %v9514 = vshrl.u32 2102212464, %v9505
        %v9515 = vor.u32 %v9513, %v9514
        %v9516 = vshll.u32 2102212464, %v9504
        %v9517 = vshrl.u32 920167782, %v9505
        %v9518 = vor.u32 %v9516, %v9517
        %v9519 = vshll.u32 920167782, %v9504
        %v9520 = vshrl.u32 1326507024, %v9505
        %v9521 = vor.u32 %v9519, %v9520
        %vm9522 = vcmp.lt.s32.totalorder %v9503, 1
        %vm9523 = vcmp.lt.s32.totalorder %v9503, 2
        %vm9524 = vcmp.lt.s32.totalorder %v9503, 3
        %vm9525 = vcmp.lt.s32.totalorder %v9503, 4
        %v9526 = vsel %vm9522, %v9506, %v9509
        %v9527 = vsel %vm9525, %v9515, 2102212464
        %v9528 = vsel %vm9524, %v9512, %v9527
        %v9529 = vsel %vm9523, %v9526, %v9528
        %v9530 = vsel %vm9522, %v9509, %v9512
        %v9531 = vsel %vm9525, %v9518, 920167782
        %v9532 = vsel %vm9524, %v9515, %v9531
        %v9533 = vsel %vm9523, %v9530, %v9532
        %v9534 = vsel %vm9522, %v9512, %v9515
        %v9535 = vsel %vm9525, %v9521, 1326507024
        %v9536 = vsel %vm9524, %v9518, %v9535
        %v9537 = vsel %vm9523, %v9534, %v9536
        %v9538 = vshll.u32 %v9498, 8
        %v9539 = vmul.u32.u64.compose %v9538, %v9537
        %v9540 = vextract.low.u32 %v9539
        %v9541 = vextract.high.u32 %v9539
        %v9542 = vmul.u32.u64.compose %v9538, %v9533
        %v9543 = vextract.low.u32 %v9542
        %v9544 = vextract.high.u32 %v9542
        %v9545 = vmul.u32 %v9538, %v9529
        %v9546 = vadd.s32 %v9541, %v9543
        %vm9547 = vc.u32 %v9541, %v9543
        %v9548 = vadd.s32 %v9544, 1
        %v9549 = vsel %vm9547, %v9548, %v9544
        %v9550 = vadd.s32 %v9545, %v9549
        %v9551 = vadd.s32 %v9550, 536870912
        %v9552 = vshrl.u32 %v9551, 30
        %v9553 = vshll.u32 %v9552, 30
        %v9554 = vsub.s32 %v9550, %v9553
        %vm9555 = vcmp.lt.s32.totalorder %v9554, 0
        %v9556 = vsub.s32 0, %v9554
        %v9557 = vsel %vm9555, %v9556, %v9554
        %v9558 = vclz %v9557
        %v9559 = vsub.s32 %v9558, 2
        %vm9560 = vcmp.gt.s32.totalorder 0, %v9559
        %v9561 = vsel %vm9560, 0, %v9559
        %v9562 = vsub.s32 32, %v9561
        %v9563 = vshll.u32 %v9554, %v9561
        %v9564 = vshrl.u32 %v9546, %v9562
        %v9565 = vor.u32 %v9563, %v9564
        %v9566 = vsub.s32 4294967266, %v9561
        %v9567 = vadd.s32 %v9566, 127
        %v9568 = vshll.u32 %v9567, 23
        %v9569 = vor.u32 4788187, %v9568
        %v9570 = vand.u32 2147483647, %v9569
        %v9572 = vcvt.s32.f32 %v9565
        %v9573 = vmul.f32 %v9572, %v9570
        %v9574 = vxor.u32 %v9573, 2147483648
        %v9575 = vsel %vm9492, %v9574, %v9573
        %v9576 = vsub.s32 4, %v9552
        %v9577 = vsel %vm9492, %v9576, %v9552
        %v9578 = vsel %vm9491, %v227, %v9575
        %v9579 = vsel %vm9491, 0, %v9577
        %v9580 = vcosq.f32.pop %v9578
        %v9581 = vsinq.f32.pop %v9578
        %vm9582 = vweird.f32 %v227
        %v9583 = vadd.s32 %v9579, 3
        %v9584 = vand.u32 %v9583, 3
        %vm9585 = vcmp.lt.s32.totalorder %v9584, 2
        %vm9586 = vcmp.eq.s32.totalorder %v9584, 0
        %v9587 = vxor.u32 %v9581, 2147483648
        %v9588 = vsel %vm9586, %v9580, %v9587
        %vm9589 = vcmp.eq.s32.totalorder %v9584, 2
        %v9590 = vxor.u32 %v9580, 2147483648
        %v9591 = vsel %vm9589, %v9590, %v9581
        %v9592 = vsel %vm9585, %v9588, %v9591
        %v9593 = vsel %vm9582, nan, %v9592
        %v9594 = vand.u32 2147483647, %v228
        %vm9595 = vcmp.le.f32.partialorder %v9594, 0.7853982
        %vm9596 = vcmp.lt.s32.totalorder %v228, 0
        %v9597 = vand.u32 %v228, 2139095040
        %v9598 = vshrl.u32 %v9597, 23
        %v9599 = vsub.s32 %v9598, 127
        %v9600 = vand.u32 2147483647, %v228
        %v9601 = vand.u32 %v9600, 8388607
        %v9602 = vor.u32 %v9601, 8388608
        %v9603 = vsub.s32 0, %v9602
        %v9604 = vadd.s32 %v9599, 1
        %vm9605 = vcmp.gt.s32.totalorder %v9604, 0
        %v9606 = vsel %vm9605, %v9604, 0
        %v9607 = vshrl.u32 %v9606, 5
        %v9608 = vand.u32 %v9606, 31
        %v9609 = vsub.s32 32, %v9608
        %v9610 = vshrl.u32 683565275, %v9609
        %v9611 = vshll.u32 683565275, %v9608
        %v9612 = vshrl.u32 2475754826, %v9609
        %v9613 = vor.u32 %v9611, %v9612
        %v9614 = vshll.u32 2475754826, %v9608
        %v9615 = vshrl.u32 2131351028, %v9609
        %v9616 = vor.u32 %v9614, %v9615
        %v9617 = vshll.u32 2131351028, %v9608
        %v9618 = vshrl.u32 2102212464, %v9609
        %v9619 = vor.u32 %v9617, %v9618
        %v9620 = vshll.u32 2102212464, %v9608
        %v9621 = vshrl.u32 920167782, %v9609
        %v9622 = vor.u32 %v9620, %v9621
        %v9623 = vshll.u32 920167782, %v9608
        %v9624 = vshrl.u32 1326507024, %v9609
        %v9625 = vor.u32 %v9623, %v9624
        %vm9626 = vcmp.lt.s32.totalorder %v9607, 1
        %vm9627 = vcmp.lt.s32.totalorder %v9607, 2
        %vm9628 = vcmp.lt.s32.totalorder %v9607, 3
        %vm9629 = vcmp.lt.s32.totalorder %v9607, 4
        %v9630 = vsel %vm9626, %v9610, %v9613
        %v9631 = vsel %vm9629, %v9619, 2102212464
        %v9632 = vsel %vm9628, %v9616, %v9631
        %v9633 = vsel %vm9627, %v9630, %v9632
        %v9634 = vsel %vm9626, %v9613, %v9616
        %v9635 = vsel %vm9629, %v9622, 920167782
        %v9636 = vsel %vm9628, %v9619, %v9635
        %v9637 = vsel %vm9627, %v9634, %v9636
        %v9638 = vsel %vm9626, %v9616, %v9619
        %v9639 = vsel %vm9629, %v9625, 1326507024
        %v9640 = vsel %vm9628, %v9622, %v9639
        %v9641 = vsel %vm9627, %v9638, %v9640
        %v9642 = vshll.u32 %v9602, 8
        %v9643 = vmul.u32.u64.compose %v9642, %v9641
        %v9644 = vextract.low.u32 %v9643
        %v9645 = vextract.high.u32 %v9643
        %v9646 = vmul.u32.u64.compose %v9642, %v9637
        %v9647 = vextract.low.u32 %v9646
        %v9648 = vextract.high.u32 %v9646
        %v9649 = vmul.u32 %v9642, %v9633
        %v9650 = vadd.s32 %v9645, %v9647
        %vm9651 = vc.u32 %v9645, %v9647
        %v9652 = vadd.s32 %v9648, 1
        %v9653 = vsel %vm9651, %v9652, %v9648
        %v9654 = vadd.s32 %v9649, %v9653
        %v9655 = vadd.s32 %v9654, 536870912
        %v9656 = vshrl.u32 %v9655, 30
        %v9657 = vshll.u32 %v9656, 30
        %v9658 = vsub.s32 %v9654, %v9657
        %vm9659 = vcmp.lt.s32.totalorder %v9658, 0
        %v9660 = vsub.s32 0, %v9658
        %v9661 = vsel %vm9659, %v9660, %v9658
        %v9662 = vclz %v9661
        %v9663 = vsub.s32 %v9662, 2
        %vm9664 = vcmp.gt.s32.totalorder 0, %v9663
        %v9665 = vsel %vm9664, 0, %v9663
        %v9666 = vsub.s32 32, %v9665
        %v9667 = vshll.u32 %v9658, %v9665
        %v9668 = vshrl.u32 %v9650, %v9666
        %v9669 = vor.u32 %v9667, %v9668
        %v9670 = vsub.s32 4294967266, %v9665
        %v9671 = vadd.s32 %v9670, 127
        %v9672 = vshll.u32 %v9671, 23
        %v9673 = vor.u32 4788187, %v9672
        %v9674 = vand.u32 2147483647, %v9673
        %v9676 = vcvt.s32.f32 %v9669
        %v9677 = vmul.f32 %v9676, %v9674
        %v9678 = vxor.u32 %v9677, 2147483648
        %v9679 = vsel %vm9596, %v9678, %v9677
        %v9680 = vsub.s32 4, %v9656
        %v9681 = vsel %vm9596, %v9680, %v9656
        %v9682 = vsel %vm9595, %v228, %v9679
        %v9683 = vsel %vm9595, 0, %v9681
        %v9684 = vcosq.f32.pop %v9682
        %v9685 = vsinq.f32.pop %v9682
        %vm9686 = vweird.f32 %v228
        %v9687 = vadd.s32 %v9683, 3
        %v9688 = vand.u32 %v9687, 3
        %vm9689 = vcmp.lt.s32.totalorder %v9688, 2
        %vm9690 = vcmp.eq.s32.totalorder %v9688, 0
        %v9691 = vxor.u32 %v9685, 2147483648
        %v9692 = vsel %vm9690, %v9684, %v9691
        %vm9693 = vcmp.eq.s32.totalorder %v9688, 2
        %v9694 = vxor.u32 %v9684, 2147483648
        %v9695 = vsel %vm9693, %v9694, %v9685
        %v9696 = vsel %vm9689, %v9692, %v9695
        %v9697 = vsel %vm9686, nan, %v9696
        %v9698 = vand.u32 2147483647, %v229
        %vm9699 = vcmp.le.f32.partialorder %v9698, 0.7853982
        %vm9700 = vcmp.lt.s32.totalorder %v229, 0
        %v9701 = vand.u32 %v229, 2139095040
        %v9702 = vshrl.u32 %v9701, 23
        %v9703 = vsub.s32 %v9702, 127
        %v9704 = vand.u32 2147483647, %v229
        %v9705 = vand.u32 %v9704, 8388607
        %v9706 = vor.u32 %v9705, 8388608
        %v9707 = vsub.s32 0, %v9706
        %v9708 = vadd.s32 %v9703, 1
        %vm9709 = vcmp.gt.s32.totalorder %v9708, 0
        %v9710 = vsel %vm9709, %v9708, 0
        %v9711 = vshrl.u32 %v9710, 5
        %v9712 = vand.u32 %v9710, 31
        %v9713 = vsub.s32 32, %v9712
        %v9714 = vshrl.u32 683565275, %v9713
        %v9715 = vshll.u32 683565275, %v9712
        %v9716 = vshrl.u32 2475754826, %v9713
        %v9717 = vor.u32 %v9715, %v9716
        %v9718 = vshll.u32 2475754826, %v9712
        %v9719 = vshrl.u32 2131351028, %v9713
        %v9720 = vor.u32 %v9718, %v9719
        %v9721 = vshll.u32 2131351028, %v9712
        %v9722 = vshrl.u32 2102212464, %v9713
        %v9723 = vor.u32 %v9721, %v9722
        %v9724 = vshll.u32 2102212464, %v9712
        %v9725 = vshrl.u32 920167782, %v9713
        %v9726 = vor.u32 %v9724, %v9725
        %v9727 = vshll.u32 920167782, %v9712
        %v9728 = vshrl.u32 1326507024, %v9713
        %v9729 = vor.u32 %v9727, %v9728
        %vm9730 = vcmp.lt.s32.totalorder %v9711, 1
        %vm9731 = vcmp.lt.s32.totalorder %v9711, 2
        %vm9732 = vcmp.lt.s32.totalorder %v9711, 3
        %vm9733 = vcmp.lt.s32.totalorder %v9711, 4
        %v9734 = vsel %vm9730, %v9714, %v9717
        %v9735 = vsel %vm9733, %v9723, 2102212464
        %v9736 = vsel %vm9732, %v9720, %v9735
        %v9737 = vsel %vm9731, %v9734, %v9736
        %v9738 = vsel %vm9730, %v9717, %v9720
        %v9739 = vsel %vm9733, %v9726, 920167782
        %v9740 = vsel %vm9732, %v9723, %v9739
        %v9741 = vsel %vm9731, %v9738, %v9740
        %v9742 = vsel %vm9730, %v9720, %v9723
        %v9743 = vsel %vm9733, %v9729, 1326507024
        %v9744 = vsel %vm9732, %v9726, %v9743
        %v9745 = vsel %vm9731, %v9742, %v9744
        %v9746 = vshll.u32 %v9706, 8
        %v9747 = vmul.u32.u64.compose %v9746, %v9745
        %v9748 = vextract.low.u32 %v9747
        %v9749 = vextract.high.u32 %v9747
        %v9750 = vmul.u32.u64.compose %v9746, %v9741
        %v9751 = vextract.low.u32 %v9750
        %v9752 = vextract.high.u32 %v9750
        %v9753 = vmul.u32 %v9746, %v9737
        %v9754 = vadd.s32 %v9749, %v9751
        %vm9755 = vc.u32 %v9749, %v9751
        %v9756 = vadd.s32 %v9752, 1
        %v9757 = vsel %vm9755, %v9756, %v9752
        %v9758 = vadd.s32 %v9753, %v9757
        %v9759 = vadd.s32 %v9758, 536870912
        %v9760 = vshrl.u32 %v9759, 30
        %v9761 = vshll.u32 %v9760, 30
        %v9762 = vsub.s32 %v9758, %v9761
        %vm9763 = vcmp.lt.s32.totalorder %v9762, 0
        %v9764 = vsub.s32 0, %v9762
        %v9765 = vsel %vm9763, %v9764, %v9762
        %v9766 = vclz %v9765
        %v9767 = vsub.s32 %v9766, 2
        %vm9768 = vcmp.gt.s32.totalorder 0, %v9767
        %v9769 = vsel %vm9768, 0, %v9767
        %v9770 = vsub.s32 32, %v9769
        %v9771 = vshll.u32 %v9762, %v9769
        %v9772 = vshrl.u32 %v9754, %v9770
        %v9773 = vor.u32 %v9771, %v9772
        %v9774 = vsub.s32 4294967266, %v9769
        %v9775 = vadd.s32 %v9774, 127
        %v9776 = vshll.u32 %v9775, 23
        %v9777 = vor.u32 4788187, %v9776
        %v9778 = vand.u32 2147483647, %v9777
        %v9780 = vcvt.s32.f32 %v9773
        %v9781 = vmul.f32 %v9780, %v9778
        %v9782 = vxor.u32 %v9781, 2147483648
        %v9783 = vsel %vm9700, %v9782, %v9781
        %v9784 = vsub.s32 4, %v9760
        %v9785 = vsel %vm9700, %v9784, %v9760
        %v9786 = vsel %vm9699, %v229, %v9783
        %v9787 = vsel %vm9699, 0, %v9785
        %v9788 = vcosq.f32.pop %v9786
        %v9789 = vsinq.f32.pop %v9786
        %vm9790 = vweird.f32 %v229
        %v9791 = vadd.s32 %v9787, 3
        %v9792 = vand.u32 %v9791, 3
        %vm9793 = vcmp.lt.s32.totalorder %v9792, 2
        %vm9794 = vcmp.eq.s32.totalorder %v9792, 0
        %v9795 = vxor.u32 %v9789, 2147483648
        %v9796 = vsel %vm9794, %v9788, %v9795
        %vm9797 = vcmp.eq.s32.totalorder %v9792, 2
        %v9798 = vxor.u32 %v9788, 2147483648
        %v9799 = vsel %vm9797, %v9798, %v9789
        %v9800 = vsel %vm9793, %v9796, %v9799
        %v9801 = vsel %vm9790, nan, %v9800
        %v9802 = vand.u32 2147483647, %v230
        %vm9803 = vcmp.le.f32.partialorder %v9802, 0.7853982
        %vm9804 = vcmp.lt.s32.totalorder %v230, 0
        %v9805 = vand.u32 %v230, 2139095040
        %v9806 = vshrl.u32 %v9805, 23
        %v9807 = vsub.s32 %v9806, 127
        %v9808 = vand.u32 2147483647, %v230
        %v9809 = vand.u32 %v9808, 8388607
        %v9810 = vor.u32 %v9809, 8388608
        %v9811 = vsub.s32 0, %v9810
        %v9812 = vadd.s32 %v9807, 1
        %vm9813 = vcmp.gt.s32.totalorder %v9812, 0
        %v9814 = vsel %vm9813, %v9812, 0
        %v9815 = vshrl.u32 %v9814, 5
        %v9816 = vand.u32 %v9814, 31
        %v9817 = vsub.s32 32, %v9816
        %v9818 = vshrl.u32 683565275, %v9817
        %v9819 = vshll.u32 683565275, %v9816
        %v9820 = vshrl.u32 2475754826, %v9817
        %v9821 = vor.u32 %v9819, %v9820
        %v9822 = vshll.u32 2475754826, %v9816
        %v9823 = vshrl.u32 2131351028, %v9817
        %v9824 = vor.u32 %v9822, %v9823
        %v9825 = vshll.u32 2131351028, %v9816
        %v9826 = vshrl.u32 2102212464, %v9817
        %v9827 = vor.u32 %v9825, %v9826
        %v9828 = vshll.u32 2102212464, %v9816
        %v9829 = vshrl.u32 920167782, %v9817
        %v9830 = vor.u32 %v9828, %v9829
        %v9831 = vshll.u32 920167782, %v9816
        %v9832 = vshrl.u32 1326507024, %v9817
        %v9833 = vor.u32 %v9831, %v9832
        %vm9834 = vcmp.lt.s32.totalorder %v9815, 1
        %vm9835 = vcmp.lt.s32.totalorder %v9815, 2
        %vm9836 = vcmp.lt.s32.totalorder %v9815, 3
        %vm9837 = vcmp.lt.s32.totalorder %v9815, 4
        %v9838 = vsel %vm9834, %v9818, %v9821
        %v9839 = vsel %vm9837, %v9827, 2102212464
        %v9840 = vsel %vm9836, %v9824, %v9839
        %v9841 = vsel %vm9835, %v9838, %v9840
        %v9842 = vsel %vm9834, %v9821, %v9824
        %v9843 = vsel %vm9837, %v9830, 920167782
        %v9844 = vsel %vm9836, %v9827, %v9843
        %v9845 = vsel %vm9835, %v9842, %v9844
        %v9846 = vsel %vm9834, %v9824, %v9827
        %v9847 = vsel %vm9837, %v9833, 1326507024
        %v9848 = vsel %vm9836, %v9830, %v9847
        %v9849 = vsel %vm9835, %v9846, %v9848
        %v9850 = vshll.u32 %v9810, 8
        %v9851 = vmul.u32.u64.compose %v9850, %v9849
        %v9852 = vextract.low.u32 %v9851
        %v9853 = vextract.high.u32 %v9851
        %v9854 = vmul.u32.u64.compose %v9850, %v9845
        %v9855 = vextract.low.u32 %v9854
        %v9856 = vextract.high.u32 %v9854
        %v9857 = vmul.u32 %v9850, %v9841
        %v9858 = vadd.s32 %v9853, %v9855
        %vm9859 = vc.u32 %v9853, %v9855
        %v9860 = vadd.s32 %v9856, 1
        %v9861 = vsel %vm9859, %v9860, %v9856
        %v9862 = vadd.s32 %v9857, %v9861
        %v9863 = vadd.s32 %v9862, 536870912
        %v9864 = vshrl.u32 %v9863, 30
        %v9865 = vshll.u32 %v9864, 30
        %v9866 = vsub.s32 %v9862, %v9865
        %vm9867 = vcmp.lt.s32.totalorder %v9866, 0
        %v9868 = vsub.s32 0, %v9866
        %v9869 = vsel %vm9867, %v9868, %v9866
        %v9870 = vclz %v9869
        %v9871 = vsub.s32 %v9870, 2
        %vm9872 = vcmp.gt.s32.totalorder 0, %v9871
        %v9873 = vsel %vm9872, 0, %v9871
        %v9874 = vsub.s32 32, %v9873
        %v9875 = vshll.u32 %v9866, %v9873
        %v9876 = vshrl.u32 %v9858, %v9874
        %v9877 = vor.u32 %v9875, %v9876
        %v9878 = vsub.s32 4294967266, %v9873
        %v9879 = vadd.s32 %v9878, 127
        %v9880 = vshll.u32 %v9879, 23
        %v9881 = vor.u32 4788187, %v9880
        %v9882 = vand.u32 2147483647, %v9881
        %v9884 = vcvt.s32.f32 %v9877
        %v9885 = vmul.f32 %v9884, %v9882
        %v9886 = vxor.u32 %v9885, 2147483648
        %v9887 = vsel %vm9804, %v9886, %v9885
        %v9888 = vsub.s32 4, %v9864
        %v9889 = vsel %vm9804, %v9888, %v9864
        %v9890 = vsel %vm9803, %v230, %v9887
        %v9891 = vsel %vm9803, 0, %v9889
        %v9892 = vcosq.f32.pop %v9890
        %v9893 = vsinq.f32.pop %v9890
        %vm9894 = vweird.f32 %v230
        %v9895 = vadd.s32 %v9891, 3
        %v9896 = vand.u32 %v9895, 3
        %vm9897 = vcmp.lt.s32.totalorder %v9896, 2
        %vm9898 = vcmp.eq.s32.totalorder %v9896, 0
        %v9899 = vxor.u32 %v9893, 2147483648
        %v9900 = vsel %vm9898, %v9892, %v9899
        %vm9901 = vcmp.eq.s32.totalorder %v9896, 2
        %v9902 = vxor.u32 %v9892, 2147483648
        %v9903 = vsel %vm9901, %v9902, %v9893
        %v9904 = vsel %vm9897, %v9900, %v9903
        %v9905 = vsel %vm9894, nan, %v9904
        %v9906 = vand.u32 2147483647, %v231
        %vm9907 = vcmp.le.f32.partialorder %v9906, 0.7853982
        %vm9908 = vcmp.lt.s32.totalorder %v231, 0
        %v9909 = vand.u32 %v231, 2139095040
        %v9910 = vshrl.u32 %v9909, 23
        %v9911 = vsub.s32 %v9910, 127
        %v9912 = vand.u32 2147483647, %v231
        %v9913 = vand.u32 %v9912, 8388607
        %v9914 = vor.u32 %v9913, 8388608
        %v9915 = vsub.s32 0, %v9914
        %v9916 = vadd.s32 %v9911, 1
        %vm9917 = vcmp.gt.s32.totalorder %v9916, 0
        %v9918 = vsel %vm9917, %v9916, 0
        %v9919 = vshrl.u32 %v9918, 5
        %v9920 = vand.u32 %v9918, 31
        %v9921 = vsub.s32 32, %v9920
        %v9922 = vshrl.u32 683565275, %v9921
        %v9923 = vshll.u32 683565275, %v9920
        %v9924 = vshrl.u32 2475754826, %v9921
        %v9925 = vor.u32 %v9923, %v9924
        %v9926 = vshll.u32 2475754826, %v9920
        %v9927 = vshrl.u32 2131351028, %v9921
        %v9928 = vor.u32 %v9926, %v9927
        %v9929 = vshll.u32 2131351028, %v9920
        %v9930 = vshrl.u32 2102212464, %v9921
        %v9931 = vor.u32 %v9929, %v9930
        %v9932 = vshll.u32 2102212464, %v9920
        %v9933 = vshrl.u32 920167782, %v9921
        %v9934 = vor.u32 %v9932, %v9933
        %v9935 = vshll.u32 920167782, %v9920
        %v9936 = vshrl.u32 1326507024, %v9921
        %v9937 = vor.u32 %v9935, %v9936
        %vm9938 = vcmp.lt.s32.totalorder %v9919, 1
        %vm9939 = vcmp.lt.s32.totalorder %v9919, 2
        %vm9940 = vcmp.lt.s32.totalorder %v9919, 3
        %vm9941 = vcmp.lt.s32.totalorder %v9919, 4
        %v9942 = vsel %vm9938, %v9922, %v9925
        %v9943 = vsel %vm9941, %v9931, 2102212464
        %v9944 = vsel %vm9940, %v9928, %v9943
        %v9945 = vsel %vm9939, %v9942, %v9944
        %v9946 = vsel %vm9938, %v9925, %v9928
        %v9947 = vsel %vm9941, %v9934, 920167782
        %v9948 = vsel %vm9940, %v9931, %v9947
        %v9949 = vsel %vm9939, %v9946, %v9948
        %v9950 = vsel %vm9938, %v9928, %v9931
        %v9951 = vsel %vm9941, %v9937, 1326507024
        %v9952 = vsel %vm9940, %v9934, %v9951
        %v9953 = vsel %vm9939, %v9950, %v9952
        %v9954 = vshll.u32 %v9914, 8
        %v9955 = vmul.u32.u64.compose %v9954, %v9953
        %v9956 = vextract.low.u32 %v9955
        %v9957 = vextract.high.u32 %v9955
        %v9958 = vmul.u32.u64.compose %v9954, %v9949
        %v9959 = vextract.low.u32 %v9958
        %v9960 = vextract.high.u32 %v9958
        %v9961 = vmul.u32 %v9954, %v9945
        %v9962 = vadd.s32 %v9957, %v9959
        %vm9963 = vc.u32 %v9957, %v9959
        %v9964 = vadd.s32 %v9960, 1
        %v9965 = vsel %vm9963, %v9964, %v9960
        %v9966 = vadd.s32 %v9961, %v9965
        %v9967 = vadd.s32 %v9966, 536870912
        %v9968 = vshrl.u32 %v9967, 30
        %v9969 = vshll.u32 %v9968, 30
        %v9970 = vsub.s32 %v9966, %v9969
        %vm9971 = vcmp.lt.s32.totalorder %v9970, 0
        %v9972 = vsub.s32 0, %v9970
        %v9973 = vsel %vm9971, %v9972, %v9970
        %v9974 = vclz %v9973
        %v9975 = vsub.s32 %v9974, 2
        %vm9976 = vcmp.gt.s32.totalorder 0, %v9975
        %v9977 = vsel %vm9976, 0, %v9975
        %v9978 = vsub.s32 32, %v9977
        %v9979 = vshll.u32 %v9970, %v9977
        %v9980 = vshrl.u32 %v9962, %v9978
        %v9981 = vor.u32 %v9979, %v9980
        %v9982 = vsub.s32 4294967266, %v9977
        %v9983 = vadd.s32 %v9982, 127
        %v9984 = vshll.u32 %v9983, 23
        %v9985 = vor.u32 4788187, %v9984
        %v9986 = vand.u32 2147483647, %v9985
        %v9988 = vcvt.s32.f32 %v9981
        %v9989 = vmul.f32 %v9988, %v9986
        %v9990 = vxor.u32 %v9989, 2147483648
        %v9991 = vsel %vm9908, %v9990, %v9989
        %v9992 = vsub.s32 4, %v9968
        %v9993 = vsel %vm9908, %v9992, %v9968
        %v9994 = vsel %vm9907, %v231, %v9991
        %v9995 = vsel %vm9907, 0, %v9993
        %v9996 = vcosq.f32.pop %v9994
        %v9997 = vsinq.f32.pop %v9994
        %vm9998 = vweird.f32 %v231
        %v9999 = vadd.s32 %v9995, 3
        %v10000 = vand.u32 %v9999, 3
        %vm10001 = vcmp.lt.s32.totalorder %v10000, 2
        %vm10002 = vcmp.eq.s32.totalorder %v10000, 0
        %v10003 = vxor.u32 %v9997, 2147483648
        %v10004 = vsel %vm10002, %v9996, %v10003
        %vm10005 = vcmp.eq.s32.totalorder %v10000, 2
        %v10006 = vxor.u32 %v9996, 2147483648
        %v10007 = vsel %vm10005, %v10006, %v9997
        %v10008 = vsel %vm10001, %v10004, %v10007
        %v10009 = vsel %vm9998, nan, %v10008
        %v10010 = vand.u32 2147483647, %v232
        %vm10011 = vcmp.le.f32.partialorder %v10010, 0.7853982
        %vm10012 = vcmp.lt.s32.totalorder %v232, 0
        %v10013 = vand.u32 %v232, 2139095040
        %v10014 = vshrl.u32 %v10013, 23
        %v10015 = vsub.s32 %v10014, 127
        %v10016 = vand.u32 2147483647, %v232
        %v10017 = vand.u32 %v10016, 8388607
        %v10018 = vor.u32 %v10017, 8388608
        %v10019 = vsub.s32 0, %v10018
        %v10020 = vadd.s32 %v10015, 1
        %vm10021 = vcmp.gt.s32.totalorder %v10020, 0
        %v10022 = vsel %vm10021, %v10020, 0
        %v10023 = vshrl.u32 %v10022, 5
        %v10024 = vand.u32 %v10022, 31
        %v10025 = vsub.s32 32, %v10024
        %v10026 = vshrl.u32 683565275, %v10025
        %v10027 = vshll.u32 683565275, %v10024
        %v10028 = vshrl.u32 2475754826, %v10025
        %v10029 = vor.u32 %v10027, %v10028
        %v10030 = vshll.u32 2475754826, %v10024
        %v10031 = vshrl.u32 2131351028, %v10025
        %v10032 = vor.u32 %v10030, %v10031
        %v10033 = vshll.u32 2131351028, %v10024
        %v10034 = vshrl.u32 2102212464, %v10025
        %v10035 = vor.u32 %v10033, %v10034
        %v10036 = vshll.u32 2102212464, %v10024
        %v10037 = vshrl.u32 920167782, %v10025
        %v10038 = vor.u32 %v10036, %v10037
        %v10039 = vshll.u32 920167782, %v10024
        %v10040 = vshrl.u32 1326507024, %v10025
        %v10041 = vor.u32 %v10039, %v10040
        %vm10042 = vcmp.lt.s32.totalorder %v10023, 1
        %vm10043 = vcmp.lt.s32.totalorder %v10023, 2
        %vm10044 = vcmp.lt.s32.totalorder %v10023, 3
        %vm10045 = vcmp.lt.s32.totalorder %v10023, 4
        %v10046 = vsel %vm10042, %v10026, %v10029
        %v10047 = vsel %vm10045, %v10035, 2102212464
        %v10048 = vsel %vm10044, %v10032, %v10047
        %v10049 = vsel %vm10043, %v10046, %v10048
        %v10050 = vsel %vm10042, %v10029, %v10032
        %v10051 = vsel %vm10045, %v10038, 920167782
        %v10052 = vsel %vm10044, %v10035, %v10051
        %v10053 = vsel %vm10043, %v10050, %v10052
        %v10054 = vsel %vm10042, %v10032, %v10035
        %v10055 = vsel %vm10045, %v10041, 1326507024
        %v10056 = vsel %vm10044, %v10038, %v10055
        %v10057 = vsel %vm10043, %v10054, %v10056
        %v10058 = vshll.u32 %v10018, 8
        %v10059 = vmul.u32.u64.compose %v10058, %v10057
        %v10060 = vextract.low.u32 %v10059
        %v10061 = vextract.high.u32 %v10059
        %v10062 = vmul.u32.u64.compose %v10058, %v10053
        %v10063 = vextract.low.u32 %v10062
        %v10064 = vextract.high.u32 %v10062
        %v10065 = vmul.u32 %v10058, %v10049
        %v10066 = vadd.s32 %v10061, %v10063
        %vm10067 = vc.u32 %v10061, %v10063
        %v10068 = vadd.s32 %v10064, 1
        %v10069 = vsel %vm10067, %v10068, %v10064
        %v10070 = vadd.s32 %v10065, %v10069
        %v10071 = vadd.s32 %v10070, 536870912
        %v10072 = vshrl.u32 %v10071, 30
        %v10073 = vshll.u32 %v10072, 30
        %v10074 = vsub.s32 %v10070, %v10073
        %vm10075 = vcmp.lt.s32.totalorder %v10074, 0
        %v10076 = vsub.s32 0, %v10074
        %v10077 = vsel %vm10075, %v10076, %v10074
        %v10078 = vclz %v10077
        %v10079 = vsub.s32 %v10078, 2
        %vm10080 = vcmp.gt.s32.totalorder 0, %v10079
        %v10081 = vsel %vm10080, 0, %v10079
        %v10082 = vsub.s32 32, %v10081
        %v10083 = vshll.u32 %v10074, %v10081
        %v10084 = vshrl.u32 %v10066, %v10082
        %v10085 = vor.u32 %v10083, %v10084
        %v10086 = vsub.s32 4294967266, %v10081
        %v10087 = vadd.s32 %v10086, 127
        %v10088 = vshll.u32 %v10087, 23
        %v10089 = vor.u32 4788187, %v10088
        %v10090 = vand.u32 2147483647, %v10089
        %v10092 = vcvt.s32.f32 %v10085
        %v10093 = vmul.f32 %v10092, %v10090
        %v10094 = vxor.u32 %v10093, 2147483648
        %v10095 = vsel %vm10012, %v10094, %v10093
        %v10096 = vsub.s32 4, %v10072
        %v10097 = vsel %vm10012, %v10096, %v10072
        %v10098 = vsel %vm10011, %v232, %v10095
        %v10099 = vsel %vm10011, 0, %v10097
        %v10100 = vcosq.f32.pop %v10098
        %v10101 = vsinq.f32.pop %v10098
        %vm10102 = vweird.f32 %v232
        %v10103 = vadd.s32 %v10099, 3
        %v10104 = vand.u32 %v10103, 3
        %vm10105 = vcmp.lt.s32.totalorder %v10104, 2
        %vm10106 = vcmp.eq.s32.totalorder %v10104, 0
        %v10107 = vxor.u32 %v10101, 2147483648
        %v10108 = vsel %vm10106, %v10100, %v10107
        %vm10109 = vcmp.eq.s32.totalorder %v10104, 2
        %v10110 = vxor.u32 %v10100, 2147483648
        %v10111 = vsel %vm10109, %v10110, %v10101
        %v10112 = vsel %vm10105, %v10108, %v10111
        %v10113 = vsel %vm10102, nan, %v10112
        %v10114 = vand.u32 2147483647, %v233
        %vm10115 = vcmp.le.f32.partialorder %v10114, 0.7853982
        %vm10116 = vcmp.lt.s32.totalorder %v233, 0
        %v10117 = vand.u32 %v233, 2139095040
        %v10118 = vshrl.u32 %v10117, 23
        %v10119 = vsub.s32 %v10118, 127
        %v10120 = vand.u32 2147483647, %v233
        %v10121 = vand.u32 %v10120, 8388607
        %v10122 = vor.u32 %v10121, 8388608
        %v10123 = vsub.s32 0, %v10122
        %v10124 = vadd.s32 %v10119, 1
        %vm10125 = vcmp.gt.s32.totalorder %v10124, 0
        %v10126 = vsel %vm10125, %v10124, 0
        %v10127 = vshrl.u32 %v10126, 5
        %v10128 = vand.u32 %v10126, 31
        %v10129 = vsub.s32 32, %v10128
        %v10130 = vshrl.u32 683565275, %v10129
        %v10131 = vshll.u32 683565275, %v10128
        %v10132 = vshrl.u32 2475754826, %v10129
        %v10133 = vor.u32 %v10131, %v10132
        %v10134 = vshll.u32 2475754826, %v10128
        %v10135 = vshrl.u32 2131351028, %v10129
        %v10136 = vor.u32 %v10134, %v10135
        %v10137 = vshll.u32 2131351028, %v10128
        %v10138 = vshrl.u32 2102212464, %v10129
        %v10139 = vor.u32 %v10137, %v10138
        %v10140 = vshll.u32 2102212464, %v10128
        %v10141 = vshrl.u32 920167782, %v10129
        %v10142 = vor.u32 %v10140, %v10141
        %v10143 = vshll.u32 920167782, %v10128
        %v10144 = vshrl.u32 1326507024, %v10129
        %v10145 = vor.u32 %v10143, %v10144
        %vm10146 = vcmp.lt.s32.totalorder %v10127, 1
        %vm10147 = vcmp.lt.s32.totalorder %v10127, 2
        %vm10148 = vcmp.lt.s32.totalorder %v10127, 3
        %vm10149 = vcmp.lt.s32.totalorder %v10127, 4
        %v10150 = vsel %vm10146, %v10130, %v10133
        %v10151 = vsel %vm10149, %v10139, 2102212464
        %v10152 = vsel %vm10148, %v10136, %v10151
        %v10153 = vsel %vm10147, %v10150, %v10152
        %v10154 = vsel %vm10146, %v10133, %v10136
        %v10155 = vsel %vm10149, %v10142, 920167782
        %v10156 = vsel %vm10148, %v10139, %v10155
        %v10157 = vsel %vm10147, %v10154, %v10156
        %v10158 = vsel %vm10146, %v10136, %v10139
        %v10159 = vsel %vm10149, %v10145, 1326507024
        %v10160 = vsel %vm10148, %v10142, %v10159
        %v10161 = vsel %vm10147, %v10158, %v10160
        %v10162 = vshll.u32 %v10122, 8
        %v10163 = vmul.u32.u64.compose %v10162, %v10161
        %v10164 = vextract.low.u32 %v10163
        %v10165 = vextract.high.u32 %v10163
        %v10166 = vmul.u32.u64.compose %v10162, %v10157
        %v10167 = vextract.low.u32 %v10166
        %v10168 = vextract.high.u32 %v10166
        %v10169 = vmul.u32 %v10162, %v10153
        %v10170 = vadd.s32 %v10165, %v10167
        %vm10171 = vc.u32 %v10165, %v10167
        %v10172 = vadd.s32 %v10168, 1
        %v10173 = vsel %vm10171, %v10172, %v10168
        %v10174 = vadd.s32 %v10169, %v10173
        %v10175 = vadd.s32 %v10174, 536870912
        %v10176 = vshrl.u32 %v10175, 30
        %v10177 = vshll.u32 %v10176, 30
        %v10178 = vsub.s32 %v10174, %v10177
        %vm10179 = vcmp.lt.s32.totalorder %v10178, 0
        %v10180 = vsub.s32 0, %v10178
        %v10181 = vsel %vm10179, %v10180, %v10178
        %v10182 = vclz %v10181
        %v10183 = vsub.s32 %v10182, 2
        %vm10184 = vcmp.gt.s32.totalorder 0, %v10183
        %v10185 = vsel %vm10184, 0, %v10183
        %v10186 = vsub.s32 32, %v10185
        %v10187 = vshll.u32 %v10178, %v10185
        %v10188 = vshrl.u32 %v10170, %v10186
        %v10189 = vor.u32 %v10187, %v10188
        %v10190 = vsub.s32 4294967266, %v10185
        %v10191 = vadd.s32 %v10190, 127
        %v10192 = vshll.u32 %v10191, 23
        %v10193 = vor.u32 4788187, %v10192
        %v10194 = vand.u32 2147483647, %v10193
        %v10196 = vcvt.s32.f32 %v10189
        %v10197 = vmul.f32 %v10196, %v10194
        %v10198 = vxor.u32 %v10197, 2147483648
        %v10199 = vsel %vm10116, %v10198, %v10197
        %v10200 = vsub.s32 4, %v10176
        %v10201 = vsel %vm10116, %v10200, %v10176
        %v10202 = vsel %vm10115, %v233, %v10199
        %v10203 = vsel %vm10115, 0, %v10201
        %v10204 = vcosq.f32.pop %v10202
        %v10205 = vsinq.f32.pop %v10202
        %vm10206 = vweird.f32 %v233
        %v10207 = vadd.s32 %v10203, 3
        %v10208 = vand.u32 %v10207, 3
        %vm10209 = vcmp.lt.s32.totalorder %v10208, 2
        %vm10210 = vcmp.eq.s32.totalorder %v10208, 0
        %v10211 = vxor.u32 %v10205, 2147483648
        %v10212 = vsel %vm10210, %v10204, %v10211
        %vm10213 = vcmp.eq.s32.totalorder %v10208, 2
        %v10214 = vxor.u32 %v10204, 2147483648
        %v10215 = vsel %vm10213, %v10214, %v10205
        %v10216 = vsel %vm10209, %v10212, %v10215
        %v10217 = vsel %vm10206, nan, %v10216
        %10218 = vst [vmem:[%s135] sm:$0xff] %v337
        %10219 = vst [vmem:[%s135 + $0x8] sm:$0xff] %v441
        %10220 = vst [vmem:[%s135 + $0x10] sm:$0xff] %v545
        %10221 = vst [vmem:[%s135 + $0x18] sm:$0xff] %v649
        %10222 = vst [vmem:[%s135 + $0x20] sm:$0xff] %v753
        %10223 = vst [vmem:[%s135 + $0x28] sm:$0xff] %v857
        %10224 = vst [vmem:[%s135 + $0x30] sm:$0xff] %v961
        %10225 = vst [vmem:[%s135 + $0x38] sm:$0xff] %v1065
        %10226 = vst [vmem:[%s135 + $0x40] sm:$0xff] %v1169
        %10227 = vst [vmem:[%s135 + $0x48] sm:$0xff] %v1273
        %10228 = vst [vmem:[%s135 + $0x50] sm:$0xff] %v1377
        %10229 = vst [vmem:[%s135 + $0x58] sm:$0xff] %v1481
        %10230 = vst [vmem:[%s135 + $0x60] sm:$0xff] %v1585
        %10231 = vst [vmem:[%s135 + $0x68] sm:$0xff] %v1689
        %10232 = vst [vmem:[%s135 + $0x70] sm:$0xff] %v1793
        %10233 = vst [vmem:[%s135 + $0x78] sm:$0xff] %v1897
        %10234 = vst [vmem:[%s135 + $0x80] sm:$0xff] %v2001
        %10235 = vst [vmem:[%s135 + $0x88] sm:$0xff] %v2105
        %10236 = vst [vmem:[%s135 + $0x90] sm:$0xff] %v2209
        %10237 = vst [vmem:[%s135 + $0x98] sm:$0xff] %v2313
        %10238 = vst [vmem:[%s135 + $0xa0] sm:$0xff] %v2417
        %10239 = vst [vmem:[%s135 + $0xa8] sm:$0xff] %v2521
        %10240 = vst [vmem:[%s135 + $0xb0] sm:$0xff] %v2625
        %10241 = vst [vmem:[%s135 + $0xb8] sm:$0xff] %v2729
        %10242 = vst [vmem:[%s135 + $0xc0] sm:$0xff] %v2833
        %10243 = vst [vmem:[%s135 + $0xc8] sm:$0xff] %v2937
        %10244 = vst [vmem:[%s135 + $0xd0] sm:$0xff] %v3041
        %10245 = vst [vmem:[%s135 + $0xd8] sm:$0xff] %v3145
        %10246 = vst [vmem:[%s135 + $0xe0] sm:$0xff] %v3249
        %10247 = vst [vmem:[%s135 + $0xe8] sm:$0xff] %v3353
        %10248 = vst [vmem:[%s135 + $0xf0] sm:$0xff] %v3457
        %10249 = vst [vmem:[%s135 + $0xf8] sm:$0xff] %v3561
        %10250 = vst [vmem:[%s135 + $0x100] sm:$0xff] %v3665
        %10251 = vst [vmem:[%s135 + $0x108] sm:$0xff] %v3769
        %10252 = vst [vmem:[%s135 + $0x110] sm:$0xff] %v3873
        %10253 = vst [vmem:[%s135 + $0x118] sm:$0xff] %v3977
        %10254 = vst [vmem:[%s135 + $0x120] sm:$0xff] %v4081
        %10255 = vst [vmem:[%s135 + $0x128] sm:$0xff] %v4185
        %10256 = vst [vmem:[%s135 + $0x130] sm:$0xff] %v4289
        %10257 = vst [vmem:[%s135 + $0x138] sm:$0xff] %v4393
        %10258 = vst [vmem:[%s135 + $0x140] sm:$0xff] %v4497
        %10259 = vst [vmem:[%s135 + $0x148] sm:$0xff] %v4601
        %10260 = vst [vmem:[%s135 + $0x150] sm:$0xff] %v4705
        %10261 = vst [vmem:[%s135 + $0x158] sm:$0xff] %v4809
        %10262 = vst [vmem:[%s135 + $0x160] sm:$0xff] %v4913
        %10263 = vst [vmem:[%s135 + $0x168] sm:$0xff] %v5017
        %10264 = vst [vmem:[%s135 + $0x170] sm:$0xff] %v5121
        %10265 = vst [vmem:[%s135 + $0x178] sm:$0xff] %v5225
        %10266 = vst [vmem:[%s135 + $0x180] sm:$0xff] %v5329
        %10267 = vst [vmem:[%s135 + $0x188] sm:$0xff] %v5433
        %10268 = vst [vmem:[%s135 + $0x190] sm:$0xff] %v5537
        %10269 = vst [vmem:[%s135 + $0x198] sm:$0xff] %v5641
        %10270 = vst [vmem:[%s135 + $0x1a0] sm:$0xff] %v5745
        %10271 = vst [vmem:[%s135 + $0x1a8] sm:$0xff] %v5849
        %10272 = vst [vmem:[%s135 + $0x1b0] sm:$0xff] %v5953
        %10273 = vst [vmem:[%s135 + $0x1b8] sm:$0xff] %v6057
        %10274 = vst [vmem:[%s135 + $0x1c0] sm:$0xff] %v6161
        %10275 = vst [vmem:[%s135 + $0x1c8] sm:$0xff] %v6265
        %10276 = vst [vmem:[%s135 + $0x1d0] sm:$0xff] %v6369
        %10277 = vst [vmem:[%s135 + $0x1d8] sm:$0xff] %v6473
        %10278 = vst [vmem:[%s135 + $0x1e0] sm:$0xff] %v6577
        %10279 = vst [vmem:[%s135 + $0x1e8] sm:$0xff] %v6681
        %10280 = vst [vmem:[%s135 + $0x1f0] sm:$0xff] %v6785
        %10281 = vst [vmem:[%s135 + $0x1f8] sm:$0xff] %v6889
        %10282 = vst [vmem:[%s135 + $0x200] sm:$0xff] %v6993
        %10283 = vst [vmem:[%s135 + $0x208] sm:$0xff] %v7097
        %10284 = vst [vmem:[%s135 + $0x210] sm:$0xff] %v7201
        %10285 = vst [vmem:[%s135 + $0x218] sm:$0xff] %v7305
        %10286 = vst [vmem:[%s135 + $0x220] sm:$0xff] %v7409
        %10287 = vst [vmem:[%s135 + $0x228] sm:$0xff] %v7513
        %10288 = vst [vmem:[%s135 + $0x230] sm:$0xff] %v7617
        %10289 = vst [vmem:[%s135 + $0x238] sm:$0xff] %v7721
        %10290 = vst [vmem:[%s135 + $0x240] sm:$0xff] %v7825
        %10291 = vst [vmem:[%s135 + $0x248] sm:$0xff] %v7929
        %10292 = vst [vmem:[%s135 + $0x250] sm:$0xff] %v8033
        %10293 = vst [vmem:[%s135 + $0x258] sm:$0xff] %v8137
        %10294 = vst [vmem:[%s135 + $0x260] sm:$0xff] %v8241
        %10295 = vst [vmem:[%s135 + $0x268] sm:$0xff] %v8345
        %10296 = vst [vmem:[%s135 + $0x270] sm:$0xff] %v8449
        %10297 = vst [vmem:[%s135 + $0x278] sm:$0xff] %v8553
        %10298 = vst [vmem:[%s135 + $0x280] sm:$0xff] %v8657
        %10299 = vst [vmem:[%s135 + $0x288] sm:$0xff] %v8761
        %10300 = vst [vmem:[%s135 + $0x290] sm:$0xff] %v8865
        %10301 = vst [vmem:[%s135 + $0x298] sm:$0xff] %v8969
        %10302 = vst [vmem:[%s135 + $0x2a0] sm:$0xff] %v9073
        %10303 = vst [vmem:[%s135 + $0x2a8] sm:$0xff] %v9177
        %10304 = vst [vmem:[%s135 + $0x2b0] sm:$0xff] %v9281
        %10305 = vst [vmem:[%s135 + $0x2b8] sm:$0xff] %v9385
        %10306 = vst [vmem:[%s135 + $0x2c0] sm:$0xff] %v9489
        %10307 = vst [vmem:[%s135 + $0x2c8] sm:$0xff] %v9593
        %10308 = vst [vmem:[%s135 + $0x2d0] sm:$0xff] %v9697
        %10309 = vst [vmem:[%s135 + $0x2d8] sm:$0xff] %v9801
        %10310 = vst [vmem:[%s135 + $0x2e0] sm:$0xff] %v9905
        %10311 = vst [vmem:[%s135 + $0x2e8] sm:$0xff] %v10009
        %10312 = vst [vmem:[%s135 + $0x2f0] sm:$0xff] %v10113
        %10313 = vst [vmem:[%s135 + $0x2f8] sm:$0xff] %v10217
        %s10314 = sand.u32 %s52, 1
        %s10315 = scalar_lea.sflag [#allocation4], %s10314
        %s10316 = sand.u32 %s52, 1
        %s10317 = smul.addr %s10316, 768
        %s10318 = scalar_lea.vmem [#allocation5], %s10317
        // Predicated region
        $region29: #{tpu_custom_call.1} parent=23 // pred_check
          %p10319 = pneg %p62
        $region30: #{tpu_custom_call.1} parent=23 // pred_check_branch
          %10321 = sbr.rel (%p10319) target = $region32
        $region31: #{tpu_custom_call.1} parent=23 // pred_region
          %s10322 = smul.u32 32, %s18
          %s10324 = ssub.s32 12288, 12288
          %10325 = vsyncadd %s10315, %s10324
          %s10326 = smul.addr %s10322, 3
          %s10327 = smul.addr %s10326, 128
          %s10328 = scalar_lea.hbm %s1, %s10327
          %s10329 = sshll.u32 %s10318, 4
          %s10330 = int_to_ptr.vmem [resolvable:$true] %s10329
          %10335 = dma.vmem_to_hbm [thread:$0]  %s10330, 12288, %s10328, %s10315, 384, 384, 24
        $region32: #{tpu_custom_call.1} parent=23 // pred_fallthru
          _
      $region24: #{tpu_custom_call.1} parent=5 // pred_fallthru
        _
      %p10336 = scmp.le.s32.totalorder 2, %s13
      // Predicated region
      $region33: #{tpu_custom_call.1} parent=5 // pred_check
        %p10337 = pneg %p10336
      $region34: #{tpu_custom_call.1} parent=5 // pred_check_branch
        %10339 = sbr.rel (%p10337) target = $region36
      $region35: #{tpu_custom_call.1} parent=5 // pred_region
        %s10340 = ssub.s32 %s13, 2
        // Predicated region
        $region37: #{tpu_custom_call.1} parent=35 // pred_check
          %p10341 = pneg %p68
        $region38: #{tpu_custom_call.1} parent=35 // pred_check_branch
          %10343 = sbr.rel (%p10341) target = $region40
        $region39: #{tpu_custom_call.1} parent=35 // pred_region
          %s10344 = sand.u32 %s53, 1
          %s10345 = scalar_lea.sflag [#allocation4], %s10344
          %s10346 = sand.u32 %s53, 1
          %s10347 = smul.addr %s10346, 768
          %s10348 = scalar_lea.vmem [#allocation5], %s10347
          %10349 = dma.done %s10345, 12288
        $region40: #{tpu_custom_call.1} parent=35 // pred_fallthru
          _
      $region36: #{tpu_custom_call.1} parent=5 // pred_fallthru
        _
    $region6: #{tpu_custom_call.1} parent=1 // loop_footer
      %s17 = sadd.s32 1, %s13
    $region7: #{tpu_custom_call.1} parent=1 // loop_footer_branch
      %12 = sbr.rel target = $region3
    $region8: #{tpu_custom_call.1} parent=1 // loop_exit
      _
    %10350 = vsyncpa [#allocation3], 1
    %s10351 = scalar_lea.sflag [#allocation3], 1
    %10352 = vsyncpa %s10351, 1
    %10353 = vsyncpa [#allocation4], 1
    %s10354 = scalar_lea.sflag [#allocation4], 1
    %10355 = vsyncpa %s10354, 1

</llo_original>
